<compile_context>
chip_gen: v6e
topology: v6e:2x2x1
jax: 0.10.0
libtpu: 0.0.40
codegen_flags: <defaults>
</compile_context>

<pallas_src>
import numpy as np
import jax
import jax.numpy as jnp
from jax.experimental import pallas as pl
from jax.experimental.pallas import tpu as pltpu

_EPS = 1e-5
_GN_GROUPS = 32
_VMEM_LIMIT = 32 * 1024 * 1024


# ----------------------------- in-kernel helpers ----------------------------

def _prelu(v, a):
    return jnp.where(v > 0, v, a * v)


def _groupnorm(h, gamma, beta, gmat):
    """GroupNorm(32) over one sample's (S, C) f32 slab.

    gmat is None  -> C == num_groups: per-channel statistics (two-pass), no
                     MXU work and no gmat DMA at all.
    gmat (C, C)   -> per-channel (sum, sum-of-squares) aggregated to per-group
                     sums with ONE (2, C) @ (C, C) MXU matmul
                     (gmat[i, j] = 1 iff channels i, j share a group).
    """
    S, C = h.shape
    if gmat is None:
        inv_n = jnp.float32(1.0 / S)
        mean = jnp.sum(h, axis=0, keepdims=True) * inv_n
        c = h - mean
        var = jnp.sum(c * c, axis=0, keepdims=True) * inv_n
        return c * jax.lax.rsqrt(var + _EPS) * gamma + beta
    inv_n = jnp.float32(1.0 / (S * (C // _GN_GROUPS)))
    s1 = jnp.sum(h, axis=0, keepdims=True)           # (1, C)
    s2 = jnp.sum(h * h, axis=0, keepdims=True)       # (1, C)
    s = jnp.concatenate([s1, s2], axis=0)            # (2, C)
    g = jnp.dot(s, gmat, preferred_element_type=jnp.float32) * inv_n
    mean = g[0:1, :]
    var = jnp.maximum(g[1:2, :] - mean * mean, 0.0)
    return (h - mean) * jax.lax.rsqrt(var + _EPS) * gamma + beta


# ------------------------------- fused kernel --------------------------------

def _make_bottleneck_kernel(D, H, W, has_gmat_mid, has_gmat_out):
    S = D * H * W

    def kernel(*refs):
        it = iter(refs)
        x_ref = next(it)                   # (S, Cin) f32  (also the residual)
        w1_ref = next(it)                  # (Cin, mid) bf16
        w2_ref = next(it)                  # (27, mid, mid) bf16 block-diag taps
        w3_ref = next(it)                  # (mid, out) bf16
        g1_ref, b1_ref = next(it), next(it)
        g2_ref, b2_ref = next(it), next(it)
        g3_ref, b3_ref = next(it), next(it)
        alpha_ref = next(it)               # (1, 1) f32
        gmat_mid = next(it)[...] if has_gmat_mid else None
        gmat_out = next(it)[...] if has_gmat_out else None
        o_ref = next(it)                   # (S, out) f32
        xp_ref = next(it)                  # (D+2, H+2, W+2, mid) f32 scratch

        Cmid = xp_ref.shape[-1]
        Dp, Hp, Wp = D + 2, H + 2, W + 2
        a = alpha_ref[0, 0]

        # ---- conv1 (1x1x1, bf16 MXU / f32 acc) + GN1 + PReLU ----------------
        h1 = jnp.dot(x_ref[...].astype(jnp.bfloat16), w1_ref[...],
                     preferred_element_type=jnp.float32)          # (S, mid)
        h1 = _prelu(_groupnorm(h1, g1_ref[...], b1_ref[...], gmat_mid), a)

        # ---- conv2: grouped 3x3x3, stride 1, pad 1 --------------------------
        # Zero only the 6 halo faces; the interior is fully overwritten below.
        xp_ref[0:1, :, :, :] = jnp.zeros((1, Hp, Wp, Cmid), jnp.float32)
        xp_ref[Dp - 1:Dp, :, :, :] = jnp.zeros((1, Hp, Wp, Cmid), jnp.float32)
        xp_ref[:, 0:1, :, :] = jnp.zeros((Dp, 1, Wp, Cmid), jnp.float32)
        xp_ref[:, Hp - 1:Hp, :, :] = jnp.zeros((Dp, 1, Wp, Cmid), jnp.float32)
        xp_ref[:, :, 0:1, :] = jnp.zeros((Dp, Hp, 1, Cmid), jnp.float32)
        xp_ref[:, :, Wp - 1:Wp, :] = jnp.zeros((Dp, Hp, 1, Cmid), jnp.float32)
        xp_ref[1:D + 1, 1:H + 1, 1:W + 1, :] = h1.reshape(D, H, W, Cmid)

        # 27 shifted-window matmuls accumulated in f32 (no im2col buffer).
        acc = jnp.zeros((S, Cmid), jnp.float32)
        for kd in range(3):
            for kh in range(3):
                for kw in range(3):
                    t = (kd * 3 + kh) * 3 + kw
                    patch = xp_ref[kd:kd + D, kh:kh + H, kw:kw + W, :]
                    acc = acc + jnp.dot(
                        patch.reshape(S, Cmid).astype(jnp.bfloat16),
                        w2_ref[t],
                        preferred_element_type=jnp.float32)
        h2 = _prelu(_groupnorm(acc, g2_ref[...], b2_ref[...], gmat_mid), a)

        # ---- conv3 (1x1x1) + GN3 + residual + PReLU -------------------------
        h3 = jnp.dot(h2.astype(jnp.bfloat16), w3_ref[...],
                     preferred_element_type=jnp.float32)          # (S, out)
        y = _groupnorm(h3, g3_ref[...], b3_ref[...], gmat_out)
        o_ref[...] = _prelu(y + x_ref[...], a)

    return kernel


# ------------------------------ parameter prep -------------------------------

def group_matrix(C, num_groups=_GN_GROUPS):
    g = np.arange(C) // (C // num_groups)
    return jnp.asarray((g[:, None] == g[None, :]).astype(np.float32))


def expand_grouped_weight(w2, cardinality):
    # (Cout, Cin_per_group, 3, 3, 3) -> (27, Cin_total, Cout) block-diagonal
    # per-tap im2col-free weights, bf16.
    Cout, cpg_in = w2.shape[:2]
    cpg_out = Cout // cardinality
    Cin = cpg_in * cardinality
    w_np = np.asarray(w2)
    taps = np.zeros((27, Cin, Cout), np.float32)
    for co in range(Cout):
        g = co // cpg_out
        for ci in range(cpg_in):
            taps[:, g * cpg_in + ci, co] = w_np[co, ci].reshape(27)
    return jnp.asarray(taps, jnp.bfloat16)


def make_params(key, inplanes, planes, cardinality):
    expansion = 2
    mid = cardinality * int(planes / 32)
    out_ch = planes * expansion
    assert mid % 32 == 0 and out_ch % 32 == 0 and inplanes == out_ch
    cpg = mid // cardinality
    ks = jax.random.split(key, 9)
    params = dict(
        w1=jax.random.normal(ks[0], (mid, inplanes), jnp.float32) * 0.05,
        w2=jax.random.normal(ks[1], (mid, cpg, 3, 3, 3), jnp.float32) * 0.05,
        w3=jax.random.normal(ks[2], (out_ch, mid), jnp.float32) * 0.05,
        gn1_gamma=1.0 + 0.1 * jax.random.normal(ks[3], (mid,), jnp.float32),
        gn1_beta=0.1 * jax.random.normal(ks[4], (mid,), jnp.float32),
        gn2_gamma=1.0 + 0.1 * jax.random.normal(ks[5], (mid,), jnp.float32),
        gn2_beta=0.1 * jax.random.normal(ks[6], (mid,), jnp.float32),
        gn3_gamma=1.0 + 0.1 * jax.random.normal(ks[7], (out_ch,), jnp.float32),
        gn3_beta=0.1 * jax.random.normal(ks[8], (out_ch,), jnp.float32),
        prelu_a=jnp.float32(0.25),          # nn.PReLU() default, single shared
    )
    return params, mid, out_ch


def prepare_params(params, cardinality):
    """One-time host-side weight prep (transpose / group-expand / bf16 cast)."""
    mid = params['w1'].shape[0]
    out_ch = params['w3'].shape[0]
    prep = dict(
        w1=params['w1'].T.astype(jnp.bfloat16),                  # (Cin, mid)
        w2=expand_grouped_weight(params['w2'], cardinality),     # (27, mid, mid)
        w3=params['w3'].T.astype(jnp.bfloat16),                  # (mid, out)
        gn1_gamma=params['gn1_gamma'].reshape(1, mid).astype(jnp.float32),
        gn1_beta=params['gn1_beta'].reshape(1, mid).astype(jnp.float32),
        gn2_gamma=params['gn2_gamma'].reshape(1, mid).astype(jnp.float32),
        gn2_beta=params['gn2_beta'].reshape(1, mid).astype(jnp.float32),
        gn3_gamma=params['gn3_gamma'].reshape(1, out_ch).astype(jnp.float32),
        gn3_beta=params['gn3_beta'].reshape(1, out_ch).astype(jnp.float32),
        alpha=jnp.asarray(params['prelu_a'], jnp.float32).reshape(1, 1),
    )
    # gmat is only needed when channels != num_groups (mid=32 -> per-channel).
    if mid != _GN_GROUPS:
        prep['gmat_mid'] = group_matrix(mid)
    if out_ch != _GN_GROUPS:
        prep['gmat_out'] = group_matrix(out_ch)
    return prep


# ---------------------------------- forward ----------------------------------

@jax.jit
def resnext_bottleneck_forward(x_ncdhw, prep):
    N, Cin, D, H, W = x_ncdhw.shape
    S = D * H * W
    mid = prep['w1'].shape[1]
    out_ch = prep['w3'].shape[1]

    # channels-last f32 slab; doubles as the residual inside the kernel.
    x_sc = jnp.transpose(x_ncdhw, (0, 2, 3, 4, 1)).astype(
        jnp.float32).reshape(N, S, Cin)

    has_gm = 'gmat_mid' in prep
    has_go = 'gmat_out' in prep

    def full_spec(a):
        nd = a.ndim
        return pl.BlockSpec(a.shape, lambda n, _nd=nd: (0,) * _nd)

    def per_sample(s, c):
        return pl.BlockSpec((None, s, c), lambda n: (n, 0, 0))

    inputs = [x_sc, prep['w1'], prep['w2'], prep['w3'],
              prep['gn1_gamma'], prep['gn1_beta'],
              prep['gn2_gamma'], prep['gn2_beta'],
              prep['gn3_gamma'], prep['gn3_beta'], prep['alpha']]
    in_specs = [per_sample(S, Cin)] + [full_spec(a) for a in inputs[1:]]
    if has_gm:
        inputs.append(prep['gmat_mid'])
        in_specs.append(full_spec(prep['gmat_mid']))
    if has_go:
        inputs.append(prep['gmat_out'])
        in_specs.append(full_spec(prep['gmat_out']))

    out = pl.pallas_call(
        _make_bottleneck_kernel(D, H, W, has_gm, has_go),
        out_shape=jax.ShapeDtypeStruct((N, S, out_ch), jnp.float32),
        grid=(N,),
        in_specs=in_specs,
        out_specs=per_sample(S, out_ch),
        scratch_shapes=[
            pltpu.VMEM((D + 2, H + 2, W + 2, mid), jnp.float32),  # padded h1
        ],
        compiler_params=pltpu.CompilerParams(
            dimension_semantics=("parallel",),
            vmem_limit_bytes=_VMEM_LIMIT),
    )(*inputs)

    out = out.reshape(N, D, H, W, out_ch)
    return jnp.transpose(out, (0, 4, 1, 2, 3))          # back to NCDHW


# ----------------------------- pure-JAX reference ----------------------------

def ref_forward(x, params, cardinality, conv_dtype=jnp.float32):
    """Reference via XLA ops.  With conv_dtype=bf16 it applies the same
    bf16-at-conv-boundaries / f32-accumulate precision contract the kernel
    uses, so the kernel can be checked with a tight tolerance."""
    def prelu(v, a):
        return jnp.where(v > 0, v, a * v)

    def gn(v, gamma, beta):
        N, C, D, H, W = v.shape
        G = _GN_GROUPS
        vg = v.reshape(N, G, C // G, D, H, W)
        mean = vg.mean(axis=(2, 3, 4, 5), keepdims=True)
        var = vg.var(axis=(2, 3, 4, 5), keepdims=True)
        vg = (vg - mean) * jax.lax.rsqrt(var + _EPS)
        v = vg.reshape(N, C, D, H, W)
        return (v * gamma[None, :, None, None, None]
                + beta[None, :, None, None, None])

    cd = conv_dtype
    a = params['prelu_a']
    h = jnp.einsum('ncdhw,kc->nkdhw', x.astype(cd), params['w1'].astype(cd),
                   preferred_element_type=jnp.float32)
    h = prelu(gn(h, params['gn1_gamma'], params['gn1_beta']), a)
    h = jax.lax.conv_general_dilated(
        h.astype(cd), params['w2'].astype(cd), window_strides=(1, 1, 1),
        padding=((1, 1), (1, 1), (1, 1)),
        dimension_numbers=('NCDHW', 'OIDHW', 'NCDHW'),
        feature_group_count=cardinality,
        preferred_element_type=jnp.float32)
    h = prelu(gn(h, params['gn2_gamma'], params['gn2_beta']), a)
    h = jnp.einsum('ncdhw,kc->nkdhw', h.astype(cd), params['w3'].astype(cd),
                   preferred_element_type=jnp.float32)
    h = gn(h, params['gn3_gamma'], params['gn3_beta'])
    h = h + x
    return prelu(h, a)


# ------------------------------------ main ------------------------------------

if __name__ == "__main__":
    key = jax.random.PRNGKey(0)
    kx, kp = jax.random.split(key)

    # ResNeXtBottleneck(inplanes=128, planes=64, cardinality=16, stride=1)
    #   mid_planes = 16 * int(64/32) = 32, out = planes * expansion = 128
    N, D, H, W = 2, 4, 8, 8
    inplanes, planes, cardinality = 128, 64, 16

    params, mid, out_ch = make_params(kp, inplanes, planes, cardinality)
    x = jax.random.normal(kx, (N, inplanes, D, H, W), jnp.float32)

    prep = prepare_params(params, cardinality)
    out = jax.block_until_ready(resnext_bottleneck_forward(x, prep))
    assert out.shape == (N, out_ch, D, H, W)

    # Compare against the precision-matched reference (bf16 conv inputs/weights,
    # f32 accumulation and f32 GN/residual math — identical rounding points).
    ref = jax.block_until_ready(
        ref_forward(x, params, cardinality, conv_dtype=jnp.bfloat16))
    max_err = float(jnp.max(jnp.abs(out - ref)))
    if not np.allclose(np.asarray(out), np.asarray(ref), atol=5e-3, rtol=5e-3):
        raise AssertionError(
            f"mismatch vs reference, max abs err = {max_err}")
    print("KERNEL_OK")
</pallas_src>

<mosaic_0001>
module attributes {stable_mosaic.version = 11 : i64} {
  func.func @kernel(%arg0: i32, %arg1: memref<1x256x128xf32, #tpu.memory_space<vmem>>, %arg2: memref<128x32xbf16, #tpu.memory_space<vmem>>, %arg3: memref<27x32x32xbf16, #tpu.memory_space<vmem>>, %arg4: memref<32x128xbf16, #tpu.memory_space<vmem>>, %arg5: memref<1x32xf32, #tpu.memory_space<vmem>>, %arg6: memref<1x32xf32, #tpu.memory_space<vmem>>, %arg7: memref<1x32xf32, #tpu.memory_space<vmem>>, %arg8: memref<1x32xf32, #tpu.memory_space<vmem>>, %arg9: memref<1x128xf32, #tpu.memory_space<vmem>>, %arg10: memref<1x128xf32, #tpu.memory_space<vmem>>, %arg11: memref<1x1xf32, #tpu.memory_space<vmem>>, %arg12: memref<128x128xf32, #tpu.memory_space<vmem>>, %arg13: memref<1x256x128xf32, #tpu.memory_space<vmem>>, %arg14: memref<6x10x10x32xf32, #tpu.memory_space<vmem>>) attributes {dimension_semantics = [#tpu.dimension_semantics<parallel>], iteration_bounds = array<i64: 2>, scalar_prefetch = 0 : i64, scratch_operands = 1 : i64, tpu.core_type = #tpu.core_type<tc>, window_params = [{transform_indices = @transform_0, window_bounds = array<i64: 1, 256, 128>}, {pipeline_mode = #tpu.pipeline_mode<synchronous>, transform_indices = @transform_1, window_bounds = array<i64: 128, 32>}, {pipeline_mode = #tpu.pipeline_mode<synchronous>, transform_indices = @transform_2, window_bounds = array<i64: 27, 32, 32>}, {pipeline_mode = #tpu.pipeline_mode<synchronous>, transform_indices = @transform_3, window_bounds = array<i64: 32, 128>}, {pipeline_mode = #tpu.pipeline_mode<synchronous>, transform_indices = @transform_4, window_bounds = array<i64: 1, 32>}, {pipeline_mode = #tpu.pipeline_mode<synchronous>, transform_indices = @transform_5, window_bounds = array<i64: 1, 32>}, {pipeline_mode = #tpu.pipeline_mode<synchronous>, transform_indices = @transform_6, window_bounds = array<i64: 1, 32>}, {pipeline_mode = #tpu.pipeline_mode<synchronous>, transform_indices = @transform_7, window_bounds = array<i64: 1, 32>}, {pipeline_mode = #tpu.pipeline_mode<synchronous>, transform_indices = @transform_8, window_bounds = array<i64: 1, 128>}, {pipeline_mode = #tpu.pipeline_mode<synchronous>, transform_indices = @transform_9, window_bounds = array<i64: 1, 128>}, {pipeline_mode = #tpu.pipeline_mode<synchronous>, transform_indices = @transform_10, window_bounds = array<i64: 1, 1>}, {pipeline_mode = #tpu.pipeline_mode<synchronous>, transform_indices = @transform_11, window_bounds = array<i64: 128, 128>}, {transform_indices = @transform_12, window_bounds = array<i64: 1, 256, 128>}]} {
    %c0 = arith.constant 0 : index
    %c0_0 = arith.constant 0 : index
    %0 = vector.load %arg12[%c0, %c0_0] : memref<128x128xf32, #tpu.memory_space<vmem>>, vector<128x128xf32>
    %c0_1 = arith.constant 0 : index
    %c0_2 = arith.constant 0 : index
    %1 = vector.load %arg11[%c0_1, %c0_2] : memref<1x1xf32, #tpu.memory_space<vmem>>, vector<1x1xf32>
    %2 = vector.extract %1[0, 0] : f32 from vector<1x1xf32>
    %c0_3 = arith.constant 0 : index
    %c0_4 = arith.constant 0 : index
    %c0_5 = arith.constant 0 : index
    %3 = vector.load %arg1[%c0_3, %c0_4, %c0_5] : memref<1x256x128xf32, #tpu.memory_space<vmem>>, vector<1x256x128xf32>
    %4 = vector.shape_cast %3 : vector<1x256x128xf32> to vector<256x128xf32>
    %5 = arith.truncf %4 : vector<256x128xf32> to vector<256x128xbf16>
    %c0_6 = arith.constant 0 : index
    %c0_7 = arith.constant 0 : index
    %6 = vector.load %arg2[%c0_6, %c0_7] : memref<128x32xbf16, #tpu.memory_space<vmem>>, vector<128x32xbf16>
    %cst = arith.constant dense<0.000000e+00> : vector<256x32xf32>
    %7 = tpu.matmul %5, %6, %cst {dimension_numbers = #tpu.dot_dimension_numbers<[1], [0], [0], [1], [0, 0, 1, 1], [], []>} : vector<256x128xbf16>, vector<128x32xbf16>, vector<256x32xf32> -> vector<256x32xf32>
    %c0_8 = arith.constant 0 : index
    %c0_9 = arith.constant 0 : index
    %8 = vector.load %arg5[%c0_8, %c0_9] : memref<1x32xf32, #tpu.memory_space<vmem>>, vector<1x32xf32>
    %c0_10 = arith.constant 0 : index
    %c0_11 = arith.constant 0 : index
    %9 = vector.load %arg6[%c0_10, %c0_11] : memref<1x32xf32, #tpu.memory_space<vmem>>, vector<1x32xf32>
    %cst_12 = arith.constant dense<0.000000e+00> : vector<32xf32>
    %10 = vector.multi_reduction <add>, %7, %cst_12 [0] : vector<256x32xf32> to vector<32xf32>
    %11 = vector.shape_cast %10 : vector<32xf32> to vector<1x32xf32>
    %cst_13 = arith.constant 3.906250e-03 : f32
    %12 = vector.broadcast %cst_13 : f32 to vector<1x32xf32>
    %13 = arith.mulf %11, %12 : vector<1x32xf32>
    %14 = vector.broadcast %13 : vector<1x32xf32> to vector<256x32xf32>
    %15 = arith.subf %7, %14 : vector<256x32xf32>
    %16 = arith.mulf %15, %15 : vector<256x32xf32>
    %cst_14 = arith.constant dense<0.000000e+00> : vector<32xf32>
    %17 = vector.multi_reduction <add>, %16, %cst_14 [0] : vector<256x32xf32> to vector<32xf32>
    %18 = vector.shape_cast %17 : vector<32xf32> to vector<1x32xf32>
    %cst_15 = arith.constant 3.906250e-03 : f32
    %19 = vector.broadcast %cst_15 : f32 to vector<1x32xf32>
    %20 = arith.mulf %18, %19 : vector<1x32xf32>
    %cst_16 = arith.constant 9.99999974E-6 : f32
    %21 = vector.broadcast %cst_16 : f32 to vector<1x32xf32>
    %22 = arith.addf %20, %21 : vector<1x32xf32>
    %23 = math.rsqrt %22 : vector<1x32xf32>
    %24 = vector.broadcast %23 : vector<1x32xf32> to vector<256x32xf32>
    %25 = arith.mulf %15, %24 : vector<256x32xf32>
    %26 = vector.broadcast %8 : vector<1x32xf32> to vector<256x32xf32>
    %27 = arith.mulf %25, %26 : vector<256x32xf32>
    %28 = vector.broadcast %9 : vector<1x32xf32> to vector<256x32xf32>
    %29 = arith.addf %27, %28 : vector<256x32xf32>
    %cst_17 = arith.constant 0.000000e+00 : f32
    %30 = vector.broadcast %cst_17 : f32 to vector<256x32xf32>
    %31 = arith.cmpf ogt, %29, %30 : vector<256x32xf32>
    %32 = vector.broadcast %2 : f32 to vector<256x32xf32>
    %33 = arith.mulf %32, %29 : vector<256x32xf32>
    %34 = arith.select %31, %29, %33 : vector<256x32xi1>, vector<256x32xf32>
    %cst_18 = arith.constant 0.000000e+00 : f32
    %35 = vector.broadcast %cst_18 : f32 to vector<1x10x10x32xf32>
    %c0_19 = arith.constant 0 : index
    %c0_20 = arith.constant 0 : index
    %c0_21 = arith.constant 0 : index
    %c0_22 = arith.constant 0 : index
    %36 = vector.load %arg14[%c0_19, %c0_20, %c0_21, %c0_22] : memref<6x10x10x32xf32, #tpu.memory_space<vmem>>, vector<1x10x10x32xf32>
    tpu.vector_store %arg14[%c0_19, %c0_20, %c0_21, %c0_22], %35 {strides = array<i32>} : memref<6x10x10x32xf32, #tpu.memory_space<vmem>>, vector<1x10x10x32xf32>,
    %cst_23 = arith.constant 0.000000e+00 : f32
    %37 = vector.broadcast %cst_23 : f32 to vector<1x10x10x32xf32>
    %c5 = arith.constant 5 : index
    %c0_24 = arith.constant 0 : index
    %c0_25 = arith.constant 0 : index
    %c0_26 = arith.constant 0 : index
    %38 = vector.load %arg14[%c5, %c0_24, %c0_25, %c0_26] : memref<6x10x10x32xf32, #tpu.memory_space<vmem>>, vector<1x10x10x32xf32>
    tpu.vector_store %arg14[%c5, %c0_24, %c0_25, %c0_26], %37 {strides = array<i32>} : memref<6x10x10x32xf32, #tpu.memory_space<vmem>>, vector<1x10x10x32xf32>,
    %cst_27 = arith.constant 0.000000e+00 : f32
    %39 = vector.broadcast %cst_27 : f32 to vector<6x1x10x32xf32>
    %c0_28 = arith.constant 0 : index
    %c0_29 = arith.constant 0 : index
    %c0_30 = arith.constant 0 : index
    %c0_31 = arith.constant 0 : index
    %40 = vector.load %arg14[%c0_28, %c0_29, %c0_30, %c0_31] : memref<6x10x10x32xf32, #tpu.memory_space<vmem>>, vector<6x1x10x32xf32>
    tpu.vector_store %arg14[%c0_28, %c0_29, %c0_30, %c0_31], %39 {strides = array<i32>} : memref<6x10x10x32xf32, #tpu.memory_space<vmem>>, vector<6x1x10x32xf32>,
    %cst_32 = arith.constant 0.000000e+00 : f32
    %41 = vector.broadcast %cst_32 : f32 to vector<6x1x10x32xf32>
    %c0_33 = arith.constant 0 : index
    %c9 = arith.constant 9 : index
    %c0_34 = arith.constant 0 : index
    %c0_35 = arith.constant 0 : index
    %42 = vector.load %arg14[%c0_33, %c9, %c0_34, %c0_35] : memref<6x10x10x32xf32, #tpu.memory_space<vmem>>, vector<6x1x10x32xf32>
    tpu.vector_store %arg14[%c0_33, %c9, %c0_34, %c0_35], %41 {strides = array<i32>} : memref<6x10x10x32xf32, #tpu.memory_space<vmem>>, vector<6x1x10x32xf32>,
    %cst_36 = arith.constant 0.000000e+00 : f32
    %43 = vector.broadcast %cst_36 : f32 to vector<6x10x1x32xf32>
    %c0_37 = arith.constant 0 : index
    %c0_38 = arith.constant 0 : index
    %c0_39 = arith.constant 0 : index
    %c0_40 = arith.constant 0 : index
    %44 = vector.load %arg14[%c0_37, %c0_38, %c0_39, %c0_40] : memref<6x10x10x32xf32, #tpu.memory_space<vmem>>, vector<6x10x1x32xf32>
    tpu.vector_store %arg14[%c0_37, %c0_38, %c0_39, %c0_40], %43 {strides = array<i32>} : memref<6x10x10x32xf32, #tpu.memory_space<vmem>>, vector<6x10x1x32xf32>,
    %cst_41 = arith.constant 0.000000e+00 : f32
    %45 = vector.broadcast %cst_41 : f32 to vector<6x10x1x32xf32>
    %c0_42 = arith.constant 0 : index
    %c0_43 = arith.constant 0 : index
    %c9_44 = arith.constant 9 : index
    %c0_45 = arith.constant 0 : index
    %46 = vector.load %arg14[%c0_42, %c0_43, %c9_44, %c0_45] : memref<6x10x10x32xf32, #tpu.memory_space<vmem>>, vector<6x10x1x32xf32>
    tpu.vector_store %arg14[%c0_42, %c0_43, %c9_44, %c0_45], %45 {strides = array<i32>} : memref<6x10x10x32xf32, #tpu.memory_space<vmem>>, vector<6x10x1x32xf32>,
    %47 = vector.shape_cast %34 : vector<256x32xf32> to vector<4x8x8x32xf32>
    %c1 = arith.constant 1 : index
    %c1_46 = arith.constant 1 : index
    %c1_47 = arith.constant 1 : index
    %c0_48 = arith.constant 0 : index
    %48 = vector.load %arg14[%c1, %c1_46, %c1_47, %c0_48] : memref<6x10x10x32xf32, #tpu.memory_space<vmem>>, vector<4x8x8x32xf32>
    tpu.vector_store %arg14[%c1, %c1_46, %c1_47, %c0_48], %47 {strides = array<i32>} : memref<6x10x10x32xf32, #tpu.memory_space<vmem>>, vector<4x8x8x32xf32>,
    %cst_49 = arith.constant 0.000000e+00 : f32
    %49 = vector.broadcast %cst_49 : f32 to vector<256x32xf32>
    %c0_50 = arith.constant 0 : index
    %c0_51 = arith.constant 0 : index
    %c0_52 = arith.constant 0 : index
    %c0_53 = arith.constant 0 : index
    %50 = vector.load %arg14[%c0_50, %c0_51, %c0_52, %c0_53] : memref<6x10x10x32xf32, #tpu.memory_space<vmem>>, vector<4x8x8x32xf32>
    %51 = vector.shape_cast %50 : vector<4x8x8x32xf32> to vector<256x32xf32>
    %52 = arith.truncf %51 : vector<256x32xf32> to vector<256x32xbf16>
    %c0_54 = arith.constant 0 : index
    %c0_55 = arith.constant 0 : index
    %c0_56 = arith.constant 0 : index
    %53 = vector.load %arg3[%c0_54, %c0_55, %c0_56] : memref<27x32x32xbf16, #tpu.memory_space<vmem>>, vector<1x32x32xbf16>
    %54 = vector.shape_cast %53 : vector<1x32x32xbf16> to vector<32x32xbf16>
    %cst_57 = arith.constant dense<0.000000e+00> : vector<256x32xf32>
    %55 = tpu.matmul %52, %54, %cst_57 {dimension_numbers = #tpu.dot_dimension_numbers<[1], [0], [0], [1], [0, 0, 1, 1], [], []>} : vector<256x32xbf16>, vector<32x32xbf16>, vector<256x32xf32> -> vector<256x32xf32>
    %56 = arith.addf %49, %55 : vector<256x32xf32>
    %c0_58 = arith.constant 0 : index
    %c0_59 = arith.constant 0 : index
    %c1_60 = arith.constant 1 : index
    %c0_61 = arith.constant 0 : index
    %57 = vector.load %arg14[%c0_58, %c0_59, %c1_60, %c0_61] : memref<6x10x10x32xf32, #tpu.memory_space<vmem>>, vector<4x8x8x32xf32>
    %58 = vector.shape_cast %57 : vector<4x8x8x32xf32> to vector<256x32xf32>
    %59 = arith.truncf %58 : vector<256x32xf32> to vector<256x32xbf16>
    %c1_62 = arith.constant 1 : index
    %c0_63 = arith.constant 0 : index
    %c0_64 = arith.constant 0 : index
    %60 = vector.load %arg3[%c1_62, %c0_63, %c0_64] : memref<27x32x32xbf16, #tpu.memory_space<vmem>>, vector<1x32x32xbf16>
    %61 = vector.shape_cast %60 : vector<1x32x32xbf16> to vector<32x32xbf16>
    %cst_65 = arith.constant dense<0.000000e+00> : vector<256x32xf32>
    %62 = tpu.matmul %59, %61, %cst_65 {dimension_numbers = #tpu.dot_dimension_numbers<[1], [0], [0], [1], [0, 0, 1, 1], [], []>} : vector<256x32xbf16>, vector<32x32xbf16>, vector<256x32xf32> -> vector<256x32xf32>
    %63 = arith.addf %56, %62 : vector<256x32xf32>
    %c0_66 = arith.constant 0 : index
    %c0_67 = arith.constant 0 : index
    %c2 = arith.constant 2 : index
    %c0_68 = arith.constant 0 : index
    %64 = vector.load %arg14[%c0_66, %c0_67, %c2, %c0_68] : memref<6x10x10x32xf32, #tpu.memory_space<vmem>>, vector<4x8x8x32xf32>
    %65 = vector.shape_cast %64 : vector<4x8x8x32xf32> to vector<256x32xf32>
    %66 = arith.truncf %65 : vector<256x32xf32> to vector<256x32xbf16>
    %c2_69 = arith.constant 2 : index
    %c0_70 = arith.constant 0 : index
    %c0_71 = arith.constant 0 : index
    %67 = vector.load %arg3[%c2_69, %c0_70, %c0_71] : memref<27x32x32xbf16, #tpu.memory_space<vmem>>, vector<1x32x32xbf16>
    %68 = vector.shape_cast %67 : vector<1x32x32xbf16> to vector<32x32xbf16>
    %cst_72 = arith.constant dense<0.000000e+00> : vector<256x32xf32>
    %69 = tpu.matmul %66, %68, %cst_72 {dimension_numbers = #tpu.dot_dimension_numbers<[1], [0], [0], [1], [0, 0, 1, 1], [], []>} : vector<256x32xbf16>, vector<32x32xbf16>, vector<256x32xf32> -> vector<256x32xf32>
    %70 = arith.addf %63, %69 : vector<256x32xf32>
    %c0_73 = arith.constant 0 : index
    %c1_74 = arith.constant 1 : index
    %c0_75 = arith.constant 0 : index
    %c0_76 = arith.constant 0 : index
    %71 = vector.load %arg14[%c0_73, %c1_74, %c0_75, %c0_76] : memref<6x10x10x32xf32, #tpu.memory_space<vmem>>, vector<4x8x8x32xf32>
    %72 = vector.shape_cast %71 : vector<4x8x8x32xf32> to vector<256x32xf32>
    %73 = arith.truncf %72 : vector<256x32xf32> to vector<256x32xbf16>
    %c3 = arith.constant 3 : index
    %c0_77 = arith.constant 0 : index
    %c0_78 = arith.constant 0 : index
    %74 = vector.load %arg3[%c3, %c0_77, %c0_78] : memref<27x32x32xbf16, #tpu.memory_space<vmem>>, vector<1x32x32xbf16>
    %75 = vector.shape_cast %74 : vector<1x32x32xbf16> to vector<32x32xbf16>
    %cst_79 = arith.constant dense<0.000000e+00> : vector<256x32xf32>
    %76 = tpu.matmul %73, %75, %cst_79 {dimension_numbers = #tpu.dot_dimension_numbers<[1], [0], [0], [1], [0, 0, 1, 1], [], []>} : vector<256x32xbf16>, vector<32x32xbf16>, vector<256x32xf32> -> vector<256x32xf32>
    %77 = arith.addf %70, %76 : vector<256x32xf32>
    %c0_80 = arith.constant 0 : index
    %c1_81 = arith.constant 1 : index
    %c1_82 = arith.constant 1 : index
    %c0_83 = arith.constant 0 : index
    %78 = vector.load %arg14[%c0_80, %c1_81, %c1_82, %c0_83] : memref<6x10x10x32xf32, #tpu.memory_space<vmem>>, vector<4x8x8x32xf32>
    %79 = vector.shape_cast %78 : vector<4x8x8x32xf32> to vector<256x32xf32>
    %80 = arith.truncf %79 : vector<256x32xf32> to vector<256x32xbf16>
    %c4 = arith.constant 4 : index
    %c0_84 = arith.constant 0 : index
    %c0_85 = arith.constant 0 : index
    %81 = vector.load %arg3[%c4, %c0_84, %c0_85] : memref<27x32x32xbf16, #tpu.memory_space<vmem>>, vector<1x32x32xbf16>
    %82 = vector.shape_cast %81 : vector<1x32x32xbf16> to vector<32x32xbf16>
    %cst_86 = arith.constant dense<0.000000e+00> : vector<256x32xf32>
    %83 = tpu.matmul %80, %82, %cst_86 {dimension_numbers = #tpu.dot_dimension_numbers<[1], [0], [0], [1], [0, 0, 1, 1], [], []>} : vector<256x32xbf16>, vector<32x32xbf16>, vector<256x32xf32> -> vector<256x32xf32>
    %84 = arith.addf %77, %83 : vector<256x32xf32>
    %c0_87 = arith.constant 0 : index
    %c1_88 = arith.constant 1 : index
    %c2_89 = arith.constant 2 : index
    %c0_90 = arith.constant 0 : index
    %85 = vector.load %arg14[%c0_87, %c1_88, %c2_89, %c0_90] : memref<6x10x10x32xf32, #tpu.memory_space<vmem>>, vector<4x8x8x32xf32>
    %86 = vector.shape_cast %85 : vector<4x8x8x32xf32> to vector<256x32xf32>
    %87 = arith.truncf %86 : vector<256x32xf32> to vector<256x32xbf16>
    %c5_91 = arith.constant 5 : index
    %c0_92 = arith.constant 0 : index
    %c0_93 = arith.constant 0 : index
    %88 = vector.load %arg3[%c5_91, %c0_92, %c0_93] : memref<27x32x32xbf16, #tpu.memory_space<vmem>>, vector<1x32x32xbf16>
    %89 = vector.shape_cast %88 : vector<1x32x32xbf16> to vector<32x32xbf16>
    %cst_94 = arith.constant dense<0.000000e+00> : vector<256x32xf32>
    %90 = tpu.matmul %87, %89, %cst_94 {dimension_numbers = #tpu.dot_dimension_numbers<[1], [0], [0], [1], [0, 0, 1, 1], [], []>} : vector<256x32xbf16>, vector<32x32xbf16>, vector<256x32xf32> -> vector<256x32xf32>
    %91 = arith.addf %84, %90 : vector<256x32xf32>
    %c0_95 = arith.constant 0 : index
    %c2_96 = arith.constant 2 : index
    %c0_97 = arith.constant 0 : index
    %c0_98 = arith.constant 0 : index
    %92 = vector.load %arg14[%c0_95, %c2_96, %c0_97, %c0_98] : memref<6x10x10x32xf32, #tpu.memory_space<vmem>>, vector<4x8x8x32xf32>
    %93 = vector.shape_cast %92 : vector<4x8x8x32xf32> to vector<256x32xf32>
    %94 = arith.truncf %93 : vector<256x32xf32> to vector<256x32xbf16>
    %c6 = arith.constant 6 : index
    %c0_99 = arith.constant 0 : index
    %c0_100 = arith.constant 0 : index
    %95 = vector.load %arg3[%c6, %c0_99, %c0_100] : memref<27x32x32xbf16, #tpu.memory_space<vmem>>, vector<1x32x32xbf16>
    %96 = vector.shape_cast %95 : vector<1x32x32xbf16> to vector<32x32xbf16>
    %cst_101 = arith.constant dense<0.000000e+00> : vector<256x32xf32>
    %97 = tpu.matmul %94, %96, %cst_101 {dimension_numbers = #tpu.dot_dimension_numbers<[1], [0], [0], [1], [0, 0, 1, 1], [], []>} : vector<256x32xbf16>, vector<32x32xbf16>, vector<256x32xf32> -> vector<256x32xf32>
    %98 = arith.addf %91, %97 : vector<256x32xf32>
    %c0_102 = arith.constant 0 : index
    %c2_103 = arith.constant 2 : index
    %c1_104 = arith.constant 1 : index
    %c0_105 = arith.constant 0 : index
    %99 = vector.load %arg14[%c0_102, %c2_103, %c1_104, %c0_105] : memref<6x10x10x32xf32, #tpu.memory_space<vmem>>, vector<4x8x8x32xf32>
    %100 = vector.shape_cast %99 : vector<4x8x8x32xf32> to vector<256x32xf32>
    %101 = arith.truncf %100 : vector<256x32xf32> to vector<256x32xbf16>
    %c7 = arith.constant 7 : index
    %c0_106 = arith.constant 0 : index
    %c0_107 = arith.constant 0 : index
    %102 = vector.load %arg3[%c7, %c0_106, %c0_107] : memref<27x32x32xbf16, #tpu.memory_space<vmem>>, vector<1x32x32xbf16>
    %103 = vector.shape_cast %102 : vector<1x32x32xbf16> to vector<32x32xbf16>
    %cst_108 = arith.constant dense<0.000000e+00> : vector<256x32xf32>
    %104 = tpu.matmul %101, %103, %cst_108 {dimension_numbers = #tpu.dot_dimension_numbers<[1], [0], [0], [1], [0, 0, 1, 1], [], []>} : vector<256x32xbf16>, vector<32x32xbf16>, vector<256x32xf32> -> vector<256x32xf32>
    %105 = arith.addf %98, %104 : vector<256x32xf32>
    %c0_109 = arith.constant 0 : index
    %c2_110 = arith.constant 2 : index
    %c2_111 = arith.constant 2 : index
    %c0_112 = arith.constant 0 : index
    %106 = vector.load %arg14[%c0_109, %c2_110, %c2_111, %c0_112] : memref<6x10x10x32xf32, #tpu.memory_space<vmem>>, vector<4x8x8x32xf32>
    %107 = vector.shape_cast %106 : vector<4x8x8x32xf32> to vector<256x32xf32>
    %108 = arith.truncf %107 : vector<256x32xf32> to vector<256x32xbf16>
    %c8 = arith.constant 8 : index
    %c0_113 = arith.constant 0 : index
    %c0_114 = arith.constant 0 : index
    %109 = vector.load %arg3[%c8, %c0_113, %c0_114] : memref<27x32x32xbf16, #tpu.memory_space<vmem>>, vector<1x32x32xbf16>
    %110 = vector.shape_cast %109 : vector<1x32x32xbf16> to vector<32x32xbf16>
    %cst_115 = arith.constant dense<0.000000e+00> : vector<256x32xf32>
    %111 = tpu.matmul %108, %110, %cst_115 {dimension_numbers = #tpu.dot_dimension_numbers<[1], [0], [0], [1], [0, 0, 1, 1], [], []>} : vector<256x32xbf16>, vector<32x32xbf16>, vector<256x32xf32> -> vector<256x32xf32>
    %112 = arith.addf %105, %111 : vector<256x32xf32>
    %c1_116 = arith.constant 1 : index
    %c0_117 = arith.constant 0 : index
    %c0_118 = arith.constant 0 : index
    %c0_119 = arith.constant 0 : index
    %113 = vector.load %arg14[%c1_116, %c0_117, %c0_118, %c0_119] : memref<6x10x10x32xf32, #tpu.memory_space<vmem>>, vector<4x8x8x32xf32>
    %114 = vector.shape_cast %113 : vector<4x8x8x32xf32> to vector<256x32xf32>
    %115 = arith.truncf %114 : vector<256x32xf32> to vector<256x32xbf16>
    %c9_120 = arith.constant 9 : index
    %c0_121 = arith.constant 0 : index
    %c0_122 = arith.constant 0 : index
    %116 = vector.load %arg3[%c9_120, %c0_121, %c0_122] : memref<27x32x32xbf16, #tpu.memory_space<vmem>>, vector<1x32x32xbf16>
    %117 = vector.shape_cast %116 : vector<1x32x32xbf16> to vector<32x32xbf16>
    %cst_123 = arith.constant dense<0.000000e+00> : vector<256x32xf32>
    %118 = tpu.matmul %115, %117, %cst_123 {dimension_numbers = #tpu.dot_dimension_numbers<[1], [0], [0], [1], [0, 0, 1, 1], [], []>} : vector<256x32xbf16>, vector<32x32xbf16>, vector<256x32xf32> -> vector<256x32xf32>
    %119 = arith.addf %112, %118 : vector<256x32xf32>
    %c1_124 = arith.constant 1 : index
    %c0_125 = arith.constant 0 : index
    %c1_126 = arith.constant 1 : index
    %c0_127 = arith.constant 0 : index
    %120 = vector.load %arg14[%c1_124, %c0_125, %c1_126, %c0_127] : memref<6x10x10x32xf32, #tpu.memory_space<vmem>>, vector<4x8x8x32xf32>
    %121 = vector.shape_cast %120 : vector<4x8x8x32xf32> to vector<256x32xf32>
    %122 = arith.truncf %121 : vector<256x32xf32> to vector<256x32xbf16>
    %c10 = arith.constant 10 : index
    %c0_128 = arith.constant 0 : index
    %c0_129 = arith.constant 0 : index
    %123 = vector.load %arg3[%c10, %c0_128, %c0_129] : memref<27x32x32xbf16, #tpu.memory_space<vmem>>, vector<1x32x32xbf16>
    %124 = vector.shape_cast %123 : vector<1x32x32xbf16> to vector<32x32xbf16>
    %cst_130 = arith.constant dense<0.000000e+00> : vector<256x32xf32>
    %125 = tpu.matmul %122, %124, %cst_130 {dimension_numbers = #tpu.dot_dimension_numbers<[1], [0], [0], [1], [0, 0, 1, 1], [], []>} : vector<256x32xbf16>, vector<32x32xbf16>, vector<256x32xf32> -> vector<256x32xf32>
    %126 = arith.addf %119, %125 : vector<256x32xf32>
    %c1_131 = arith.constant 1 : index
    %c0_132 = arith.constant 0 : index
    %c2_133 = arith.constant 2 : index
    %c0_134 = arith.constant 0 : index
    %127 = vector.load %arg14[%c1_131, %c0_132, %c2_133, %c0_134] : memref<6x10x10x32xf32, #tpu.memory_space<vmem>>, vector<4x8x8x32xf32>
    %128 = vector.shape_cast %127 : vector<4x8x8x32xf32> to vector<256x32xf32>
    %129 = arith.truncf %128 : vector<256x32xf32> to vector<256x32xbf16>
    %c11 = arith.constant 11 : index
    %c0_135 = arith.constant 0 : index
    %c0_136 = arith.constant 0 : index
    %130 = vector.load %arg3[%c11, %c0_135, %c0_136] : memref<27x32x32xbf16, #tpu.memory_space<vmem>>, vector<1x32x32xbf16>
    %131 = vector.shape_cast %130 : vector<1x32x32xbf16> to vector<32x32xbf16>
    %cst_137 = arith.constant dense<0.000000e+00> : vector<256x32xf32>
    %132 = tpu.matmul %129, %131, %cst_137 {dimension_numbers = #tpu.dot_dimension_numbers<[1], [0], [0], [1], [0, 0, 1, 1], [], []>} : vector<256x32xbf16>, vector<32x32xbf16>, vector<256x32xf32> -> vector<256x32xf32>
    %133 = arith.addf %126, %132 : vector<256x32xf32>
    %c1_138 = arith.constant 1 : index
    %c1_139 = arith.constant 1 : index
    %c0_140 = arith.constant 0 : index
    %c0_141 = arith.constant 0 : index
    %134 = vector.load %arg14[%c1_138, %c1_139, %c0_140, %c0_141] : memref<6x10x10x32xf32, #tpu.memory_space<vmem>>, vector<4x8x8x32xf32>
    %135 = vector.shape_cast %134 : vector<4x8x8x32xf32> to vector<256x32xf32>
    %136 = arith.truncf %135 : vector<256x32xf32> to vector<256x32xbf16>
    %c12 = arith.constant 12 : index
    %c0_142 = arith.constant 0 : index
    %c0_143 = arith.constant 0 : index
    %137 = vector.load %arg3[%c12, %c0_142, %c0_143] : memref<27x32x32xbf16, #tpu.memory_space<vmem>>, vector<1x32x32xbf16>
    %138 = vector.shape_cast %137 : vector<1x32x32xbf16> to vector<32x32xbf16>
    %cst_144 = arith.constant dense<0.000000e+00> : vector<256x32xf32>
    %139 = tpu.matmul %136, %138, %cst_144 {dimension_numbers = #tpu.dot_dimension_numbers<[1], [0], [0], [1], [0, 0, 1, 1], [], []>} : vector<256x32xbf16>, vector<32x32xbf16>, vector<256x32xf32> -> vector<256x32xf32>
    %140 = arith.addf %133, %139 : vector<256x32xf32>
    %c1_145 = arith.constant 1 : index
    %c1_146 = arith.constant 1 : index
    %c1_147 = arith.constant 1 : index
    %c0_148 = arith.constant 0 : index
    %141 = vector.load %arg14[%c1_145, %c1_146, %c1_147, %c0_148] : memref<6x10x10x32xf32, #tpu.memory_space<vmem>>, vector<4x8x8x32xf32>
    %142 = vector.shape_cast %141 : vector<4x8x8x32xf32> to vector<256x32xf32>
    %143 = arith.truncf %142 : vector<256x32xf32> to vector<256x32xbf16>
    %c13 = arith.constant 13 : index
    %c0_149 = arith.constant 0 : index
    %c0_150 = arith.constant 0 : index
    %144 = vector.load %arg3[%c13, %c0_149, %c0_150] : memref<27x32x32xbf16, #tpu.memory_space<vmem>>, vector<1x32x32xbf16>
    %145 = vector.shape_cast %144 : vector<1x32x32xbf16> to vector<32x32xbf16>
    %cst_151 = arith.constant dense<0.000000e+00> : vector<256x32xf32>
    %146 = tpu.matmul %143, %145, %cst_151 {dimension_numbers = #tpu.dot_dimension_numbers<[1], [0], [0], [1], [0, 0, 1, 1], [], []>} : vector<256x32xbf16>, vector<32x32xbf16>, vector<256x32xf32> -> vector<256x32xf32>
    %147 = arith.addf %140, %146 : vector<256x32xf32>
    %c1_152 = arith.constant 1 : index
    %c1_153 = arith.constant 1 : index
    %c2_154 = arith.constant 2 : index
    %c0_155 = arith.constant 0 : index
    %148 = vector.load %arg14[%c1_152, %c1_153, %c2_154, %c0_155] : memref<6x10x10x32xf32, #tpu.memory_space<vmem>>, vector<4x8x8x32xf32>
    %149 = vector.shape_cast %148 : vector<4x8x8x32xf32> to vector<256x32xf32>
    %150 = arith.truncf %149 : vector<256x32xf32> to vector<256x32xbf16>
    %c14 = arith.constant 14 : index
    %c0_156 = arith.constant 0 : index
    %c0_157 = arith.constant 0 : index
    %151 = vector.load %arg3[%c14, %c0_156, %c0_157] : memref<27x32x32xbf16, #tpu.memory_space<vmem>>, vector<1x32x32xbf16>
    %152 = vector.shape_cast %151 : vector<1x32x32xbf16> to vector<32x32xbf16>
    %cst_158 = arith.constant dense<0.000000e+00> : vector<256x32xf32>
    %153 = tpu.matmul %150, %152, %cst_158 {dimension_numbers = #tpu.dot_dimension_numbers<[1], [0], [0], [1], [0, 0, 1, 1], [], []>} : vector<256x32xbf16>, vector<32x32xbf16>, vector<256x32xf32> -> vector<256x32xf32>
    %154 = arith.addf %147, %153 : vector<256x32xf32>
    %c1_159 = arith.constant 1 : index
    %c2_160 = arith.constant 2 : index
    %c0_161 = arith.constant 0 : index
    %c0_162 = arith.constant 0 : index
    %155 = vector.load %arg14[%c1_159, %c2_160, %c0_161, %c0_162] : memref<6x10x10x32xf32, #tpu.memory_space<vmem>>, vector<4x8x8x32xf32>
    %156 = vector.shape_cast %155 : vector<4x8x8x32xf32> to vector<256x32xf32>
    %157 = arith.truncf %156 : vector<256x32xf32> to vector<256x32xbf16>
    %c15 = arith.constant 15 : index
    %c0_163 = arith.constant 0 : index
    %c0_164 = arith.constant 0 : index
    %158 = vector.load %arg3[%c15, %c0_163, %c0_164] : memref<27x32x32xbf16, #tpu.memory_space<vmem>>, vector<1x32x32xbf16>
    %159 = vector.shape_cast %158 : vector<1x32x32xbf16> to vector<32x32xbf16>
    %cst_165 = arith.constant dense<0.000000e+00> : vector<256x32xf32>
    %160 = tpu.matmul %157, %159, %cst_165 {dimension_numbers = #tpu.dot_dimension_numbers<[1], [0], [0], [1], [0, 0, 1, 1], [], []>} : vector<256x32xbf16>, vector<32x32xbf16>, vector<256x32xf32> -> vector<256x32xf32>
    %161 = arith.addf %154, %160 : vector<256x32xf32>
    %c1_166 = arith.constant 1 : index
    %c2_167 = arith.constant 2 : index
    %c1_168 = arith.constant 1 : index
    %c0_169 = arith.constant 0 : index
    %162 = vector.load %arg14[%c1_166, %c2_167, %c1_168, %c0_169] : memref<6x10x10x32xf32, #tpu.memory_space<vmem>>, vector<4x8x8x32xf32>
    %163 = vector.shape_cast %162 : vector<4x8x8x32xf32> to vector<256x32xf32>
    %164 = arith.truncf %163 : vector<256x32xf32> to vector<256x32xbf16>
    %c16 = arith.constant 16 : index
    %c0_170 = arith.constant 0 : index
    %c0_171 = arith.constant 0 : index
    %165 = vector.load %arg3[%c16, %c0_170, %c0_171] : memref<27x32x32xbf16, #tpu.memory_space<vmem>>, vector<1x32x32xbf16>
    %166 = vector.shape_cast %165 : vector<1x32x32xbf16> to vector<32x32xbf16>
    %cst_172 = arith.constant dense<0.000000e+00> : vector<256x32xf32>
    %167 = tpu.matmul %164, %166, %cst_172 {dimension_numbers = #tpu.dot_dimension_numbers<[1], [0], [0], [1], [0, 0, 1, 1], [], []>} : vector<256x32xbf16>, vector<32x32xbf16>, vector<256x32xf32> -> vector<256x32xf32>
    %168 = arith.addf %161, %167 : vector<256x32xf32>
    %c1_173 = arith.constant 1 : index
    %c2_174 = arith.constant 2 : index
    %c2_175 = arith.constant 2 : index
    %c0_176 = arith.constant 0 : index
    %169 = vector.load %arg14[%c1_173, %c2_174, %c2_175, %c0_176] : memref<6x10x10x32xf32, #tpu.memory_space<vmem>>, vector<4x8x8x32xf32>
    %170 = vector.shape_cast %169 : vector<4x8x8x32xf32> to vector<256x32xf32>
    %171 = arith.truncf %170 : vector<256x32xf32> to vector<256x32xbf16>
    %c17 = arith.constant 17 : index
    %c0_177 = arith.constant 0 : index
    %c0_178 = arith.constant 0 : index
    %172 = vector.load %arg3[%c17, %c0_177, %c0_178] : memref<27x32x32xbf16, #tpu.memory_space<vmem>>, vector<1x32x32xbf16>
    %173 = vector.shape_cast %172 : vector<1x32x32xbf16> to vector<32x32xbf16>
    %cst_179 = arith.constant dense<0.000000e+00> : vector<256x32xf32>
    %174 = tpu.matmul %171, %173, %cst_179 {dimension_numbers = #tpu.dot_dimension_numbers<[1], [0], [0], [1], [0, 0, 1, 1], [], []>} : vector<256x32xbf16>, vector<32x32xbf16>, vector<256x32xf32> -> vector<256x32xf32>
    %175 = arith.addf %168, %174 : vector<256x32xf32>
    %c2_180 = arith.constant 2 : index
    %c0_181 = arith.constant 0 : index
    %c0_182 = arith.constant 0 : index
    %c0_183 = arith.constant 0 : index
    %176 = vector.load %arg14[%c2_180, %c0_181, %c0_182, %c0_183] : memref<6x10x10x32xf32, #tpu.memory_space<vmem>>, vector<4x8x8x32xf32>
    %177 = vector.shape_cast %176 : vector<4x8x8x32xf32> to vector<256x32xf32>
    %178 = arith.truncf %177 : vector<256x32xf32> to vector<256x32xbf16>
    %c18 = arith.constant 18 : index
    %c0_184 = arith.constant 0 : index
    %c0_185 = arith.constant 0 : index
    %179 = vector.load %arg3[%c18, %c0_184, %c0_185] : memref<27x32x32xbf16, #tpu.memory_space<vmem>>, vector<1x32x32xbf16>
    %180 = vector.shape_cast %179 : vector<1x32x32xbf16> to vector<32x32xbf16>
    %cst_186 = arith.constant dense<0.000000e+00> : vector<256x32xf32>
    %181 = tpu.matmul %178, %180, %cst_186 {dimension_numbers = #tpu.dot_dimension_numbers<[1], [0], [0], [1], [0, 0, 1, 1], [], []>} : vector<256x32xbf16>, vector<32x32xbf16>, vector<256x32xf32> -> vector<256x32xf32>
    %182 = arith.addf %175, %181 : vector<256x32xf32>
    %c2_187 = arith.constant 2 : index
    %c0_188 = arith.constant 0 : index
    %c1_189 = arith.constant 1 : index
    %c0_190 = arith.constant 0 : index
    %183 = vector.load %arg14[%c2_187, %c0_188, %c1_189, %c0_190] : memref<6x10x10x32xf32, #tpu.memory_space<vmem>>, vector<4x8x8x32xf32>
    %184 = vector.shape_cast %183 : vector<4x8x8x32xf32> to vector<256x32xf32>
    %185 = arith.truncf %184 : vector<256x32xf32> to vector<256x32xbf16>
    %c19 = arith.constant 19 : index
    %c0_191 = arith.constant 0 : index
    %c0_192 = arith.constant 0 : index
    %186 = vector.load %arg3[%c19, %c0_191, %c0_192] : memref<27x32x32xbf16, #tpu.memory_space<vmem>>, vector<1x32x32xbf16>
    %187 = vector.shape_cast %186 : vector<1x32x32xbf16> to vector<32x32xbf16>
    %cst_193 = arith.constant dense<0.000000e+00> : vector<256x32xf32>
    %188 = tpu.matmul %185, %187, %cst_193 {dimension_numbers = #tpu.dot_dimension_numbers<[1], [0], [0], [1], [0, 0, 1, 1], [], []>} : vector<256x32xbf16>, vector<32x32xbf16>, vector<256x32xf32> -> vector<256x32xf32>
    %189 = arith.addf %182, %188 : vector<256x32xf32>
    %c2_194 = arith.constant 2 : index
    %c0_195 = arith.constant 0 : index
    %c2_196 = arith.constant 2 : index
    %c0_197 = arith.constant 0 : index
    %190 = vector.load %arg14[%c2_194, %c0_195, %c2_196, %c0_197] : memref<6x10x10x32xf32, #tpu.memory_space<vmem>>, vector<4x8x8x32xf32>
    %191 = vector.shape_cast %190 : vector<4x8x8x32xf32> to vector<256x32xf32>
    %192 = arith.truncf %191 : vector<256x32xf32> to vector<256x32xbf16>
    %c20 = arith.constant 20 : index
    %c0_198 = arith.constant 0 : index
    %c0_199 = arith.constant 0 : index
    %193 = vector.load %arg3[%c20, %c0_198, %c0_199] : memref<27x32x32xbf16, #tpu.memory_space<vmem>>, vector<1x32x32xbf16>
    %194 = vector.shape_cast %193 : vector<1x32x32xbf16> to vector<32x32xbf16>
    %cst_200 = arith.constant dense<0.000000e+00> : vector<256x32xf32>
    %195 = tpu.matmul %192, %194, %cst_200 {dimension_numbers = #tpu.dot_dimension_numbers<[1], [0], [0], [1], [0, 0, 1, 1], [], []>} : vector<256x32xbf16>, vector<32x32xbf16>, vector<256x32xf32> -> vector<256x32xf32>
    %196 = arith.addf %189, %195 : vector<256x32xf32>
    %c2_201 = arith.constant 2 : index
    %c1_202 = arith.constant 1 : index
    %c0_203 = arith.constant 0 : index
    %c0_204 = arith.constant 0 : index
    %197 = vector.load %arg14[%c2_201, %c1_202, %c0_203, %c0_204] : memref<6x10x10x32xf32, #tpu.memory_space<vmem>>, vector<4x8x8x32xf32>
    %198 = vector.shape_cast %197 : vector<4x8x8x32xf32> to vector<256x32xf32>
    %199 = arith.truncf %198 : vector<256x32xf32> to vector<256x32xbf16>
    %c21 = arith.constant 21 : index
    %c0_205 = arith.constant 0 : index
    %c0_206 = arith.constant 0 : index
    %200 = vector.load %arg3[%c21, %c0_205, %c0_206] : memref<27x32x32xbf16, #tpu.memory_space<vmem>>, vector<1x32x32xbf16>
    %201 = vector.shape_cast %200 : vector<1x32x32xbf16> to vector<32x32xbf16>
    %cst_207 = arith.constant dense<0.000000e+00> : vector<256x32xf32>
    %202 = tpu.matmul %199, %201, %cst_207 {dimension_numbers = #tpu.dot_dimension_numbers<[1], [0], [0], [1], [0, 0, 1, 1], [], []>} : vector<256x32xbf16>, vector<32x32xbf16>, vector<256x32xf32> -> vector<256x32xf32>
    %203 = arith.addf %196, %202 : vector<256x32xf32>
    %c2_208 = arith.constant 2 : index
    %c1_209 = arith.constant 1 : index
    %c1_210 = arith.constant 1 : index
    %c0_211 = arith.constant 0 : index
    %204 = vector.load %arg14[%c2_208, %c1_209, %c1_210, %c0_211] : memref<6x10x10x32xf32, #tpu.memory_space<vmem>>, vector<4x8x8x32xf32>
    %205 = vector.shape_cast %204 : vector<4x8x8x32xf32> to vector<256x32xf32>
    %206 = arith.truncf %205 : vector<256x32xf32> to vector<256x32xbf16>
    %c22 = arith.constant 22 : index
    %c0_212 = arith.constant 0 : index
    %c0_213 = arith.constant 0 : index
    %207 = vector.load %arg3[%c22, %c0_212, %c0_213] : memref<27x32x32xbf16, #tpu.memory_space<vmem>>, vector<1x32x32xbf16>
    %208 = vector.shape_cast %207 : vector<1x32x32xbf16> to vector<32x32xbf16>
    %cst_214 = arith.constant dense<0.000000e+00> : vector<256x32xf32>
    %209 = tpu.matmul %206, %208, %cst_214 {dimension_numbers = #tpu.dot_dimension_numbers<[1], [0], [0], [1], [0, 0, 1, 1], [], []>} : vector<256x32xbf16>, vector<32x32xbf16>, vector<256x32xf32> -> vector<256x32xf32>
    %210 = arith.addf %203, %209 : vector<256x32xf32>
    %c2_215 = arith.constant 2 : index
    %c1_216 = arith.constant 1 : index
    %c2_217 = arith.constant 2 : index
    %c0_218 = arith.constant 0 : index
    %211 = vector.load %arg14[%c2_215, %c1_216, %c2_217, %c0_218] : memref<6x10x10x32xf32, #tpu.memory_space<vmem>>, vector<4x8x8x32xf32>
    %212 = vector.shape_cast %211 : vector<4x8x8x32xf32> to vector<256x32xf32>
    %213 = arith.truncf %212 : vector<256x32xf32> to vector<256x32xbf16>
    %c23 = arith.constant 23 : index
    %c0_219 = arith.constant 0 : index
    %c0_220 = arith.constant 0 : index
    %214 = vector.load %arg3[%c23, %c0_219, %c0_220] : memref<27x32x32xbf16, #tpu.memory_space<vmem>>, vector<1x32x32xbf16>
    %215 = vector.shape_cast %214 : vector<1x32x32xbf16> to vector<32x32xbf16>
    %cst_221 = arith.constant dense<0.000000e+00> : vector<256x32xf32>
    %216 = tpu.matmul %213, %215, %cst_221 {dimension_numbers = #tpu.dot_dimension_numbers<[1], [0], [0], [1], [0, 0, 1, 1], [], []>} : vector<256x32xbf16>, vector<32x32xbf16>, vector<256x32xf32> -> vector<256x32xf32>
    %217 = arith.addf %210, %216 : vector<256x32xf32>
    %c2_222 = arith.constant 2 : index
    %c2_223 = arith.constant 2 : index
    %c0_224 = arith.constant 0 : index
    %c0_225 = arith.constant 0 : index
    %218 = vector.load %arg14[%c2_222, %c2_223, %c0_224, %c0_225] : memref<6x10x10x32xf32, #tpu.memory_space<vmem>>, vector<4x8x8x32xf32>
    %219 = vector.shape_cast %218 : vector<4x8x8x32xf32> to vector<256x32xf32>
    %220 = arith.truncf %219 : vector<256x32xf32> to vector<256x32xbf16>
    %c24 = arith.constant 24 : index
    %c0_226 = arith.constant 0 : index
    %c0_227 = arith.constant 0 : index
    %221 = vector.load %arg3[%c24, %c0_226, %c0_227] : memref<27x32x32xbf16, #tpu.memory_space<vmem>>, vector<1x32x32xbf16>
    %222 = vector.shape_cast %221 : vector<1x32x32xbf16> to vector<32x32xbf16>
    %cst_228 = arith.constant dense<0.000000e+00> : vector<256x32xf32>
    %223 = tpu.matmul %220, %222, %cst_228 {dimension_numbers = #tpu.dot_dimension_numbers<[1], [0], [0], [1], [0, 0, 1, 1], [], []>} : vector<256x32xbf16>, vector<32x32xbf16>, vector<256x32xf32> -> vector<256x32xf32>
    %224 = arith.addf %217, %223 : vector<256x32xf32>
    %c2_229 = arith.constant 2 : index
    %c2_230 = arith.constant 2 : index
    %c1_231 = arith.constant 1 : index
    %c0_232 = arith.constant 0 : index
    %225 = vector.load %arg14[%c2_229, %c2_230, %c1_231, %c0_232] : memref<6x10x10x32xf32, #tpu.memory_space<vmem>>, vector<4x8x8x32xf32>
    %226 = vector.shape_cast %225 : vector<4x8x8x32xf32> to vector<256x32xf32>
    %227 = arith.truncf %226 : vector<256x32xf32> to vector<256x32xbf16>
    %c25 = arith.constant 25 : index
    %c0_233 = arith.constant 0 : index
    %c0_234 = arith.constant 0 : index
    %228 = vector.load %arg3[%c25, %c0_233, %c0_234] : memref<27x32x32xbf16, #tpu.memory_space<vmem>>, vector<1x32x32xbf16>
    %229 = vector.shape_cast %228 : vector<1x32x32xbf16> to vector<32x32xbf16>
    %cst_235 = arith.constant dense<0.000000e+00> : vector<256x32xf32>
    %230 = tpu.matmul %227, %229, %cst_235 {dimension_numbers = #tpu.dot_dimension_numbers<[1], [0], [0], [1], [0, 0, 1, 1], [], []>} : vector<256x32xbf16>, vector<32x32xbf16>, vector<256x32xf32> -> vector<256x32xf32>
    %231 = arith.addf %224, %230 : vector<256x32xf32>
    %c2_236 = arith.constant 2 : index
    %c2_237 = arith.constant 2 : index
    %c2_238 = arith.constant 2 : index
    %c0_239 = arith.constant 0 : index
    %232 = vector.load %arg14[%c2_236, %c2_237, %c2_238, %c0_239] : memref<6x10x10x32xf32, #tpu.memory_space<vmem>>, vector<4x8x8x32xf32>
    %233 = vector.shape_cast %232 : vector<4x8x8x32xf32> to vector<256x32xf32>
    %234 = arith.truncf %233 : vector<256x32xf32> to vector<256x32xbf16>
    %c26 = arith.constant 26 : index
    %c0_240 = arith.constant 0 : index
    %c0_241 = arith.constant 0 : index
    %235 = vector.load %arg3[%c26, %c0_240, %c0_241] : memref<27x32x32xbf16, #tpu.memory_space<vmem>>, vector<1x32x32xbf16>
    %236 = vector.shape_cast %235 : vector<1x32x32xbf16> to vector<32x32xbf16>
    %cst_242 = arith.constant dense<0.000000e+00> : vector<256x32xf32>
    %237 = tpu.matmul %234, %236, %cst_242 {dimension_numbers = #tpu.dot_dimension_numbers<[1], [0], [0], [1], [0, 0, 1, 1], [], []>} : vector<256x32xbf16>, vector<32x32xbf16>, vector<256x32xf32> -> vector<256x32xf32>
    %238 = arith.addf %231, %237 : vector<256x32xf32>
    %c0_243 = arith.constant 0 : index
    %c0_244 = arith.constant 0 : index
    %239 = vector.load %arg7[%c0_243, %c0_244] : memref<1x32xf32, #tpu.memory_space<vmem>>, vector<1x32xf32>
    %c0_245 = arith.constant 0 : index
    %c0_246 = arith.constant 0 : index
    %240 = vector.load %arg8[%c0_245, %c0_246] : memref<1x32xf32, #tpu.memory_space<vmem>>, vector<1x32xf32>
    %cst_247 = arith.constant dense<0.000000e+00> : vector<32xf32>
    %241 = vector.multi_reduction <add>, %238, %cst_247 [0] : vector<256x32xf32> to vector<32xf32>
    %242 = vector.shape_cast %241 : vector<32xf32> to vector<1x32xf32>
    %cst_248 = arith.constant 3.906250e-03 : f32
    %243 = vector.broadcast %cst_248 : f32 to vector<1x32xf32>
    %244 = arith.mulf %242, %243 : vector<1x32xf32>
    %245 = vector.broadcast %244 : vector<1x32xf32> to vector<256x32xf32>
    %246 = arith.subf %238, %245 : vector<256x32xf32>
    %247 = arith.mulf %246, %246 : vector<256x32xf32>
    %cst_249 = arith.constant dense<0.000000e+00> : vector<32xf32>
    %248 = vector.multi_reduction <add>, %247, %cst_249 [0] : vector<256x32xf32> to vector<32xf32>
    %249 = vector.shape_cast %248 : vector<32xf32> to vector<1x32xf32>
    %cst_250 = arith.constant 3.906250e-03 : f32
    %250 = vector.broadcast %cst_250 : f32 to vector<1x32xf32>
    %251 = arith.mulf %249, %250 : vector<1x32xf32>
    %cst_251 = arith.constant 9.99999974E-6 : f32
    %252 = vector.broadcast %cst_251 : f32 to vector<1x32xf32>
    %253 = arith.addf %251, %252 : vector<1x32xf32>
    %254 = math.rsqrt %253 : vector<1x32xf32>
    %255 = vector.broadcast %254 : vector<1x32xf32> to vector<256x32xf32>
    %256 = arith.mulf %246, %255 : vector<256x32xf32>
    %257 = vector.broadcast %239 : vector<1x32xf32> to vector<256x32xf32>
    %258 = arith.mulf %256, %257 : vector<256x32xf32>
    %259 = vector.broadcast %240 : vector<1x32xf32> to vector<256x32xf32>
    %260 = arith.addf %258, %259 : vector<256x32xf32>
    %cst_252 = arith.constant 0.000000e+00 : f32
    %261 = vector.broadcast %cst_252 : f32 to vector<256x32xf32>
    %262 = arith.cmpf ogt, %260, %261 : vector<256x32xf32>
    %263 = vector.broadcast %2 : f32 to vector<256x32xf32>
    %264 = arith.mulf %263, %260 : vector<256x32xf32>
    %265 = arith.select %262, %260, %264 : vector<256x32xi1>, vector<256x32xf32>
    %266 = arith.truncf %265 : vector<256x32xf32> to vector<256x32xbf16>
    %c0_253 = arith.constant 0 : index
    %c0_254 = arith.constant 0 : index
    %267 = vector.load %arg4[%c0_253, %c0_254] : memref<32x128xbf16, #tpu.memory_space<vmem>>, vector<32x128xbf16>
    %cst_255 = arith.constant dense<0.000000e+00> : vector<256x128xf32>
    %268 = tpu.matmul %266, %267, %cst_255 {dimension_numbers = #tpu.dot_dimension_numbers<[1], [0], [0], [1], [0, 0, 1, 1], [], []>} : vector<256x32xbf16>, vector<32x128xbf16>, vector<256x128xf32> -> vector<256x128xf32>
    %c0_256 = arith.constant 0 : index
    %c0_257 = arith.constant 0 : index
    %269 = vector.load %arg9[%c0_256, %c0_257] : memref<1x128xf32, #tpu.memory_space<vmem>>, vector<1x128xf32>
    %c0_258 = arith.constant 0 : index
    %c0_259 = arith.constant 0 : index
    %270 = vector.load %arg10[%c0_258, %c0_259] : memref<1x128xf32, #tpu.memory_space<vmem>>, vector<1x128xf32>
    %cst_260 = arith.constant dense<0.000000e+00> : vector<128xf32>
    %271 = vector.multi_reduction <add>, %268, %cst_260 [0] : vector<256x128xf32> to vector<128xf32>
    %272 = vector.shape_cast %271 : vector<128xf32> to vector<1x128xf32>
    %273 = arith.mulf %268, %268 : vector<256x128xf32>
    %cst_261 = arith.constant dense<0.000000e+00> : vector<128xf32>
    %274 = vector.multi_reduction <add>, %273, %cst_261 [0] : vector<256x128xf32> to vector<128xf32>
    %275 = vector.shape_cast %274 : vector<128xf32> to vector<1x128xf32>
    %276 = tpu.concatenate %272, %275 in 0 : vector<1x128xf32>, vector<1x128xf32> -> vector<2x128xf32>
    %cst_262 = arith.constant dense<0.000000e+00> : vector<2x128xf32>
    %277 = tpu.matmul %276, %0, %cst_262 {dimension_numbers = #tpu.dot_dimension_numbers<[1], [0], [0], [1], [0, 0, 1, 1], [], []>} : vector<2x128xf32>, vector<128x128xf32>, vector<2x128xf32> -> vector<2x128xf32>
    %cst_263 = arith.constant 9.765625E-4 : f32
    %278 = vector.broadcast %cst_263 : f32 to vector<2x128xf32>
    %279 = arith.mulf %277, %278 : vector<2x128xf32>
    %280 = vector.extract_strided_slice %279 {offsets = [0, 0], sizes = [1, 128], strides = [1, 1]} : vector<2x128xf32> to vector<1x128xf32>
    %281 = vector.extract_strided_slice %279 {offsets = [1, 0], sizes = [1, 128], strides = [1, 1]} : vector<2x128xf32> to vector<1x128xf32>
    %282 = arith.mulf %280, %280 : vector<1x128xf32>
    %283 = arith.subf %281, %282 : vector<1x128xf32>
    %cst_264 = arith.constant 0.000000e+00 : f32
    %284 = vector.broadcast %cst_264 : f32 to vector<1x128xf32>
    %285 = arith.maximumf %283, %284 : vector<1x128xf32>
    %286 = vector.broadcast %280 : vector<1x128xf32> to vector<256x128xf32>
    %287 = arith.subf %268, %286 : vector<256x128xf32>
    %cst_265 = arith.constant 9.99999974E-6 : f32
    %288 = vector.broadcast %cst_265 : f32 to vector<1x128xf32>
    %289 = arith.addf %285, %288 : vector<1x128xf32>
    %290 = math.rsqrt %289 : vector<1x128xf32>
    %291 = vector.broadcast %290 : vector<1x128xf32> to vector<256x128xf32>
    %292 = arith.mulf %287, %291 : vector<256x128xf32>
    %293 = vector.broadcast %269 : vector<1x128xf32> to vector<256x128xf32>
    %294 = arith.mulf %292, %293 : vector<256x128xf32>
    %295 = vector.broadcast %270 : vector<1x128xf32> to vector<256x128xf32>
    %296 = arith.addf %294, %295 : vector<256x128xf32>
    %c0_266 = arith.constant 0 : index
    %c0_267 = arith.constant 0 : index
    %c0_268 = arith.constant 0 : index
    %297 = vector.load %arg1[%c0_266, %c0_267, %c0_268] : memref<1x256x128xf32, #tpu.memory_space<vmem>>, vector<1x256x128xf32>
    %298 = vector.shape_cast %297 : vector<1x256x128xf32> to vector<256x128xf32>
    %299 = arith.addf %296, %298 : vector<256x128xf32>
    %cst_269 = arith.constant 0.000000e+00 : f32
    %300 = vector.broadcast %cst_269 : f32 to vector<256x128xf32>
    %301 = arith.cmpf ogt, %299, %300 : vector<256x128xf32>
    %302 = vector.broadcast %2 : f32 to vector<256x128xf32>
    %303 = arith.mulf %302, %299 : vector<256x128xf32>
    %304 = arith.select %301, %299, %303 : vector<256x128xi1>, vector<256x128xf32>
    %c0_270 = arith.constant 0 : index
    %c0_271 = arith.constant 0 : index
    %c0_272 = arith.constant 0 : index
    %305 = vector.load %arg13[%c0_270, %c0_271, %c0_272] : memref<1x256x128xf32, #tpu.memory_space<vmem>>, vector<1x256x128xf32>
    %306 = vector.shape_cast %305 : vector<1x256x128xf32> to vector<256x128xf32>
    %307 = vector.shape_cast %304 : vector<256x128xf32> to vector<1x256x128xf32>
    tpu.vector_store %arg13[%c0_270, %c0_271, %c0_272], %307 {strides = array<i32>} : memref<1x256x128xf32, #tpu.memory_space<vmem>>, vector<1x256x128xf32>,
    return
  }
  func.func @transform_0(%arg0: i32) -> (i32, i32, i32) {
    %c0_i32 = arith.constant 0 : i32
    %c0_i32_0 = arith.constant 0 : i32
    %c0_i32_1 = arith.constant 0 : i32
    return %arg0, %c0_i32, %c0_i32_0 : i32, i32, i32
  }
  func.func @transform_1(%arg0: i32) -> (i32, i32) {
    %c0_i32 = arith.constant 0 : i32
    %c0_i32_0 = arith.constant 0 : i32
    %c0_i32_1 = arith.constant 0 : i32
    return %c0_i32, %c0_i32_0 : i32, i32
  }
  func.func @transform_2(%arg0: i32) -> (i32, i32, i32) {
    %c0_i32 = arith.constant 0 : i32
    %c0_i32_0 = arith.constant 0 : i32
    %c0_i32_1 = arith.constant 0 : i32
    %c0_i32_2 = arith.constant 0 : i32
    return %c0_i32, %c0_i32_0, %c0_i32_1 : i32, i32, i32
  }
  func.func @transform_3(%arg0: i32) -> (i32, i32) {
    %c0_i32 = arith.constant 0 : i32
    %c0_i32_0 = arith.constant 0 : i32
    %c0_i32_1 = arith.constant 0 : i32
    return %c0_i32, %c0_i32_0 : i32, i32
  }
  func.func @transform_4(%arg0: i32) -> (i32, i32) {
    %c0_i32 = arith.constant 0 : i32
    %c0_i32_0 = arith.constant 0 : i32
    %c0_i32_1 = arith.constant 0 : i32
    return %c0_i32, %c0_i32_0 : i32, i32
  }
  func.func @transform_5(%arg0: i32) -> (i32, i32) {
    %c0_i32 = arith.constant 0 : i32
    %c0_i32_0 = arith.constant 0 : i32
    %c0_i32_1 = arith.constant 0 : i32
    return %c0_i32, %c0_i32_0 : i32, i32
  }
  func.func @transform_6(%arg0: i32) -> (i32, i32) {
    %c0_i32 = arith.constant 0 : i32
    %c0_i32_0 = arith.constant 0 : i32
    %c0_i32_1 = arith.constant 0 : i32
    return %c0_i32, %c0_i32_0 : i32, i32
  }
  func.func @transform_7(%arg0: i32) -> (i32, i32) {
    %c0_i32 = arith.constant 0 : i32
    %c0_i32_0 = arith.constant 0 : i32
    %c0_i32_1 = arith.constant 0 : i32
    return %c0_i32, %c0_i32_0 : i32, i32
  }
  func.func @transform_8(%arg0: i32) -> (i32, i32) {
    %c0_i32 = arith.constant 0 : i32
    %c0_i32_0 = arith.constant 0 : i32
    %c0_i32_1 = arith.constant 0 : i32
    return %c0_i32, %c0_i32_0 : i32, i32
  }
  func.func @transform_9(%arg0: i32) -> (i32, i32) {
    %c0_i32 = arith.constant 0 : i32
    %c0_i32_0 = arith.constant 0 : i32
    %c0_i32_1 = arith.constant 0 : i32
    return %c0_i32, %c0_i32_0 : i32, i32
  }
  func.func @transform_10(%arg0: i32) -> (i32, i32) {
    %c0_i32 = arith.constant 0 : i32
    %c0_i32_0 = arith.constant 0 : i32
    %c0_i32_1 = arith.constant 0 : i32
    return %c0_i32, %c0_i32_0 : i32, i32
  }
  func.func @transform_11(%arg0: i32) -> (i32, i32) {
    %c0_i32 = arith.constant 0 : i32
    %c0_i32_0 = arith.constant 0 : i32
    %c0_i32_1 = arith.constant 0 : i32
    return %c0_i32, %c0_i32_0 : i32, i32
  }
  func.func @transform_12(%arg0: i32) -> (i32, i32, i32) {
    %c0_i32 = arith.constant 0 : i32
    %c0_i32_0 = arith.constant 0 : i32
    %c0_i32_1 = arith.constant 0 : i32
    return %arg0, %c0_i32, %c0_i32_0 : i32, i32, i32
  }
}

</mosaic_0001>

<llo_original>
// kernel: resnext_bottleneck_forward.1
$region0: #{resnext_bottleneck_forward.1}
  #allocation0 [shape = 'u32[]', space=smem, size = 0x4, offset = 0x4, fixed_abs, tag = 'smem constant byte address 0x4 - core index']
  #allocation1 [shape = 'u32[144,128]{1,0:T(1,128)}', space=vmem, size = 0x12000, scoped, tag = 'internal scratch']
  #allocation2 [shape = 'f32[6,10,10,32]{3,2,1,0:T(8,128)}', space=vmem, size = 0x78000, scoped, tag = 'scratch operand']
  #allocation3 [shape = 'f32[1,1]{1,0:T(1,128)S(1)}', space=vmem, size = 0x200, scoped, tag = 'scoped memory for resnext_bottleneck_forward.1']
  %s0 = inlined_call_operand.hbm [shape: f32[2,256,128], index: 0, kind: input, shape index: {}]
  %s1 = inlined_call_operand.vmem [shape: bf16[128,32], index: 1, kind: input, shape index: {}]
  %s2 = inlined_call_operand.hbm [shape: bf16[27,32,32], index: 2, kind: input, shape index: {}]
  %s3 = inlined_call_operand.vmem [shape: bf16[32,128], index: 3, kind: input, shape index: {}]
  %s4 = inlined_call_operand.vmem [shape: f32[1,32], index: 4, kind: input, shape index: {}]
  %s5 = inlined_call_operand.vmem [shape: f32[1,32], index: 5, kind: input, shape index: {}]
  %s6 = inlined_call_operand.vmem [shape: f32[1,32], index: 6, kind: input, shape index: {}]
  %s7 = inlined_call_operand.vmem [shape: f32[1,32], index: 7, kind: input, shape index: {}]
  %s8 = inlined_call_operand.vmem [shape: f32[1,128], index: 8, kind: input, shape index: {}]
  %s9 = inlined_call_operand.vmem [shape: f32[1,128], index: 9, kind: input, shape index: {}]
  %s10 = inlined_call_operand.<no memory space> [shape: f32[1,1], index: 10, kind: input, shape index: {}]
  %s11 = inlined_call_operand.hbm [shape: f32[128,128], index: 11, kind: input, shape index: {}]
  %s12 = inlined_call_operand.hbm [shape: f32[2,256,128], index: 12, kind: output, shape index: {}]
  %s13 = sld [smem:[#allocation0]]
  $region93: #{resnext_bottleneck_forward.1} parent=0
    _
  %s15 = ssub.s32 1, %s13
  %s16 = scalar_select 0, %s15, %s13
  %v17 = vstv %s10
  %18 = vst [vmem:[#allocation3] sm:$0x1] %v17
  $region1: #{resnext_bottleneck_forward.1} parent=0
    #allocation4 [shape = 'u8[262144]{0}', space=vmem, size = 0x40000, scoped, tag = 'input window, operand 0']
    #allocation5 [shape = 's32[2]{0}', space=sflag, size = 0x8, scoped, tag = 'scoped memory for resnext_bottleneck_forward.1']
    #allocation6 [shape = 's32[2]{0}', space=sflag, size = 0x8, scoped, tag = 'scoped memory for resnext_bottleneck_forward.1']
    #allocation7 [shape = 'u8[221184]{0}', space=vmem, size = 0x36000, scoped, tag = 'input window, operand 2, single buffered']
    #allocation8 [shape = 's32[1]{0}', space=sflag, size = 0x4, scoped, tag = 'scoped memory for resnext_bottleneck_forward.1']
    #allocation9 [shape = 'u8[65536]{0}', space=vmem, size = 0x10000, scoped, tag = 'input window, operand 11, single buffered']
    #allocation10 [shape = 'u8[262144]{0}', space=vmem, size = 0x40000, scoped, tag = 'output window, operand 0']
    %19 = vsyncpa [#allocation5], 0
    %s20 = scalar_lea.sflag [#allocation5], 1
    %21 = vsyncpa %s20, 0
    %22 = vsyncpa [#allocation8], 0
    %23 = vsyncpa [#allocation6], 0
    %s24 = scalar_lea.sflag [#allocation6], 1
    %25 = vsyncpa %s24, 0
    loop: start=0, step=1, limit=4
    $region2: #{resnext_bottleneck_forward.1} parent=1 // loop_pre_header
      _
    $region3: #{resnext_bottleneck_forward.1} parent=1 // loop_header
      %s27 = sphi 0, %s31
      %p28 = scmp.ge.s32.totalorder %s27, 4
      %s37 = sphi 0, %s39
      %s40 = sphi 0, %s37
      %s41 = sphi 0, %s40
      %s57 = sphi 0, %s41
      %s61 = sphi 0, %s61
      %s63 = sphi 0, %s61
      %s64 = sphi 0, %s63
      %s78 = sphi 0, %s64
      %s82 = sphi 0, %s82
      %s84 = sphi 0, %s82
      %s85 = sphi 0, %s84
      %s99 = sphi 0, %s85
      %s103 = sphi 0, %s103
      %s105 = sphi 0, %s103
      %s106 = sphi 0, %s105
      %s120 = sphi 0, %s106
      %s124 = sphi 0, %s124
      %s126 = sphi 0, %s124
      %s127 = sphi 0, %s126
      %s141 = sphi 0, %s127
      %s145 = sphi 0, %s145
      %s147 = sphi 0, %s145
      %s148 = sphi 0, %s147
      %s162 = sphi 0, %s148
      %s166 = sphi 0, %s166
      %s168 = sphi 0, %s166
      %s169 = sphi 0, %s168
      %s183 = sphi 0, %s169
      %s187 = sphi 0, %s187
      %s189 = sphi 0, %s187
      %s190 = sphi 0, %s189
      %s204 = sphi 0, %s190
      %s208 = sphi 0, %s208
      %s210 = sphi 0, %s208
      %s211 = sphi 0, %s210
      %s225 = sphi 0, %s211
      %s229 = sphi 0, %s229
      %s231 = sphi 0, %s229
      %s232 = sphi 0, %s231
      %s246 = sphi 0, %s232
      %s250 = sphi 0, %s250
      %s252 = sphi 0, %s250
      %s253 = sphi 0, %s252
      %s267 = sphi 0, %s253
      %s271 = sphi 0, %s271
      %s273 = sphi 0, %s271
      %s274 = sphi 0, %s273
      %s288 = sphi 0, %s274
      %s294 = sphi 0, %s296
      %s297 = sphi 0, %s294
      %s298 = sphi 0, %s297
      %s314 = sphi 0, %s298
    $region4: #{resnext_bottleneck_forward.1} parent=1 // loop_header_branch
      %30 = sbr.rel (%p28) target = $region8
    $region5: #{resnext_bottleneck_forward.1} parent=1 // loop_body
      %s32 = ssub.s32 %s27, 1
      %s33 = ssub.s32 %s27, 2
      %s34 = sadd.s32 %s27, 1
      %s35 = ssub.s32 %s27, %s34
      %p36 = scmp.eq.s32.totalorder %s35, 0
      %s38 = sadd.s32 %s37, 1
      %s39 = scalar_select %p36, %s37, %s38
      %p42 = pneg %p36
      %p43 = scmp.eq.s32.totalorder %s27, 1
      %p44 = por %p42, %p43
      %p45 = scmp.ne.s32.totalorder %s37, %s40
      %p46 = scmp.eq.s32.totalorder %s27, 0
      %p47 = por %p45, %p46
      %p48 = scmp.ne.s32.totalorder %s37, %s40
      %p49 = scmp.eq.s32.totalorder %s32, 1
      %p50 = por %p48, %p49
      %p51 = scmp.ne.s32.totalorder %s40, %s41
      %p52 = scmp.eq.s32.totalorder %s32, 0
      %p53 = por %p51, %p52
      %p54 = scmp.ne.s32.totalorder %s40, %s41
      %p55 = scmp.eq.s32.totalorder %s33, 1
      %p56 = por %p54, %p55
      %p58 = scmp.ne.s32.totalorder %s41, %s57
      %p59 = scmp.eq.s32.totalorder %s33, 0
      %p60 = por %p58, %p59
      %s62 = sadd.s32 %s61, 1
      %p65 = scmp.eq.s32.totalorder %s27, 1
      %p66 = scmp.ne.s32.totalorder %s61, %s63
      %p67 = scmp.eq.s32.totalorder %s27, 0
      %p68 = por %p66, %p67
      %p69 = scmp.ne.s32.totalorder %s61, %s63
      %p70 = scmp.eq.s32.totalorder %s32, 1
      %p71 = por %p69, %p70
      %p72 = scmp.ne.s32.totalorder %s63, %s64
      %p73 = scmp.eq.s32.totalorder %s32, 0
      %p74 = por %p72, %p73
      %p75 = scmp.ne.s32.totalorder %s63, %s64
      %p76 = scmp.eq.s32.totalorder %s33, 1
      %p77 = por %p75, %p76
      %p79 = scmp.ne.s32.totalorder %s64, %s78
      %p80 = scmp.eq.s32.totalorder %s33, 0
      %p81 = por %p79, %p80
      %s83 = sadd.s32 %s82, 1
      %p86 = scmp.eq.s32.totalorder %s27, 1
      %p87 = scmp.ne.s32.totalorder %s82, %s84
      %p88 = scmp.eq.s32.totalorder %s27, 0
      %p89 = por %p87, %p88
      %p90 = scmp.ne.s32.totalorder %s82, %s84
      %p91 = scmp.eq.s32.totalorder %s32, 1
      %p92 = por %p90, %p91
      %p93 = scmp.ne.s32.totalorder %s84, %s85
      %p94 = scmp.eq.s32.totalorder %s32, 0
      %p95 = por %p93, %p94
      %p96 = scmp.ne.s32.totalorder %s84, %s85
      %p97 = scmp.eq.s32.totalorder %s33, 1
      %p98 = por %p96, %p97
      %p100 = scmp.ne.s32.totalorder %s85, %s99
      %p101 = scmp.eq.s32.totalorder %s33, 0
      %p102 = por %p100, %p101
      %s104 = sadd.s32 %s103, 1
      %p107 = scmp.eq.s32.totalorder %s27, 1
      %p108 = scmp.ne.s32.totalorder %s103, %s105
      %p109 = scmp.eq.s32.totalorder %s27, 0
      %p110 = por %p108, %p109
      %p111 = scmp.ne.s32.totalorder %s103, %s105
      %p112 = scmp.eq.s32.totalorder %s32, 1
      %p113 = por %p111, %p112
      %p114 = scmp.ne.s32.totalorder %s105, %s106
      %p115 = scmp.eq.s32.totalorder %s32, 0
      %p116 = por %p114, %p115
      %p117 = scmp.ne.s32.totalorder %s105, %s106
      %p118 = scmp.eq.s32.totalorder %s33, 1
      %p119 = por %p117, %p118
      %p121 = scmp.ne.s32.totalorder %s106, %s120
      %p122 = scmp.eq.s32.totalorder %s33, 0
      %p123 = por %p121, %p122
      %s125 = sadd.s32 %s124, 1
      %p128 = scmp.eq.s32.totalorder %s27, 1
      %p129 = scmp.ne.s32.totalorder %s124, %s126
      %p130 = scmp.eq.s32.totalorder %s27, 0
      %p131 = por %p129, %p130
      %p132 = scmp.ne.s32.totalorder %s124, %s126
      %p133 = scmp.eq.s32.totalorder %s32, 1
      %p134 = por %p132, %p133
      %p135 = scmp.ne.s32.totalorder %s126, %s127
      %p136 = scmp.eq.s32.totalorder %s32, 0
      %p137 = por %p135, %p136
      %p138 = scmp.ne.s32.totalorder %s126, %s127
      %p139 = scmp.eq.s32.totalorder %s33, 1
      %p140 = por %p138, %p139
      %p142 = scmp.ne.s32.totalorder %s127, %s141
      %p143 = scmp.eq.s32.totalorder %s33, 0
      %p144 = por %p142, %p143
      %s146 = sadd.s32 %s145, 1
      %p149 = scmp.eq.s32.totalorder %s27, 1
      %p150 = scmp.ne.s32.totalorder %s145, %s147
      %p151 = scmp.eq.s32.totalorder %s27, 0
      %p152 = por %p150, %p151
      %p153 = scmp.ne.s32.totalorder %s145, %s147
      %p154 = scmp.eq.s32.totalorder %s32, 1
      %p155 = por %p153, %p154
      %p156 = scmp.ne.s32.totalorder %s147, %s148
      %p157 = scmp.eq.s32.totalorder %s32, 0
      %p158 = por %p156, %p157
      %p159 = scmp.ne.s32.totalorder %s147, %s148
      %p160 = scmp.eq.s32.totalorder %s33, 1
      %p161 = por %p159, %p160
      %p163 = scmp.ne.s32.totalorder %s148, %s162
      %p164 = scmp.eq.s32.totalorder %s33, 0
      %p165 = por %p163, %p164
      %s167 = sadd.s32 %s166, 1
      %p170 = scmp.eq.s32.totalorder %s27, 1
      %p171 = scmp.ne.s32.totalorder %s166, %s168
      %p172 = scmp.eq.s32.totalorder %s27, 0
      %p173 = por %p171, %p172
      %p174 = scmp.ne.s32.totalorder %s166, %s168
      %p175 = scmp.eq.s32.totalorder %s32, 1
      %p176 = por %p174, %p175
      %p177 = scmp.ne.s32.totalorder %s168, %s169
      %p178 = scmp.eq.s32.totalorder %s32, 0
      %p179 = por %p177, %p178
      %p180 = scmp.ne.s32.totalorder %s168, %s169
      %p181 = scmp.eq.s32.totalorder %s33, 1
      %p182 = por %p180, %p181
      %p184 = scmp.ne.s32.totalorder %s169, %s183
      %p185 = scmp.eq.s32.totalorder %s33, 0
      %p186 = por %p184, %p185
      %s188 = sadd.s32 %s187, 1
      %p191 = scmp.eq.s32.totalorder %s27, 1
      %p192 = scmp.ne.s32.totalorder %s187, %s189
      %p193 = scmp.eq.s32.totalorder %s27, 0
      %p194 = por %p192, %p193
      %p195 = scmp.ne.s32.totalorder %s187, %s189
      %p196 = scmp.eq.s32.totalorder %s32, 1
      %p197 = por %p195, %p196
      %p198 = scmp.ne.s32.totalorder %s189, %s190
      %p199 = scmp.eq.s32.totalorder %s32, 0
      %p200 = por %p198, %p199
      %p201 = scmp.ne.s32.totalorder %s189, %s190
      %p202 = scmp.eq.s32.totalorder %s33, 1
      %p203 = por %p201, %p202
      %p205 = scmp.ne.s32.totalorder %s190, %s204
      %p206 = scmp.eq.s32.totalorder %s33, 0
      %p207 = por %p205, %p206
      %s209 = sadd.s32 %s208, 1
      %p212 = scmp.eq.s32.totalorder %s27, 1
      %p213 = scmp.ne.s32.totalorder %s208, %s210
      %p214 = scmp.eq.s32.totalorder %s27, 0
      %p215 = por %p213, %p214
      %p216 = scmp.ne.s32.totalorder %s208, %s210
      %p217 = scmp.eq.s32.totalorder %s32, 1
      %p218 = por %p216, %p217
      %p219 = scmp.ne.s32.totalorder %s210, %s211
      %p220 = scmp.eq.s32.totalorder %s32, 0
      %p221 = por %p219, %p220
      %p222 = scmp.ne.s32.totalorder %s210, %s211
      %p223 = scmp.eq.s32.totalorder %s33, 1
      %p224 = por %p222, %p223
      %p226 = scmp.ne.s32.totalorder %s211, %s225
      %p227 = scmp.eq.s32.totalorder %s33, 0
      %p228 = por %p226, %p227
      %s230 = sadd.s32 %s229, 1
      %p233 = scmp.eq.s32.totalorder %s27, 1
      %p234 = scmp.ne.s32.totalorder %s229, %s231
      %p235 = scmp.eq.s32.totalorder %s27, 0
      %p236 = por %p234, %p235
      %p237 = scmp.ne.s32.totalorder %s229, %s231
      %p238 = scmp.eq.s32.totalorder %s32, 1
      %p239 = por %p237, %p238
      %p240 = scmp.ne.s32.totalorder %s231, %s232
      %p241 = scmp.eq.s32.totalorder %s32, 0
      %p242 = por %p240, %p241
      %p243 = scmp.ne.s32.totalorder %s231, %s232
      %p244 = scmp.eq.s32.totalorder %s33, 1
      %p245 = por %p243, %p244
      %p247 = scmp.ne.s32.totalorder %s232, %s246
      %p248 = scmp.eq.s32.totalorder %s33, 0
      %p249 = por %p247, %p248
      %s251 = sadd.s32 %s250, 1
      %p254 = scmp.eq.s32.totalorder %s27, 1
      %p255 = scmp.ne.s32.totalorder %s250, %s252
      %p256 = scmp.eq.s32.totalorder %s27, 0
      %p257 = por %p255, %p256
      %p258 = scmp.ne.s32.totalorder %s250, %s252
      %p259 = scmp.eq.s32.totalorder %s32, 1
      %p260 = por %p258, %p259
      %p261 = scmp.ne.s32.totalorder %s252, %s253
      %p262 = scmp.eq.s32.totalorder %s32, 0
      %p263 = por %p261, %p262
      %p264 = scmp.ne.s32.totalorder %s252, %s253
      %p265 = scmp.eq.s32.totalorder %s33, 1
      %p266 = por %p264, %p265
      %p268 = scmp.ne.s32.totalorder %s253, %s267
      %p269 = scmp.eq.s32.totalorder %s33, 0
      %p270 = por %p268, %p269
      %s272 = sadd.s32 %s271, 1
      %p275 = scmp.eq.s32.totalorder %s27, 1
      %p276 = scmp.ne.s32.totalorder %s271, %s273
      %p277 = scmp.eq.s32.totalorder %s27, 0
      %p278 = por %p276, %p277
      %p279 = scmp.ne.s32.totalorder %s271, %s273
      %p280 = scmp.eq.s32.totalorder %s32, 1
      %p281 = por %p279, %p280
      %p282 = scmp.ne.s32.totalorder %s273, %s274
      %p283 = scmp.eq.s32.totalorder %s32, 0
      %p284 = por %p282, %p283
      %p285 = scmp.ne.s32.totalorder %s273, %s274
      %p286 = scmp.eq.s32.totalorder %s33, 1
      %p287 = por %p285, %p286
      %p289 = scmp.ne.s32.totalorder %s274, %s288
      %p290 = scmp.eq.s32.totalorder %s33, 0
      %p291 = por %p289, %p290
      %s292 = ssub.s32 %s27, %s34
      %p293 = scmp.eq.s32.totalorder %s292, 0
      %s295 = sadd.s32 %s294, 1
      %s296 = scalar_select %p293, %s294, %s295
      %p299 = pneg %p293
      %p300 = scmp.eq.s32.totalorder %s27, 1
      %p301 = por %p299, %p300
      %p302 = scmp.ne.s32.totalorder %s294, %s297
      %p303 = scmp.eq.s32.totalorder %s27, 0
      %p304 = por %p302, %p303
      %p305 = scmp.ne.s32.totalorder %s294, %s297
      %p306 = scmp.eq.s32.totalorder %s32, 1
      %p307 = por %p305, %p306
      %p308 = scmp.ne.s32.totalorder %s297, %s298
      %p309 = scmp.eq.s32.totalorder %s32, 0
      %p310 = por %p308, %p309
      %p311 = scmp.ne.s32.totalorder %s297, %s298
      %p312 = scmp.eq.s32.totalorder %s33, 1
      %p313 = por %p311, %p312
      %p315 = scmp.ne.s32.totalorder %s298, %s314
      %p316 = scmp.eq.s32.totalorder %s33, 0
      %p317 = por %p315, %p316
      %p318 = scmp.le.s32.totalorder 1, %s27
      %p319 = scmp.lt.s32.totalorder %s27, 3
      %p320 = pnand %p318, %p319
      %p321 = pneg %p320
      // Predicated region
      $region9: #{resnext_bottleneck_forward.1} parent=5 // pred_check
        _
      $region10: #{resnext_bottleneck_forward.1} parent=5 // pred_check_branch
        %323 = sbr.rel (%p320) target = $region12
      $region11: #{resnext_bottleneck_forward.1} parent=5 // pred_region
        %s324 = ssub.s32 %s27, 1
        // Predicated region
        $region13: #{resnext_bottleneck_forward.1} parent=11 // pred_check
          %p325 = pneg %p74
        $region14: #{resnext_bottleneck_forward.1} parent=11 // pred_check_branch
          %327 = sbr.rel (%p325) target = $region16
        $region15: #{resnext_bottleneck_forward.1} parent=11 // pred_region
          _
        $region16: #{resnext_bottleneck_forward.1} parent=11 // pred_fallthru
          _
        // Predicated region
        $region17: #{resnext_bottleneck_forward.1} parent=11 // pred_check
          %p328 = pneg %p95
        $region18: #{resnext_bottleneck_forward.1} parent=11 // pred_check_branch
          %330 = sbr.rel (%p328) target = $region20
        $region19: #{resnext_bottleneck_forward.1} parent=11 // pred_region
          %s332 = ssub.s32 6912, 6912
          %333 = vsyncadd [#allocation8], %s332
          %s334 = sshll.u32 [#allocation7], 4
          %s335 = int_to_ptr.vmem [resolvable:$true] %s334
          %340 = dma.hbm_to_vmem [thread:$0]  %s2, 6912, %s335, [#allocation8], 64, 64, 4
        $region20: #{resnext_bottleneck_forward.1} parent=11 // pred_fallthru
          _
        // Predicated region
        $region21: #{resnext_bottleneck_forward.1} parent=11 // pred_check
          %p341 = pneg %p116
        $region22: #{resnext_bottleneck_forward.1} parent=11 // pred_check_branch
          %343 = sbr.rel (%p341) target = $region24
        $region23: #{resnext_bottleneck_forward.1} parent=11 // pred_region
          _
        $region24: #{resnext_bottleneck_forward.1} parent=11 // pred_fallthru
          _
        // Predicated region
        $region25: #{resnext_bottleneck_forward.1} parent=11 // pred_check
          %p344 = pneg %p137
        $region26: #{resnext_bottleneck_forward.1} parent=11 // pred_check_branch
          %346 = sbr.rel (%p344) target = $region28
        $region27: #{resnext_bottleneck_forward.1} parent=11 // pred_region
          _
        $region28: #{resnext_bottleneck_forward.1} parent=11 // pred_fallthru
          _
        // Predicated region
        $region29: #{resnext_bottleneck_forward.1} parent=11 // pred_check
          %p347 = pneg %p158
        $region30: #{resnext_bottleneck_forward.1} parent=11 // pred_check_branch
          %349 = sbr.rel (%p347) target = $region32
        $region31: #{resnext_bottleneck_forward.1} parent=11 // pred_region
          _
        $region32: #{resnext_bottleneck_forward.1} parent=11 // pred_fallthru
          _
        // Predicated region
        $region33: #{resnext_bottleneck_forward.1} parent=11 // pred_check
          %p350 = pneg %p179
        $region34: #{resnext_bottleneck_forward.1} parent=11 // pred_check_branch
          %352 = sbr.rel (%p350) target = $region36
        $region35: #{resnext_bottleneck_forward.1} parent=11 // pred_region
          _
        $region36: #{resnext_bottleneck_forward.1} parent=11 // pred_fallthru
          _
        // Predicated region
        $region37: #{resnext_bottleneck_forward.1} parent=11 // pred_check
          %p353 = pneg %p200
        $region38: #{resnext_bottleneck_forward.1} parent=11 // pred_check_branch
          %355 = sbr.rel (%p353) target = $region40
        $region39: #{resnext_bottleneck_forward.1} parent=11 // pred_region
          _
        $region40: #{resnext_bottleneck_forward.1} parent=11 // pred_fallthru
          _
        // Predicated region
        $region41: #{resnext_bottleneck_forward.1} parent=11 // pred_check
          %p356 = pneg %p221
        $region42: #{resnext_bottleneck_forward.1} parent=11 // pred_check_branch
          %358 = sbr.rel (%p356) target = $region44
        $region43: #{resnext_bottleneck_forward.1} parent=11 // pred_region
          _
        $region44: #{resnext_bottleneck_forward.1} parent=11 // pred_fallthru
          _
        // Predicated region
        $region45: #{resnext_bottleneck_forward.1} parent=11 // pred_check
          %p359 = pneg %p242
        $region46: #{resnext_bottleneck_forward.1} parent=11 // pred_check_branch
          %361 = sbr.rel (%p359) target = $region48
        $region47: #{resnext_bottleneck_forward.1} parent=11 // pred_region
          _
        $region48: #{resnext_bottleneck_forward.1} parent=11 // pred_fallthru
          _
        // Predicated region
        $region49: #{resnext_bottleneck_forward.1} parent=11 // pred_check
          %p362 = pneg %p263
        $region50: #{resnext_bottleneck_forward.1} parent=11 // pred_check_branch
          %364 = sbr.rel (%p362) target = $region52
        $region51: #{resnext_bottleneck_forward.1} parent=11 // pred_region
          _
        $region52: #{resnext_bottleneck_forward.1} parent=11 // pred_fallthru
          _
        // Predicated region
        $region53: #{resnext_bottleneck_forward.1} parent=11 // pred_check
          %p365 = pneg %p284
        $region54: #{resnext_bottleneck_forward.1} parent=11 // pred_check_branch
          %367 = sbr.rel (%p365) target = $region56
        $region55: #{resnext_bottleneck_forward.1} parent=11 // pred_region
          %s369 = ssub.s32 2048, 2048
          %370 = vsyncadd [#allocation8], %s369
          %s371 = sshll.u32 [#allocation9], 4
          %s372 = int_to_ptr.vmem [resolvable:$true] %s371
          %377 = dma.hbm_to_vmem [thread:$0]  %s11, 2048, %s372, [#allocation8], 128, 128, 8
        $region56: #{resnext_bottleneck_forward.1} parent=11 // pred_fallthru
          _
      $region12: #{resnext_bottleneck_forward.1} parent=5 // pred_fallthru
        _
      %p378 = scmp.lt.s32.totalorder %s27, 2
      // Predicated region
      $region57: #{resnext_bottleneck_forward.1} parent=5 // pred_check
        %p379 = pneg %p378
      $region58: #{resnext_bottleneck_forward.1} parent=5 // pred_check_branch
        %381 = sbr.rel (%p379) target = $region60
      $region59: #{resnext_bottleneck_forward.1} parent=5 // pred_region
        // Predicated region
        $region61: #{resnext_bottleneck_forward.1} parent=59 // pred_check
          %p382 = pneg %p47
        $region62: #{resnext_bottleneck_forward.1} parent=59 // pred_check_branch
          %384 = sbr.rel (%p382) target = $region64
        $region63: #{resnext_bottleneck_forward.1} parent=59 // pred_region
          %s385 = sand.u32 %s37, 1
          %s386 = scalar_lea.sflag [#allocation5], %s385
          %s387 = sand.u32 %s37, 1
          %s388 = smul.addr %s387, 256
          %s389 = scalar_lea.vmem [#allocation4], %s388
          %s391 = ssub.s32 4096, 4096
          %392 = vsyncadd %s386, %s391
          %s393 = smul.addr %s27, 32
          %s394 = smul.addr %s393, 128
          %s395 = scalar_lea.hbm %s0, %s394
          %s396 = sshll.u32 %s389, 4
          %s397 = int_to_ptr.vmem [resolvable:$true] %s396
          %402 = dma.hbm_to_vmem [thread:$0]  %s395, 4096, %s397, %s386, 128, 128, 8
        $region64: #{resnext_bottleneck_forward.1} parent=59 // pred_fallthru
          _
      $region60: #{resnext_bottleneck_forward.1} parent=5 // pred_fallthru
        _
      %p403 = scmp.le.s32.totalorder 1, %s27
      %p404 = scmp.lt.s32.totalorder %s27, 3
      %p405 = pnand %p403, %p404
      %p406 = pneg %p405
      // Predicated region
      $region65: #{resnext_bottleneck_forward.1} parent=5 // pred_check
        _
      $region66: #{resnext_bottleneck_forward.1} parent=5 // pred_check_branch
        %408 = sbr.rel (%p405) target = $region68
      $region67: #{resnext_bottleneck_forward.1} parent=5 // pred_region
        %s409 = ssub.s32 %s27, 1
        %s410 = sand.u32 %s40, 1
        %s411 = scalar_lea.sflag [#allocation5], %s410
        %s412 = sand.u32 %s40, 1
        %s413 = smul.addr %s412, 256
        %s414 = scalar_lea.vmem [#allocation4], %s413
        // Predicated region
        $region69: #{resnext_bottleneck_forward.1} parent=67 // pred_check
          %p415 = pneg %p53
        $region70: #{resnext_bottleneck_forward.1} parent=67 // pred_check_branch
          %417 = sbr.rel (%p415) target = $region72
        $region71: #{resnext_bottleneck_forward.1} parent=67 // pred_region
          %418 = dma.done %s411, 4096
        $region72: #{resnext_bottleneck_forward.1} parent=67 // pred_fallthru
          _
        // Predicated region
        $region73: #{resnext_bottleneck_forward.1} parent=67 // pred_check
          %p419 = pneg %p95
        $region74: #{resnext_bottleneck_forward.1} parent=67 // pred_check_branch
          %421 = sbr.rel (%p419) target = $region76
        $region75: #{resnext_bottleneck_forward.1} parent=67 // pred_region
          %422 = dma.done [#allocation8], 6912
        $region76: #{resnext_bottleneck_forward.1} parent=67 // pred_fallthru
          _
        // Predicated region
        $region77: #{resnext_bottleneck_forward.1} parent=67 // pred_check
          %p423 = pneg %p284
        $region78: #{resnext_bottleneck_forward.1} parent=67 // pred_check_branch
          %425 = sbr.rel (%p423) target = $region80
        $region79: #{resnext_bottleneck_forward.1} parent=67 // pred_region
          %426 = dma.done [#allocation8], 2048
        $region80: #{resnext_bottleneck_forward.1} parent=67 // pred_fallthru
          _
        %s427 = sand.u32 %s40, 1
        %s428 = scalar_lea.sflag [#allocation5], %s427
        %s429 = sand.u32 %s40, 1
        %s430 = smul.addr %s429, 256
        %s431 = scalar_lea.vmem [#allocation4], %s430
        %p432 = pneg %p53
        %p433 = pneg %p50
        %p434 = pneg %p74
        %p435 = pneg %p71
        %p436 = pneg %p95
        %p437 = pneg %p92
        %p438 = pneg %p116
        %p439 = pneg %p113
        %p440 = pneg %p137
        %p441 = pneg %p134
        %p442 = pneg %p158
        %p443 = pneg %p155
        %p444 = pneg %p179
        %p445 = pneg %p176
        %p446 = pneg %p200
        %p447 = pneg %p197
        %p448 = pneg %p221
        %p449 = pneg %p218
        %p450 = pneg %p242
        %p451 = pneg %p239
        %p452 = pneg %p263
        %p453 = pneg %p260
        %p454 = pneg %p284
        %p455 = pneg %p281
        %p456 = pneg %p310
        %p457 = pneg %p307
        %s458 = sand.u32 %s297, 1
        %s459 = scalar_lea.sflag [#allocation6], %s458
        %s460 = sand.u32 %s297, 1
        %s461 = smul.addr %s460, 256
        %s462 = scalar_lea.vmem [#allocation10], %s461
        %v464 = vld [vmem:[#allocation9] sm:$0xff]
        %v465 = vld [vmem:[#allocation9 + $0x8] sm:$0xff]
        %v466 = vld [vmem:[#allocation9 + $0x10] sm:$0xff]
        %v467 = vld [vmem:[#allocation9 + $0x18] sm:$0xff]
        %v468 = vld [vmem:[#allocation9 + $0x20] sm:$0xff]
        %v469 = vld [vmem:[#allocation9 + $0x28] sm:$0xff]
        %v470 = vld [vmem:[#allocation9 + $0x30] sm:$0xff]
        %v471 = vld [vmem:[#allocation9 + $0x38] sm:$0xff]
        %v472 = vld [vmem:[#allocation9 + $0x40] sm:$0xff]
        %v473 = vld [vmem:[#allocation9 + $0x48] sm:$0xff]
        %v474 = vld [vmem:[#allocation9 + $0x50] sm:$0xff]
        %v475 = vld [vmem:[#allocation9 + $0x58] sm:$0xff]
        %v476 = vld [vmem:[#allocation9 + $0x60] sm:$0xff]
        %v477 = vld [vmem:[#allocation9 + $0x68] sm:$0xff]
        %v478 = vld [vmem:[#allocation9 + $0x70] sm:$0xff]
        %v479 = vld [vmem:[#allocation9 + $0x78] sm:$0xff]
        %v480 = vld [vmem:[#allocation3] sm:$0x1]
        %s481 = vtos %v480
        %v482 = vld [vmem:[%s414] sm:$0xff]
        %v483 = vld [vmem:[%s414 + $0x8] sm:$0xff]
        %v484 = vld [vmem:[%s414 + $0x10] sm:$0xff]
        %v485 = vld [vmem:[%s414 + $0x18] sm:$0xff]
        %v486 = vld [vmem:[%s414 + $0x20] sm:$0xff]
        %v487 = vld [vmem:[%s414 + $0x28] sm:$0xff]
        %v488 = vld [vmem:[%s414 + $0x30] sm:$0xff]
        %v489 = vld [vmem:[%s414 + $0x38] sm:$0xff]
        %v490 = vld [vmem:[%s414 + $0x40] sm:$0xff]
        %v491 = vld [vmem:[%s414 + $0x48] sm:$0xff]
        %v492 = vld [vmem:[%s414 + $0x50] sm:$0xff]
        %v493 = vld [vmem:[%s414 + $0x58] sm:$0xff]
        %v494 = vld [vmem:[%s414 + $0x60] sm:$0xff]
        %v495 = vld [vmem:[%s414 + $0x68] sm:$0xff]
        %v496 = vld [vmem:[%s414 + $0x70] sm:$0xff]
        %v497 = vld [vmem:[%s414 + $0x78] sm:$0xff]
        %v498 = vld [vmem:[%s414 + $0x80] sm:$0xff]
        %v499 = vld [vmem:[%s414 + $0x88] sm:$0xff]
        %v500 = vld [vmem:[%s414 + $0x90] sm:$0xff]
        %v501 = vld [vmem:[%s414 + $0x98] sm:$0xff]
        %v502 = vld [vmem:[%s414 + $0xa0] sm:$0xff]
        %v503 = vld [vmem:[%s414 + $0xa8] sm:$0xff]
        %v504 = vld [vmem:[%s414 + $0xb0] sm:$0xff]
        %v505 = vld [vmem:[%s414 + $0xb8] sm:$0xff]
        %v506 = vld [vmem:[%s414 + $0xc0] sm:$0xff]
        %v507 = vld [vmem:[%s414 + $0xc8] sm:$0xff]
        %v508 = vld [vmem:[%s414 + $0xd0] sm:$0xff]
        %v509 = vld [vmem:[%s414 + $0xd8] sm:$0xff]
        %v510 = vld [vmem:[%s414 + $0xe0] sm:$0xff]
        %v511 = vld [vmem:[%s414 + $0xe8] sm:$0xff]
        %v512 = vld [vmem:[%s414 + $0xf0] sm:$0xff]
        %v513 = vld [vmem:[%s414 + $0xf8] sm:$0xff]
        %v514 = vpack.c.bf16 %v483, %v482
        %v515 = vpack.c.bf16 %v485, %v484
        %v516 = vpack.c.bf16 %v487, %v486
        %v517 = vpack.c.bf16 %v489, %v488
        %v518 = vpack.c.bf16 %v491, %v490
        %v519 = vpack.c.bf16 %v493, %v492
        %v520 = vpack.c.bf16 %v495, %v494
        %v521 = vpack.c.bf16 %v497, %v496
        %v522 = vpack.c.bf16 %v499, %v498
        %v523 = vpack.c.bf16 %v501, %v500
        %v524 = vpack.c.bf16 %v503, %v502
        %v525 = vpack.c.bf16 %v505, %v504
        %v526 = vpack.c.bf16 %v507, %v506
        %v527 = vpack.c.bf16 %v509, %v508
        %v528 = vpack.c.bf16 %v511, %v510
        %v529 = vpack.c.bf16 %v513, %v512
        %v530 = vld [vmem:[%s1] sm:$0xf]
        %v531 = vld [vmem:[%s1 + $0x4] sm:$0xf]
        %v532 = vld [vmem:[%s1 + $0x8] sm:$0xf]
        %v533 = vld [vmem:[%s1 + $0xc] sm:$0xf]
        %v534 = vld [vmem:[%s1 + $0x10] sm:$0xf]
        %v535 = vld [vmem:[%s1 + $0x14] sm:$0xf]
        %v536 = vld [vmem:[%s1 + $0x18] sm:$0xf]
        %v537 = vld [vmem:[%s1 + $0x1c] sm:$0xf]
        %v538 = vld [vmem:[%s1 + $0x20] sm:$0xf]
        %v539 = vld [vmem:[%s1 + $0x24] sm:$0xf]
        %v540 = vld [vmem:[%s1 + $0x28] sm:$0xf]
        %v541 = vld [vmem:[%s1 + $0x2c] sm:$0xf]
        %v542 = vld [vmem:[%s1 + $0x30] sm:$0xf]
        %v543 = vld [vmem:[%s1 + $0x34] sm:$0xf]
        %v544 = vld [vmem:[%s1 + $0x38] sm:$0xf]
        %v545 = vld [vmem:[%s1 + $0x3c] sm:$0xf]
        %v562 = vunpack.c.l.b16 %v530
        %v563 = vunpack.c.l.b16 %v531
        %v564 = vunpack.c.l.b16 %v532
        %v565 = vunpack.c.l.b16 %v533
        %v566 = vunpack.c.l.b16 %v534
        %v567 = vunpack.c.l.b16 %v535
        %v568 = vunpack.c.l.b16 %v536
        %v569 = vunpack.c.l.b16 %v537
        %v570 = vunpack.c.l.b16 %v538
        %v571 = vunpack.c.l.b16 %v539
        %v572 = vunpack.c.l.b16 %v540
        %v573 = vunpack.c.l.b16 %v541
        %v574 = vunpack.c.l.b16 %v542
        %v575 = vunpack.c.l.b16 %v543
        %v576 = vunpack.c.l.b16 %v544
        %v577 = vunpack.c.l.b16 %v545
        %v578 = vpack.c.b16 %v563, %v562
        %v579 = vpack.c.b16 %v565, %v564
        %v580 = vpack.c.b16 %v567, %v566
        %v581 = vpack.c.b16 %v569, %v568
        %v582 = vpack.c.b16 %v571, %v570
        %v583 = vpack.c.b16 %v573, %v572
        %v584 = vpack.c.b16 %v575, %v574
        %v585 = vpack.c.b16 %v577, %v576
        %594 = vmatprep.subr.bf16.mxu0 0
        %595 = vmatpush1.bf16.msra.mxu0 %v585
        %596 = vmatprep.subr.bf16.mxu0 0
        %597 = vmatpush1.bf16.msra.mxu0 %v584
        %598 = vmatprep.subr.bf16.mxu0 0
        %599 = vmatpush1.bf16.msra.mxu0 %v583
        %600 = vmatprep.subr.bf16.mxu0 0
        %601 = vmatpush1.bf16.msra.mxu0 %v582
        %602 = vmatprep.subr.bf16.mxu0 0
        %603 = vmatpush1.bf16.msra.mxu0 %v581
        %604 = vmatprep.subr.bf16.mxu0 0
        %605 = vmatpush1.bf16.msra.mxu0 %v580
        %606 = vmatprep.subr.bf16.mxu0 0
        %607 = vmatpush1.bf16.msra.mxu0 %v579
        %608 = vmatprep.subr.bf16.mxu0 0
        %609 = vmatpush1.bf16.msra.mxu0 %v578
        %610 = vmatprep.subr.bf16.mxu0 0
        %611 = vmatpush2.bf16.msra.mxu0 0
        %612 = vmatprep.subr.bf16.mxu0 0
        %613 = vmatpush2.bf16.msra.mxu0 0
        %614 = vmatprep.subr.bf16.mxu0 0
        %615 = vmatpush2.bf16.msra.mxu0 0
        %616 = vmatprep.subr.bf16.mxu0 0
        %617 = vmatpush2.bf16.msra.mxu0 0
        %618 = vmatprep.subr.bf16.mxu0 0
        %619 = vmatpush2.bf16.msra.mxu0 0
        %620 = vmatprep.subr.bf16.mxu0 0
        %621 = vmatpush2.bf16.msra.mxu0 0
        %622 = vmatprep.subr.bf16.mxu0 0
        %623 = vmatpush2.bf16.msra.mxu0 0
        %624 = vmatprep.subr.bf16.mxu0 0
        %625 = vmatpush2.bf16.msra.mxu0 0
        %626 = vmatprep.mubr.bf16.mxu0 0
        %627 = vmatmul.mubr.bf16.gmra.mxu0 %v514
        %v628 = vpop.f32.mrf.mxu0
        %v629 = vadd.f32 0.0, %v628
        %v630 = vpop.f32.mrf.mxu0
        %v631 = vpop.f32.mrf.mxu0
        %v632 = vadd.f32 0.0, %v631
        %v633 = vpop.f32.mrf.mxu0
        %634 = vmatprep.mubr.bf16.mxu0 0
        %635 = vmatmul.mubr.bf16.gmra.mxu0 %v515
        %v636 = vpop.f32.mrf.mxu0
        %v637 = vadd.f32 0.0, %v636
        %v638 = vpop.f32.mrf.mxu0
        %v639 = vpop.f32.mrf.mxu0
        %v640 = vadd.f32 0.0, %v639
        %v641 = vpop.f32.mrf.mxu0
        %642 = vmatprep.mubr.bf16.mxu0 0
        %643 = vmatmul.mubr.bf16.gmra.mxu0 %v516
        %v644 = vpop.f32.mrf.mxu0
        %v645 = vadd.f32 0.0, %v644
        %v646 = vpop.f32.mrf.mxu0
        %v647 = vpop.f32.mrf.mxu0
        %v648 = vadd.f32 0.0, %v647
        %v649 = vpop.f32.mrf.mxu0
        %650 = vmatprep.mubr.bf16.mxu0 0
        %651 = vmatmul.mubr.bf16.gmra.mxu0 %v517
        %v652 = vpop.f32.mrf.mxu0
        %v653 = vadd.f32 0.0, %v652
        %v654 = vpop.f32.mrf.mxu0
        %v655 = vpop.f32.mrf.mxu0
        %v656 = vadd.f32 0.0, %v655
        %v657 = vpop.f32.mrf.mxu0
        %658 = vmatprep.mubr.bf16.mxu0 0
        %659 = vmatmul.mubr.bf16.gmra.mxu0 %v518
        %v660 = vpop.f32.mrf.mxu0
        %v661 = vadd.f32 0.0, %v660
        %v662 = vpop.f32.mrf.mxu0
        %v663 = vpop.f32.mrf.mxu0
        %v664 = vadd.f32 0.0, %v663
        %v665 = vpop.f32.mrf.mxu0
        %666 = vmatprep.mubr.bf16.mxu0 0
        %667 = vmatmul.mubr.bf16.gmra.mxu0 %v519
        %v668 = vpop.f32.mrf.mxu0
        %v669 = vadd.f32 0.0, %v668
        %v670 = vpop.f32.mrf.mxu0
        %v671 = vpop.f32.mrf.mxu0
        %v672 = vadd.f32 0.0, %v671
        %v673 = vpop.f32.mrf.mxu0
        %674 = vmatprep.mubr.bf16.mxu0 0
        %675 = vmatmul.mubr.bf16.gmra.mxu0 %v520
        %v676 = vpop.f32.mrf.mxu0
        %v677 = vadd.f32 0.0, %v676
        %v678 = vpop.f32.mrf.mxu0
        %v679 = vpop.f32.mrf.mxu0
        %v680 = vadd.f32 0.0, %v679
        %v681 = vpop.f32.mrf.mxu0
        %682 = vmatprep.mubr.bf16.mxu0 0
        %683 = vmatmul.mubr.bf16.gmra.mxu0 %v521
        %v684 = vpop.f32.mrf.mxu0
        %v685 = vadd.f32 0.0, %v684
        %v686 = vpop.f32.mrf.mxu0
        %v687 = vpop.f32.mrf.mxu0
        %v688 = vadd.f32 0.0, %v687
        %v689 = vpop.f32.mrf.mxu0
        %690 = vmatprep.mubr.bf16.mxu0 0
        %691 = vmatmul.mubr.bf16.gmra.mxu0 %v522
        %v692 = vpop.f32.mrf.mxu0
        %v693 = vadd.f32 0.0, %v692
        %v694 = vpop.f32.mrf.mxu0
        %v695 = vpop.f32.mrf.mxu0
        %v696 = vadd.f32 0.0, %v695
        %v697 = vpop.f32.mrf.mxu0
        %698 = vmatprep.mubr.bf16.mxu0 0
        %699 = vmatmul.mubr.bf16.gmra.mxu0 %v523
        %v700 = vpop.f32.mrf.mxu0
        %v701 = vadd.f32 0.0, %v700
        %v702 = vpop.f32.mrf.mxu0
        %v703 = vpop.f32.mrf.mxu0
        %v704 = vadd.f32 0.0, %v703
        %v705 = vpop.f32.mrf.mxu0
        %706 = vmatprep.mubr.bf16.mxu0 0
        %707 = vmatmul.mubr.bf16.gmra.mxu0 %v524
        %v708 = vpop.f32.mrf.mxu0
        %v709 = vadd.f32 0.0, %v708
        %v710 = vpop.f32.mrf.mxu0
        %v711 = vpop.f32.mrf.mxu0
        %v712 = vadd.f32 0.0, %v711
        %v713 = vpop.f32.mrf.mxu0
        %714 = vmatprep.mubr.bf16.mxu0 0
        %715 = vmatmul.mubr.bf16.gmra.mxu0 %v525
        %v716 = vpop.f32.mrf.mxu0
        %v717 = vadd.f32 0.0, %v716
        %v718 = vpop.f32.mrf.mxu0
        %v719 = vpop.f32.mrf.mxu0
        %v720 = vadd.f32 0.0, %v719
        %v721 = vpop.f32.mrf.mxu0
        %722 = vmatprep.mubr.bf16.mxu0 0
        %723 = vmatmul.mubr.bf16.gmra.mxu0 %v526
        %v724 = vpop.f32.mrf.mxu0
        %v725 = vadd.f32 0.0, %v724
        %v726 = vpop.f32.mrf.mxu0
        %v727 = vpop.f32.mrf.mxu0
        %v728 = vadd.f32 0.0, %v727
        %v729 = vpop.f32.mrf.mxu0
        %730 = vmatprep.mubr.bf16.mxu0 0
        %731 = vmatmul.mubr.bf16.gmra.mxu0 %v527
        %v732 = vpop.f32.mrf.mxu0
        %v733 = vadd.f32 0.0, %v732
        %v734 = vpop.f32.mrf.mxu0
        %v735 = vpop.f32.mrf.mxu0
        %v736 = vadd.f32 0.0, %v735
        %v737 = vpop.f32.mrf.mxu0
        %738 = vmatprep.mubr.bf16.mxu0 0
        %739 = vmatmul.mubr.bf16.gmra.mxu0 %v528
        %v740 = vpop.f32.mrf.mxu0
        %v741 = vadd.f32 0.0, %v740
        %v742 = vpop.f32.mrf.mxu0
        %v743 = vpop.f32.mrf.mxu0
        %v744 = vadd.f32 0.0, %v743
        %v745 = vpop.f32.mrf.mxu0
        %746 = vmatprep.mubr.bf16.mxu0 0
        %747 = vmatmul.mubr.bf16.gmra.mxu0 %v529
        %v748 = vpop.f32.mrf.mxu0
        %v749 = vadd.f32 0.0, %v748
        %v750 = vpop.f32.mrf.mxu0
        %v751 = vpop.f32.mrf.mxu0
        %v752 = vadd.f32 0.0, %v751
        %v753 = vpop.f32.mrf.mxu0
        %754 = vdwg.mxu0
        %v755 = vld [vmem:[%s4] sm:$0x1]
        %v756 = vld [vmem:[%s5] sm:$0x1]
        %vm757 = vcmask 261120
        %v758 = vsel %vm757, %v629, 0.0
        %v759 = vsel %vm757, %v632, 0.0
        %v760 = vadd.f32 %v758, %v759
        %v761 = vsel %vm757, %v637, 0.0
        %v762 = vadd.f32 %v760, %v761
        %v763 = vsel %vm757, %v640, 0.0
        %v764 = vadd.f32 %v762, %v763
        %v765 = vsel %vm757, %v645, 0.0
        %v766 = vadd.f32 %v764, %v765
        %v767 = vsel %vm757, %v648, 0.0
        %v768 = vadd.f32 %v766, %v767
        %v769 = vsel %vm757, %v653, 0.0
        %v770 = vadd.f32 %v768, %v769
        %v771 = vsel %vm757, %v656, 0.0
        %v772 = vadd.f32 %v770, %v771
        %v773 = vsel %vm757, %v661, 0.0
        %v774 = vadd.f32 %v772, %v773
        %v775 = vsel %vm757, %v664, 0.0
        %v776 = vadd.f32 %v774, %v775
        %v777 = vsel %vm757, %v669, 0.0
        %v778 = vadd.f32 %v776, %v777
        %v779 = vsel %vm757, %v672, 0.0
        %v780 = vadd.f32 %v778, %v779
        %v781 = vsel %vm757, %v677, 0.0
        %v782 = vadd.f32 %v780, %v781
        %v783 = vsel %vm757, %v680, 0.0
        %v784 = vadd.f32 %v782, %v783
        %v785 = vsel %vm757, %v685, 0.0
        %v786 = vadd.f32 %v784, %v785
        %v787 = vsel %vm757, %v688, 0.0
        %v788 = vadd.f32 %v786, %v787
        %v789 = vsel %vm757, %v693, 0.0
        %v790 = vadd.f32 %v788, %v789
        %v791 = vsel %vm757, %v696, 0.0
        %v792 = vadd.f32 %v790, %v791
        %v793 = vsel %vm757, %v701, 0.0
        %v794 = vadd.f32 %v792, %v793
        %v795 = vsel %vm757, %v704, 0.0
        %v796 = vadd.f32 %v794, %v795
        %v797 = vsel %vm757, %v709, 0.0
        %v798 = vadd.f32 %v796, %v797
        %v799 = vsel %vm757, %v712, 0.0
        %v800 = vadd.f32 %v798, %v799
        %v801 = vsel %vm757, %v717, 0.0
        %v802 = vadd.f32 %v800, %v801
        %v803 = vsel %vm757, %v720, 0.0
        %v804 = vadd.f32 %v802, %v803
        %v805 = vsel %vm757, %v725, 0.0
        %v806 = vadd.f32 %v804, %v805
        %v807 = vsel %vm757, %v728, 0.0
        %v808 = vadd.f32 %v806, %v807
        %v809 = vsel %vm757, %v733, 0.0
        %v810 = vadd.f32 %v808, %v809
        %v811 = vsel %vm757, %v736, 0.0
        %v812 = vadd.f32 %v810, %v811
        %v813 = vsel %vm757, %v741, 0.0
        %v814 = vadd.f32 %v812, %v813
        %v815 = vsel %vm757, %v744, 0.0
        %v816 = vadd.f32 %v814, %v815
        %v817 = vsel %vm757, %v749, 0.0
        %v818 = vadd.f32 %v816, %v817
        %v819 = vsel %vm757, %v752, 0.0
        %v820 = vadd.f32 %v818, %v819
        %v821 = vrot.slane %v820, 4
        %v822 = vadd.f32 %v820, %v821
        %v823 = vrot.slane %v822, 2
        %v824 = vadd.f32 %v822, %v823
        %v825 = vrot.slane %v824, 1
        %v826 = vadd.f32 %v824, %v825
        %v827 = vmul.f32 %v826, 0.00390625
        %v828 = vsub.f32 %v629, %v827
        %v829 = vsub.f32 %v632, %v827
        %v830 = vsub.f32 %v637, %v827
        %v831 = vsub.f32 %v640, %v827
        %v832 = vsub.f32 %v645, %v827
        %v833 = vsub.f32 %v648, %v827
        %v834 = vsub.f32 %v653, %v827
        %v835 = vsub.f32 %v656, %v827
        %v836 = vsub.f32 %v661, %v827
        %v837 = vsub.f32 %v664, %v827
        %v838 = vsub.f32 %v669, %v827
        %v839 = vsub.f32 %v672, %v827
        %v840 = vsub.f32 %v677, %v827
        %v841 = vsub.f32 %v680, %v827
        %v842 = vsub.f32 %v685, %v827
        %v843 = vsub.f32 %v688, %v827
        %v844 = vsub.f32 %v693, %v827
        %v845 = vsub.f32 %v696, %v827
        %v846 = vsub.f32 %v701, %v827
        %v847 = vsub.f32 %v704, %v827
        %v848 = vsub.f32 %v709, %v827
        %v849 = vsub.f32 %v712, %v827
        %v850 = vsub.f32 %v717, %v827
        %v851 = vsub.f32 %v720, %v827
        %v852 = vsub.f32 %v725, %v827
        %v853 = vsub.f32 %v728, %v827
        %v854 = vsub.f32 %v733, %v827
        %v855 = vsub.f32 %v736, %v827
        %v856 = vsub.f32 %v741, %v827
        %v857 = vsub.f32 %v744, %v827
        %v858 = vsub.f32 %v749, %v827
        %v859 = vsub.f32 %v752, %v827
        %v860 = vmul.f32 %v828, %v828
        %v861 = vmul.f32 %v829, %v829
        %v862 = vmul.f32 %v830, %v830
        %v863 = vmul.f32 %v831, %v831
        %v864 = vmul.f32 %v832, %v832
        %v865 = vmul.f32 %v833, %v833
        %v866 = vmul.f32 %v834, %v834
        %v867 = vmul.f32 %v835, %v835
        %v868 = vmul.f32 %v836, %v836
        %v869 = vmul.f32 %v837, %v837
        %v870 = vmul.f32 %v838, %v838
        %v871 = vmul.f32 %v839, %v839
        %v872 = vmul.f32 %v840, %v840
        %v873 = vmul.f32 %v841, %v841
        %v874 = vmul.f32 %v842, %v842
        %v875 = vmul.f32 %v843, %v843
        %v876 = vmul.f32 %v844, %v844
        %v877 = vmul.f32 %v845, %v845
        %v878 = vmul.f32 %v846, %v846
        %v879 = vmul.f32 %v847, %v847
        %v880 = vmul.f32 %v848, %v848
        %v881 = vmul.f32 %v849, %v849
        %v882 = vmul.f32 %v850, %v850
        %v883 = vmul.f32 %v851, %v851
        %v884 = vmul.f32 %v852, %v852
        %v885 = vmul.f32 %v853, %v853
        %v886 = vmul.f32 %v854, %v854
        %v887 = vmul.f32 %v855, %v855
        %v888 = vmul.f32 %v856, %v856
        %v889 = vmul.f32 %v857, %v857
        %v890 = vmul.f32 %v858, %v858
        %v891 = vmul.f32 %v859, %v859
        %v892 = vsel %vm757, %v860, 0.0
        %v893 = vsel %vm757, %v861, 0.0
        %v894 = vadd.f32 %v892, %v893
        %v895 = vsel %vm757, %v862, 0.0
        %v896 = vadd.f32 %v894, %v895
        %v897 = vsel %vm757, %v863, 0.0
        %v898 = vadd.f32 %v896, %v897
        %v899 = vsel %vm757, %v864, 0.0
        %v900 = vadd.f32 %v898, %v899
        %v901 = vsel %vm757, %v865, 0.0
        %v902 = vadd.f32 %v900, %v901
        %v903 = vsel %vm757, %v866, 0.0
        %v904 = vadd.f32 %v902, %v903
        %v905 = vsel %vm757, %v867, 0.0
        %v906 = vadd.f32 %v904, %v905
        %v907 = vsel %vm757, %v868, 0.0
        %v908 = vadd.f32 %v906, %v907
        %v909 = vsel %vm757, %v869, 0.0
        %v910 = vadd.f32 %v908, %v909
        %v911 = vsel %vm757, %v870, 0.0
        %v912 = vadd.f32 %v910, %v911
        %v913 = vsel %vm757, %v871, 0.0
        %v914 = vadd.f32 %v912, %v913
        %v915 = vsel %vm757, %v872, 0.0
        %v916 = vadd.f32 %v914, %v915
        %v917 = vsel %vm757, %v873, 0.0
        %v918 = vadd.f32 %v916, %v917
        %v919 = vsel %vm757, %v874, 0.0
        %v920 = vadd.f32 %v918, %v919
        %v921 = vsel %vm757, %v875, 0.0
        %v922 = vadd.f32 %v920, %v921
        %v923 = vsel %vm757, %v876, 0.0
        %v924 = vadd.f32 %v922, %v923
        %v925 = vsel %vm757, %v877, 0.0
        %v926 = vadd.f32 %v924, %v925
        %v927 = vsel %vm757, %v878, 0.0
        %v928 = vadd.f32 %v926, %v927
        %v929 = vsel %vm757, %v879, 0.0
        %v930 = vadd.f32 %v928, %v929
        %v931 = vsel %vm757, %v880, 0.0
        %v932 = vadd.f32 %v930, %v931
        %v933 = vsel %vm757, %v881, 0.0
        %v934 = vadd.f32 %v932, %v933
        %v935 = vsel %vm757, %v882, 0.0
        %v936 = vadd.f32 %v934, %v935
        %v937 = vsel %vm757, %v883, 0.0
        %v938 = vadd.f32 %v936, %v937
        %v939 = vsel %vm757, %v884, 0.0
        %v940 = vadd.f32 %v938, %v939
        %v941 = vsel %vm757, %v885, 0.0
        %v942 = vadd.f32 %v940, %v941
        %v943 = vsel %vm757, %v886, 0.0
        %v944 = vadd.f32 %v942, %v943
        %v945 = vsel %vm757, %v887, 0.0
        %v946 = vadd.f32 %v944, %v945
        %v947 = vsel %vm757, %v888, 0.0
        %v948 = vadd.f32 %v946, %v947
        %v949 = vsel %vm757, %v889, 0.0
        %v950 = vadd.f32 %v948, %v949
        %v951 = vsel %vm757, %v890, 0.0
        %v952 = vadd.f32 %v950, %v951
        %v953 = vsel %vm757, %v891, 0.0
        %v954 = vadd.f32 %v952, %v953
        %v955 = vrot.slane %v954, 4
        %v956 = vadd.f32 %v954, %v955
        %v957 = vrot.slane %v956, 2
        %v958 = vadd.f32 %v956, %v957
        %v959 = vrot.slane %v958, 1
        %v960 = vadd.f32 %v958, %v959
        %v961 = vmul.f32 %v960, 0.00390625
        %v962 = vadd.f32 %v961, 1e-05
        %v963 = vrsqrt.pop %v962
        %v964 = vmul.f32 %v828, %v963
        %v965 = vmul.f32 %v829, %v963
        %v966 = vmul.f32 %v830, %v963
        %v967 = vmul.f32 %v831, %v963
        %v968 = vmul.f32 %v832, %v963
        %v969 = vmul.f32 %v833, %v963
        %v970 = vmul.f32 %v834, %v963
        %v971 = vmul.f32 %v835, %v963
        %v972 = vmul.f32 %v836, %v963
        %v973 = vmul.f32 %v837, %v963
        %v974 = vmul.f32 %v838, %v963
        %v975 = vmul.f32 %v839, %v963
        %v976 = vmul.f32 %v840, %v963
        %v977 = vmul.f32 %v841, %v963
        %v978 = vmul.f32 %v842, %v963
        %v979 = vmul.f32 %v843, %v963
        %v980 = vmul.f32 %v844, %v963
        %v981 = vmul.f32 %v845, %v963
        %v982 = vmul.f32 %v846, %v963
        %v983 = vmul.f32 %v847, %v963
        %v984 = vmul.f32 %v848, %v963
        %v985 = vmul.f32 %v849, %v963
        %v986 = vmul.f32 %v850, %v963
        %v987 = vmul.f32 %v851, %v963
        %v988 = vmul.f32 %v852, %v963
        %v989 = vmul.f32 %v853, %v963
        %v990 = vmul.f32 %v854, %v963
        %v991 = vmul.f32 %v855, %v963
        %v992 = vmul.f32 %v856, %v963
        %v993 = vmul.f32 %v857, %v963
        %v994 = vmul.f32 %v858, %v963
        %v995 = vmul.f32 %v859, %v963
        %v997 = vlaneseq
        %v998 = vshrl.u32 %v997, 7
        %v999 = vsub.s32 0, %v998
        %v1000 = vrot.slane %v755, %v999
        %v1002 = vmul.f32 %v964, %v1000
        %v1003 = vmul.f32 %v965, %v1000
        %v1004 = vmul.f32 %v966, %v1000
        %v1005 = vmul.f32 %v967, %v1000
        %v1006 = vmul.f32 %v968, %v1000
        %v1007 = vmul.f32 %v969, %v1000
        %v1008 = vmul.f32 %v970, %v1000
        %v1009 = vmul.f32 %v971, %v1000
        %v1010 = vmul.f32 %v972, %v1000
        %v1011 = vmul.f32 %v973, %v1000
        %v1012 = vmul.f32 %v974, %v1000
        %v1013 = vmul.f32 %v975, %v1000
        %v1014 = vmul.f32 %v976, %v1000
        %v1015 = vmul.f32 %v977, %v1000
        %v1016 = vmul.f32 %v978, %v1000
        %v1017 = vmul.f32 %v979, %v1000
        %v1018 = vmul.f32 %v980, %v1000
        %v1019 = vmul.f32 %v981, %v1000
        %v1020 = vmul.f32 %v982, %v1000
        %v1021 = vmul.f32 %v983, %v1000
        %v1022 = vmul.f32 %v984, %v1000
        %v1023 = vmul.f32 %v985, %v1000
        %v1024 = vmul.f32 %v986, %v1000
        %v1025 = vmul.f32 %v987, %v1000
        %v1026 = vmul.f32 %v988, %v1000
        %v1027 = vmul.f32 %v989, %v1000
        %v1028 = vmul.f32 %v990, %v1000
        %v1029 = vmul.f32 %v991, %v1000
        %v1030 = vmul.f32 %v992, %v1000
        %v1031 = vmul.f32 %v993, %v1000
        %v1032 = vmul.f32 %v994, %v1000
        %v1033 = vmul.f32 %v995, %v1000
        %v1035 = vlaneseq
        %v1036 = vshrl.u32 %v1035, 7
        %v1037 = vsub.s32 0, %v1036
        %v1038 = vrot.slane %v756, %v1037
        %v1040 = vadd.f32 %v1002, %v1038
        %v1041 = vadd.f32 %v1003, %v1038
        %v1042 = vadd.f32 %v1004, %v1038
        %v1043 = vadd.f32 %v1005, %v1038
        %v1044 = vadd.f32 %v1006, %v1038
        %v1045 = vadd.f32 %v1007, %v1038
        %v1046 = vadd.f32 %v1008, %v1038
        %v1047 = vadd.f32 %v1009, %v1038
        %v1048 = vadd.f32 %v1010, %v1038
        %v1049 = vadd.f32 %v1011, %v1038
        %v1050 = vadd.f32 %v1012, %v1038
        %v1051 = vadd.f32 %v1013, %v1038
        %v1052 = vadd.f32 %v1014, %v1038
        %v1053 = vadd.f32 %v1015, %v1038
        %v1054 = vadd.f32 %v1016, %v1038
        %v1055 = vadd.f32 %v1017, %v1038
        %v1056 = vadd.f32 %v1018, %v1038
        %v1057 = vadd.f32 %v1019, %v1038
        %v1058 = vadd.f32 %v1020, %v1038
        %v1059 = vadd.f32 %v1021, %v1038
        %v1060 = vadd.f32 %v1022, %v1038
        %v1061 = vadd.f32 %v1023, %v1038
        %v1062 = vadd.f32 %v1024, %v1038
        %v1063 = vadd.f32 %v1025, %v1038
        %v1064 = vadd.f32 %v1026, %v1038
        %v1065 = vadd.f32 %v1027, %v1038
        %v1066 = vadd.f32 %v1028, %v1038
        %v1067 = vadd.f32 %v1029, %v1038
        %v1068 = vadd.f32 %v1030, %v1038
        %v1069 = vadd.f32 %v1031, %v1038
        %v1070 = vadd.f32 %v1032, %v1038
        %v1071 = vadd.f32 %v1033, %v1038
        %vm1072 = vcmp.gt.f32.partialorder %v1040, 0.0
        %vm1073 = vcmp.gt.f32.partialorder %v1041, 0.0
        %vm1074 = vcmp.gt.f32.partialorder %v1042, 0.0
        %vm1075 = vcmp.gt.f32.partialorder %v1043, 0.0
        %vm1076 = vcmp.gt.f32.partialorder %v1044, 0.0
        %vm1077 = vcmp.gt.f32.partialorder %v1045, 0.0
        %vm1078 = vcmp.gt.f32.partialorder %v1046, 0.0
        %vm1079 = vcmp.gt.f32.partialorder %v1047, 0.0
        %vm1080 = vcmp.gt.f32.partialorder %v1048, 0.0
        %vm1081 = vcmp.gt.f32.partialorder %v1049, 0.0
        %vm1082 = vcmp.gt.f32.partialorder %v1050, 0.0
        %vm1083 = vcmp.gt.f32.partialorder %v1051, 0.0
        %vm1084 = vcmp.gt.f32.partialorder %v1052, 0.0
        %vm1085 = vcmp.gt.f32.partialorder %v1053, 0.0
        %vm1086 = vcmp.gt.f32.partialorder %v1054, 0.0
        %vm1087 = vcmp.gt.f32.partialorder %v1055, 0.0
        %vm1088 = vcmp.gt.f32.partialorder %v1056, 0.0
        %vm1089 = vcmp.gt.f32.partialorder %v1057, 0.0
        %vm1090 = vcmp.gt.f32.partialorder %v1058, 0.0
        %vm1091 = vcmp.gt.f32.partialorder %v1059, 0.0
        %vm1092 = vcmp.gt.f32.partialorder %v1060, 0.0
        %vm1093 = vcmp.gt.f32.partialorder %v1061, 0.0
        %vm1094 = vcmp.gt.f32.partialorder %v1062, 0.0
        %vm1095 = vcmp.gt.f32.partialorder %v1063, 0.0
        %vm1096 = vcmp.gt.f32.partialorder %v1064, 0.0
        %vm1097 = vcmp.gt.f32.partialorder %v1065, 0.0
        %vm1098 = vcmp.gt.f32.partialorder %v1066, 0.0
        %vm1099 = vcmp.gt.f32.partialorder %v1067, 0.0
        %vm1100 = vcmp.gt.f32.partialorder %v1068, 0.0
        %vm1101 = vcmp.gt.f32.partialorder %v1069, 0.0
        %vm1102 = vcmp.gt.f32.partialorder %v1070, 0.0
        %vm1103 = vcmp.gt.f32.partialorder %v1071, 0.0
        %v1104 = vstv %s481
        %v1105 = vmul.f32 %v1104, %v1040
        %v1106 = vmul.f32 %v1104, %v1041
        %v1107 = vmul.f32 %v1104, %v1042
        %v1108 = vmul.f32 %v1104, %v1043
        %v1109 = vmul.f32 %v1104, %v1044
        %v1110 = vmul.f32 %v1104, %v1045
        %v1111 = vmul.f32 %v1104, %v1046
        %v1112 = vmul.f32 %v1104, %v1047
        %v1113 = vmul.f32 %v1104, %v1048
        %v1114 = vmul.f32 %v1104, %v1049
        %v1115 = vmul.f32 %v1104, %v1050
        %v1116 = vmul.f32 %v1104, %v1051
        %v1117 = vmul.f32 %v1104, %v1052
        %v1118 = vmul.f32 %v1104, %v1053
        %v1119 = vmul.f32 %v1104, %v1054
        %v1120 = vmul.f32 %v1104, %v1055
        %v1121 = vmul.f32 %v1104, %v1056
        %v1122 = vmul.f32 %v1104, %v1057
        %v1123 = vmul.f32 %v1104, %v1058
        %v1124 = vmul.f32 %v1104, %v1059
        %v1125 = vmul.f32 %v1104, %v1060
        %v1126 = vmul.f32 %v1104, %v1061
        %v1127 = vmul.f32 %v1104, %v1062
        %v1128 = vmul.f32 %v1104, %v1063
        %v1129 = vmul.f32 %v1104, %v1064
        %v1130 = vmul.f32 %v1104, %v1065
        %v1131 = vmul.f32 %v1104, %v1066
        %v1132 = vmul.f32 %v1104, %v1067
        %v1133 = vmul.f32 %v1104, %v1068
        %v1134 = vmul.f32 %v1104, %v1069
        %v1135 = vmul.f32 %v1104, %v1070
        %v1136 = vmul.f32 %v1104, %v1071
        %v1137 = vsel %vm1072, %v1040, %v1105
        %v1138 = vsel %vm1073, %v1041, %v1106
        %v1139 = vsel %vm1074, %v1042, %v1107
        %v1140 = vsel %vm1075, %v1043, %v1108
        %v1141 = vsel %vm1076, %v1044, %v1109
        %v1142 = vsel %vm1077, %v1045, %v1110
        %v1143 = vsel %vm1078, %v1046, %v1111
        %v1144 = vsel %vm1079, %v1047, %v1112
        %v1145 = vsel %vm1080, %v1048, %v1113
        %v1146 = vsel %vm1081, %v1049, %v1114
        %v1147 = vsel %vm1082, %v1050, %v1115
        %v1148 = vsel %vm1083, %v1051, %v1116
        %v1149 = vsel %vm1084, %v1052, %v1117
        %v1150 = vsel %vm1085, %v1053, %v1118
        %v1151 = vsel %vm1086, %v1054, %v1119
        %v1152 = vsel %vm1087, %v1055, %v1120
        %v1153 = vsel %vm1088, %v1056, %v1121
        %v1154 = vsel %vm1089, %v1057, %v1122
        %v1155 = vsel %vm1090, %v1058, %v1123
        %v1156 = vsel %vm1091, %v1059, %v1124
        %v1157 = vsel %vm1092, %v1060, %v1125
        %v1158 = vsel %vm1093, %v1061, %v1126
        %v1159 = vsel %vm1094, %v1062, %v1127
        %v1160 = vsel %vm1095, %v1063, %v1128
        %v1161 = vsel %vm1096, %v1064, %v1129
        %v1162 = vsel %vm1097, %v1065, %v1130
        %v1163 = vsel %vm1098, %v1066, %v1131
        %v1164 = vsel %vm1099, %v1067, %v1132
        %v1165 = vsel %vm1100, %v1068, %v1133
        %v1166 = vsel %vm1101, %v1069, %v1134
        %v1167 = vsel %vm1102, %v1070, %v1135
        %v1168 = vsel %vm1103, %v1071, %v1136
        %1169 = vst.msk [vmem:[#allocation2] sm:$0xff] %vm757, 0.0
        %vm1170 = vcmask 254976
        %1171 = vst.msk [vmem:[#allocation2 + $0x8] sm:$0x3] %vm1170, 0.0
        %1172 = vst.msk [vmem:[#allocation2 + $0x10] sm:$0xff] %vm757, 0.0
        %1173 = vst.msk [vmem:[#allocation2 + $0x18] sm:$0x3] %vm1170, 0.0
        %1174 = vst.msk [vmem:[#allocation2 + $0x20] sm:$0xff] %vm757, 0.0
        %1175 = vst.msk [vmem:[#allocation2 + $0x28] sm:$0x3] %vm1170, 0.0
        %1176 = vst.msk [vmem:[#allocation2 + $0x30] sm:$0xff] %vm757, 0.0
        %1177 = vst.msk [vmem:[#allocation2 + $0x38] sm:$0x3] %vm1170, 0.0
        %1178 = vst.msk [vmem:[#allocation2 + $0x40] sm:$0xff] %vm757, 0.0
        %1179 = vst.msk [vmem:[#allocation2 + $0x48] sm:$0x3] %vm1170, 0.0
        %1180 = vst.msk [vmem:[#allocation2 + $0x50] sm:$0xff] %vm757, 0.0
        %1181 = vst.msk [vmem:[#allocation2 + $0x58] sm:$0x3] %vm1170, 0.0
        %1182 = vst.msk [vmem:[#allocation2 + $0x60] sm:$0xff] %vm757, 0.0
        %1183 = vst.msk [vmem:[#allocation2 + $0x68] sm:$0x3] %vm1170, 0.0
        %1184 = vst.msk [vmem:[#allocation2 + $0x70] sm:$0xff] %vm757, 0.0
        %1185 = vst.msk [vmem:[#allocation2 + $0x78] sm:$0x3] %vm1170, 0.0
        %1186 = vst.msk [vmem:[#allocation2 + $0x80] sm:$0xff] %vm757, 0.0
        %1187 = vst.msk [vmem:[#allocation2 + $0x88] sm:$0x3] %vm1170, 0.0
        %1188 = vst.msk [vmem:[#allocation2 + $0x90] sm:$0xff] %vm757, 0.0
        %1189 = vst.msk [vmem:[#allocation2 + $0x98] sm:$0x3] %vm1170, 0.0
        %s1190 = scalar_lea.vmem [#allocation2], 800
        %1191 = vst.msk [vmem:[%s1190] sm:$0xff] %vm757, 0.0
        %1192 = vst.msk [vmem:[%s1190 + $0x8] sm:$0x3] %vm1170, 0.0
        %1193 = vst.msk [vmem:[%s1190 + $0x10] sm:$0xff] %vm757, 0.0
        %1194 = vst.msk [vmem:[%s1190 + $0x18] sm:$0x3] %vm1170, 0.0
        %1195 = vst.msk [vmem:[%s1190 + $0x20] sm:$0xff] %vm757, 0.0
        %1196 = vst.msk [vmem:[%s1190 + $0x28] sm:$0x3] %vm1170, 0.0
        %1197 = vst.msk [vmem:[%s1190 + $0x30] sm:$0xff] %vm757, 0.0
        %1198 = vst.msk [vmem:[%s1190 + $0x38] sm:$0x3] %vm1170, 0.0
        %1199 = vst.msk [vmem:[%s1190 + $0x40] sm:$0xff] %vm757, 0.0
        %1200 = vst.msk [vmem:[%s1190 + $0x48] sm:$0x3] %vm1170, 0.0
        %1201 = vst.msk [vmem:[%s1190 + $0x50] sm:$0xff] %vm757, 0.0
        %1202 = vst.msk [vmem:[%s1190 + $0x58] sm:$0x3] %vm1170, 0.0
        %1203 = vst.msk [vmem:[%s1190 + $0x60] sm:$0xff] %vm757, 0.0
        %1204 = vst.msk [vmem:[%s1190 + $0x68] sm:$0x3] %vm1170, 0.0
        %1205 = vst.msk [vmem:[%s1190 + $0x70] sm:$0xff] %vm757, 0.0
        %1206 = vst.msk [vmem:[%s1190 + $0x78] sm:$0x3] %vm1170, 0.0
        %1207 = vst.msk [vmem:[%s1190 + $0x80] sm:$0xff] %vm757, 0.0
        %1208 = vst.msk [vmem:[%s1190 + $0x88] sm:$0x3] %vm1170, 0.0
        %1209 = vst.msk [vmem:[%s1190 + $0x90] sm:$0xff] %vm757, 0.0
        %1210 = vst.msk [vmem:[%s1190 + $0x98] sm:$0x3] %vm1170, 0.0
        %1211 = vst.msk [vmem:[#allocation2] sm:$0xff] %vm757, 0.0
        %1212 = vst.msk [vmem:[#allocation2 + $0x8] sm:$0x3] %vm1170, 0.0
        %1213 = vst.msk [vmem:[#allocation2 + $0xa0] sm:$0xff] %vm757, 0.0
        %1214 = vst.msk [vmem:[#allocation2 + $0xa8] sm:$0x3] %vm1170, 0.0
        %1215 = vst.msk [vmem:[#allocation2 + $0x140] sm:$0xff] %vm757, 0.0
        %1216 = vst.msk [vmem:[#allocation2 + $0x148] sm:$0x3] %vm1170, 0.0
        %1217 = vst.msk [vmem:[#allocation2 + $0x1e0] sm:$0xff] %vm757, 0.0
        %1218 = vst.msk [vmem:[#allocation2 + $0x1e8] sm:$0x3] %vm1170, 0.0
        %1219 = vst.msk [vmem:[#allocation2 + $0x280] sm:$0xff] %vm757, 0.0
        %1220 = vst.msk [vmem:[#allocation2 + $0x288] sm:$0x3] %vm1170, 0.0
        %1221 = vst.msk [vmem:[#allocation2 + $0x320] sm:$0xff] %vm757, 0.0
        %1222 = vst.msk [vmem:[#allocation2 + $0x328] sm:$0x3] %vm1170, 0.0
        %s1223 = scalar_lea.vmem [#allocation2], 144
        %1224 = vst.msk [vmem:[%s1223] sm:$0xff] %vm757, 0.0
        %1225 = vst.msk [vmem:[%s1223 + $0x8] sm:$0x3] %vm1170, 0.0
        %1226 = vst.msk [vmem:[%s1223 + $0xa0] sm:$0xff] %vm757, 0.0
        %1227 = vst.msk [vmem:[%s1223 + $0xa8] sm:$0x3] %vm1170, 0.0
        %1228 = vst.msk [vmem:[%s1223 + $0x140] sm:$0xff] %vm757, 0.0
        %1229 = vst.msk [vmem:[%s1223 + $0x148] sm:$0x3] %vm1170, 0.0
        %1230 = vst.msk [vmem:[%s1223 + $0x1e0] sm:$0xff] %vm757, 0.0
        %1231 = vst.msk [vmem:[%s1223 + $0x1e8] sm:$0x3] %vm1170, 0.0
        %1232 = vst.msk [vmem:[%s1223 + $0x280] sm:$0xff] %vm757, 0.0
        %1233 = vst.msk [vmem:[%s1223 + $0x288] sm:$0x3] %vm1170, 0.0
        %1234 = vst.msk [vmem:[%s1223 + $0x320] sm:$0xff] %vm757, 0.0
        %1235 = vst.msk [vmem:[%s1223 + $0x328] sm:$0x3] %vm1170, 0.0
        %vm1236 = vcmask 253952
        %1237 = vst.msk [vmem:[#allocation2] sm:$0x1] %vm1236, 0.0
        %1238 = vst.msk [vmem:[#allocation2 + $0x10] sm:$0x1] %vm1236, 0.0
        %1239 = vst.msk [vmem:[#allocation2 + $0x20] sm:$0x1] %vm1236, 0.0
        %1240 = vst.msk [vmem:[#allocation2 + $0x30] sm:$0x1] %vm1236, 0.0
        %1241 = vst.msk [vmem:[#allocation2 + $0x40] sm:$0x1] %vm1236, 0.0
        %1242 = vst.msk [vmem:[#allocation2 + $0x50] sm:$0x1] %vm1236, 0.0
        %1243 = vst.msk [vmem:[#allocation2 + $0x60] sm:$0x1] %vm1236, 0.0
        %1244 = vst.msk [vmem:[#allocation2 + $0x70] sm:$0x1] %vm1236, 0.0
        %1245 = vst.msk [vmem:[#allocation2 + $0x80] sm:$0x1] %vm1236, 0.0
        %1246 = vst.msk [vmem:[#allocation2 + $0x90] sm:$0x1] %vm1236, 0.0
        %1247 = vst.msk [vmem:[#allocation2 + $0xa0] sm:$0x1] %vm1236, 0.0
        %1248 = vst.msk [vmem:[#allocation2 + $0xb0] sm:$0x1] %vm1236, 0.0
        %1249 = vst.msk [vmem:[#allocation2 + $0xc0] sm:$0x1] %vm1236, 0.0
        %1250 = vst.msk [vmem:[#allocation2 + $0xd0] sm:$0x1] %vm1236, 0.0
        %1251 = vst.msk [vmem:[#allocation2 + $0xe0] sm:$0x1] %vm1236, 0.0
        %1252 = vst.msk [vmem:[#allocation2 + $0xf0] sm:$0x1] %vm1236, 0.0
        %1253 = vst.msk [vmem:[#allocation2 + $0x100] sm:$0x1] %vm1236, 0.0
        %1254 = vst.msk [vmem:[#allocation2 + $0x110] sm:$0x1] %vm1236, 0.0
        %1255 = vst.msk [vmem:[#allocation2 + $0x120] sm:$0x1] %vm1236, 0.0
        %1256 = vst.msk [vmem:[#allocation2 + $0x130] sm:$0x1] %vm1236, 0.0
        %1257 = vst.msk [vmem:[#allocation2 + $0x140] sm:$0x1] %vm1236, 0.0
        %1258 = vst.msk [vmem:[#allocation2 + $0x150] sm:$0x1] %vm1236, 0.0
        %1259 = vst.msk [vmem:[#allocation2 + $0x160] sm:$0x1] %vm1236, 0.0
        %1260 = vst.msk [vmem:[#allocation2 + $0x170] sm:$0x1] %vm1236, 0.0
        %1261 = vst.msk [vmem:[#allocation2 + $0x180] sm:$0x1] %vm1236, 0.0
        %1262 = vst.msk [vmem:[#allocation2 + $0x190] sm:$0x1] %vm1236, 0.0
        %1263 = vst.msk [vmem:[#allocation2 + $0x1a0] sm:$0x1] %vm1236, 0.0
        %1264 = vst.msk [vmem:[#allocation2 + $0x1b0] sm:$0x1] %vm1236, 0.0
        %1265 = vst.msk [vmem:[#allocation2 + $0x1c0] sm:$0x1] %vm1236, 0.0
        %1266 = vst.msk [vmem:[#allocation2 + $0x1d0] sm:$0x1] %vm1236, 0.0
        %1267 = vst.msk [vmem:[#allocation2 + $0x1e0] sm:$0x1] %vm1236, 0.0
        %1268 = vst.msk [vmem:[#allocation2 + $0x1f0] sm:$0x1] %vm1236, 0.0
        %1269 = vst.msk [vmem:[#allocation2 + $0x200] sm:$0x1] %vm1236, 0.0
        %1270 = vst.msk [vmem:[#allocation2 + $0x210] sm:$0x1] %vm1236, 0.0
        %1271 = vst.msk [vmem:[#allocation2 + $0x220] sm:$0x1] %vm1236, 0.0
        %1272 = vst.msk [vmem:[#allocation2 + $0x230] sm:$0x1] %vm1236, 0.0
        %1273 = vst.msk [vmem:[#allocation2 + $0x240] sm:$0x1] %vm1236, 0.0
        %1274 = vst.msk [vmem:[#allocation2 + $0x250] sm:$0x1] %vm1236, 0.0
        %1275 = vst.msk [vmem:[#allocation2 + $0x260] sm:$0x1] %vm1236, 0.0
        %1276 = vst.msk [vmem:[#allocation2 + $0x270] sm:$0x1] %vm1236, 0.0
        %1277 = vst.msk [vmem:[#allocation2 + $0x280] sm:$0x1] %vm1236, 0.0
        %1278 = vst.msk [vmem:[#allocation2 + $0x290] sm:$0x1] %vm1236, 0.0
        %1279 = vst.msk [vmem:[#allocation2 + $0x2a0] sm:$0x1] %vm1236, 0.0
        %1280 = vst.msk [vmem:[#allocation2 + $0x2b0] sm:$0x1] %vm1236, 0.0
        %1281 = vst.msk [vmem:[#allocation2 + $0x2c0] sm:$0x1] %vm1236, 0.0
        %1282 = vst.msk [vmem:[#allocation2 + $0x2d0] sm:$0x1] %vm1236, 0.0
        %1283 = vst.msk [vmem:[#allocation2 + $0x2e0] sm:$0x1] %vm1236, 0.0
        %1284 = vst.msk [vmem:[#allocation2 + $0x2f0] sm:$0x1] %vm1236, 0.0
        %1285 = vst.msk [vmem:[#allocation2 + $0x300] sm:$0x1] %vm1236, 0.0
        %1286 = vst.msk [vmem:[#allocation2 + $0x310] sm:$0x1] %vm1236, 0.0
        %1287 = vst.msk [vmem:[#allocation2 + $0x320] sm:$0x1] %vm1236, 0.0
        %1288 = vst.msk [vmem:[#allocation2 + $0x330] sm:$0x1] %vm1236, 0.0
        %1289 = vst.msk [vmem:[#allocation2 + $0x340] sm:$0x1] %vm1236, 0.0
        %1290 = vst.msk [vmem:[#allocation2 + $0x350] sm:$0x1] %vm1236, 0.0
        %1291 = vst.msk [vmem:[#allocation2 + $0x360] sm:$0x1] %vm1236, 0.0
        %1292 = vst.msk [vmem:[#allocation2 + $0x370] sm:$0x1] %vm1236, 0.0
        %1293 = vst.msk [vmem:[#allocation2 + $0x380] sm:$0x1] %vm1236, 0.0
        %1294 = vst.msk [vmem:[#allocation2 + $0x390] sm:$0x1] %vm1236, 0.0
        %1295 = vst.msk [vmem:[#allocation2 + $0x3a0] sm:$0x1] %vm1236, 0.0
        %1296 = vst.msk [vmem:[#allocation2 + $0x3b0] sm:$0x1] %vm1236, 0.0
        %1297 = vst.msk [vmem:[#allocation2 + $0x9] sm:$0x1] %vm1236, 0.0
        %1298 = vst.msk [vmem:[#allocation2 + $0x19] sm:$0x1] %vm1236, 0.0
        %1299 = vst.msk [vmem:[#allocation2 + $0x29] sm:$0x1] %vm1236, 0.0
        %1300 = vst.msk [vmem:[#allocation2 + $0x39] sm:$0x1] %vm1236, 0.0
        %1301 = vst.msk [vmem:[#allocation2 + $0x49] sm:$0x1] %vm1236, 0.0
        %1302 = vst.msk [vmem:[#allocation2 + $0x59] sm:$0x1] %vm1236, 0.0
        %1303 = vst.msk [vmem:[#allocation2 + $0x69] sm:$0x1] %vm1236, 0.0
        %1304 = vst.msk [vmem:[#allocation2 + $0x79] sm:$0x1] %vm1236, 0.0
        %1305 = vst.msk [vmem:[#allocation2 + $0x89] sm:$0x1] %vm1236, 0.0
        %1306 = vst.msk [vmem:[#allocation2 + $0x99] sm:$0x1] %vm1236, 0.0
        %1307 = vst.msk [vmem:[#allocation2 + $0xa9] sm:$0x1] %vm1236, 0.0
        %1308 = vst.msk [vmem:[#allocation2 + $0xb9] sm:$0x1] %vm1236, 0.0
        %1309 = vst.msk [vmem:[#allocation2 + $0xc9] sm:$0x1] %vm1236, 0.0
        %1310 = vst.msk [vmem:[#allocation2 + $0xd9] sm:$0x1] %vm1236, 0.0
        %1311 = vst.msk [vmem:[#allocation2 + $0xe9] sm:$0x1] %vm1236, 0.0
        %1312 = vst.msk [vmem:[#allocation2 + $0xf9] sm:$0x1] %vm1236, 0.0
        %1313 = vst.msk [vmem:[#allocation2 + $0x109] sm:$0x1] %vm1236, 0.0
        %1314 = vst.msk [vmem:[#allocation2 + $0x119] sm:$0x1] %vm1236, 0.0
        %1315 = vst.msk [vmem:[#allocation2 + $0x129] sm:$0x1] %vm1236, 0.0
        %1316 = vst.msk [vmem:[#allocation2 + $0x139] sm:$0x1] %vm1236, 0.0
        %1317 = vst.msk [vmem:[#allocation2 + $0x149] sm:$0x1] %vm1236, 0.0
        %1318 = vst.msk [vmem:[#allocation2 + $0x159] sm:$0x1] %vm1236, 0.0
        %1319 = vst.msk [vmem:[#allocation2 + $0x169] sm:$0x1] %vm1236, 0.0
        %1320 = vst.msk [vmem:[#allocation2 + $0x179] sm:$0x1] %vm1236, 0.0
        %1321 = vst.msk [vmem:[#allocation2 + $0x189] sm:$0x1] %vm1236, 0.0
        %1322 = vst.msk [vmem:[#allocation2 + $0x199] sm:$0x1] %vm1236, 0.0
        %1323 = vst.msk [vmem:[#allocation2 + $0x1a9] sm:$0x1] %vm1236, 0.0
        %1324 = vst.msk [vmem:[#allocation2 + $0x1b9] sm:$0x1] %vm1236, 0.0
        %1325 = vst.msk [vmem:[#allocation2 + $0x1c9] sm:$0x1] %vm1236, 0.0
        %1326 = vst.msk [vmem:[#allocation2 + $0x1d9] sm:$0x1] %vm1236, 0.0
        %1327 = vst.msk [vmem:[#allocation2 + $0x1e9] sm:$0x1] %vm1236, 0.0
        %1328 = vst.msk [vmem:[#allocation2 + $0x1f9] sm:$0x1] %vm1236, 0.0
        %1329 = vst.msk [vmem:[#allocation2 + $0x209] sm:$0x1] %vm1236, 0.0
        %1330 = vst.msk [vmem:[#allocation2 + $0x219] sm:$0x1] %vm1236, 0.0
        %1331 = vst.msk [vmem:[#allocation2 + $0x229] sm:$0x1] %vm1236, 0.0
        %1332 = vst.msk [vmem:[#allocation2 + $0x239] sm:$0x1] %vm1236, 0.0
        %1333 = vst.msk [vmem:[#allocation2 + $0x249] sm:$0x1] %vm1236, 0.0
        %1334 = vst.msk [vmem:[#allocation2 + $0x259] sm:$0x1] %vm1236, 0.0
        %1335 = vst.msk [vmem:[#allocation2 + $0x269] sm:$0x1] %vm1236, 0.0
        %1336 = vst.msk [vmem:[#allocation2 + $0x279] sm:$0x1] %vm1236, 0.0
        %1337 = vst.msk [vmem:[#allocation2 + $0x289] sm:$0x1] %vm1236, 0.0
        %1338 = vst.msk [vmem:[#allocation2 + $0x299] sm:$0x1] %vm1236, 0.0
        %1339 = vst.msk [vmem:[#allocation2 + $0x2a9] sm:$0x1] %vm1236, 0.0
        %1340 = vst.msk [vmem:[#allocation2 + $0x2b9] sm:$0x1] %vm1236, 0.0
        %1341 = vst.msk [vmem:[#allocation2 + $0x2c9] sm:$0x1] %vm1236, 0.0
        %1342 = vst.msk [vmem:[#allocation2 + $0x2d9] sm:$0x1] %vm1236, 0.0
        %1343 = vst.msk [vmem:[#allocation2 + $0x2e9] sm:$0x1] %vm1236, 0.0
        %1344 = vst.msk [vmem:[#allocation2 + $0x2f9] sm:$0x1] %vm1236, 0.0
        %1345 = vst.msk [vmem:[#allocation2 + $0x309] sm:$0x1] %vm1236, 0.0
        %1346 = vst.msk [vmem:[#allocation2 + $0x319] sm:$0x1] %vm1236, 0.0
        %1347 = vst.msk [vmem:[#allocation2 + $0x329] sm:$0x1] %vm1236, 0.0
        %1348 = vst.msk [vmem:[#allocation2 + $0x339] sm:$0x1] %vm1236, 0.0
        %1349 = vst.msk [vmem:[#allocation2 + $0x349] sm:$0x1] %vm1236, 0.0
        %1350 = vst.msk [vmem:[#allocation2 + $0x359] sm:$0x1] %vm1236, 0.0
        %1351 = vst.msk [vmem:[#allocation2 + $0x369] sm:$0x1] %vm1236, 0.0
        %1352 = vst.msk [vmem:[#allocation2 + $0x379] sm:$0x1] %vm1236, 0.0
        %1353 = vst.msk [vmem:[#allocation2 + $0x389] sm:$0x1] %vm1236, 0.0
        %1354 = vst.msk [vmem:[#allocation2 + $0x399] sm:$0x1] %vm1236, 0.0
        %1355 = vst.msk [vmem:[#allocation2 + $0x3a9] sm:$0x1] %vm1236, 0.0
        %1356 = vst.msk [vmem:[#allocation2 + $0x3b9] sm:$0x1] %vm1236, 0.0
        %s1357 = scalar_lea.vmem [#allocation2], 176
        %1358 = vst.msk [vmem:[%s1357 + $0x1] sm:$0xff] %vm757, %v1137
        %1359 = vst.msk [vmem:[%s1357 + $0x11] sm:$0xff] %vm757, %v1138
        %1360 = vst.msk [vmem:[%s1357 + $0x21] sm:$0xff] %vm757, %v1139
        %1361 = vst.msk [vmem:[%s1357 + $0x31] sm:$0xff] %vm757, %v1140
        %1362 = vst.msk [vmem:[%s1357 + $0x41] sm:$0xff] %vm757, %v1141
        %1363 = vst.msk [vmem:[%s1357 + $0x51] sm:$0xff] %vm757, %v1142
        %1364 = vst.msk [vmem:[%s1357 + $0x61] sm:$0xff] %vm757, %v1143
        %1365 = vst.msk [vmem:[%s1357 + $0x71] sm:$0xff] %vm757, %v1144
        %1366 = vst.msk [vmem:[%s1357 + $0xa1] sm:$0xff] %vm757, %v1145
        %1367 = vst.msk [vmem:[%s1357 + $0xb1] sm:$0xff] %vm757, %v1146
        %1368 = vst.msk [vmem:[%s1357 + $0xc1] sm:$0xff] %vm757, %v1147
        %1369 = vst.msk [vmem:[%s1357 + $0xd1] sm:$0xff] %vm757, %v1148
        %1370 = vst.msk [vmem:[%s1357 + $0xe1] sm:$0xff] %vm757, %v1149
        %1371 = vst.msk [vmem:[%s1357 + $0xf1] sm:$0xff] %vm757, %v1150
        %1372 = vst.msk [vmem:[%s1357 + $0x101] sm:$0xff] %vm757, %v1151
        %1373 = vst.msk [vmem:[%s1357 + $0x111] sm:$0xff] %vm757, %v1152
        %1374 = vst.msk [vmem:[%s1357 + $0x141] sm:$0xff] %vm757, %v1153
        %1375 = vst.msk [vmem:[%s1357 + $0x151] sm:$0xff] %vm757, %v1154
        %1376 = vst.msk [vmem:[%s1357 + $0x161] sm:$0xff] %vm757, %v1155
        %1377 = vst.msk [vmem:[%s1357 + $0x171] sm:$0xff] %vm757, %v1156
        %1378 = vst.msk [vmem:[%s1357 + $0x181] sm:$0xff] %vm757, %v1157
        %1379 = vst.msk [vmem:[%s1357 + $0x191] sm:$0xff] %vm757, %v1158
        %1380 = vst.msk [vmem:[%s1357 + $0x1a1] sm:$0xff] %vm757, %v1159
        %1381 = vst.msk [vmem:[%s1357 + $0x1b1] sm:$0xff] %vm757, %v1160
        %1382 = vst.msk [vmem:[%s1357 + $0x1e1] sm:$0xff] %vm757, %v1161
        %1383 = vst.msk [vmem:[%s1357 + $0x1f1] sm:$0xff] %vm757, %v1162
        %1384 = vst.msk [vmem:[%s1357 + $0x201] sm:$0xff] %vm757, %v1163
        %1385 = vst.msk [vmem:[%s1357 + $0x211] sm:$0xff] %vm757, %v1164
        %1386 = vst.msk [vmem:[%s1357 + $0x221] sm:$0xff] %vm757, %v1165
        %1387 = vst.msk [vmem:[%s1357 + $0x231] sm:$0xff] %vm757, %v1166
        %1388 = vst.msk [vmem:[%s1357 + $0x241] sm:$0xff] %vm757, %v1167
        %1389 = vst.msk [vmem:[%s1357 + $0x251] sm:$0xff] %vm757, %v1168
        %v1390 = vld [vmem:[#allocation2] sm:$0xff]
        %v1391 = vld [vmem:[#allocation2 + $0x10] sm:$0xff]
        %v1392 = vld [vmem:[#allocation2 + $0x20] sm:$0xff]
        %v1393 = vld [vmem:[#allocation2 + $0x30] sm:$0xff]
        %v1394 = vld [vmem:[#allocation2 + $0x40] sm:$0xff]
        %v1395 = vld [vmem:[#allocation2 + $0x50] sm:$0xff]
        %v1396 = vld [vmem:[#allocation2 + $0x60] sm:$0xff]
        %v1397 = vld [vmem:[#allocation2 + $0x70] sm:$0xff]
        %v1398 = vld [vmem:[#allocation2 + $0xa0] sm:$0xff]
        %v1399 = vld [vmem:[#allocation2 + $0xb0] sm:$0xff]
        %v1400 = vld [vmem:[#allocation2 + $0xc0] sm:$0xff]
        %v1401 = vld [vmem:[#allocation2 + $0xd0] sm:$0xff]
        %v1402 = vld [vmem:[#allocation2 + $0xe0] sm:$0xff]
        %v1403 = vld [vmem:[#allocation2 + $0xf0] sm:$0xff]
        %v1404 = vld [vmem:[#allocation2 + $0x100] sm:$0xff]
        %v1405 = vld [vmem:[#allocation2 + $0x110] sm:$0xff]
        %v1406 = vld [vmem:[#allocation2 + $0x140] sm:$0xff]
        %v1407 = vld [vmem:[#allocation2 + $0x150] sm:$0xff]
        %v1408 = vld [vmem:[#allocation2 + $0x160] sm:$0xff]
        %v1409 = vld [vmem:[#allocation2 + $0x170] sm:$0xff]
        %v1410 = vld [vmem:[#allocation2 + $0x180] sm:$0xff]
        %v1411 = vld [vmem:[#allocation2 + $0x190] sm:$0xff]
        %v1412 = vld [vmem:[#allocation2 + $0x1a0] sm:$0xff]
        %v1413 = vld [vmem:[#allocation2 + $0x1b0] sm:$0xff]
        %v1414 = vld [vmem:[#allocation2 + $0x1e0] sm:$0xff]
        %v1415 = vld [vmem:[#allocation2 + $0x1f0] sm:$0xff]
        %v1416 = vld [vmem:[#allocation2 + $0x200] sm:$0xff]
        %v1417 = vld [vmem:[#allocation2 + $0x210] sm:$0xff]
        %v1418 = vld [vmem:[#allocation2 + $0x220] sm:$0xff]
        %v1419 = vld [vmem:[#allocation2 + $0x230] sm:$0xff]
        %v1420 = vld [vmem:[#allocation2 + $0x240] sm:$0xff]
        %v1421 = vld [vmem:[#allocation2 + $0x250] sm:$0xff]
        %v1422 = vpack.c.bf16 %v1391, %v1390
        %v1423 = vpack.c.bf16 %v1393, %v1392
        %v1424 = vpack.c.bf16 %v1395, %v1394
        %v1425 = vpack.c.bf16 %v1397, %v1396
        %v1426 = vpack.c.bf16 %v1399, %v1398
        %v1427 = vpack.c.bf16 %v1401, %v1400
        %v1428 = vpack.c.bf16 %v1403, %v1402
        %v1429 = vpack.c.bf16 %v1405, %v1404
        %v1430 = vpack.c.bf16 %v1407, %v1406
        %v1431 = vpack.c.bf16 %v1409, %v1408
        %v1432 = vpack.c.bf16 %v1411, %v1410
        %v1433 = vpack.c.bf16 %v1413, %v1412
        %v1434 = vpack.c.bf16 %v1415, %v1414
        %v1435 = vpack.c.bf16 %v1417, %v1416
        %v1436 = vpack.c.bf16 %v1419, %v1418
        %v1437 = vpack.c.bf16 %v1421, %v1420
        %v1438 = vld [vmem:[#allocation7] sm:$0xf]
        %v1439 = vld [vmem:[#allocation7 + $0x4] sm:$0xf]
        %v1440 = vld [vmem:[#allocation7 + $0x8] sm:$0xf]
        %v1441 = vld [vmem:[#allocation7 + $0xc] sm:$0xf]
        %v1442 = vld [vmem:[#allocation2 + $0x1] sm:$0xff]
        %v1443 = vld [vmem:[#allocation2 + $0x11] sm:$0xff]
        %v1444 = vld [vmem:[#allocation2 + $0x21] sm:$0xff]
        %v1445 = vld [vmem:[#allocation2 + $0x31] sm:$0xff]
        %v1446 = vld [vmem:[#allocation2 + $0x41] sm:$0xff]
        %v1447 = vld [vmem:[#allocation2 + $0x51] sm:$0xff]
        %v1448 = vld [vmem:[#allocation2 + $0x61] sm:$0xff]
        %v1449 = vld [vmem:[#allocation2 + $0x71] sm:$0xff]
        %v1450 = vld [vmem:[#allocation2 + $0xa1] sm:$0xff]
        %v1451 = vld [vmem:[#allocation2 + $0xb1] sm:$0xff]
        %v1452 = vld [vmem:[#allocation2 + $0xc1] sm:$0xff]
        %v1453 = vld [vmem:[#allocation2 + $0xd1] sm:$0xff]
        %v1454 = vld [vmem:[#allocation2 + $0xe1] sm:$0xff]
        %v1455 = vld [vmem:[#allocation2 + $0xf1] sm:$0xff]
        %v1456 = vld [vmem:[#allocation2 + $0x101] sm:$0xff]
        %v1457 = vld [vmem:[#allocation2 + $0x111] sm:$0xff]
        %v1458 = vld [vmem:[#allocation2 + $0x141] sm:$0xff]
        %v1459 = vld [vmem:[#allocation2 + $0x151] sm:$0xff]
        %v1460 = vld [vmem:[#allocation2 + $0x161] sm:$0xff]
        %v1461 = vld [vmem:[#allocation2 + $0x171] sm:$0xff]
        %v1462 = vld [vmem:[#allocation2 + $0x181] sm:$0xff]
        %v1463 = vld [vmem:[#allocation2 + $0x191] sm:$0xff]
        %v1464 = vld [vmem:[#allocation2 + $0x1a1] sm:$0xff]
        %v1465 = vld [vmem:[#allocation2 + $0x1b1] sm:$0xff]
        %v1466 = vld [vmem:[#allocation2 + $0x1e1] sm:$0xff]
        %v1467 = vld [vmem:[#allocation2 + $0x1f1] sm:$0xff]
        %v1468 = vld [vmem:[#allocation2 + $0x201] sm:$0xff]
        %v1469 = vld [vmem:[#allocation2 + $0x211] sm:$0xff]
        %v1470 = vld [vmem:[#allocation2 + $0x221] sm:$0xff]
        %v1471 = vld [vmem:[#allocation2 + $0x231] sm:$0xff]
        %v1472 = vld [vmem:[#allocation2 + $0x241] sm:$0xff]
        %v1473 = vld [vmem:[#allocation2 + $0x251] sm:$0xff]
        %v1474 = vpack.c.bf16 %v1443, %v1442
        %v1475 = vpack.c.bf16 %v1445, %v1444
        %v1476 = vpack.c.bf16 %v1447, %v1446
        %v1477 = vpack.c.bf16 %v1449, %v1448
        %v1478 = vpack.c.bf16 %v1451, %v1450
        %v1479 = vpack.c.bf16 %v1453, %v1452
        %v1480 = vpack.c.bf16 %v1455, %v1454
        %v1481 = vpack.c.bf16 %v1457, %v1456
        %v1482 = vpack.c.bf16 %v1459, %v1458
        %v1483 = vpack.c.bf16 %v1461, %v1460
        %v1484 = vpack.c.bf16 %v1463, %v1462
        %v1485 = vpack.c.bf16 %v1465, %v1464
        %v1486 = vpack.c.bf16 %v1467, %v1466
        %v1487 = vpack.c.bf16 %v1469, %v1468
        %v1488 = vpack.c.bf16 %v1471, %v1470
        %v1489 = vpack.c.bf16 %v1473, %v1472
        %s1490 = scalar_lea.vmem [#allocation7], 16
        %v1491 = vld [vmem:[%s1490] sm:$0xf]
        %v1492 = vld [vmem:[%s1490 + $0x4] sm:$0xf]
        %v1493 = vld [vmem:[%s1490 + $0x8] sm:$0xf]
        %v1494 = vld [vmem:[%s1490 + $0xc] sm:$0xf]
        %v1499 = vunpack.c.l.b16 %v1491
        %v1500 = vunpack.c.l.b16 %v1492
        %v1501 = vunpack.c.l.b16 %v1493
        %v1502 = vunpack.c.l.b16 %v1494
        %v1503 = vpack.c.b16 %v1500, %v1499
        %v1504 = vpack.c.b16 %v1502, %v1501
        %v1508 = vsel %vm757, %v1474, 0
        %v1511 = vsel %vm757, %v1475, 0
        %v1514 = vsel %vm757, %v1476, 0
        %v1517 = vsel %vm757, %v1477, 0
        %v1520 = vsel %vm757, %v1478, 0
        %v1523 = vsel %vm757, %v1479, 0
        %v1526 = vsel %vm757, %v1480, 0
        %v1529 = vsel %vm757, %v1481, 0
        %v1532 = vsel %vm757, %v1482, 0
        %v1535 = vsel %vm757, %v1483, 0
        %v1538 = vsel %vm757, %v1484, 0
        %v1541 = vsel %vm757, %v1485, 0
        %v1544 = vsel %vm757, %v1486, 0
        %v1547 = vsel %vm757, %v1487, 0
        %v1550 = vsel %vm757, %v1488, 0
        %v1553 = vsel %vm757, %v1489, 0
        %1555 = vmatprep.subr.bf16.mxu0 0
        %1556 = vmatpush1.bf16.msra.mxu0 0
        %1557 = vmatprep.subr.bf16.mxu0 0
        %1558 = vmatpush1.bf16.msra.mxu0 0
        %1559 = vmatprep.subr.bf16.mxu0 0
        %1560 = vmatpush1.bf16.msra.mxu0 0
        %1561 = vmatprep.subr.bf16.mxu0 0
        %1562 = vmatpush1.bf16.msra.mxu0 0
        %1563 = vmatprep.subr.bf16.mxu0 0
        %1564 = vmatpush1.bf16.msra.mxu0 0
        %1565 = vmatprep.subr.bf16.mxu0 0
        %1566 = vmatpush1.bf16.msra.mxu0 0
        %1567 = vmatprep.subr.bf16.mxu0 0
        %1568 = vmatpush1.bf16.msra.mxu0 %v1504
        %1569 = vmatprep.subr.bf16.mxu0 0
        %1570 = vmatpush1.bf16.msra.mxu0 %v1503
        %1571 = vmatprep.subr.bf16.mxu0 0
        %1572 = vmatpush2.bf16.msra.mxu0 0
        %1573 = vmatprep.subr.bf16.mxu0 0
        %1574 = vmatpush2.bf16.msra.mxu0 0
        %1575 = vmatprep.subr.bf16.mxu0 0
        %1576 = vmatpush2.bf16.msra.mxu0 0
        %1577 = vmatprep.subr.bf16.mxu0 0
        %1578 = vmatpush2.bf16.msra.mxu0 0
        %1579 = vmatprep.subr.bf16.mxu0 0
        %1580 = vmatpush2.bf16.msra.mxu0 0
        %1581 = vmatprep.subr.bf16.mxu0 0
        %1582 = vmatpush2.bf16.msra.mxu0 0
        %1583 = vmatprep.subr.bf16.mxu0 0
        %1584 = vmatpush2.bf16.msra.mxu0 0
        %1585 = vmatprep.subr.bf16.mxu0 0
        %1586 = vmatpush2.bf16.msra.mxu0 0
        %1587 = vmatprep.mubr.bf16.mxu0 0
        %1588 = vmatmul.mubr.bf16.gmra.mxu0 %v1508
        %v1589 = vpop.f32.mrf.mxu0
        %v1590 = vadd.f32 0.0, %v1589
        %v1591 = vpop.f32.mrf.mxu0
        %v1592 = vpop.f32.mrf.mxu0
        %v1593 = vadd.f32 0.0, %v1592
        %v1594 = vpop.f32.mrf.mxu0
        %1595 = vmatprep.mubr.bf16.mxu0 0
        %1596 = vmatmul.mubr.bf16.gmra.mxu0 %v1511
        %v1597 = vpop.f32.mrf.mxu0
        %v1598 = vadd.f32 0.0, %v1597
        %v1599 = vpop.f32.mrf.mxu0
        %v1600 = vpop.f32.mrf.mxu0
        %v1601 = vadd.f32 0.0, %v1600
        %v1602 = vpop.f32.mrf.mxu0
        %1603 = vmatprep.mubr.bf16.mxu0 0
        %1604 = vmatmul.mubr.bf16.gmra.mxu0 %v1514
        %v1605 = vpop.f32.mrf.mxu0
        %v1606 = vadd.f32 0.0, %v1605
        %v1607 = vpop.f32.mrf.mxu0
        %v1608 = vpop.f32.mrf.mxu0
        %v1609 = vadd.f32 0.0, %v1608
        %v1610 = vpop.f32.mrf.mxu0
        %1611 = vmatprep.mubr.bf16.mxu0 0
        %1612 = vmatmul.mubr.bf16.gmra.mxu0 %v1517
        %v1613 = vpop.f32.mrf.mxu0
        %v1614 = vadd.f32 0.0, %v1613
        %v1615 = vpop.f32.mrf.mxu0
        %v1616 = vpop.f32.mrf.mxu0
        %v1617 = vadd.f32 0.0, %v1616
        %v1618 = vpop.f32.mrf.mxu0
        %1619 = vmatprep.mubr.bf16.mxu0 0
        %1620 = vmatmul.mubr.bf16.gmra.mxu0 %v1520
        %v1621 = vpop.f32.mrf.mxu0
        %v1622 = vadd.f32 0.0, %v1621
        %v1623 = vpop.f32.mrf.mxu0
        %v1624 = vpop.f32.mrf.mxu0
        %v1625 = vadd.f32 0.0, %v1624
        %v1626 = vpop.f32.mrf.mxu0
        %1627 = vmatprep.mubr.bf16.mxu0 0
        %1628 = vmatmul.mubr.bf16.gmra.mxu0 %v1523
        %v1629 = vpop.f32.mrf.mxu0
        %v1630 = vadd.f32 0.0, %v1629
        %v1631 = vpop.f32.mrf.mxu0
        %v1632 = vpop.f32.mrf.mxu0
        %v1633 = vadd.f32 0.0, %v1632
        %v1634 = vpop.f32.mrf.mxu0
        %1635 = vmatprep.mubr.bf16.mxu0 0
        %1636 = vmatmul.mubr.bf16.gmra.mxu0 %v1526
        %v1637 = vpop.f32.mrf.mxu0
        %v1638 = vadd.f32 0.0, %v1637
        %v1639 = vpop.f32.mrf.mxu0
        %v1640 = vpop.f32.mrf.mxu0
        %v1641 = vadd.f32 0.0, %v1640
        %v1642 = vpop.f32.mrf.mxu0
        %1643 = vmatprep.mubr.bf16.mxu0 0
        %1644 = vmatmul.mubr.bf16.gmra.mxu0 %v1529
        %v1645 = vpop.f32.mrf.mxu0
        %v1646 = vadd.f32 0.0, %v1645
        %v1647 = vpop.f32.mrf.mxu0
        %v1648 = vpop.f32.mrf.mxu0
        %v1649 = vadd.f32 0.0, %v1648
        %v1650 = vpop.f32.mrf.mxu0
        %1651 = vmatprep.mubr.bf16.mxu0 0
        %1652 = vmatmul.mubr.bf16.gmra.mxu0 %v1532
        %v1653 = vpop.f32.mrf.mxu0
        %v1654 = vadd.f32 0.0, %v1653
        %v1655 = vpop.f32.mrf.mxu0
        %v1656 = vpop.f32.mrf.mxu0
        %v1657 = vadd.f32 0.0, %v1656
        %v1658 = vpop.f32.mrf.mxu0
        %1659 = vmatprep.mubr.bf16.mxu0 0
        %1660 = vmatmul.mubr.bf16.gmra.mxu0 %v1535
        %v1661 = vpop.f32.mrf.mxu0
        %v1662 = vadd.f32 0.0, %v1661
        %v1663 = vpop.f32.mrf.mxu0
        %v1664 = vpop.f32.mrf.mxu0
        %v1665 = vadd.f32 0.0, %v1664
        %v1666 = vpop.f32.mrf.mxu0
        %1667 = vmatprep.mubr.bf16.mxu0 0
        %1668 = vmatmul.mubr.bf16.gmra.mxu0 %v1538
        %v1669 = vpop.f32.mrf.mxu0
        %v1670 = vadd.f32 0.0, %v1669
        %v1671 = vpop.f32.mrf.mxu0
        %v1672 = vpop.f32.mrf.mxu0
        %v1673 = vadd.f32 0.0, %v1672
        %v1674 = vpop.f32.mrf.mxu0
        %1675 = vmatprep.mubr.bf16.mxu0 0
        %1676 = vmatmul.mubr.bf16.gmra.mxu0 %v1541
        %v1677 = vpop.f32.mrf.mxu0
        %v1678 = vadd.f32 0.0, %v1677
        %v1679 = vpop.f32.mrf.mxu0
        %v1680 = vpop.f32.mrf.mxu0
        %v1681 = vadd.f32 0.0, %v1680
        %v1682 = vpop.f32.mrf.mxu0
        %1683 = vmatprep.mubr.bf16.mxu0 0
        %1684 = vmatmul.mubr.bf16.gmra.mxu0 %v1544
        %v1685 = vpop.f32.mrf.mxu0
        %v1686 = vadd.f32 0.0, %v1685
        %v1687 = vpop.f32.mrf.mxu0
        %v1688 = vpop.f32.mrf.mxu0
        %v1689 = vadd.f32 0.0, %v1688
        %v1690 = vpop.f32.mrf.mxu0
        %1691 = vmatprep.mubr.bf16.mxu0 0
        %1692 = vmatmul.mubr.bf16.gmra.mxu0 %v1547
        %v1693 = vpop.f32.mrf.mxu0
        %v1694 = vadd.f32 0.0, %v1693
        %v1695 = vpop.f32.mrf.mxu0
        %v1696 = vpop.f32.mrf.mxu0
        %v1697 = vadd.f32 0.0, %v1696
        %v1698 = vpop.f32.mrf.mxu0
        %1699 = vmatprep.mubr.bf16.mxu0 0
        %1700 = vmatmul.mubr.bf16.gmra.mxu0 %v1550
        %v1701 = vpop.f32.mrf.mxu0
        %v1702 = vadd.f32 0.0, %v1701
        %v1703 = vpop.f32.mrf.mxu0
        %v1704 = vpop.f32.mrf.mxu0
        %v1705 = vadd.f32 0.0, %v1704
        %v1706 = vpop.f32.mrf.mxu0
        %1707 = vmatprep.mubr.bf16.mxu0 0
        %1708 = vmatmul.mubr.bf16.gmra.mxu0 %v1553
        %v1709 = vpop.f32.mrf.mxu0
        %v1710 = vadd.f32 0.0, %v1709
        %v1711 = vpop.f32.mrf.mxu0
        %v1712 = vpop.f32.mrf.mxu0
        %v1713 = vadd.f32 0.0, %v1712
        %v1714 = vpop.f32.mrf.mxu0
        %1715 = vdwg.mxu0
        %v1720 = vunpack.c.l.b16 %v1438
        %v1721 = vunpack.c.l.b16 %v1439
        %v1722 = vunpack.c.l.b16 %v1440
        %v1723 = vunpack.c.l.b16 %v1441
        %v1724 = vpack.c.b16 %v1721, %v1720
        %v1725 = vpack.c.b16 %v1723, %v1722
        %v1729 = vsel %vm757, %v1422, 0
        %v1732 = vsel %vm757, %v1423, 0
        %v1735 = vsel %vm757, %v1424, 0
        %v1738 = vsel %vm757, %v1425, 0
        %v1741 = vsel %vm757, %v1426, 0
        %v1744 = vsel %vm757, %v1427, 0
        %v1747 = vsel %vm757, %v1428, 0
        %v1750 = vsel %vm757, %v1429, 0
        %v1753 = vsel %vm757, %v1430, 0
        %v1756 = vsel %vm757, %v1431, 0
        %v1759 = vsel %vm757, %v1432, 0
        %v1762 = vsel %vm757, %v1433, 0
        %v1765 = vsel %vm757, %v1434, 0
        %v1768 = vsel %vm757, %v1435, 0
        %v1771 = vsel %vm757, %v1436, 0
        %v1774 = vsel %vm757, %v1437, 0
        %1776 = vmatprep.subr.bf16.mxu0 0
        %1777 = vmatpush1.bf16.msra.mxu0 0
        %1778 = vmatprep.subr.bf16.mxu0 0
        %1779 = vmatpush1.bf16.msra.mxu0 0
        %1780 = vmatprep.subr.bf16.mxu0 0
        %1781 = vmatpush1.bf16.msra.mxu0 0
        %1782 = vmatprep.subr.bf16.mxu0 0
        %1783 = vmatpush1.bf16.msra.mxu0 0
        %1784 = vmatprep.subr.bf16.mxu0 0
        %1785 = vmatpush1.bf16.msra.mxu0 0
        %1786 = vmatprep.subr.bf16.mxu0 0
        %1787 = vmatpush1.bf16.msra.mxu0 0
        %1788 = vmatprep.subr.bf16.mxu0 0
        %1789 = vmatpush1.bf16.msra.mxu0 %v1725
        %1790 = vmatprep.subr.bf16.mxu0 0
        %1791 = vmatpush1.bf16.msra.mxu0 %v1724
        %1792 = vmatprep.subr.bf16.mxu0 0
        %1793 = vmatpush2.bf16.msra.mxu0 0
        %1794 = vmatprep.subr.bf16.mxu0 0
        %1795 = vmatpush2.bf16.msra.mxu0 0
        %1796 = vmatprep.subr.bf16.mxu0 0
        %1797 = vmatpush2.bf16.msra.mxu0 0
        %1798 = vmatprep.subr.bf16.mxu0 0
        %1799 = vmatpush2.bf16.msra.mxu0 0
        %1800 = vmatprep.subr.bf16.mxu0 0
        %1801 = vmatpush2.bf16.msra.mxu0 0
        %1802 = vmatprep.subr.bf16.mxu0 0
        %1803 = vmatpush2.bf16.msra.mxu0 0
        %1804 = vmatprep.subr.bf16.mxu0 0
        %1805 = vmatpush2.bf16.msra.mxu0 0
        %1806 = vmatprep.subr.bf16.mxu0 0
        %1807 = vmatpush2.bf16.msra.mxu0 0
        %1808 = vmatprep.mubr.bf16.mxu0 0
        %1809 = vmatmul.mubr.bf16.gmra.mxu0 %v1729
        %v1810 = vpop.f32.mrf.mxu0
        %v1811 = vadd.f32 %v1590, %v1810
        %v1812 = vpop.f32.mrf.mxu0
        %v1813 = vpop.f32.mrf.mxu0
        %v1814 = vadd.f32 %v1593, %v1813
        %v1815 = vpop.f32.mrf.mxu0
        %1816 = vmatprep.mubr.bf16.mxu0 0
        %1817 = vmatmul.mubr.bf16.gmra.mxu0 %v1732
        %v1818 = vpop.f32.mrf.mxu0
        %v1819 = vadd.f32 %v1598, %v1818
        %v1820 = vpop.f32.mrf.mxu0
        %v1821 = vpop.f32.mrf.mxu0
        %v1822 = vadd.f32 %v1601, %v1821
        %v1823 = vpop.f32.mrf.mxu0
        %1824 = vmatprep.mubr.bf16.mxu0 0
        %1825 = vmatmul.mubr.bf16.gmra.mxu0 %v1735
        %v1826 = vpop.f32.mrf.mxu0
        %v1827 = vadd.f32 %v1606, %v1826
        %v1828 = vpop.f32.mrf.mxu0
        %v1829 = vpop.f32.mrf.mxu0
        %v1830 = vadd.f32 %v1609, %v1829
        %v1831 = vpop.f32.mrf.mxu0
        %1832 = vmatprep.mubr.bf16.mxu0 0
        %1833 = vmatmul.mubr.bf16.gmra.mxu0 %v1738
        %v1834 = vpop.f32.mrf.mxu0
        %v1835 = vadd.f32 %v1614, %v1834
        %v1836 = vpop.f32.mrf.mxu0
        %v1837 = vpop.f32.mrf.mxu0
        %v1838 = vadd.f32 %v1617, %v1837
        %v1839 = vpop.f32.mrf.mxu0
        %1840 = vmatprep.mubr.bf16.mxu0 0
        %1841 = vmatmul.mubr.bf16.gmra.mxu0 %v1741
        %v1842 = vpop.f32.mrf.mxu0
        %v1843 = vadd.f32 %v1622, %v1842
        %v1844 = vpop.f32.mrf.mxu0
        %v1845 = vpop.f32.mrf.mxu0
        %v1846 = vadd.f32 %v1625, %v1845
        %v1847 = vpop.f32.mrf.mxu0
        %1848 = vmatprep.mubr.bf16.mxu0 0
        %1849 = vmatmul.mubr.bf16.gmra.mxu0 %v1744
        %v1850 = vpop.f32.mrf.mxu0
        %v1851 = vadd.f32 %v1630, %v1850
        %v1852 = vpop.f32.mrf.mxu0
        %v1853 = vpop.f32.mrf.mxu0
        %v1854 = vadd.f32 %v1633, %v1853
        %v1855 = vpop.f32.mrf.mxu0
        %1856 = vmatprep.mubr.bf16.mxu0 0
        %1857 = vmatmul.mubr.bf16.gmra.mxu0 %v1747
        %v1858 = vpop.f32.mrf.mxu0
        %v1859 = vadd.f32 %v1638, %v1858
        %v1860 = vpop.f32.mrf.mxu0
        %v1861 = vpop.f32.mrf.mxu0
        %v1862 = vadd.f32 %v1641, %v1861
        %v1863 = vpop.f32.mrf.mxu0
        %1864 = vmatprep.mubr.bf16.mxu0 0
        %1865 = vmatmul.mubr.bf16.gmra.mxu0 %v1750
        %v1866 = vpop.f32.mrf.mxu0
        %v1867 = vadd.f32 %v1646, %v1866
        %v1868 = vpop.f32.mrf.mxu0
        %v1869 = vpop.f32.mrf.mxu0
        %v1870 = vadd.f32 %v1649, %v1869
        %v1871 = vpop.f32.mrf.mxu0
        %1872 = vmatprep.mubr.bf16.mxu0 0
        %1873 = vmatmul.mubr.bf16.gmra.mxu0 %v1753
        %v1874 = vpop.f32.mrf.mxu0
        %v1875 = vadd.f32 %v1654, %v1874
        %v1876 = vpop.f32.mrf.mxu0
        %v1877 = vpop.f32.mrf.mxu0
        %v1878 = vadd.f32 %v1657, %v1877
        %v1879 = vpop.f32.mrf.mxu0
        %1880 = vmatprep.mubr.bf16.mxu0 0
        %1881 = vmatmul.mubr.bf16.gmra.mxu0 %v1756
        %v1882 = vpop.f32.mrf.mxu0
        %v1883 = vadd.f32 %v1662, %v1882
        %v1884 = vpop.f32.mrf.mxu0
        %v1885 = vpop.f32.mrf.mxu0
        %v1886 = vadd.f32 %v1665, %v1885
        %v1887 = vpop.f32.mrf.mxu0
        %1888 = vmatprep.mubr.bf16.mxu0 0
        %1889 = vmatmul.mubr.bf16.gmra.mxu0 %v1759
        %v1890 = vpop.f32.mrf.mxu0
        %v1891 = vadd.f32 %v1670, %v1890
        %v1892 = vpop.f32.mrf.mxu0
        %v1893 = vpop.f32.mrf.mxu0
        %v1894 = vadd.f32 %v1673, %v1893
        %v1895 = vpop.f32.mrf.mxu0
        %1896 = vmatprep.mubr.bf16.mxu0 0
        %1897 = vmatmul.mubr.bf16.gmra.mxu0 %v1762
        %v1898 = vpop.f32.mrf.mxu0
        %v1899 = vadd.f32 %v1678, %v1898
        %v1900 = vpop.f32.mrf.mxu0
        %v1901 = vpop.f32.mrf.mxu0
        %v1902 = vadd.f32 %v1681, %v1901
        %v1903 = vpop.f32.mrf.mxu0
        %1904 = vmatprep.mubr.bf16.mxu0 0
        %1905 = vmatmul.mubr.bf16.gmra.mxu0 %v1765
        %v1906 = vpop.f32.mrf.mxu0
        %v1907 = vadd.f32 %v1686, %v1906
        %v1908 = vpop.f32.mrf.mxu0
        %v1909 = vpop.f32.mrf.mxu0
        %v1910 = vadd.f32 %v1689, %v1909
        %v1911 = vpop.f32.mrf.mxu0
        %1912 = vmatprep.mubr.bf16.mxu0 0
        %1913 = vmatmul.mubr.bf16.gmra.mxu0 %v1768
        %v1914 = vpop.f32.mrf.mxu0
        %v1915 = vadd.f32 %v1694, %v1914
        %v1916 = vpop.f32.mrf.mxu0
        %v1917 = vpop.f32.mrf.mxu0
        %v1918 = vadd.f32 %v1697, %v1917
        %v1919 = vpop.f32.mrf.mxu0
        %1920 = vmatprep.mubr.bf16.mxu0 0
        %1921 = vmatmul.mubr.bf16.gmra.mxu0 %v1771
        %v1922 = vpop.f32.mrf.mxu0
        %v1923 = vadd.f32 %v1702, %v1922
        %v1924 = vpop.f32.mrf.mxu0
        %v1925 = vpop.f32.mrf.mxu0
        %v1926 = vadd.f32 %v1705, %v1925
        %v1927 = vpop.f32.mrf.mxu0
        %1928 = vmatprep.mubr.bf16.mxu0 0
        %1929 = vmatmul.mubr.bf16.gmra.mxu0 %v1774
        %v1930 = vpop.f32.mrf.mxu0
        %v1931 = vadd.f32 %v1710, %v1930
        %v1932 = vpop.f32.mrf.mxu0
        %v1933 = vpop.f32.mrf.mxu0
        %v1934 = vadd.f32 %v1713, %v1933
        %v1935 = vpop.f32.mrf.mxu0
        %1936 = vdwg.mxu0
        %v1937 = vld [vmem:[#allocation2 + $0x2] sm:$0xff]
        %v1938 = vld [vmem:[#allocation2 + $0x12] sm:$0xff]
        %v1939 = vld [vmem:[#allocation2 + $0x22] sm:$0xff]
        %v1940 = vld [vmem:[#allocation2 + $0x32] sm:$0xff]
        %v1941 = vld [vmem:[#allocation2 + $0x42] sm:$0xff]
        %v1942 = vld [vmem:[#allocation2 + $0x52] sm:$0xff]
        %v1943 = vld [vmem:[#allocation2 + $0x62] sm:$0xff]
        %v1944 = vld [vmem:[#allocation2 + $0x72] sm:$0xff]
        %v1945 = vld [vmem:[#allocation2 + $0xa2] sm:$0xff]
        %v1946 = vld [vmem:[#allocation2 + $0xb2] sm:$0xff]
        %v1947 = vld [vmem:[#allocation2 + $0xc2] sm:$0xff]
        %v1948 = vld [vmem:[#allocation2 + $0xd2] sm:$0xff]
        %v1949 = vld [vmem:[#allocation2 + $0xe2] sm:$0xff]
        %v1950 = vld [vmem:[#allocation2 + $0xf2] sm:$0xff]
        %v1951 = vld [vmem:[#allocation2 + $0x102] sm:$0xff]
        %v1952 = vld [vmem:[#allocation2 + $0x112] sm:$0xff]
        %v1953 = vld [vmem:[#allocation2 + $0x142] sm:$0xff]
        %v1954 = vld [vmem:[#allocation2 + $0x152] sm:$0xff]
        %v1955 = vld [vmem:[#allocation2 + $0x162] sm:$0xff]
        %v1956 = vld [vmem:[#allocation2 + $0x172] sm:$0xff]
        %v1957 = vld [vmem:[#allocation2 + $0x182] sm:$0xff]
        %v1958 = vld [vmem:[#allocation2 + $0x192] sm:$0xff]
        %v1959 = vld [vmem:[#allocation2 + $0x1a2] sm:$0xff]
        %v1960 = vld [vmem:[#allocation2 + $0x1b2] sm:$0xff]
        %v1961 = vld [vmem:[#allocation2 + $0x1e2] sm:$0xff]
        %v1962 = vld [vmem:[#allocation2 + $0x1f2] sm:$0xff]
        %v1963 = vld [vmem:[#allocation2 + $0x202] sm:$0xff]
        %v1964 = vld [vmem:[#allocation2 + $0x212] sm:$0xff]
        %v1965 = vld [vmem:[#allocation2 + $0x222] sm:$0xff]
        %v1966 = vld [vmem:[#allocation2 + $0x232] sm:$0xff]
        %v1967 = vld [vmem:[#allocation2 + $0x242] sm:$0xff]
        %v1968 = vld [vmem:[#allocation2 + $0x252] sm:$0xff]
        %v1969 = vpack.c.bf16 %v1938, %v1937
        %v1970 = vpack.c.bf16 %v1940, %v1939
        %v1971 = vpack.c.bf16 %v1942, %v1941
        %v1972 = vpack.c.bf16 %v1944, %v1943
        %v1973 = vpack.c.bf16 %v1946, %v1945
        %v1974 = vpack.c.bf16 %v1948, %v1947
        %v1975 = vpack.c.bf16 %v1950, %v1949
        %v1976 = vpack.c.bf16 %v1952, %v1951
        %v1977 = vpack.c.bf16 %v1954, %v1953
        %v1978 = vpack.c.bf16 %v1956, %v1955
        %v1979 = vpack.c.bf16 %v1958, %v1957
        %v1980 = vpack.c.bf16 %v1960, %v1959
        %v1981 = vpack.c.bf16 %v1962, %v1961
        %v1982 = vpack.c.bf16 %v1964, %v1963
        %v1983 = vpack.c.bf16 %v1966, %v1965
        %v1984 = vpack.c.bf16 %v1968, %v1967
        %s1985 = scalar_lea.vmem [#allocation7], 32
        %v1986 = vld [vmem:[%s1985] sm:$0xf]
        %v1987 = vld [vmem:[%s1985 + $0x4] sm:$0xf]
        %v1988 = vld [vmem:[%s1985 + $0x8] sm:$0xf]
        %v1989 = vld [vmem:[%s1985 + $0xc] sm:$0xf]
        %v1994 = vunpack.c.l.b16 %v1986
        %v1995 = vunpack.c.l.b16 %v1987
        %v1996 = vunpack.c.l.b16 %v1988
        %v1997 = vunpack.c.l.b16 %v1989
        %v1998 = vpack.c.b16 %v1995, %v1994
        %v1999 = vpack.c.b16 %v1997, %v1996
        %v2003 = vsel %vm757, %v1969, 0
        %v2006 = vsel %vm757, %v1970, 0
        %v2009 = vsel %vm757, %v1971, 0
        %v2012 = vsel %vm757, %v1972, 0
        %v2015 = vsel %vm757, %v1973, 0
        %v2018 = vsel %vm757, %v1974, 0
        %v2021 = vsel %vm757, %v1975, 0
        %v2024 = vsel %vm757, %v1976, 0
        %v2027 = vsel %vm757, %v1977, 0
        %v2030 = vsel %vm757, %v1978, 0
        %v2033 = vsel %vm757, %v1979, 0
        %v2036 = vsel %vm757, %v1980, 0
        %v2039 = vsel %vm757, %v1981, 0
        %v2042 = vsel %vm757, %v1982, 0
        %v2045 = vsel %vm757, %v1983, 0
        %v2048 = vsel %vm757, %v1984, 0
        %2050 = vmatprep.subr.bf16.mxu0 0
        %2051 = vmatpush1.bf16.msra.mxu0 0
        %2052 = vmatprep.subr.bf16.mxu0 0
        %2053 = vmatpush1.bf16.msra.mxu0 0
        %2054 = vmatprep.subr.bf16.mxu0 0
        %2055 = vmatpush1.bf16.msra.mxu0 0
        %2056 = vmatprep.subr.bf16.mxu0 0
        %2057 = vmatpush1.bf16.msra.mxu0 0
        %2058 = vmatprep.subr.bf16.mxu0 0
        %2059 = vmatpush1.bf16.msra.mxu0 0
        %2060 = vmatprep.subr.bf16.mxu0 0
        %2061 = vmatpush1.bf16.msra.mxu0 0
        %2062 = vmatprep.subr.bf16.mxu0 0
        %2063 = vmatpush1.bf16.msra.mxu0 %v1999
        %2064 = vmatprep.subr.bf16.mxu0 0
        %2065 = vmatpush1.bf16.msra.mxu0 %v1998
        %2066 = vmatprep.subr.bf16.mxu0 0
        %2067 = vmatpush2.bf16.msra.mxu0 0
        %2068 = vmatprep.subr.bf16.mxu0 0
        %2069 = vmatpush2.bf16.msra.mxu0 0
        %2070 = vmatprep.subr.bf16.mxu0 0
        %2071 = vmatpush2.bf16.msra.mxu0 0
        %2072 = vmatprep.subr.bf16.mxu0 0
        %2073 = vmatpush2.bf16.msra.mxu0 0
        %2074 = vmatprep.subr.bf16.mxu0 0
        %2075 = vmatpush2.bf16.msra.mxu0 0
        %2076 = vmatprep.subr.bf16.mxu0 0
        %2077 = vmatpush2.bf16.msra.mxu0 0
        %2078 = vmatprep.subr.bf16.mxu0 0
        %2079 = vmatpush2.bf16.msra.mxu0 0
        %2080 = vmatprep.subr.bf16.mxu0 0
        %2081 = vmatpush2.bf16.msra.mxu0 0
        %2082 = vmatprep.mubr.bf16.mxu0 0
        %2083 = vmatmul.mubr.bf16.gmra.mxu0 %v2003
        %v2084 = vpop.f32.mrf.mxu0
        %v2085 = vadd.f32 0.0, %v2084
        %v2086 = vpop.f32.mrf.mxu0
        %v2087 = vpop.f32.mrf.mxu0
        %v2088 = vadd.f32 0.0, %v2087
        %v2089 = vpop.f32.mrf.mxu0
        %2090 = vmatprep.mubr.bf16.mxu0 0
        %2091 = vmatmul.mubr.bf16.gmra.mxu0 %v2006
        %v2092 = vpop.f32.mrf.mxu0
        %v2093 = vadd.f32 0.0, %v2092
        %v2094 = vpop.f32.mrf.mxu0
        %v2095 = vpop.f32.mrf.mxu0
        %v2096 = vadd.f32 0.0, %v2095
        %v2097 = vpop.f32.mrf.mxu0
        %2098 = vmatprep.mubr.bf16.mxu0 0
        %2099 = vmatmul.mubr.bf16.gmra.mxu0 %v2009
        %v2100 = vpop.f32.mrf.mxu0
        %v2101 = vadd.f32 0.0, %v2100
        %v2102 = vpop.f32.mrf.mxu0
        %v2103 = vpop.f32.mrf.mxu0
        %v2104 = vadd.f32 0.0, %v2103
        %v2105 = vpop.f32.mrf.mxu0
        %2106 = vmatprep.mubr.bf16.mxu0 0
        %2107 = vmatmul.mubr.bf16.gmra.mxu0 %v2012
        %v2108 = vpop.f32.mrf.mxu0
        %v2109 = vadd.f32 0.0, %v2108
        %v2110 = vpop.f32.mrf.mxu0
        %v2111 = vpop.f32.mrf.mxu0
        %v2112 = vadd.f32 0.0, %v2111
        %v2113 = vpop.f32.mrf.mxu0
        %2114 = vmatprep.mubr.bf16.mxu0 0
        %2115 = vmatmul.mubr.bf16.gmra.mxu0 %v2015
        %v2116 = vpop.f32.mrf.mxu0
        %v2117 = vadd.f32 0.0, %v2116
        %v2118 = vpop.f32.mrf.mxu0
        %v2119 = vpop.f32.mrf.mxu0
        %v2120 = vadd.f32 0.0, %v2119
        %v2121 = vpop.f32.mrf.mxu0
        %2122 = vmatprep.mubr.bf16.mxu0 0
        %2123 = vmatmul.mubr.bf16.gmra.mxu0 %v2018
        %v2124 = vpop.f32.mrf.mxu0
        %v2125 = vadd.f32 0.0, %v2124
        %v2126 = vpop.f32.mrf.mxu0
        %v2127 = vpop.f32.mrf.mxu0
        %v2128 = vadd.f32 0.0, %v2127
        %v2129 = vpop.f32.mrf.mxu0
        %2130 = vmatprep.mubr.bf16.mxu0 0
        %2131 = vmatmul.mubr.bf16.gmra.mxu0 %v2021
        %v2132 = vpop.f32.mrf.mxu0
        %v2133 = vadd.f32 0.0, %v2132
        %v2134 = vpop.f32.mrf.mxu0
        %v2135 = vpop.f32.mrf.mxu0
        %v2136 = vadd.f32 0.0, %v2135
        %v2137 = vpop.f32.mrf.mxu0
        %2138 = vmatprep.mubr.bf16.mxu0 0
        %2139 = vmatmul.mubr.bf16.gmra.mxu0 %v2024
        %v2140 = vpop.f32.mrf.mxu0
        %v2141 = vadd.f32 0.0, %v2140
        %v2142 = vpop.f32.mrf.mxu0
        %v2143 = vpop.f32.mrf.mxu0
        %v2144 = vadd.f32 0.0, %v2143
        %v2145 = vpop.f32.mrf.mxu0
        %2146 = vmatprep.mubr.bf16.mxu0 0
        %2147 = vmatmul.mubr.bf16.gmra.mxu0 %v2027
        %v2148 = vpop.f32.mrf.mxu0
        %v2149 = vadd.f32 0.0, %v2148
        %v2150 = vpop.f32.mrf.mxu0
        %v2151 = vpop.f32.mrf.mxu0
        %v2152 = vadd.f32 0.0, %v2151
        %v2153 = vpop.f32.mrf.mxu0
        %2154 = vmatprep.mubr.bf16.mxu0 0
        %2155 = vmatmul.mubr.bf16.gmra.mxu0 %v2030
        %v2156 = vpop.f32.mrf.mxu0
        %v2157 = vadd.f32 0.0, %v2156
        %v2158 = vpop.f32.mrf.mxu0
        %v2159 = vpop.f32.mrf.mxu0
        %v2160 = vadd.f32 0.0, %v2159
        %v2161 = vpop.f32.mrf.mxu0
        %2162 = vmatprep.mubr.bf16.mxu0 0
        %2163 = vmatmul.mubr.bf16.gmra.mxu0 %v2033
        %v2164 = vpop.f32.mrf.mxu0
        %v2165 = vadd.f32 0.0, %v2164
        %v2166 = vpop.f32.mrf.mxu0
        %v2167 = vpop.f32.mrf.mxu0
        %v2168 = vadd.f32 0.0, %v2167
        %v2169 = vpop.f32.mrf.mxu0
        %2170 = vmatprep.mubr.bf16.mxu0 0
        %2171 = vmatmul.mubr.bf16.gmra.mxu0 %v2036
        %v2172 = vpop.f32.mrf.mxu0
        %v2173 = vadd.f32 0.0, %v2172
        %v2174 = vpop.f32.mrf.mxu0
        %v2175 = vpop.f32.mrf.mxu0
        %v2176 = vadd.f32 0.0, %v2175
        %v2177 = vpop.f32.mrf.mxu0
        %2178 = vmatprep.mubr.bf16.mxu0 0
        %2179 = vmatmul.mubr.bf16.gmra.mxu0 %v2039
        %v2180 = vpop.f32.mrf.mxu0
        %v2181 = vadd.f32 0.0, %v2180
        %v2182 = vpop.f32.mrf.mxu0
        %v2183 = vpop.f32.mrf.mxu0
        %v2184 = vadd.f32 0.0, %v2183
        %v2185 = vpop.f32.mrf.mxu0
        %2186 = vmatprep.mubr.bf16.mxu0 0
        %2187 = vmatmul.mubr.bf16.gmra.mxu0 %v2042
        %v2188 = vpop.f32.mrf.mxu0
        %v2189 = vadd.f32 0.0, %v2188
        %v2190 = vpop.f32.mrf.mxu0
        %v2191 = vpop.f32.mrf.mxu0
        %v2192 = vadd.f32 0.0, %v2191
        %v2193 = vpop.f32.mrf.mxu0
        %2194 = vmatprep.mubr.bf16.mxu0 0
        %2195 = vmatmul.mubr.bf16.gmra.mxu0 %v2045
        %v2196 = vpop.f32.mrf.mxu0
        %v2197 = vadd.f32 0.0, %v2196
        %v2198 = vpop.f32.mrf.mxu0
        %v2199 = vpop.f32.mrf.mxu0
        %v2200 = vadd.f32 0.0, %v2199
        %v2201 = vpop.f32.mrf.mxu0
        %2202 = vmatprep.mubr.bf16.mxu0 0
        %2203 = vmatmul.mubr.bf16.gmra.mxu0 %v2048
        %v2204 = vpop.f32.mrf.mxu0
        %v2205 = vadd.f32 0.0, %v2204
        %v2206 = vpop.f32.mrf.mxu0
        %v2207 = vpop.f32.mrf.mxu0
        %v2208 = vadd.f32 0.0, %v2207
        %v2209 = vpop.f32.mrf.mxu0
        %2210 = vdwg.mxu0
        %v2211 = vadd.f32 %v1811, %v2085
        %v2212 = vadd.f32 %v1814, %v2088
        %v2213 = vadd.f32 %v1819, %v2093
        %v2214 = vadd.f32 %v1822, %v2096
        %v2215 = vadd.f32 %v1827, %v2101
        %v2216 = vadd.f32 %v1830, %v2104
        %v2217 = vadd.f32 %v1835, %v2109
        %v2218 = vadd.f32 %v1838, %v2112
        %v2219 = vadd.f32 %v1843, %v2117
        %v2220 = vadd.f32 %v1846, %v2120
        %v2221 = vadd.f32 %v1851, %v2125
        %v2222 = vadd.f32 %v1854, %v2128
        %v2223 = vadd.f32 %v1859, %v2133
        %v2224 = vadd.f32 %v1862, %v2136
        %v2225 = vadd.f32 %v1867, %v2141
        %v2226 = vadd.f32 %v1870, %v2144
        %v2227 = vadd.f32 %v1875, %v2149
        %v2228 = vadd.f32 %v1878, %v2152
        %v2229 = vadd.f32 %v1883, %v2157
        %v2230 = vadd.f32 %v1886, %v2160
        %v2231 = vadd.f32 %v1891, %v2165
        %v2232 = vadd.f32 %v1894, %v2168
        %v2233 = vadd.f32 %v1899, %v2173
        %v2234 = vadd.f32 %v1902, %v2176
        %v2235 = vadd.f32 %v1907, %v2181
        %v2236 = vadd.f32 %v1910, %v2184
        %v2237 = vadd.f32 %v1915, %v2189
        %v2238 = vadd.f32 %v1918, %v2192
        %v2239 = vadd.f32 %v1923, %v2197
        %v2240 = vadd.f32 %v1926, %v2200
        %v2241 = vadd.f32 %v1931, %v2205
        %v2242 = vadd.f32 %v1934, %v2208
        %s2243 = scalar_lea.vmem [#allocation2], 16
        %v2244 = vld [vmem:[%s2243] sm:$0xff]
        %v2245 = vld [vmem:[%s2243 + $0x10] sm:$0xff]
        %v2246 = vld [vmem:[%s2243 + $0x20] sm:$0xff]
        %v2247 = vld [vmem:[%s2243 + $0x30] sm:$0xff]
        %v2248 = vld [vmem:[%s2243 + $0x40] sm:$0xff]
        %v2249 = vld [vmem:[%s2243 + $0x50] sm:$0xff]
        %v2250 = vld [vmem:[%s2243 + $0x60] sm:$0xff]
        %v2251 = vld [vmem:[%s2243 + $0x70] sm:$0xff]
        %v2252 = vld [vmem:[%s2243 + $0xa0] sm:$0xff]
        %v2253 = vld [vmem:[%s2243 + $0xb0] sm:$0xff]
        %v2254 = vld [vmem:[%s2243 + $0xc0] sm:$0xff]
        %v2255 = vld [vmem:[%s2243 + $0xd0] sm:$0xff]
        %v2256 = vld [vmem:[%s2243 + $0xe0] sm:$0xff]
        %v2257 = vld [vmem:[%s2243 + $0xf0] sm:$0xff]
        %v2258 = vld [vmem:[%s2243 + $0x100] sm:$0xff]
        %v2259 = vld [vmem:[%s2243 + $0x110] sm:$0xff]
        %v2260 = vld [vmem:[%s2243 + $0x140] sm:$0xff]
        %v2261 = vld [vmem:[%s2243 + $0x150] sm:$0xff]
        %v2262 = vld [vmem:[%s2243 + $0x160] sm:$0xff]
        %v2263 = vld [vmem:[%s2243 + $0x170] sm:$0xff]
        %v2264 = vld [vmem:[%s2243 + $0x180] sm:$0xff]
        %v2265 = vld [vmem:[%s2243 + $0x190] sm:$0xff]
        %v2266 = vld [vmem:[%s2243 + $0x1a0] sm:$0xff]
        %v2267 = vld [vmem:[%s2243 + $0x1b0] sm:$0xff]
        %v2268 = vld [vmem:[%s2243 + $0x1e0] sm:$0xff]
        %v2269 = vld [vmem:[%s2243 + $0x1f0] sm:$0xff]
        %v2270 = vld [vmem:[%s2243 + $0x200] sm:$0xff]
        %v2271 = vld [vmem:[%s2243 + $0x210] sm:$0xff]
        %v2272 = vld [vmem:[%s2243 + $0x220] sm:$0xff]
        %v2273 = vld [vmem:[%s2243 + $0x230] sm:$0xff]
        %v2274 = vld [vmem:[%s2243 + $0x240] sm:$0xff]
        %v2275 = vld [vmem:[%s2243 + $0x250] sm:$0xff]
        %v2276 = vpack.c.bf16 %v2245, %v2244
        %v2277 = vpack.c.bf16 %v2247, %v2246
        %v2278 = vpack.c.bf16 %v2249, %v2248
        %v2279 = vpack.c.bf16 %v2251, %v2250
        %v2280 = vpack.c.bf16 %v2253, %v2252
        %v2281 = vpack.c.bf16 %v2255, %v2254
        %v2282 = vpack.c.bf16 %v2257, %v2256
        %v2283 = vpack.c.bf16 %v2259, %v2258
        %v2284 = vpack.c.bf16 %v2261, %v2260
        %v2285 = vpack.c.bf16 %v2263, %v2262
        %v2286 = vpack.c.bf16 %v2265, %v2264
        %v2287 = vpack.c.bf16 %v2267, %v2266
        %v2288 = vpack.c.bf16 %v2269, %v2268
        %v2289 = vpack.c.bf16 %v2271, %v2270
        %v2290 = vpack.c.bf16 %v2273, %v2272
        %v2291 = vpack.c.bf16 %v2275, %v2274
        %s2292 = scalar_lea.vmem [#allocation7], 48
        %v2293 = vld [vmem:[%s2292] sm:$0xf]
        %v2294 = vld [vmem:[%s2292 + $0x4] sm:$0xf]
        %v2295 = vld [vmem:[%s2292 + $0x8] sm:$0xf]
        %v2296 = vld [vmem:[%s2292 + $0xc] sm:$0xf]
        %v2301 = vunpack.c.l.b16 %v2293
        %v2302 = vunpack.c.l.b16 %v2294
        %v2303 = vunpack.c.l.b16 %v2295
        %v2304 = vunpack.c.l.b16 %v2296
        %v2305 = vpack.c.b16 %v2302, %v2301
        %v2306 = vpack.c.b16 %v2304, %v2303
        %v2310 = vsel %vm757, %v2276, 0
        %v2313 = vsel %vm757, %v2277, 0
        %v2316 = vsel %vm757, %v2278, 0
        %v2319 = vsel %vm757, %v2279, 0
        %v2322 = vsel %vm757, %v2280, 0
        %v2325 = vsel %vm757, %v2281, 0
        %v2328 = vsel %vm757, %v2282, 0
        %v2331 = vsel %vm757, %v2283, 0
        %v2334 = vsel %vm757, %v2284, 0
        %v2337 = vsel %vm757, %v2285, 0
        %v2340 = vsel %vm757, %v2286, 0
        %v2343 = vsel %vm757, %v2287, 0
        %v2346 = vsel %vm757, %v2288, 0
        %v2349 = vsel %vm757, %v2289, 0
        %v2352 = vsel %vm757, %v2290, 0
        %v2355 = vsel %vm757, %v2291, 0
        %2357 = vmatprep.subr.bf16.mxu0 0
        %2358 = vmatpush1.bf16.msra.mxu0 0
        %2359 = vmatprep.subr.bf16.mxu0 0
        %2360 = vmatpush1.bf16.msra.mxu0 0
        %2361 = vmatprep.subr.bf16.mxu0 0
        %2362 = vmatpush1.bf16.msra.mxu0 0
        %2363 = vmatprep.subr.bf16.mxu0 0
        %2364 = vmatpush1.bf16.msra.mxu0 0
        %2365 = vmatprep.subr.bf16.mxu0 0
        %2366 = vmatpush1.bf16.msra.mxu0 0
        %2367 = vmatprep.subr.bf16.mxu0 0
        %2368 = vmatpush1.bf16.msra.mxu0 0
        %2369 = vmatprep.subr.bf16.mxu0 0
        %2370 = vmatpush1.bf16.msra.mxu0 %v2306
        %2371 = vmatprep.subr.bf16.mxu0 0
        %2372 = vmatpush1.bf16.msra.mxu0 %v2305
        %2373 = vmatprep.subr.bf16.mxu0 0
        %2374 = vmatpush2.bf16.msra.mxu0 0
        %2375 = vmatprep.subr.bf16.mxu0 0
        %2376 = vmatpush2.bf16.msra.mxu0 0
        %2377 = vmatprep.subr.bf16.mxu0 0
        %2378 = vmatpush2.bf16.msra.mxu0 0
        %2379 = vmatprep.subr.bf16.mxu0 0
        %2380 = vmatpush2.bf16.msra.mxu0 0
        %2381 = vmatprep.subr.bf16.mxu0 0
        %2382 = vmatpush2.bf16.msra.mxu0 0
        %2383 = vmatprep.subr.bf16.mxu0 0
        %2384 = vmatpush2.bf16.msra.mxu0 0
        %2385 = vmatprep.subr.bf16.mxu0 0
        %2386 = vmatpush2.bf16.msra.mxu0 0
        %2387 = vmatprep.subr.bf16.mxu0 0
        %2388 = vmatpush2.bf16.msra.mxu0 0
        %2389 = vmatprep.mubr.bf16.mxu0 0
        %2390 = vmatmul.mubr.bf16.gmra.mxu0 %v2310
        %v2391 = vpop.f32.mrf.mxu0
        %v2392 = vadd.f32 0.0, %v2391
        %v2393 = vpop.f32.mrf.mxu0
        %v2394 = vpop.f32.mrf.mxu0
        %v2395 = vadd.f32 0.0, %v2394
        %v2396 = vpop.f32.mrf.mxu0
        %2397 = vmatprep.mubr.bf16.mxu0 0
        %2398 = vmatmul.mubr.bf16.gmra.mxu0 %v2313
        %v2399 = vpop.f32.mrf.mxu0
        %v2400 = vadd.f32 0.0, %v2399
        %v2401 = vpop.f32.mrf.mxu0
        %v2402 = vpop.f32.mrf.mxu0
        %v2403 = vadd.f32 0.0, %v2402
        %v2404 = vpop.f32.mrf.mxu0
        %2405 = vmatprep.mubr.bf16.mxu0 0
        %2406 = vmatmul.mubr.bf16.gmra.mxu0 %v2316
        %v2407 = vpop.f32.mrf.mxu0
        %v2408 = vadd.f32 0.0, %v2407
        %v2409 = vpop.f32.mrf.mxu0
        %v2410 = vpop.f32.mrf.mxu0
        %v2411 = vadd.f32 0.0, %v2410
        %v2412 = vpop.f32.mrf.mxu0
        %2413 = vmatprep.mubr.bf16.mxu0 0
        %2414 = vmatmul.mubr.bf16.gmra.mxu0 %v2319
        %v2415 = vpop.f32.mrf.mxu0
        %v2416 = vadd.f32 0.0, %v2415
        %v2417 = vpop.f32.mrf.mxu0
        %v2418 = vpop.f32.mrf.mxu0
        %v2419 = vadd.f32 0.0, %v2418
        %v2420 = vpop.f32.mrf.mxu0
        %2421 = vmatprep.mubr.bf16.mxu0 0
        %2422 = vmatmul.mubr.bf16.gmra.mxu0 %v2322
        %v2423 = vpop.f32.mrf.mxu0
        %v2424 = vadd.f32 0.0, %v2423
        %v2425 = vpop.f32.mrf.mxu0
        %v2426 = vpop.f32.mrf.mxu0
        %v2427 = vadd.f32 0.0, %v2426
        %v2428 = vpop.f32.mrf.mxu0
        %2429 = vmatprep.mubr.bf16.mxu0 0
        %2430 = vmatmul.mubr.bf16.gmra.mxu0 %v2325
        %v2431 = vpop.f32.mrf.mxu0
        %v2432 = vadd.f32 0.0, %v2431
        %v2433 = vpop.f32.mrf.mxu0
        %v2434 = vpop.f32.mrf.mxu0
        %v2435 = vadd.f32 0.0, %v2434
        %v2436 = vpop.f32.mrf.mxu0
        %2437 = vmatprep.mubr.bf16.mxu0 0
        %2438 = vmatmul.mubr.bf16.gmra.mxu0 %v2328
        %v2439 = vpop.f32.mrf.mxu0
        %v2440 = vadd.f32 0.0, %v2439
        %v2441 = vpop.f32.mrf.mxu0
        %v2442 = vpop.f32.mrf.mxu0
        %v2443 = vadd.f32 0.0, %v2442
        %v2444 = vpop.f32.mrf.mxu0
        %2445 = vmatprep.mubr.bf16.mxu0 0
        %2446 = vmatmul.mubr.bf16.gmra.mxu0 %v2331
        %v2447 = vpop.f32.mrf.mxu0
        %v2448 = vadd.f32 0.0, %v2447
        %v2449 = vpop.f32.mrf.mxu0
        %v2450 = vpop.f32.mrf.mxu0
        %v2451 = vadd.f32 0.0, %v2450
        %v2452 = vpop.f32.mrf.mxu0
        %2453 = vmatprep.mubr.bf16.mxu0 0
        %2454 = vmatmul.mubr.bf16.gmra.mxu0 %v2334
        %v2455 = vpop.f32.mrf.mxu0
        %v2456 = vadd.f32 0.0, %v2455
        %v2457 = vpop.f32.mrf.mxu0
        %v2458 = vpop.f32.mrf.mxu0
        %v2459 = vadd.f32 0.0, %v2458
        %v2460 = vpop.f32.mrf.mxu0
        %2461 = vmatprep.mubr.bf16.mxu0 0
        %2462 = vmatmul.mubr.bf16.gmra.mxu0 %v2337
        %v2463 = vpop.f32.mrf.mxu0
        %v2464 = vadd.f32 0.0, %v2463
        %v2465 = vpop.f32.mrf.mxu0
        %v2466 = vpop.f32.mrf.mxu0
        %v2467 = vadd.f32 0.0, %v2466
        %v2468 = vpop.f32.mrf.mxu0
        %2469 = vmatprep.mubr.bf16.mxu0 0
        %2470 = vmatmul.mubr.bf16.gmra.mxu0 %v2340
        %v2471 = vpop.f32.mrf.mxu0
        %v2472 = vadd.f32 0.0, %v2471
        %v2473 = vpop.f32.mrf.mxu0
        %v2474 = vpop.f32.mrf.mxu0
        %v2475 = vadd.f32 0.0, %v2474
        %v2476 = vpop.f32.mrf.mxu0
        %2477 = vmatprep.mubr.bf16.mxu0 0
        %2478 = vmatmul.mubr.bf16.gmra.mxu0 %v2343
        %v2479 = vpop.f32.mrf.mxu0
        %v2480 = vadd.f32 0.0, %v2479
        %v2481 = vpop.f32.mrf.mxu0
        %v2482 = vpop.f32.mrf.mxu0
        %v2483 = vadd.f32 0.0, %v2482
        %v2484 = vpop.f32.mrf.mxu0
        %2485 = vmatprep.mubr.bf16.mxu0 0
        %2486 = vmatmul.mubr.bf16.gmra.mxu0 %v2346
        %v2487 = vpop.f32.mrf.mxu0
        %v2488 = vadd.f32 0.0, %v2487
        %v2489 = vpop.f32.mrf.mxu0
        %v2490 = vpop.f32.mrf.mxu0
        %v2491 = vadd.f32 0.0, %v2490
        %v2492 = vpop.f32.mrf.mxu0
        %2493 = vmatprep.mubr.bf16.mxu0 0
        %2494 = vmatmul.mubr.bf16.gmra.mxu0 %v2349
        %v2495 = vpop.f32.mrf.mxu0
        %v2496 = vadd.f32 0.0, %v2495
        %v2497 = vpop.f32.mrf.mxu0
        %v2498 = vpop.f32.mrf.mxu0
        %v2499 = vadd.f32 0.0, %v2498
        %v2500 = vpop.f32.mrf.mxu0
        %2501 = vmatprep.mubr.bf16.mxu0 0
        %2502 = vmatmul.mubr.bf16.gmra.mxu0 %v2352
        %v2503 = vpop.f32.mrf.mxu0
        %v2504 = vadd.f32 0.0, %v2503
        %v2505 = vpop.f32.mrf.mxu0
        %v2506 = vpop.f32.mrf.mxu0
        %v2507 = vadd.f32 0.0, %v2506
        %v2508 = vpop.f32.mrf.mxu0
        %2509 = vmatprep.mubr.bf16.mxu0 0
        %2510 = vmatmul.mubr.bf16.gmra.mxu0 %v2355
        %v2511 = vpop.f32.mrf.mxu0
        %v2512 = vadd.f32 0.0, %v2511
        %v2513 = vpop.f32.mrf.mxu0
        %v2514 = vpop.f32.mrf.mxu0
        %v2515 = vadd.f32 0.0, %v2514
        %v2516 = vpop.f32.mrf.mxu0
        %2517 = vdwg.mxu0
        %v2518 = vadd.f32 %v2211, %v2392
        %v2519 = vadd.f32 %v2212, %v2395
        %v2520 = vadd.f32 %v2213, %v2400
        %v2521 = vadd.f32 %v2214, %v2403
        %v2522 = vadd.f32 %v2215, %v2408
        %v2523 = vadd.f32 %v2216, %v2411
        %v2524 = vadd.f32 %v2217, %v2416
        %v2525 = vadd.f32 %v2218, %v2419
        %v2526 = vadd.f32 %v2219, %v2424
        %v2527 = vadd.f32 %v2220, %v2427
        %v2528 = vadd.f32 %v2221, %v2432
        %v2529 = vadd.f32 %v2222, %v2435
        %v2530 = vadd.f32 %v2223, %v2440
        %v2531 = vadd.f32 %v2224, %v2443
        %v2532 = vadd.f32 %v2225, %v2448
        %v2533 = vadd.f32 %v2226, %v2451
        %v2534 = vadd.f32 %v2227, %v2456
        %v2535 = vadd.f32 %v2228, %v2459
        %v2536 = vadd.f32 %v2229, %v2464
        %v2537 = vadd.f32 %v2230, %v2467
        %v2538 = vadd.f32 %v2231, %v2472
        %v2539 = vadd.f32 %v2232, %v2475
        %v2540 = vadd.f32 %v2233, %v2480
        %v2541 = vadd.f32 %v2234, %v2483
        %v2542 = vadd.f32 %v2235, %v2488
        %v2543 = vadd.f32 %v2236, %v2491
        %v2544 = vadd.f32 %v2237, %v2496
        %v2545 = vadd.f32 %v2238, %v2499
        %v2546 = vadd.f32 %v2239, %v2504
        %v2547 = vadd.f32 %v2240, %v2507
        %v2548 = vadd.f32 %v2241, %v2512
        %v2549 = vadd.f32 %v2242, %v2515
        %v2550 = vld [vmem:[%s2243 + $0x1] sm:$0xff]
        %v2551 = vld [vmem:[%s2243 + $0x11] sm:$0xff]
        %v2552 = vld [vmem:[%s2243 + $0x21] sm:$0xff]
        %v2553 = vld [vmem:[%s2243 + $0x31] sm:$0xff]
        %v2554 = vld [vmem:[%s2243 + $0x41] sm:$0xff]
        %v2555 = vld [vmem:[%s2243 + $0x51] sm:$0xff]
        %v2556 = vld [vmem:[%s2243 + $0x61] sm:$0xff]
        %v2557 = vld [vmem:[%s2243 + $0x71] sm:$0xff]
        %v2558 = vld [vmem:[%s2243 + $0xa1] sm:$0xff]
        %v2559 = vld [vmem:[%s2243 + $0xb1] sm:$0xff]
        %v2560 = vld [vmem:[%s2243 + $0xc1] sm:$0xff]
        %v2561 = vld [vmem:[%s2243 + $0xd1] sm:$0xff]
        %v2562 = vld [vmem:[%s2243 + $0xe1] sm:$0xff]
        %v2563 = vld [vmem:[%s2243 + $0xf1] sm:$0xff]
        %v2564 = vld [vmem:[%s2243 + $0x101] sm:$0xff]
        %v2565 = vld [vmem:[%s2243 + $0x111] sm:$0xff]
        %v2566 = vld [vmem:[%s2243 + $0x141] sm:$0xff]
        %v2567 = vld [vmem:[%s2243 + $0x151] sm:$0xff]
        %v2568 = vld [vmem:[%s2243 + $0x161] sm:$0xff]
        %v2569 = vld [vmem:[%s2243 + $0x171] sm:$0xff]
        %v2570 = vld [vmem:[%s2243 + $0x181] sm:$0xff]
        %v2571 = vld [vmem:[%s2243 + $0x191] sm:$0xff]
        %v2572 = vld [vmem:[%s2243 + $0x1a1] sm:$0xff]
        %v2573 = vld [vmem:[%s2243 + $0x1b1] sm:$0xff]
        %v2574 = vld [vmem:[%s2243 + $0x1e1] sm:$0xff]
        %v2575 = vld [vmem:[%s2243 + $0x1f1] sm:$0xff]
        %v2576 = vld [vmem:[%s2243 + $0x201] sm:$0xff]
        %v2577 = vld [vmem:[%s2243 + $0x211] sm:$0xff]
        %v2578 = vld [vmem:[%s2243 + $0x221] sm:$0xff]
        %v2579 = vld [vmem:[%s2243 + $0x231] sm:$0xff]
        %v2580 = vld [vmem:[%s2243 + $0x241] sm:$0xff]
        %v2581 = vld [vmem:[%s2243 + $0x251] sm:$0xff]
        %v2582 = vpack.c.bf16 %v2551, %v2550
        %v2583 = vpack.c.bf16 %v2553, %v2552
        %v2584 = vpack.c.bf16 %v2555, %v2554
        %v2585 = vpack.c.bf16 %v2557, %v2556
        %v2586 = vpack.c.bf16 %v2559, %v2558
        %v2587 = vpack.c.bf16 %v2561, %v2560
        %v2588 = vpack.c.bf16 %v2563, %v2562
        %v2589 = vpack.c.bf16 %v2565, %v2564
        %v2590 = vpack.c.bf16 %v2567, %v2566
        %v2591 = vpack.c.bf16 %v2569, %v2568
        %v2592 = vpack.c.bf16 %v2571, %v2570
        %v2593 = vpack.c.bf16 %v2573, %v2572
        %v2594 = vpack.c.bf16 %v2575, %v2574
        %v2595 = vpack.c.bf16 %v2577, %v2576
        %v2596 = vpack.c.bf16 %v2579, %v2578
        %v2597 = vpack.c.bf16 %v2581, %v2580
        %s2598 = scalar_lea.vmem [#allocation7], 64
        %v2599 = vld [vmem:[%s2598] sm:$0xf]
        %v2600 = vld [vmem:[%s2598 + $0x4] sm:$0xf]
        %v2601 = vld [vmem:[%s2598 + $0x8] sm:$0xf]
        %v2602 = vld [vmem:[%s2598 + $0xc] sm:$0xf]
        %v2607 = vunpack.c.l.b16 %v2599
        %v2608 = vunpack.c.l.b16 %v2600
        %v2609 = vunpack.c.l.b16 %v2601
        %v2610 = vunpack.c.l.b16 %v2602
        %v2611 = vpack.c.b16 %v2608, %v2607
        %v2612 = vpack.c.b16 %v2610, %v2609
        %v2616 = vsel %vm757, %v2582, 0
        %v2619 = vsel %vm757, %v2583, 0
        %v2622 = vsel %vm757, %v2584, 0
        %v2625 = vsel %vm757, %v2585, 0
        %v2628 = vsel %vm757, %v2586, 0
        %v2631 = vsel %vm757, %v2587, 0
        %v2634 = vsel %vm757, %v2588, 0
        %v2637 = vsel %vm757, %v2589, 0
        %v2640 = vsel %vm757, %v2590, 0
        %v2643 = vsel %vm757, %v2591, 0
        %v2646 = vsel %vm757, %v2592, 0
        %v2649 = vsel %vm757, %v2593, 0
        %v2652 = vsel %vm757, %v2594, 0
        %v2655 = vsel %vm757, %v2595, 0
        %v2658 = vsel %vm757, %v2596, 0
        %v2661 = vsel %vm757, %v2597, 0
        %2663 = vmatprep.subr.bf16.mxu0 0
        %2664 = vmatpush1.bf16.msra.mxu0 0
        %2665 = vmatprep.subr.bf16.mxu0 0
        %2666 = vmatpush1.bf16.msra.mxu0 0
        %2667 = vmatprep.subr.bf16.mxu0 0
        %2668 = vmatpush1.bf16.msra.mxu0 0
        %2669 = vmatprep.subr.bf16.mxu0 0
        %2670 = vmatpush1.bf16.msra.mxu0 0
        %2671 = vmatprep.subr.bf16.mxu0 0
        %2672 = vmatpush1.bf16.msra.mxu0 0
        %2673 = vmatprep.subr.bf16.mxu0 0
        %2674 = vmatpush1.bf16.msra.mxu0 0
        %2675 = vmatprep.subr.bf16.mxu0 0
        %2676 = vmatpush1.bf16.msra.mxu0 %v2612
        %2677 = vmatprep.subr.bf16.mxu0 0
        %2678 = vmatpush1.bf16.msra.mxu0 %v2611
        %2679 = vmatprep.subr.bf16.mxu0 0
        %2680 = vmatpush2.bf16.msra.mxu0 0
        %2681 = vmatprep.subr.bf16.mxu0 0
        %2682 = vmatpush2.bf16.msra.mxu0 0
        %2683 = vmatprep.subr.bf16.mxu0 0
        %2684 = vmatpush2.bf16.msra.mxu0 0
        %2685 = vmatprep.subr.bf16.mxu0 0
        %2686 = vmatpush2.bf16.msra.mxu0 0
        %2687 = vmatprep.subr.bf16.mxu0 0
        %2688 = vmatpush2.bf16.msra.mxu0 0
        %2689 = vmatprep.subr.bf16.mxu0 0
        %2690 = vmatpush2.bf16.msra.mxu0 0
        %2691 = vmatprep.subr.bf16.mxu0 0
        %2692 = vmatpush2.bf16.msra.mxu0 0
        %2693 = vmatprep.subr.bf16.mxu0 0
        %2694 = vmatpush2.bf16.msra.mxu0 0
        %2695 = vmatprep.mubr.bf16.mxu0 0
        %2696 = vmatmul.mubr.bf16.gmra.mxu0 %v2616
        %v2697 = vpop.f32.mrf.mxu0
        %v2698 = vadd.f32 0.0, %v2697
        %v2699 = vpop.f32.mrf.mxu0
        %v2700 = vpop.f32.mrf.mxu0
        %v2701 = vadd.f32 0.0, %v2700
        %v2702 = vpop.f32.mrf.mxu0
        %2703 = vmatprep.mubr.bf16.mxu0 0
        %2704 = vmatmul.mubr.bf16.gmra.mxu0 %v2619
        %v2705 = vpop.f32.mrf.mxu0
        %v2706 = vadd.f32 0.0, %v2705
        %v2707 = vpop.f32.mrf.mxu0
        %v2708 = vpop.f32.mrf.mxu0
        %v2709 = vadd.f32 0.0, %v2708
        %v2710 = vpop.f32.mrf.mxu0
        %2711 = vmatprep.mubr.bf16.mxu0 0
        %2712 = vmatmul.mubr.bf16.gmra.mxu0 %v2622
        %v2713 = vpop.f32.mrf.mxu0
        %v2714 = vadd.f32 0.0, %v2713
        %v2715 = vpop.f32.mrf.mxu0
        %v2716 = vpop.f32.mrf.mxu0
        %v2717 = vadd.f32 0.0, %v2716
        %v2718 = vpop.f32.mrf.mxu0
        %2719 = vmatprep.mubr.bf16.mxu0 0
        %2720 = vmatmul.mubr.bf16.gmra.mxu0 %v2625
        %v2721 = vpop.f32.mrf.mxu0
        %v2722 = vadd.f32 0.0, %v2721
        %v2723 = vpop.f32.mrf.mxu0
        %v2724 = vpop.f32.mrf.mxu0
        %v2725 = vadd.f32 0.0, %v2724
        %v2726 = vpop.f32.mrf.mxu0
        %2727 = vmatprep.mubr.bf16.mxu0 0
        %2728 = vmatmul.mubr.bf16.gmra.mxu0 %v2628
        %v2729 = vpop.f32.mrf.mxu0
        %v2730 = vadd.f32 0.0, %v2729
        %v2731 = vpop.f32.mrf.mxu0
        %v2732 = vpop.f32.mrf.mxu0
        %v2733 = vadd.f32 0.0, %v2732
        %v2734 = vpop.f32.mrf.mxu0
        %2735 = vmatprep.mubr.bf16.mxu0 0
        %2736 = vmatmul.mubr.bf16.gmra.mxu0 %v2631
        %v2737 = vpop.f32.mrf.mxu0
        %v2738 = vadd.f32 0.0, %v2737
        %v2739 = vpop.f32.mrf.mxu0
        %v2740 = vpop.f32.mrf.mxu0
        %v2741 = vadd.f32 0.0, %v2740
        %v2742 = vpop.f32.mrf.mxu0
        %2743 = vmatprep.mubr.bf16.mxu0 0
        %2744 = vmatmul.mubr.bf16.gmra.mxu0 %v2634
        %v2745 = vpop.f32.mrf.mxu0
        %v2746 = vadd.f32 0.0, %v2745
        %v2747 = vpop.f32.mrf.mxu0
        %v2748 = vpop.f32.mrf.mxu0
        %v2749 = vadd.f32 0.0, %v2748
        %v2750 = vpop.f32.mrf.mxu0
        %2751 = vmatprep.mubr.bf16.mxu0 0
        %2752 = vmatmul.mubr.bf16.gmra.mxu0 %v2637
        %v2753 = vpop.f32.mrf.mxu0
        %v2754 = vadd.f32 0.0, %v2753
        %v2755 = vpop.f32.mrf.mxu0
        %v2756 = vpop.f32.mrf.mxu0
        %v2757 = vadd.f32 0.0, %v2756
        %v2758 = vpop.f32.mrf.mxu0
        %2759 = vmatprep.mubr.bf16.mxu0 0
        %2760 = vmatmul.mubr.bf16.gmra.mxu0 %v2640
        %v2761 = vpop.f32.mrf.mxu0
        %v2762 = vadd.f32 0.0, %v2761
        %v2763 = vpop.f32.mrf.mxu0
        %v2764 = vpop.f32.mrf.mxu0
        %v2765 = vadd.f32 0.0, %v2764
        %v2766 = vpop.f32.mrf.mxu0
        %2767 = vmatprep.mubr.bf16.mxu0 0
        %2768 = vmatmul.mubr.bf16.gmra.mxu0 %v2643
        %v2769 = vpop.f32.mrf.mxu0
        %v2770 = vadd.f32 0.0, %v2769
        %v2771 = vpop.f32.mrf.mxu0
        %v2772 = vpop.f32.mrf.mxu0
        %v2773 = vadd.f32 0.0, %v2772
        %v2774 = vpop.f32.mrf.mxu0
        %2775 = vmatprep.mubr.bf16.mxu0 0
        %2776 = vmatmul.mubr.bf16.gmra.mxu0 %v2646
        %v2777 = vpop.f32.mrf.mxu0
        %v2778 = vadd.f32 0.0, %v2777
        %v2779 = vpop.f32.mrf.mxu0
        %v2780 = vpop.f32.mrf.mxu0
        %v2781 = vadd.f32 0.0, %v2780
        %v2782 = vpop.f32.mrf.mxu0
        %2783 = vmatprep.mubr.bf16.mxu0 0
        %2784 = vmatmul.mubr.bf16.gmra.mxu0 %v2649
        %v2785 = vpop.f32.mrf.mxu0
        %v2786 = vadd.f32 0.0, %v2785
        %v2787 = vpop.f32.mrf.mxu0
        %v2788 = vpop.f32.mrf.mxu0
        %v2789 = vadd.f32 0.0, %v2788
        %v2790 = vpop.f32.mrf.mxu0
        %2791 = vmatprep.mubr.bf16.mxu0 0
        %2792 = vmatmul.mubr.bf16.gmra.mxu0 %v2652
        %v2793 = vpop.f32.mrf.mxu0
        %v2794 = vadd.f32 0.0, %v2793
        %v2795 = vpop.f32.mrf.mxu0
        %v2796 = vpop.f32.mrf.mxu0
        %v2797 = vadd.f32 0.0, %v2796
        %v2798 = vpop.f32.mrf.mxu0
        %2799 = vmatprep.mubr.bf16.mxu0 0
        %2800 = vmatmul.mubr.bf16.gmra.mxu0 %v2655
        %v2801 = vpop.f32.mrf.mxu0
        %v2802 = vadd.f32 0.0, %v2801
        %v2803 = vpop.f32.mrf.mxu0
        %v2804 = vpop.f32.mrf.mxu0
        %v2805 = vadd.f32 0.0, %v2804
        %v2806 = vpop.f32.mrf.mxu0
        %2807 = vmatprep.mubr.bf16.mxu0 0
        %2808 = vmatmul.mubr.bf16.gmra.mxu0 %v2658
        %v2809 = vpop.f32.mrf.mxu0
        %v2810 = vadd.f32 0.0, %v2809
        %v2811 = vpop.f32.mrf.mxu0
        %v2812 = vpop.f32.mrf.mxu0
        %v2813 = vadd.f32 0.0, %v2812
        %v2814 = vpop.f32.mrf.mxu0
        %2815 = vmatprep.mubr.bf16.mxu0 0
        %2816 = vmatmul.mubr.bf16.gmra.mxu0 %v2661
        %v2817 = vpop.f32.mrf.mxu0
        %v2818 = vadd.f32 0.0, %v2817
        %v2819 = vpop.f32.mrf.mxu0
        %v2820 = vpop.f32.mrf.mxu0
        %v2821 = vadd.f32 0.0, %v2820
        %v2822 = vpop.f32.mrf.mxu0
        %2823 = vdwg.mxu0
        %v2824 = vadd.f32 %v2518, %v2698
        %v2825 = vadd.f32 %v2519, %v2701
        %v2826 = vadd.f32 %v2520, %v2706
        %v2827 = vadd.f32 %v2521, %v2709
        %v2828 = vadd.f32 %v2522, %v2714
        %v2829 = vadd.f32 %v2523, %v2717
        %v2830 = vadd.f32 %v2524, %v2722
        %v2831 = vadd.f32 %v2525, %v2725
        %v2832 = vadd.f32 %v2526, %v2730
        %v2833 = vadd.f32 %v2527, %v2733
        %v2834 = vadd.f32 %v2528, %v2738
        %v2835 = vadd.f32 %v2529, %v2741
        %v2836 = vadd.f32 %v2530, %v2746
        %v2837 = vadd.f32 %v2531, %v2749
        %v2838 = vadd.f32 %v2532, %v2754
        %v2839 = vadd.f32 %v2533, %v2757
        %v2840 = vadd.f32 %v2534, %v2762
        %v2841 = vadd.f32 %v2535, %v2765
        %v2842 = vadd.f32 %v2536, %v2770
        %v2843 = vadd.f32 %v2537, %v2773
        %v2844 = vadd.f32 %v2538, %v2778
        %v2845 = vadd.f32 %v2539, %v2781
        %v2846 = vadd.f32 %v2540, %v2786
        %v2847 = vadd.f32 %v2541, %v2789
        %v2848 = vadd.f32 %v2542, %v2794
        %v2849 = vadd.f32 %v2543, %v2797
        %v2850 = vadd.f32 %v2544, %v2802
        %v2851 = vadd.f32 %v2545, %v2805
        %v2852 = vadd.f32 %v2546, %v2810
        %v2853 = vadd.f32 %v2547, %v2813
        %v2854 = vadd.f32 %v2548, %v2818
        %v2855 = vadd.f32 %v2549, %v2821
        %v2856 = vld [vmem:[%s2243 + $0x2] sm:$0xff]
        %v2857 = vld [vmem:[%s2243 + $0x12] sm:$0xff]
        %v2858 = vld [vmem:[%s2243 + $0x22] sm:$0xff]
        %v2859 = vld [vmem:[%s2243 + $0x32] sm:$0xff]
        %v2860 = vld [vmem:[%s2243 + $0x42] sm:$0xff]
        %v2861 = vld [vmem:[%s2243 + $0x52] sm:$0xff]
        %v2862 = vld [vmem:[%s2243 + $0x62] sm:$0xff]
        %v2863 = vld [vmem:[%s2243 + $0x72] sm:$0xff]
        %v2864 = vld [vmem:[%s2243 + $0xa2] sm:$0xff]
        %v2865 = vld [vmem:[%s2243 + $0xb2] sm:$0xff]
        %v2866 = vld [vmem:[%s2243 + $0xc2] sm:$0xff]
        %v2867 = vld [vmem:[%s2243 + $0xd2] sm:$0xff]
        %v2868 = vld [vmem:[%s2243 + $0xe2] sm:$0xff]
        %v2869 = vld [vmem:[%s2243 + $0xf2] sm:$0xff]
        %v2870 = vld [vmem:[%s2243 + $0x102] sm:$0xff]
        %v2871 = vld [vmem:[%s2243 + $0x112] sm:$0xff]
        %v2872 = vld [vmem:[%s2243 + $0x142] sm:$0xff]
        %v2873 = vld [vmem:[%s2243 + $0x152] sm:$0xff]
        %v2874 = vld [vmem:[%s2243 + $0x162] sm:$0xff]
        %v2875 = vld [vmem:[%s2243 + $0x172] sm:$0xff]
        %v2876 = vld [vmem:[%s2243 + $0x182] sm:$0xff]
        %v2877 = vld [vmem:[%s2243 + $0x192] sm:$0xff]
        %v2878 = vld [vmem:[%s2243 + $0x1a2] sm:$0xff]
        %v2879 = vld [vmem:[%s2243 + $0x1b2] sm:$0xff]
        %v2880 = vld [vmem:[%s2243 + $0x1e2] sm:$0xff]
        %v2881 = vld [vmem:[%s2243 + $0x1f2] sm:$0xff]
        %v2882 = vld [vmem:[%s2243 + $0x202] sm:$0xff]
        %v2883 = vld [vmem:[%s2243 + $0x212] sm:$0xff]
        %v2884 = vld [vmem:[%s2243 + $0x222] sm:$0xff]
        %v2885 = vld [vmem:[%s2243 + $0x232] sm:$0xff]
        %v2886 = vld [vmem:[%s2243 + $0x242] sm:$0xff]
        %v2887 = vld [vmem:[%s2243 + $0x252] sm:$0xff]
        %v2888 = vpack.c.bf16 %v2857, %v2856
        %v2889 = vpack.c.bf16 %v2859, %v2858
        %v2890 = vpack.c.bf16 %v2861, %v2860
        %v2891 = vpack.c.bf16 %v2863, %v2862
        %v2892 = vpack.c.bf16 %v2865, %v2864
        %v2893 = vpack.c.bf16 %v2867, %v2866
        %v2894 = vpack.c.bf16 %v2869, %v2868
        %v2895 = vpack.c.bf16 %v2871, %v2870
        %v2896 = vpack.c.bf16 %v2873, %v2872
        %v2897 = vpack.c.bf16 %v2875, %v2874
        %v2898 = vpack.c.bf16 %v2877, %v2876
        %v2899 = vpack.c.bf16 %v2879, %v2878
        %v2900 = vpack.c.bf16 %v2881, %v2880
        %v2901 = vpack.c.bf16 %v2883, %v2882
        %v2902 = vpack.c.bf16 %v2885, %v2884
        %v2903 = vpack.c.bf16 %v2887, %v2886
        %s2904 = scalar_lea.vmem [#allocation7], 80
        %v2905 = vld [vmem:[%s2904] sm:$0xf]
        %v2906 = vld [vmem:[%s2904 + $0x4] sm:$0xf]
        %v2907 = vld [vmem:[%s2904 + $0x8] sm:$0xf]
        %v2908 = vld [vmem:[%s2904 + $0xc] sm:$0xf]
        %v2913 = vunpack.c.l.b16 %v2905
        %v2914 = vunpack.c.l.b16 %v2906
        %v2915 = vunpack.c.l.b16 %v2907
        %v2916 = vunpack.c.l.b16 %v2908
        %v2917 = vpack.c.b16 %v2914, %v2913
        %v2918 = vpack.c.b16 %v2916, %v2915
        %v2922 = vsel %vm757, %v2888, 0
        %v2925 = vsel %vm757, %v2889, 0
        %v2928 = vsel %vm757, %v2890, 0
        %v2931 = vsel %vm757, %v2891, 0
        %v2934 = vsel %vm757, %v2892, 0
        %v2937 = vsel %vm757, %v2893, 0
        %v2940 = vsel %vm757, %v2894, 0
        %v2943 = vsel %vm757, %v2895, 0
        %v2946 = vsel %vm757, %v2896, 0
        %v2949 = vsel %vm757, %v2897, 0
        %v2952 = vsel %vm757, %v2898, 0
        %v2955 = vsel %vm757, %v2899, 0
        %v2958 = vsel %vm757, %v2900, 0
        %v2961 = vsel %vm757, %v2901, 0
        %v2964 = vsel %vm757, %v2902, 0
        %v2967 = vsel %vm757, %v2903, 0
        %2969 = vmatprep.subr.bf16.mxu0 0
        %2970 = vmatpush1.bf16.msra.mxu0 0
        %2971 = vmatprep.subr.bf16.mxu0 0
        %2972 = vmatpush1.bf16.msra.mxu0 0
        %2973 = vmatprep.subr.bf16.mxu0 0
        %2974 = vmatpush1.bf16.msra.mxu0 0
        %2975 = vmatprep.subr.bf16.mxu0 0
        %2976 = vmatpush1.bf16.msra.mxu0 0
        %2977 = vmatprep.subr.bf16.mxu0 0
        %2978 = vmatpush1.bf16.msra.mxu0 0
        %2979 = vmatprep.subr.bf16.mxu0 0
        %2980 = vmatpush1.bf16.msra.mxu0 0
        %2981 = vmatprep.subr.bf16.mxu0 0
        %2982 = vmatpush1.bf16.msra.mxu0 %v2918
        %2983 = vmatprep.subr.bf16.mxu0 0
        %2984 = vmatpush1.bf16.msra.mxu0 %v2917
        %2985 = vmatprep.subr.bf16.mxu0 0
        %2986 = vmatpush2.bf16.msra.mxu0 0
        %2987 = vmatprep.subr.bf16.mxu0 0
        %2988 = vmatpush2.bf16.msra.mxu0 0
        %2989 = vmatprep.subr.bf16.mxu0 0
        %2990 = vmatpush2.bf16.msra.mxu0 0
        %2991 = vmatprep.subr.bf16.mxu0 0
        %2992 = vmatpush2.bf16.msra.mxu0 0
        %2993 = vmatprep.subr.bf16.mxu0 0
        %2994 = vmatpush2.bf16.msra.mxu0 0
        %2995 = vmatprep.subr.bf16.mxu0 0
        %2996 = vmatpush2.bf16.msra.mxu0 0
        %2997 = vmatprep.subr.bf16.mxu0 0
        %2998 = vmatpush2.bf16.msra.mxu0 0
        %2999 = vmatprep.subr.bf16.mxu0 0
        %3000 = vmatpush2.bf16.msra.mxu0 0
        %3001 = vmatprep.mubr.bf16.mxu0 0
        %3002 = vmatmul.mubr.bf16.gmra.mxu0 %v2922
        %v3003 = vpop.f32.mrf.mxu0
        %v3004 = vadd.f32 0.0, %v3003
        %v3005 = vpop.f32.mrf.mxu0
        %v3006 = vpop.f32.mrf.mxu0
        %v3007 = vadd.f32 0.0, %v3006
        %v3008 = vpop.f32.mrf.mxu0
        %3009 = vmatprep.mubr.bf16.mxu0 0
        %3010 = vmatmul.mubr.bf16.gmra.mxu0 %v2925
        %v3011 = vpop.f32.mrf.mxu0
        %v3012 = vadd.f32 0.0, %v3011
        %v3013 = vpop.f32.mrf.mxu0
        %v3014 = vpop.f32.mrf.mxu0
        %v3015 = vadd.f32 0.0, %v3014
        %v3016 = vpop.f32.mrf.mxu0
        %3017 = vmatprep.mubr.bf16.mxu0 0
        %3018 = vmatmul.mubr.bf16.gmra.mxu0 %v2928
        %v3019 = vpop.f32.mrf.mxu0
        %v3020 = vadd.f32 0.0, %v3019
        %v3021 = vpop.f32.mrf.mxu0
        %v3022 = vpop.f32.mrf.mxu0
        %v3023 = vadd.f32 0.0, %v3022
        %v3024 = vpop.f32.mrf.mxu0
        %3025 = vmatprep.mubr.bf16.mxu0 0
        %3026 = vmatmul.mubr.bf16.gmra.mxu0 %v2931
        %v3027 = vpop.f32.mrf.mxu0
        %v3028 = vadd.f32 0.0, %v3027
        %v3029 = vpop.f32.mrf.mxu0
        %v3030 = vpop.f32.mrf.mxu0
        %v3031 = vadd.f32 0.0, %v3030
        %v3032 = vpop.f32.mrf.mxu0
        %3033 = vmatprep.mubr.bf16.mxu0 0
        %3034 = vmatmul.mubr.bf16.gmra.mxu0 %v2934
        %v3035 = vpop.f32.mrf.mxu0
        %v3036 = vadd.f32 0.0, %v3035
        %v3037 = vpop.f32.mrf.mxu0
        %v3038 = vpop.f32.mrf.mxu0
        %v3039 = vadd.f32 0.0, %v3038
        %v3040 = vpop.f32.mrf.mxu0
        %3041 = vmatprep.mubr.bf16.mxu0 0
        %3042 = vmatmul.mubr.bf16.gmra.mxu0 %v2937
        %v3043 = vpop.f32.mrf.mxu0
        %v3044 = vadd.f32 0.0, %v3043
        %v3045 = vpop.f32.mrf.mxu0
        %v3046 = vpop.f32.mrf.mxu0
        %v3047 = vadd.f32 0.0, %v3046
        %v3048 = vpop.f32.mrf.mxu0
        %3049 = vmatprep.mubr.bf16.mxu0 0
        %3050 = vmatmul.mubr.bf16.gmra.mxu0 %v2940
        %v3051 = vpop.f32.mrf.mxu0
        %v3052 = vadd.f32 0.0, %v3051
        %v3053 = vpop.f32.mrf.mxu0
        %v3054 = vpop.f32.mrf.mxu0
        %v3055 = vadd.f32 0.0, %v3054
        %v3056 = vpop.f32.mrf.mxu0
        %3057 = vmatprep.mubr.bf16.mxu0 0
        %3058 = vmatmul.mubr.bf16.gmra.mxu0 %v2943
        %v3059 = vpop.f32.mrf.mxu0
        %v3060 = vadd.f32 0.0, %v3059
        %v3061 = vpop.f32.mrf.mxu0
        %v3062 = vpop.f32.mrf.mxu0
        %v3063 = vadd.f32 0.0, %v3062
        %v3064 = vpop.f32.mrf.mxu0
        %3065 = vmatprep.mubr.bf16.mxu0 0
        %3066 = vmatmul.mubr.bf16.gmra.mxu0 %v2946
        %v3067 = vpop.f32.mrf.mxu0
        %v3068 = vadd.f32 0.0, %v3067
        %v3069 = vpop.f32.mrf.mxu0
        %v3070 = vpop.f32.mrf.mxu0
        %v3071 = vadd.f32 0.0, %v3070
        %v3072 = vpop.f32.mrf.mxu0
        %3073 = vmatprep.mubr.bf16.mxu0 0
        %3074 = vmatmul.mubr.bf16.gmra.mxu0 %v2949
        %v3075 = vpop.f32.mrf.mxu0
        %v3076 = vadd.f32 0.0, %v3075
        %v3077 = vpop.f32.mrf.mxu0
        %v3078 = vpop.f32.mrf.mxu0
        %v3079 = vadd.f32 0.0, %v3078
        %v3080 = vpop.f32.mrf.mxu0
        %3081 = vmatprep.mubr.bf16.mxu0 0
        %3082 = vmatmul.mubr.bf16.gmra.mxu0 %v2952
        %v3083 = vpop.f32.mrf.mxu0
        %v3084 = vadd.f32 0.0, %v3083
        %v3085 = vpop.f32.mrf.mxu0
        %v3086 = vpop.f32.mrf.mxu0
        %v3087 = vadd.f32 0.0, %v3086
        %v3088 = vpop.f32.mrf.mxu0
        %3089 = vmatprep.mubr.bf16.mxu0 0
        %3090 = vmatmul.mubr.bf16.gmra.mxu0 %v2955
        %v3091 = vpop.f32.mrf.mxu0
        %v3092 = vadd.f32 0.0, %v3091
        %v3093 = vpop.f32.mrf.mxu0
        %v3094 = vpop.f32.mrf.mxu0
        %v3095 = vadd.f32 0.0, %v3094
        %v3096 = vpop.f32.mrf.mxu0
        %3097 = vmatprep.mubr.bf16.mxu0 0
        %3098 = vmatmul.mubr.bf16.gmra.mxu0 %v2958
        %v3099 = vpop.f32.mrf.mxu0
        %v3100 = vadd.f32 0.0, %v3099
        %v3101 = vpop.f32.mrf.mxu0
        %v3102 = vpop.f32.mrf.mxu0
        %v3103 = vadd.f32 0.0, %v3102
        %v3104 = vpop.f32.mrf.mxu0
        %3105 = vmatprep.mubr.bf16.mxu0 0
        %3106 = vmatmul.mubr.bf16.gmra.mxu0 %v2961
        %v3107 = vpop.f32.mrf.mxu0
        %v3108 = vadd.f32 0.0, %v3107
        %v3109 = vpop.f32.mrf.mxu0
        %v3110 = vpop.f32.mrf.mxu0
        %v3111 = vadd.f32 0.0, %v3110
        %v3112 = vpop.f32.mrf.mxu0
        %3113 = vmatprep.mubr.bf16.mxu0 0
        %3114 = vmatmul.mubr.bf16.gmra.mxu0 %v2964
        %v3115 = vpop.f32.mrf.mxu0
        %v3116 = vadd.f32 0.0, %v3115
        %v3117 = vpop.f32.mrf.mxu0
        %v3118 = vpop.f32.mrf.mxu0
        %v3119 = vadd.f32 0.0, %v3118
        %v3120 = vpop.f32.mrf.mxu0
        %3121 = vmatprep.mubr.bf16.mxu0 0
        %3122 = vmatmul.mubr.bf16.gmra.mxu0 %v2967
        %v3123 = vpop.f32.mrf.mxu0
        %v3124 = vadd.f32 0.0, %v3123
        %v3125 = vpop.f32.mrf.mxu0
        %v3126 = vpop.f32.mrf.mxu0
        %v3127 = vadd.f32 0.0, %v3126
        %v3128 = vpop.f32.mrf.mxu0
        %3129 = vdwg.mxu0
        %v3130 = vadd.f32 %v2824, %v3004
        %v3131 = vadd.f32 %v2825, %v3007
        %v3132 = vadd.f32 %v2826, %v3012
        %v3133 = vadd.f32 %v2827, %v3015
        %v3134 = vadd.f32 %v2828, %v3020
        %v3135 = vadd.f32 %v2829, %v3023
        %v3136 = vadd.f32 %v2830, %v3028
        %v3137 = vadd.f32 %v2831, %v3031
        %v3138 = vadd.f32 %v2832, %v3036
        %v3139 = vadd.f32 %v2833, %v3039
        %v3140 = vadd.f32 %v2834, %v3044
        %v3141 = vadd.f32 %v2835, %v3047
        %v3142 = vadd.f32 %v2836, %v3052
        %v3143 = vadd.f32 %v2837, %v3055
        %v3144 = vadd.f32 %v2838, %v3060
        %v3145 = vadd.f32 %v2839, %v3063
        %v3146 = vadd.f32 %v2840, %v3068
        %v3147 = vadd.f32 %v2841, %v3071
        %v3148 = vadd.f32 %v2842, %v3076
        %v3149 = vadd.f32 %v2843, %v3079
        %v3150 = vadd.f32 %v2844, %v3084
        %v3151 = vadd.f32 %v2845, %v3087
        %v3152 = vadd.f32 %v2846, %v3092
        %v3153 = vadd.f32 %v2847, %v3095
        %v3154 = vadd.f32 %v2848, %v3100
        %v3155 = vadd.f32 %v2849, %v3103
        %v3156 = vadd.f32 %v2850, %v3108
        %v3157 = vadd.f32 %v2851, %v3111
        %v3158 = vadd.f32 %v2852, %v3116
        %v3159 = vadd.f32 %v2853, %v3119
        %v3160 = vadd.f32 %v2854, %v3124
        %v3161 = vadd.f32 %v2855, %v3127
        %s3162 = scalar_lea.vmem [#allocation2], 32
        %v3163 = vld [vmem:[%s3162] sm:$0xff]
        %v3164 = vld [vmem:[%s3162 + $0x10] sm:$0xff]
        %v3165 = vld [vmem:[%s3162 + $0x20] sm:$0xff]
        %v3166 = vld [vmem:[%s3162 + $0x30] sm:$0xff]
        %v3167 = vld [vmem:[%s3162 + $0x40] sm:$0xff]
        %v3168 = vld [vmem:[%s3162 + $0x50] sm:$0xff]
        %v3169 = vld [vmem:[%s3162 + $0x60] sm:$0xff]
        %v3170 = vld [vmem:[%s3162 + $0x70] sm:$0xff]
        %v3171 = vld [vmem:[%s3162 + $0xa0] sm:$0xff]
        %v3172 = vld [vmem:[%s3162 + $0xb0] sm:$0xff]
        %v3173 = vld [vmem:[%s3162 + $0xc0] sm:$0xff]
        %v3174 = vld [vmem:[%s3162 + $0xd0] sm:$0xff]
        %v3175 = vld [vmem:[%s3162 + $0xe0] sm:$0xff]
        %v3176 = vld [vmem:[%s3162 + $0xf0] sm:$0xff]
        %v3177 = vld [vmem:[%s3162 + $0x100] sm:$0xff]
        %v3178 = vld [vmem:[%s3162 + $0x110] sm:$0xff]
        %v3179 = vld [vmem:[%s3162 + $0x140] sm:$0xff]
        %v3180 = vld [vmem:[%s3162 + $0x150] sm:$0xff]
        %v3181 = vld [vmem:[%s3162 + $0x160] sm:$0xff]
        %v3182 = vld [vmem:[%s3162 + $0x170] sm:$0xff]
        %v3183 = vld [vmem:[%s3162 + $0x180] sm:$0xff]
        %v3184 = vld [vmem:[%s3162 + $0x190] sm:$0xff]
        %v3185 = vld [vmem:[%s3162 + $0x1a0] sm:$0xff]
        %v3186 = vld [vmem:[%s3162 + $0x1b0] sm:$0xff]
        %v3187 = vld [vmem:[%s3162 + $0x1e0] sm:$0xff]
        %v3188 = vld [vmem:[%s3162 + $0x1f0] sm:$0xff]
        %v3189 = vld [vmem:[%s3162 + $0x200] sm:$0xff]
        %v3190 = vld [vmem:[%s3162 + $0x210] sm:$0xff]
        %v3191 = vld [vmem:[%s3162 + $0x220] sm:$0xff]
        %v3192 = vld [vmem:[%s3162 + $0x230] sm:$0xff]
        %v3193 = vld [vmem:[%s3162 + $0x240] sm:$0xff]
        %v3194 = vld [vmem:[%s3162 + $0x250] sm:$0xff]
        %v3195 = vpack.c.bf16 %v3164, %v3163
        %v3196 = vpack.c.bf16 %v3166, %v3165
        %v3197 = vpack.c.bf16 %v3168, %v3167
        %v3198 = vpack.c.bf16 %v3170, %v3169
        %v3199 = vpack.c.bf16 %v3172, %v3171
        %v3200 = vpack.c.bf16 %v3174, %v3173
        %v3201 = vpack.c.bf16 %v3176, %v3175
        %v3202 = vpack.c.bf16 %v3178, %v3177
        %v3203 = vpack.c.bf16 %v3180, %v3179
        %v3204 = vpack.c.bf16 %v3182, %v3181
        %v3205 = vpack.c.bf16 %v3184, %v3183
        %v3206 = vpack.c.bf16 %v3186, %v3185
        %v3207 = vpack.c.bf16 %v3188, %v3187
        %v3208 = vpack.c.bf16 %v3190, %v3189
        %v3209 = vpack.c.bf16 %v3192, %v3191
        %v3210 = vpack.c.bf16 %v3194, %v3193
        %s3211 = scalar_lea.vmem [#allocation7], 96
        %v3212 = vld [vmem:[%s3211] sm:$0xf]
        %v3213 = vld [vmem:[%s3211 + $0x4] sm:$0xf]
        %v3214 = vld [vmem:[%s3211 + $0x8] sm:$0xf]
        %v3215 = vld [vmem:[%s3211 + $0xc] sm:$0xf]
        %v3220 = vunpack.c.l.b16 %v3212
        %v3221 = vunpack.c.l.b16 %v3213
        %v3222 = vunpack.c.l.b16 %v3214
        %v3223 = vunpack.c.l.b16 %v3215
        %v3224 = vpack.c.b16 %v3221, %v3220
        %v3225 = vpack.c.b16 %v3223, %v3222
        %v3229 = vsel %vm757, %v3195, 0
        %v3232 = vsel %vm757, %v3196, 0
        %v3235 = vsel %vm757, %v3197, 0
        %v3238 = vsel %vm757, %v3198, 0
        %v3241 = vsel %vm757, %v3199, 0
        %v3244 = vsel %vm757, %v3200, 0
        %v3247 = vsel %vm757, %v3201, 0
        %v3250 = vsel %vm757, %v3202, 0
        %v3253 = vsel %vm757, %v3203, 0
        %v3256 = vsel %vm757, %v3204, 0
        %v3259 = vsel %vm757, %v3205, 0
        %v3262 = vsel %vm757, %v3206, 0
        %v3265 = vsel %vm757, %v3207, 0
        %v3268 = vsel %vm757, %v3208, 0
        %v3271 = vsel %vm757, %v3209, 0
        %v3274 = vsel %vm757, %v3210, 0
        %3276 = vmatprep.subr.bf16.mxu0 0
        %3277 = vmatpush1.bf16.msra.mxu0 0
        %3278 = vmatprep.subr.bf16.mxu0 0
        %3279 = vmatpush1.bf16.msra.mxu0 0
        %3280 = vmatprep.subr.bf16.mxu0 0
        %3281 = vmatpush1.bf16.msra.mxu0 0
        %3282 = vmatprep.subr.bf16.mxu0 0
        %3283 = vmatpush1.bf16.msra.mxu0 0
        %3284 = vmatprep.subr.bf16.mxu0 0
        %3285 = vmatpush1.bf16.msra.mxu0 0
        %3286 = vmatprep.subr.bf16.mxu0 0
        %3287 = vmatpush1.bf16.msra.mxu0 0
        %3288 = vmatprep.subr.bf16.mxu0 0
        %3289 = vmatpush1.bf16.msra.mxu0 %v3225
        %3290 = vmatprep.subr.bf16.mxu0 0
        %3291 = vmatpush1.bf16.msra.mxu0 %v3224
        %3292 = vmatprep.subr.bf16.mxu0 0
        %3293 = vmatpush2.bf16.msra.mxu0 0
        %3294 = vmatprep.subr.bf16.mxu0 0
        %3295 = vmatpush2.bf16.msra.mxu0 0
        %3296 = vmatprep.subr.bf16.mxu0 0
        %3297 = vmatpush2.bf16.msra.mxu0 0
        %3298 = vmatprep.subr.bf16.mxu0 0
        %3299 = vmatpush2.bf16.msra.mxu0 0
        %3300 = vmatprep.subr.bf16.mxu0 0
        %3301 = vmatpush2.bf16.msra.mxu0 0
        %3302 = vmatprep.subr.bf16.mxu0 0
        %3303 = vmatpush2.bf16.msra.mxu0 0
        %3304 = vmatprep.subr.bf16.mxu0 0
        %3305 = vmatpush2.bf16.msra.mxu0 0
        %3306 = vmatprep.subr.bf16.mxu0 0
        %3307 = vmatpush2.bf16.msra.mxu0 0
        %3308 = vmatprep.mubr.bf16.mxu0 0
        %3309 = vmatmul.mubr.bf16.gmra.mxu0 %v3229
        %v3310 = vpop.f32.mrf.mxu0
        %v3311 = vadd.f32 0.0, %v3310
        %v3312 = vpop.f32.mrf.mxu0
        %v3313 = vpop.f32.mrf.mxu0
        %v3314 = vadd.f32 0.0, %v3313
        %v3315 = vpop.f32.mrf.mxu0
        %3316 = vmatprep.mubr.bf16.mxu0 0
        %3317 = vmatmul.mubr.bf16.gmra.mxu0 %v3232
        %v3318 = vpop.f32.mrf.mxu0
        %v3319 = vadd.f32 0.0, %v3318
        %v3320 = vpop.f32.mrf.mxu0
        %v3321 = vpop.f32.mrf.mxu0
        %v3322 = vadd.f32 0.0, %v3321
        %v3323 = vpop.f32.mrf.mxu0
        %3324 = vmatprep.mubr.bf16.mxu0 0
        %3325 = vmatmul.mubr.bf16.gmra.mxu0 %v3235
        %v3326 = vpop.f32.mrf.mxu0
        %v3327 = vadd.f32 0.0, %v3326
        %v3328 = vpop.f32.mrf.mxu0
        %v3329 = vpop.f32.mrf.mxu0
        %v3330 = vadd.f32 0.0, %v3329
        %v3331 = vpop.f32.mrf.mxu0
        %3332 = vmatprep.mubr.bf16.mxu0 0
        %3333 = vmatmul.mubr.bf16.gmra.mxu0 %v3238
        %v3334 = vpop.f32.mrf.mxu0
        %v3335 = vadd.f32 0.0, %v3334
        %v3336 = vpop.f32.mrf.mxu0
        %v3337 = vpop.f32.mrf.mxu0
        %v3338 = vadd.f32 0.0, %v3337
        %v3339 = vpop.f32.mrf.mxu0
        %3340 = vmatprep.mubr.bf16.mxu0 0
        %3341 = vmatmul.mubr.bf16.gmra.mxu0 %v3241
        %v3342 = vpop.f32.mrf.mxu0
        %v3343 = vadd.f32 0.0, %v3342
        %v3344 = vpop.f32.mrf.mxu0
        %v3345 = vpop.f32.mrf.mxu0
        %v3346 = vadd.f32 0.0, %v3345
        %v3347 = vpop.f32.mrf.mxu0
        %3348 = vmatprep.mubr.bf16.mxu0 0
        %3349 = vmatmul.mubr.bf16.gmra.mxu0 %v3244
        %v3350 = vpop.f32.mrf.mxu0
        %v3351 = vadd.f32 0.0, %v3350
        %v3352 = vpop.f32.mrf.mxu0
        %v3353 = vpop.f32.mrf.mxu0
        %v3354 = vadd.f32 0.0, %v3353
        %v3355 = vpop.f32.mrf.mxu0
        %3356 = vmatprep.mubr.bf16.mxu0 0
        %3357 = vmatmul.mubr.bf16.gmra.mxu0 %v3247
        %v3358 = vpop.f32.mrf.mxu0
        %v3359 = vadd.f32 0.0, %v3358
        %v3360 = vpop.f32.mrf.mxu0
        %v3361 = vpop.f32.mrf.mxu0
        %v3362 = vadd.f32 0.0, %v3361
        %v3363 = vpop.f32.mrf.mxu0
        %3364 = vmatprep.mubr.bf16.mxu0 0
        %3365 = vmatmul.mubr.bf16.gmra.mxu0 %v3250
        %v3366 = vpop.f32.mrf.mxu0
        %v3367 = vadd.f32 0.0, %v3366
        %v3368 = vpop.f32.mrf.mxu0
        %v3369 = vpop.f32.mrf.mxu0
        %v3370 = vadd.f32 0.0, %v3369
        %v3371 = vpop.f32.mrf.mxu0
        %3372 = vmatprep.mubr.bf16.mxu0 0
        %3373 = vmatmul.mubr.bf16.gmra.mxu0 %v3253
        %v3374 = vpop.f32.mrf.mxu0
        %v3375 = vadd.f32 0.0, %v3374
        %v3376 = vpop.f32.mrf.mxu0
        %v3377 = vpop.f32.mrf.mxu0
        %v3378 = vadd.f32 0.0, %v3377
        %v3379 = vpop.f32.mrf.mxu0
        %3380 = vmatprep.mubr.bf16.mxu0 0
        %3381 = vmatmul.mubr.bf16.gmra.mxu0 %v3256
        %v3382 = vpop.f32.mrf.mxu0
        %v3383 = vadd.f32 0.0, %v3382
        %v3384 = vpop.f32.mrf.mxu0
        %v3385 = vpop.f32.mrf.mxu0
        %v3386 = vadd.f32 0.0, %v3385
        %v3387 = vpop.f32.mrf.mxu0
        %3388 = vmatprep.mubr.bf16.mxu0 0
        %3389 = vmatmul.mubr.bf16.gmra.mxu0 %v3259
        %v3390 = vpop.f32.mrf.mxu0
        %v3391 = vadd.f32 0.0, %v3390
        %v3392 = vpop.f32.mrf.mxu0
        %v3393 = vpop.f32.mrf.mxu0
        %v3394 = vadd.f32 0.0, %v3393
        %v3395 = vpop.f32.mrf.mxu0
        %3396 = vmatprep.mubr.bf16.mxu0 0
        %3397 = vmatmul.mubr.bf16.gmra.mxu0 %v3262
        %v3398 = vpop.f32.mrf.mxu0
        %v3399 = vadd.f32 0.0, %v3398
        %v3400 = vpop.f32.mrf.mxu0
        %v3401 = vpop.f32.mrf.mxu0
        %v3402 = vadd.f32 0.0, %v3401
        %v3403 = vpop.f32.mrf.mxu0
        %3404 = vmatprep.mubr.bf16.mxu0 0
        %3405 = vmatmul.mubr.bf16.gmra.mxu0 %v3265
        %v3406 = vpop.f32.mrf.mxu0
        %v3407 = vadd.f32 0.0, %v3406
        %v3408 = vpop.f32.mrf.mxu0
        %v3409 = vpop.f32.mrf.mxu0
        %v3410 = vadd.f32 0.0, %v3409
        %v3411 = vpop.f32.mrf.mxu0
        %3412 = vmatprep.mubr.bf16.mxu0 0
        %3413 = vmatmul.mubr.bf16.gmra.mxu0 %v3268
        %v3414 = vpop.f32.mrf.mxu0
        %v3415 = vadd.f32 0.0, %v3414
        %v3416 = vpop.f32.mrf.mxu0
        %v3417 = vpop.f32.mrf.mxu0
        %v3418 = vadd.f32 0.0, %v3417
        %v3419 = vpop.f32.mrf.mxu0
        %3420 = vmatprep.mubr.bf16.mxu0 0
        %3421 = vmatmul.mubr.bf16.gmra.mxu0 %v3271
        %v3422 = vpop.f32.mrf.mxu0
        %v3423 = vadd.f32 0.0, %v3422
        %v3424 = vpop.f32.mrf.mxu0
        %v3425 = vpop.f32.mrf.mxu0
        %v3426 = vadd.f32 0.0, %v3425
        %v3427 = vpop.f32.mrf.mxu0
        %3428 = vmatprep.mubr.bf16.mxu0 0
        %3429 = vmatmul.mubr.bf16.gmra.mxu0 %v3274
        %v3430 = vpop.f32.mrf.mxu0
        %v3431 = vadd.f32 0.0, %v3430
        %v3432 = vpop.f32.mrf.mxu0
        %v3433 = vpop.f32.mrf.mxu0
        %v3434 = vadd.f32 0.0, %v3433
        %v3435 = vpop.f32.mrf.mxu0
        %3436 = vdwg.mxu0
        %v3437 = vadd.f32 %v3130, %v3311
        %v3438 = vadd.f32 %v3131, %v3314
        %v3439 = vadd.f32 %v3132, %v3319
        %v3440 = vadd.f32 %v3133, %v3322
        %v3441 = vadd.f32 %v3134, %v3327
        %v3442 = vadd.f32 %v3135, %v3330
        %v3443 = vadd.f32 %v3136, %v3335
        %v3444 = vadd.f32 %v3137, %v3338
        %v3445 = vadd.f32 %v3138, %v3343
        %v3446 = vadd.f32 %v3139, %v3346
        %v3447 = vadd.f32 %v3140, %v3351
        %v3448 = vadd.f32 %v3141, %v3354
        %v3449 = vadd.f32 %v3142, %v3359
        %v3450 = vadd.f32 %v3143, %v3362
        %v3451 = vadd.f32 %v3144, %v3367
        %v3452 = vadd.f32 %v3145, %v3370
        %v3453 = vadd.f32 %v3146, %v3375
        %v3454 = vadd.f32 %v3147, %v3378
        %v3455 = vadd.f32 %v3148, %v3383
        %v3456 = vadd.f32 %v3149, %v3386
        %v3457 = vadd.f32 %v3150, %v3391
        %v3458 = vadd.f32 %v3151, %v3394
        %v3459 = vadd.f32 %v3152, %v3399
        %v3460 = vadd.f32 %v3153, %v3402
        %v3461 = vadd.f32 %v3154, %v3407
        %v3462 = vadd.f32 %v3155, %v3410
        %v3463 = vadd.f32 %v3156, %v3415
        %v3464 = vadd.f32 %v3157, %v3418
        %v3465 = vadd.f32 %v3158, %v3423
        %v3466 = vadd.f32 %v3159, %v3426
        %v3467 = vadd.f32 %v3160, %v3431
        %v3468 = vadd.f32 %v3161, %v3434
        %v3469 = vld [vmem:[%s3162 + $0x1] sm:$0xff]
        %v3470 = vld [vmem:[%s3162 + $0x11] sm:$0xff]
        %v3471 = vld [vmem:[%s3162 + $0x21] sm:$0xff]
        %v3472 = vld [vmem:[%s3162 + $0x31] sm:$0xff]
        %v3473 = vld [vmem:[%s3162 + $0x41] sm:$0xff]
        %v3474 = vld [vmem:[%s3162 + $0x51] sm:$0xff]
        %v3475 = vld [vmem:[%s3162 + $0x61] sm:$0xff]
        %v3476 = vld [vmem:[%s3162 + $0x71] sm:$0xff]
        %v3477 = vld [vmem:[%s3162 + $0xa1] sm:$0xff]
        %v3478 = vld [vmem:[%s3162 + $0xb1] sm:$0xff]
        %v3479 = vld [vmem:[%s3162 + $0xc1] sm:$0xff]
        %v3480 = vld [vmem:[%s3162 + $0xd1] sm:$0xff]
        %v3481 = vld [vmem:[%s3162 + $0xe1] sm:$0xff]
        %v3482 = vld [vmem:[%s3162 + $0xf1] sm:$0xff]
        %v3483 = vld [vmem:[%s3162 + $0x101] sm:$0xff]
        %v3484 = vld [vmem:[%s3162 + $0x111] sm:$0xff]
        %v3485 = vld [vmem:[%s3162 + $0x141] sm:$0xff]
        %v3486 = vld [vmem:[%s3162 + $0x151] sm:$0xff]
        %v3487 = vld [vmem:[%s3162 + $0x161] sm:$0xff]
        %v3488 = vld [vmem:[%s3162 + $0x171] sm:$0xff]
        %v3489 = vld [vmem:[%s3162 + $0x181] sm:$0xff]
        %v3490 = vld [vmem:[%s3162 + $0x191] sm:$0xff]
        %v3491 = vld [vmem:[%s3162 + $0x1a1] sm:$0xff]
        %v3492 = vld [vmem:[%s3162 + $0x1b1] sm:$0xff]
        %v3493 = vld [vmem:[%s3162 + $0x1e1] sm:$0xff]
        %v3494 = vld [vmem:[%s3162 + $0x1f1] sm:$0xff]
        %v3495 = vld [vmem:[%s3162 + $0x201] sm:$0xff]
        %v3496 = vld [vmem:[%s3162 + $0x211] sm:$0xff]
        %v3497 = vld [vmem:[%s3162 + $0x221] sm:$0xff]
        %v3498 = vld [vmem:[%s3162 + $0x231] sm:$0xff]
        %v3499 = vld [vmem:[%s3162 + $0x241] sm:$0xff]
        %v3500 = vld [vmem:[%s3162 + $0x251] sm:$0xff]
        %v3501 = vpack.c.bf16 %v3470, %v3469
        %v3502 = vpack.c.bf16 %v3472, %v3471
        %v3503 = vpack.c.bf16 %v3474, %v3473
        %v3504 = vpack.c.bf16 %v3476, %v3475
        %v3505 = vpack.c.bf16 %v3478, %v3477
        %v3506 = vpack.c.bf16 %v3480, %v3479
        %v3507 = vpack.c.bf16 %v3482, %v3481
        %v3508 = vpack.c.bf16 %v3484, %v3483
        %v3509 = vpack.c.bf16 %v3486, %v3485
        %v3510 = vpack.c.bf16 %v3488, %v3487
        %v3511 = vpack.c.bf16 %v3490, %v3489
        %v3512 = vpack.c.bf16 %v3492, %v3491
        %v3513 = vpack.c.bf16 %v3494, %v3493
        %v3514 = vpack.c.bf16 %v3496, %v3495
        %v3515 = vpack.c.bf16 %v3498, %v3497
        %v3516 = vpack.c.bf16 %v3500, %v3499
        %s3517 = scalar_lea.vmem [#allocation7], 112
        %v3518 = vld [vmem:[%s3517] sm:$0xf]
        %v3519 = vld [vmem:[%s3517 + $0x4] sm:$0xf]
        %v3520 = vld [vmem:[%s3517 + $0x8] sm:$0xf]
        %v3521 = vld [vmem:[%s3517 + $0xc] sm:$0xf]
        %v3526 = vunpack.c.l.b16 %v3518
        %v3527 = vunpack.c.l.b16 %v3519
        %v3528 = vunpack.c.l.b16 %v3520
        %v3529 = vunpack.c.l.b16 %v3521
        %v3530 = vpack.c.b16 %v3527, %v3526
        %v3531 = vpack.c.b16 %v3529, %v3528
        %v3535 = vsel %vm757, %v3501, 0
        %v3538 = vsel %vm757, %v3502, 0
        %v3541 = vsel %vm757, %v3503, 0
        %v3544 = vsel %vm757, %v3504, 0
        %v3547 = vsel %vm757, %v3505, 0
        %v3550 = vsel %vm757, %v3506, 0
        %v3553 = vsel %vm757, %v3507, 0
        %v3556 = vsel %vm757, %v3508, 0
        %v3559 = vsel %vm757, %v3509, 0
        %v3562 = vsel %vm757, %v3510, 0
        %v3565 = vsel %vm757, %v3511, 0
        %v3568 = vsel %vm757, %v3512, 0
        %v3571 = vsel %vm757, %v3513, 0
        %v3574 = vsel %vm757, %v3514, 0
        %v3577 = vsel %vm757, %v3515, 0
        %v3580 = vsel %vm757, %v3516, 0
        %3582 = vmatprep.subr.bf16.mxu0 0
        %3583 = vmatpush1.bf16.msra.mxu0 0
        %3584 = vmatprep.subr.bf16.mxu0 0
        %3585 = vmatpush1.bf16.msra.mxu0 0
        %3586 = vmatprep.subr.bf16.mxu0 0
        %3587 = vmatpush1.bf16.msra.mxu0 0
        %3588 = vmatprep.subr.bf16.mxu0 0
        %3589 = vmatpush1.bf16.msra.mxu0 0
        %3590 = vmatprep.subr.bf16.mxu0 0
        %3591 = vmatpush1.bf16.msra.mxu0 0
        %3592 = vmatprep.subr.bf16.mxu0 0
        %3593 = vmatpush1.bf16.msra.mxu0 0
        %3594 = vmatprep.subr.bf16.mxu0 0
        %3595 = vmatpush1.bf16.msra.mxu0 %v3531
        %3596 = vmatprep.subr.bf16.mxu0 0
        %3597 = vmatpush1.bf16.msra.mxu0 %v3530
        %3598 = vmatprep.subr.bf16.mxu0 0
        %3599 = vmatpush2.bf16.msra.mxu0 0
        %3600 = vmatprep.subr.bf16.mxu0 0
        %3601 = vmatpush2.bf16.msra.mxu0 0
        %3602 = vmatprep.subr.bf16.mxu0 0
        %3603 = vmatpush2.bf16.msra.mxu0 0
        %3604 = vmatprep.subr.bf16.mxu0 0
        %3605 = vmatpush2.bf16.msra.mxu0 0
        %3606 = vmatprep.subr.bf16.mxu0 0
        %3607 = vmatpush2.bf16.msra.mxu0 0
        %3608 = vmatprep.subr.bf16.mxu0 0
        %3609 = vmatpush2.bf16.msra.mxu0 0
        %3610 = vmatprep.subr.bf16.mxu0 0
        %3611 = vmatpush2.bf16.msra.mxu0 0
        %3612 = vmatprep.subr.bf16.mxu0 0
        %3613 = vmatpush2.bf16.msra.mxu0 0
        %3614 = vmatprep.mubr.bf16.mxu0 0
        %3615 = vmatmul.mubr.bf16.gmra.mxu0 %v3535
        %v3616 = vpop.f32.mrf.mxu0
        %v3617 = vadd.f32 0.0, %v3616
        %v3618 = vpop.f32.mrf.mxu0
        %v3619 = vpop.f32.mrf.mxu0
        %v3620 = vadd.f32 0.0, %v3619
        %v3621 = vpop.f32.mrf.mxu0
        %3622 = vmatprep.mubr.bf16.mxu0 0
        %3623 = vmatmul.mubr.bf16.gmra.mxu0 %v3538
        %v3624 = vpop.f32.mrf.mxu0
        %v3625 = vadd.f32 0.0, %v3624
        %v3626 = vpop.f32.mrf.mxu0
        %v3627 = vpop.f32.mrf.mxu0
        %v3628 = vadd.f32 0.0, %v3627
        %v3629 = vpop.f32.mrf.mxu0
        %3630 = vmatprep.mubr.bf16.mxu0 0
        %3631 = vmatmul.mubr.bf16.gmra.mxu0 %v3541
        %v3632 = vpop.f32.mrf.mxu0
        %v3633 = vadd.f32 0.0, %v3632
        %v3634 = vpop.f32.mrf.mxu0
        %v3635 = vpop.f32.mrf.mxu0
        %v3636 = vadd.f32 0.0, %v3635
        %v3637 = vpop.f32.mrf.mxu0
        %3638 = vmatprep.mubr.bf16.mxu0 0
        %3639 = vmatmul.mubr.bf16.gmra.mxu0 %v3544
        %v3640 = vpop.f32.mrf.mxu0
        %v3641 = vadd.f32 0.0, %v3640
        %v3642 = vpop.f32.mrf.mxu0
        %v3643 = vpop.f32.mrf.mxu0
        %v3644 = vadd.f32 0.0, %v3643
        %v3645 = vpop.f32.mrf.mxu0
        %3646 = vmatprep.mubr.bf16.mxu0 0
        %3647 = vmatmul.mubr.bf16.gmra.mxu0 %v3547
        %v3648 = vpop.f32.mrf.mxu0
        %v3649 = vadd.f32 0.0, %v3648
        %v3650 = vpop.f32.mrf.mxu0
        %v3651 = vpop.f32.mrf.mxu0
        %v3652 = vadd.f32 0.0, %v3651
        %v3653 = vpop.f32.mrf.mxu0
        %3654 = vmatprep.mubr.bf16.mxu0 0
        %3655 = vmatmul.mubr.bf16.gmra.mxu0 %v3550
        %v3656 = vpop.f32.mrf.mxu0
        %v3657 = vadd.f32 0.0, %v3656
        %v3658 = vpop.f32.mrf.mxu0
        %v3659 = vpop.f32.mrf.mxu0
        %v3660 = vadd.f32 0.0, %v3659
        %v3661 = vpop.f32.mrf.mxu0
        %3662 = vmatprep.mubr.bf16.mxu0 0
        %3663 = vmatmul.mubr.bf16.gmra.mxu0 %v3553
        %v3664 = vpop.f32.mrf.mxu0
        %v3665 = vadd.f32 0.0, %v3664
        %v3666 = vpop.f32.mrf.mxu0
        %v3667 = vpop.f32.mrf.mxu0
        %v3668 = vadd.f32 0.0, %v3667
        %v3669 = vpop.f32.mrf.mxu0
        %3670 = vmatprep.mubr.bf16.mxu0 0
        %3671 = vmatmul.mubr.bf16.gmra.mxu0 %v3556
        %v3672 = vpop.f32.mrf.mxu0
        %v3673 = vadd.f32 0.0, %v3672
        %v3674 = vpop.f32.mrf.mxu0
        %v3675 = vpop.f32.mrf.mxu0
        %v3676 = vadd.f32 0.0, %v3675
        %v3677 = vpop.f32.mrf.mxu0
        %3678 = vmatprep.mubr.bf16.mxu0 0
        %3679 = vmatmul.mubr.bf16.gmra.mxu0 %v3559
        %v3680 = vpop.f32.mrf.mxu0
        %v3681 = vadd.f32 0.0, %v3680
        %v3682 = vpop.f32.mrf.mxu0
        %v3683 = vpop.f32.mrf.mxu0
        %v3684 = vadd.f32 0.0, %v3683
        %v3685 = vpop.f32.mrf.mxu0
        %3686 = vmatprep.mubr.bf16.mxu0 0
        %3687 = vmatmul.mubr.bf16.gmra.mxu0 %v3562
        %v3688 = vpop.f32.mrf.mxu0
        %v3689 = vadd.f32 0.0, %v3688
        %v3690 = vpop.f32.mrf.mxu0
        %v3691 = vpop.f32.mrf.mxu0
        %v3692 = vadd.f32 0.0, %v3691
        %v3693 = vpop.f32.mrf.mxu0
        %3694 = vmatprep.mubr.bf16.mxu0 0
        %3695 = vmatmul.mubr.bf16.gmra.mxu0 %v3565
        %v3696 = vpop.f32.mrf.mxu0
        %v3697 = vadd.f32 0.0, %v3696
        %v3698 = vpop.f32.mrf.mxu0
        %v3699 = vpop.f32.mrf.mxu0
        %v3700 = vadd.f32 0.0, %v3699
        %v3701 = vpop.f32.mrf.mxu0
        %3702 = vmatprep.mubr.bf16.mxu0 0
        %3703 = vmatmul.mubr.bf16.gmra.mxu0 %v3568
        %v3704 = vpop.f32.mrf.mxu0
        %v3705 = vadd.f32 0.0, %v3704
        %v3706 = vpop.f32.mrf.mxu0
        %v3707 = vpop.f32.mrf.mxu0
        %v3708 = vadd.f32 0.0, %v3707
        %v3709 = vpop.f32.mrf.mxu0
        %3710 = vmatprep.mubr.bf16.mxu0 0
        %3711 = vmatmul.mubr.bf16.gmra.mxu0 %v3571
        %v3712 = vpop.f32.mrf.mxu0
        %v3713 = vadd.f32 0.0, %v3712
        %v3714 = vpop.f32.mrf.mxu0
        %v3715 = vpop.f32.mrf.mxu0
        %v3716 = vadd.f32 0.0, %v3715
        %v3717 = vpop.f32.mrf.mxu0
        %3718 = vmatprep.mubr.bf16.mxu0 0
        %3719 = vmatmul.mubr.bf16.gmra.mxu0 %v3574
        %v3720 = vpop.f32.mrf.mxu0
        %v3721 = vadd.f32 0.0, %v3720
        %v3722 = vpop.f32.mrf.mxu0
        %v3723 = vpop.f32.mrf.mxu0
        %v3724 = vadd.f32 0.0, %v3723
        %v3725 = vpop.f32.mrf.mxu0
        %3726 = vmatprep.mubr.bf16.mxu0 0
        %3727 = vmatmul.mubr.bf16.gmra.mxu0 %v3577
        %v3728 = vpop.f32.mrf.mxu0
        %v3729 = vadd.f32 0.0, %v3728
        %v3730 = vpop.f32.mrf.mxu0
        %v3731 = vpop.f32.mrf.mxu0
        %v3732 = vadd.f32 0.0, %v3731
        %v3733 = vpop.f32.mrf.mxu0
        %3734 = vmatprep.mubr.bf16.mxu0 0
        %3735 = vmatmul.mubr.bf16.gmra.mxu0 %v3580
        %v3736 = vpop.f32.mrf.mxu0
        %v3737 = vadd.f32 0.0, %v3736
        %v3738 = vpop.f32.mrf.mxu0
        %v3739 = vpop.f32.mrf.mxu0
        %v3740 = vadd.f32 0.0, %v3739
        %v3741 = vpop.f32.mrf.mxu0
        %3742 = vdwg.mxu0
        %v3743 = vadd.f32 %v3437, %v3617
        %v3744 = vadd.f32 %v3438, %v3620
        %v3745 = vadd.f32 %v3439, %v3625
        %v3746 = vadd.f32 %v3440, %v3628
        %v3747 = vadd.f32 %v3441, %v3633
        %v3748 = vadd.f32 %v3442, %v3636
        %v3749 = vadd.f32 %v3443, %v3641
        %v3750 = vadd.f32 %v3444, %v3644
        %v3751 = vadd.f32 %v3445, %v3649
        %v3752 = vadd.f32 %v3446, %v3652
        %v3753 = vadd.f32 %v3447, %v3657
        %v3754 = vadd.f32 %v3448, %v3660
        %v3755 = vadd.f32 %v3449, %v3665
        %v3756 = vadd.f32 %v3450, %v3668
        %v3757 = vadd.f32 %v3451, %v3673
        %v3758 = vadd.f32 %v3452, %v3676
        %v3759 = vadd.f32 %v3453, %v3681
        %v3760 = vadd.f32 %v3454, %v3684
        %v3761 = vadd.f32 %v3455, %v3689
        %v3762 = vadd.f32 %v3456, %v3692
        %v3763 = vadd.f32 %v3457, %v3697
        %v3764 = vadd.f32 %v3458, %v3700
        %v3765 = vadd.f32 %v3459, %v3705
        %v3766 = vadd.f32 %v3460, %v3708
        %v3767 = vadd.f32 %v3461, %v3713
        %v3768 = vadd.f32 %v3462, %v3716
        %v3769 = vadd.f32 %v3463, %v3721
        %v3770 = vadd.f32 %v3464, %v3724
        %v3771 = vadd.f32 %v3465, %v3729
        %v3772 = vadd.f32 %v3466, %v3732
        %v3773 = vadd.f32 %v3467, %v3737
        %v3774 = vadd.f32 %v3468, %v3740
        %v3775 = vld [vmem:[%s3162 + $0x2] sm:$0xff]
        %v3776 = vld [vmem:[%s3162 + $0x12] sm:$0xff]
        %v3777 = vld [vmem:[%s3162 + $0x22] sm:$0xff]
        %v3778 = vld [vmem:[%s3162 + $0x32] sm:$0xff]
        %v3779 = vld [vmem:[%s3162 + $0x42] sm:$0xff]
        %v3780 = vld [vmem:[%s3162 + $0x52] sm:$0xff]
        %v3781 = vld [vmem:[%s3162 + $0x62] sm:$0xff]
        %v3782 = vld [vmem:[%s3162 + $0x72] sm:$0xff]
        %v3783 = vld [vmem:[%s3162 + $0xa2] sm:$0xff]
        %v3784 = vld [vmem:[%s3162 + $0xb2] sm:$0xff]
        %v3785 = vld [vmem:[%s3162 + $0xc2] sm:$0xff]
        %v3786 = vld [vmem:[%s3162 + $0xd2] sm:$0xff]
        %v3787 = vld [vmem:[%s3162 + $0xe2] sm:$0xff]
        %v3788 = vld [vmem:[%s3162 + $0xf2] sm:$0xff]
        %v3789 = vld [vmem:[%s3162 + $0x102] sm:$0xff]
        %v3790 = vld [vmem:[%s3162 + $0x112] sm:$0xff]
        %v3791 = vld [vmem:[%s3162 + $0x142] sm:$0xff]
        %v3792 = vld [vmem:[%s3162 + $0x152] sm:$0xff]
        %v3793 = vld [vmem:[%s3162 + $0x162] sm:$0xff]
        %v3794 = vld [vmem:[%s3162 + $0x172] sm:$0xff]
        %v3795 = vld [vmem:[%s3162 + $0x182] sm:$0xff]
        %v3796 = vld [vmem:[%s3162 + $0x192] sm:$0xff]
        %v3797 = vld [vmem:[%s3162 + $0x1a2] sm:$0xff]
        %v3798 = vld [vmem:[%s3162 + $0x1b2] sm:$0xff]
        %v3799 = vld [vmem:[%s3162 + $0x1e2] sm:$0xff]
        %v3800 = vld [vmem:[%s3162 + $0x1f2] sm:$0xff]
        %v3801 = vld [vmem:[%s3162 + $0x202] sm:$0xff]
        %v3802 = vld [vmem:[%s3162 + $0x212] sm:$0xff]
        %v3803 = vld [vmem:[%s3162 + $0x222] sm:$0xff]
        %v3804 = vld [vmem:[%s3162 + $0x232] sm:$0xff]
        %v3805 = vld [vmem:[%s3162 + $0x242] sm:$0xff]
        %v3806 = vld [vmem:[%s3162 + $0x252] sm:$0xff]
        %v3807 = vpack.c.bf16 %v3776, %v3775
        %v3808 = vpack.c.bf16 %v3778, %v3777
        %v3809 = vpack.c.bf16 %v3780, %v3779
        %v3810 = vpack.c.bf16 %v3782, %v3781
        %v3811 = vpack.c.bf16 %v3784, %v3783
        %v3812 = vpack.c.bf16 %v3786, %v3785
        %v3813 = vpack.c.bf16 %v3788, %v3787
        %v3814 = vpack.c.bf16 %v3790, %v3789
        %v3815 = vpack.c.bf16 %v3792, %v3791
        %v3816 = vpack.c.bf16 %v3794, %v3793
        %v3817 = vpack.c.bf16 %v3796, %v3795
        %v3818 = vpack.c.bf16 %v3798, %v3797
        %v3819 = vpack.c.bf16 %v3800, %v3799
        %v3820 = vpack.c.bf16 %v3802, %v3801
        %v3821 = vpack.c.bf16 %v3804, %v3803
        %v3822 = vpack.c.bf16 %v3806, %v3805
        %s3823 = scalar_lea.vmem [#allocation7], 128
        %v3824 = vld [vmem:[%s3823] sm:$0xf]
        %v3825 = vld [vmem:[%s3823 + $0x4] sm:$0xf]
        %v3826 = vld [vmem:[%s3823 + $0x8] sm:$0xf]
        %v3827 = vld [vmem:[%s3823 + $0xc] sm:$0xf]
        %v3832 = vunpack.c.l.b16 %v3824
        %v3833 = vunpack.c.l.b16 %v3825
        %v3834 = vunpack.c.l.b16 %v3826
        %v3835 = vunpack.c.l.b16 %v3827
        %v3836 = vpack.c.b16 %v3833, %v3832
        %v3837 = vpack.c.b16 %v3835, %v3834
        %v3841 = vsel %vm757, %v3807, 0
        %v3844 = vsel %vm757, %v3808, 0
        %v3847 = vsel %vm757, %v3809, 0
        %v3850 = vsel %vm757, %v3810, 0
        %v3853 = vsel %vm757, %v3811, 0
        %v3856 = vsel %vm757, %v3812, 0
        %v3859 = vsel %vm757, %v3813, 0
        %v3862 = vsel %vm757, %v3814, 0
        %v3865 = vsel %vm757, %v3815, 0
        %v3868 = vsel %vm757, %v3816, 0
        %v3871 = vsel %vm757, %v3817, 0
        %v3874 = vsel %vm757, %v3818, 0
        %v3877 = vsel %vm757, %v3819, 0
        %v3880 = vsel %vm757, %v3820, 0
        %v3883 = vsel %vm757, %v3821, 0
        %v3886 = vsel %vm757, %v3822, 0
        %3888 = vmatprep.subr.bf16.mxu0 0
        %3889 = vmatpush1.bf16.msra.mxu0 0
        %3890 = vmatprep.subr.bf16.mxu0 0
        %3891 = vmatpush1.bf16.msra.mxu0 0
        %3892 = vmatprep.subr.bf16.mxu0 0
        %3893 = vmatpush1.bf16.msra.mxu0 0
        %3894 = vmatprep.subr.bf16.mxu0 0
        %3895 = vmatpush1.bf16.msra.mxu0 0
        %3896 = vmatprep.subr.bf16.mxu0 0
        %3897 = vmatpush1.bf16.msra.mxu0 0
        %3898 = vmatprep.subr.bf16.mxu0 0
        %3899 = vmatpush1.bf16.msra.mxu0 0
        %3900 = vmatprep.subr.bf16.mxu0 0
        %3901 = vmatpush1.bf16.msra.mxu0 %v3837
        %3902 = vmatprep.subr.bf16.mxu0 0
        %3903 = vmatpush1.bf16.msra.mxu0 %v3836
        %3904 = vmatprep.subr.bf16.mxu0 0
        %3905 = vmatpush2.bf16.msra.mxu0 0
        %3906 = vmatprep.subr.bf16.mxu0 0
        %3907 = vmatpush2.bf16.msra.mxu0 0
        %3908 = vmatprep.subr.bf16.mxu0 0
        %3909 = vmatpush2.bf16.msra.mxu0 0
        %3910 = vmatprep.subr.bf16.mxu0 0
        %3911 = vmatpush2.bf16.msra.mxu0 0
        %3912 = vmatprep.subr.bf16.mxu0 0
        %3913 = vmatpush2.bf16.msra.mxu0 0
        %3914 = vmatprep.subr.bf16.mxu0 0
        %3915 = vmatpush2.bf16.msra.mxu0 0
        %3916 = vmatprep.subr.bf16.mxu0 0
        %3917 = vmatpush2.bf16.msra.mxu0 0
        %3918 = vmatprep.subr.bf16.mxu0 0
        %3919 = vmatpush2.bf16.msra.mxu0 0
        %3920 = vmatprep.mubr.bf16.mxu0 0
        %3921 = vmatmul.mubr.bf16.gmra.mxu0 %v3841
        %v3922 = vpop.f32.mrf.mxu0
        %v3923 = vadd.f32 0.0, %v3922
        %v3924 = vpop.f32.mrf.mxu0
        %v3925 = vpop.f32.mrf.mxu0
        %v3926 = vadd.f32 0.0, %v3925
        %v3927 = vpop.f32.mrf.mxu0
        %3928 = vmatprep.mubr.bf16.mxu0 0
        %3929 = vmatmul.mubr.bf16.gmra.mxu0 %v3844
        %v3930 = vpop.f32.mrf.mxu0
        %v3931 = vadd.f32 0.0, %v3930
        %v3932 = vpop.f32.mrf.mxu0
        %v3933 = vpop.f32.mrf.mxu0
        %v3934 = vadd.f32 0.0, %v3933
        %v3935 = vpop.f32.mrf.mxu0
        %3936 = vmatprep.mubr.bf16.mxu0 0
        %3937 = vmatmul.mubr.bf16.gmra.mxu0 %v3847
        %v3938 = vpop.f32.mrf.mxu0
        %v3939 = vadd.f32 0.0, %v3938
        %v3940 = vpop.f32.mrf.mxu0
        %v3941 = vpop.f32.mrf.mxu0
        %v3942 = vadd.f32 0.0, %v3941
        %v3943 = vpop.f32.mrf.mxu0
        %3944 = vmatprep.mubr.bf16.mxu0 0
        %3945 = vmatmul.mubr.bf16.gmra.mxu0 %v3850
        %v3946 = vpop.f32.mrf.mxu0
        %v3947 = vadd.f32 0.0, %v3946
        %v3948 = vpop.f32.mrf.mxu0
        %v3949 = vpop.f32.mrf.mxu0
        %v3950 = vadd.f32 0.0, %v3949
        %v3951 = vpop.f32.mrf.mxu0
        %3952 = vmatprep.mubr.bf16.mxu0 0
        %3953 = vmatmul.mubr.bf16.gmra.mxu0 %v3853
        %v3954 = vpop.f32.mrf.mxu0
        %v3955 = vadd.f32 0.0, %v3954
        %v3956 = vpop.f32.mrf.mxu0
        %v3957 = vpop.f32.mrf.mxu0
        %v3958 = vadd.f32 0.0, %v3957
        %v3959 = vpop.f32.mrf.mxu0
        %3960 = vmatprep.mubr.bf16.mxu0 0
        %3961 = vmatmul.mubr.bf16.gmra.mxu0 %v3856
        %v3962 = vpop.f32.mrf.mxu0
        %v3963 = vadd.f32 0.0, %v3962
        %v3964 = vpop.f32.mrf.mxu0
        %v3965 = vpop.f32.mrf.mxu0
        %v3966 = vadd.f32 0.0, %v3965
        %v3967 = vpop.f32.mrf.mxu0
        %3968 = vmatprep.mubr.bf16.mxu0 0
        %3969 = vmatmul.mubr.bf16.gmra.mxu0 %v3859
        %v3970 = vpop.f32.mrf.mxu0
        %v3971 = vadd.f32 0.0, %v3970
        %v3972 = vpop.f32.mrf.mxu0
        %v3973 = vpop.f32.mrf.mxu0
        %v3974 = vadd.f32 0.0, %v3973
        %v3975 = vpop.f32.mrf.mxu0
        %3976 = vmatprep.mubr.bf16.mxu0 0
        %3977 = vmatmul.mubr.bf16.gmra.mxu0 %v3862
        %v3978 = vpop.f32.mrf.mxu0
        %v3979 = vadd.f32 0.0, %v3978
        %v3980 = vpop.f32.mrf.mxu0
        %v3981 = vpop.f32.mrf.mxu0
        %v3982 = vadd.f32 0.0, %v3981
        %v3983 = vpop.f32.mrf.mxu0
        %3984 = vmatprep.mubr.bf16.mxu0 0
        %3985 = vmatmul.mubr.bf16.gmra.mxu0 %v3865
        %v3986 = vpop.f32.mrf.mxu0
        %v3987 = vadd.f32 0.0, %v3986
        %v3988 = vpop.f32.mrf.mxu0
        %v3989 = vpop.f32.mrf.mxu0
        %v3990 = vadd.f32 0.0, %v3989
        %v3991 = vpop.f32.mrf.mxu0
        %3992 = vmatprep.mubr.bf16.mxu0 0
        %3993 = vmatmul.mubr.bf16.gmra.mxu0 %v3868
        %v3994 = vpop.f32.mrf.mxu0
        %v3995 = vadd.f32 0.0, %v3994
        %v3996 = vpop.f32.mrf.mxu0
        %v3997 = vpop.f32.mrf.mxu0
        %v3998 = vadd.f32 0.0, %v3997
        %v3999 = vpop.f32.mrf.mxu0
        %4000 = vmatprep.mubr.bf16.mxu0 0
        %4001 = vmatmul.mubr.bf16.gmra.mxu0 %v3871
        %v4002 = vpop.f32.mrf.mxu0
        %v4003 = vadd.f32 0.0, %v4002
        %v4004 = vpop.f32.mrf.mxu0
        %v4005 = vpop.f32.mrf.mxu0
        %v4006 = vadd.f32 0.0, %v4005
        %v4007 = vpop.f32.mrf.mxu0
        %4008 = vmatprep.mubr.bf16.mxu0 0
        %4009 = vmatmul.mubr.bf16.gmra.mxu0 %v3874
        %v4010 = vpop.f32.mrf.mxu0
        %v4011 = vadd.f32 0.0, %v4010
        %v4012 = vpop.f32.mrf.mxu0
        %v4013 = vpop.f32.mrf.mxu0
        %v4014 = vadd.f32 0.0, %v4013
        %v4015 = vpop.f32.mrf.mxu0
        %4016 = vmatprep.mubr.bf16.mxu0 0
        %4017 = vmatmul.mubr.bf16.gmra.mxu0 %v3877
        %v4018 = vpop.f32.mrf.mxu0
        %v4019 = vadd.f32 0.0, %v4018
        %v4020 = vpop.f32.mrf.mxu0
        %v4021 = vpop.f32.mrf.mxu0
        %v4022 = vadd.f32 0.0, %v4021
        %v4023 = vpop.f32.mrf.mxu0
        %4024 = vmatprep.mubr.bf16.mxu0 0
        %4025 = vmatmul.mubr.bf16.gmra.mxu0 %v3880
        %v4026 = vpop.f32.mrf.mxu0
        %v4027 = vadd.f32 0.0, %v4026
        %v4028 = vpop.f32.mrf.mxu0
        %v4029 = vpop.f32.mrf.mxu0
        %v4030 = vadd.f32 0.0, %v4029
        %v4031 = vpop.f32.mrf.mxu0
        %4032 = vmatprep.mubr.bf16.mxu0 0
        %4033 = vmatmul.mubr.bf16.gmra.mxu0 %v3883
        %v4034 = vpop.f32.mrf.mxu0
        %v4035 = vadd.f32 0.0, %v4034
        %v4036 = vpop.f32.mrf.mxu0
        %v4037 = vpop.f32.mrf.mxu0
        %v4038 = vadd.f32 0.0, %v4037
        %v4039 = vpop.f32.mrf.mxu0
        %4040 = vmatprep.mubr.bf16.mxu0 0
        %4041 = vmatmul.mubr.bf16.gmra.mxu0 %v3886
        %v4042 = vpop.f32.mrf.mxu0
        %v4043 = vadd.f32 0.0, %v4042
        %v4044 = vpop.f32.mrf.mxu0
        %v4045 = vpop.f32.mrf.mxu0
        %v4046 = vadd.f32 0.0, %v4045
        %v4047 = vpop.f32.mrf.mxu0
        %4048 = vdwg.mxu0
        %v4049 = vadd.f32 %v3743, %v3923
        %v4050 = vadd.f32 %v3744, %v3926
        %v4051 = vadd.f32 %v3745, %v3931
        %v4052 = vadd.f32 %v3746, %v3934
        %v4053 = vadd.f32 %v3747, %v3939
        %v4054 = vadd.f32 %v3748, %v3942
        %v4055 = vadd.f32 %v3749, %v3947
        %v4056 = vadd.f32 %v3750, %v3950
        %v4057 = vadd.f32 %v3751, %v3955
        %v4058 = vadd.f32 %v3752, %v3958
        %v4059 = vadd.f32 %v3753, %v3963
        %v4060 = vadd.f32 %v3754, %v3966
        %v4061 = vadd.f32 %v3755, %v3971
        %v4062 = vadd.f32 %v3756, %v3974
        %v4063 = vadd.f32 %v3757, %v3979
        %v4064 = vadd.f32 %v3758, %v3982
        %v4065 = vadd.f32 %v3759, %v3987
        %v4066 = vadd.f32 %v3760, %v3990
        %v4067 = vadd.f32 %v3761, %v3995
        %v4068 = vadd.f32 %v3762, %v3998
        %v4069 = vadd.f32 %v3763, %v4003
        %v4070 = vadd.f32 %v3764, %v4006
        %v4071 = vadd.f32 %v3765, %v4011
        %v4072 = vadd.f32 %v3766, %v4014
        %v4073 = vadd.f32 %v3767, %v4019
        %v4074 = vadd.f32 %v3768, %v4022
        %v4075 = vadd.f32 %v3769, %v4027
        %v4076 = vadd.f32 %v3770, %v4030
        %v4077 = vadd.f32 %v3771, %v4035
        %v4078 = vadd.f32 %v3772, %v4038
        %v4079 = vadd.f32 %v3773, %v4043
        %v4080 = vadd.f32 %v3774, %v4046
        %s4081 = scalar_lea.vmem [#allocation2], 160
        %v4082 = vld [vmem:[%s4081] sm:$0xff]
        %v4083 = vld [vmem:[%s4081 + $0x10] sm:$0xff]
        %v4084 = vld [vmem:[%s4081 + $0x20] sm:$0xff]
        %v4085 = vld [vmem:[%s4081 + $0x30] sm:$0xff]
        %v4086 = vld [vmem:[%s4081 + $0x40] sm:$0xff]
        %v4087 = vld [vmem:[%s4081 + $0x50] sm:$0xff]
        %v4088 = vld [vmem:[%s4081 + $0x60] sm:$0xff]
        %v4089 = vld [vmem:[%s4081 + $0x70] sm:$0xff]
        %v4090 = vld [vmem:[%s4081 + $0xa0] sm:$0xff]
        %v4091 = vld [vmem:[%s4081 + $0xb0] sm:$0xff]
        %v4092 = vld [vmem:[%s4081 + $0xc0] sm:$0xff]
        %v4093 = vld [vmem:[%s4081 + $0xd0] sm:$0xff]
        %v4094 = vld [vmem:[%s4081 + $0xe0] sm:$0xff]
        %v4095 = vld [vmem:[%s4081 + $0xf0] sm:$0xff]
        %v4096 = vld [vmem:[%s4081 + $0x100] sm:$0xff]
        %v4097 = vld [vmem:[%s4081 + $0x110] sm:$0xff]
        %v4098 = vld [vmem:[%s4081 + $0x140] sm:$0xff]
        %v4099 = vld [vmem:[%s4081 + $0x150] sm:$0xff]
        %v4100 = vld [vmem:[%s4081 + $0x160] sm:$0xff]
        %v4101 = vld [vmem:[%s4081 + $0x170] sm:$0xff]
        %v4102 = vld [vmem:[%s4081 + $0x180] sm:$0xff]
        %v4103 = vld [vmem:[%s4081 + $0x190] sm:$0xff]
        %v4104 = vld [vmem:[%s4081 + $0x1a0] sm:$0xff]
        %v4105 = vld [vmem:[%s4081 + $0x1b0] sm:$0xff]
        %v4106 = vld [vmem:[%s4081 + $0x1e0] sm:$0xff]
        %v4107 = vld [vmem:[%s4081 + $0x1f0] sm:$0xff]
        %v4108 = vld [vmem:[%s4081 + $0x200] sm:$0xff]
        %v4109 = vld [vmem:[%s4081 + $0x210] sm:$0xff]
        %v4110 = vld [vmem:[%s4081 + $0x220] sm:$0xff]
        %v4111 = vld [vmem:[%s4081 + $0x230] sm:$0xff]
        %v4112 = vld [vmem:[%s4081 + $0x240] sm:$0xff]
        %v4113 = vld [vmem:[%s4081 + $0x250] sm:$0xff]
        %v4114 = vpack.c.bf16 %v4083, %v4082
        %v4115 = vpack.c.bf16 %v4085, %v4084
        %v4116 = vpack.c.bf16 %v4087, %v4086
        %v4117 = vpack.c.bf16 %v4089, %v4088
        %v4118 = vpack.c.bf16 %v4091, %v4090
        %v4119 = vpack.c.bf16 %v4093, %v4092
        %v4120 = vpack.c.bf16 %v4095, %v4094
        %v4121 = vpack.c.bf16 %v4097, %v4096
        %v4122 = vpack.c.bf16 %v4099, %v4098
        %v4123 = vpack.c.bf16 %v4101, %v4100
        %v4124 = vpack.c.bf16 %v4103, %v4102
        %v4125 = vpack.c.bf16 %v4105, %v4104
        %v4126 = vpack.c.bf16 %v4107, %v4106
        %v4127 = vpack.c.bf16 %v4109, %v4108
        %v4128 = vpack.c.bf16 %v4111, %v4110
        %v4129 = vpack.c.bf16 %v4113, %v4112
        %s4130 = scalar_lea.vmem [#allocation7], 144
        %v4131 = vld [vmem:[%s4130] sm:$0xf]
        %v4132 = vld [vmem:[%s4130 + $0x4] sm:$0xf]
        %v4133 = vld [vmem:[%s4130 + $0x8] sm:$0xf]
        %v4134 = vld [vmem:[%s4130 + $0xc] sm:$0xf]
        %v4139 = vunpack.c.l.b16 %v4131
        %v4140 = vunpack.c.l.b16 %v4132
        %v4141 = vunpack.c.l.b16 %v4133
        %v4142 = vunpack.c.l.b16 %v4134
        %v4143 = vpack.c.b16 %v4140, %v4139
        %v4144 = vpack.c.b16 %v4142, %v4141
        %v4148 = vsel %vm757, %v4114, 0
        %v4151 = vsel %vm757, %v4115, 0
        %v4154 = vsel %vm757, %v4116, 0
        %v4157 = vsel %vm757, %v4117, 0
        %v4160 = vsel %vm757, %v4118, 0
        %v4163 = vsel %vm757, %v4119, 0
        %v4166 = vsel %vm757, %v4120, 0
        %v4169 = vsel %vm757, %v4121, 0
        %v4172 = vsel %vm757, %v4122, 0
        %v4175 = vsel %vm757, %v4123, 0
        %v4178 = vsel %vm757, %v4124, 0
        %v4181 = vsel %vm757, %v4125, 0
        %v4184 = vsel %vm757, %v4126, 0
        %v4187 = vsel %vm757, %v4127, 0
        %v4190 = vsel %vm757, %v4128, 0
        %v4193 = vsel %vm757, %v4129, 0
        %4195 = vmatprep.subr.bf16.mxu0 0
        %4196 = vmatpush1.bf16.msra.mxu0 0
        %4197 = vmatprep.subr.bf16.mxu0 0
        %4198 = vmatpush1.bf16.msra.mxu0 0
        %4199 = vmatprep.subr.bf16.mxu0 0
        %4200 = vmatpush1.bf16.msra.mxu0 0
        %4201 = vmatprep.subr.bf16.mxu0 0
        %4202 = vmatpush1.bf16.msra.mxu0 0
        %4203 = vmatprep.subr.bf16.mxu0 0
        %4204 = vmatpush1.bf16.msra.mxu0 0
        %4205 = vmatprep.subr.bf16.mxu0 0
        %4206 = vmatpush1.bf16.msra.mxu0 0
        %4207 = vmatprep.subr.bf16.mxu0 0
        %4208 = vmatpush1.bf16.msra.mxu0 %v4144
        %4209 = vmatprep.subr.bf16.mxu0 0
        %4210 = vmatpush1.bf16.msra.mxu0 %v4143
        %4211 = vmatprep.subr.bf16.mxu0 0
        %4212 = vmatpush2.bf16.msra.mxu0 0
        %4213 = vmatprep.subr.bf16.mxu0 0
        %4214 = vmatpush2.bf16.msra.mxu0 0
        %4215 = vmatprep.subr.bf16.mxu0 0
        %4216 = vmatpush2.bf16.msra.mxu0 0
        %4217 = vmatprep.subr.bf16.mxu0 0
        %4218 = vmatpush2.bf16.msra.mxu0 0
        %4219 = vmatprep.subr.bf16.mxu0 0
        %4220 = vmatpush2.bf16.msra.mxu0 0
        %4221 = vmatprep.subr.bf16.mxu0 0
        %4222 = vmatpush2.bf16.msra.mxu0 0
        %4223 = vmatprep.subr.bf16.mxu0 0
        %4224 = vmatpush2.bf16.msra.mxu0 0
        %4225 = vmatprep.subr.bf16.mxu0 0
        %4226 = vmatpush2.bf16.msra.mxu0 0
        %4227 = vmatprep.mubr.bf16.mxu0 0
        %4228 = vmatmul.mubr.bf16.gmra.mxu0 %v4148
        %v4229 = vpop.f32.mrf.mxu0
        %v4230 = vadd.f32 0.0, %v4229
        %v4231 = vpop.f32.mrf.mxu0
        %v4232 = vpop.f32.mrf.mxu0
        %v4233 = vadd.f32 0.0, %v4232
        %v4234 = vpop.f32.mrf.mxu0
        %4235 = vmatprep.mubr.bf16.mxu0 0
        %4236 = vmatmul.mubr.bf16.gmra.mxu0 %v4151
        %v4237 = vpop.f32.mrf.mxu0
        %v4238 = vadd.f32 0.0, %v4237
        %v4239 = vpop.f32.mrf.mxu0
        %v4240 = vpop.f32.mrf.mxu0
        %v4241 = vadd.f32 0.0, %v4240
        %v4242 = vpop.f32.mrf.mxu0
        %4243 = vmatprep.mubr.bf16.mxu0 0
        %4244 = vmatmul.mubr.bf16.gmra.mxu0 %v4154
        %v4245 = vpop.f32.mrf.mxu0
        %v4246 = vadd.f32 0.0, %v4245
        %v4247 = vpop.f32.mrf.mxu0
        %v4248 = vpop.f32.mrf.mxu0
        %v4249 = vadd.f32 0.0, %v4248
        %v4250 = vpop.f32.mrf.mxu0
        %4251 = vmatprep.mubr.bf16.mxu0 0
        %4252 = vmatmul.mubr.bf16.gmra.mxu0 %v4157
        %v4253 = vpop.f32.mrf.mxu0
        %v4254 = vadd.f32 0.0, %v4253
        %v4255 = vpop.f32.mrf.mxu0
        %v4256 = vpop.f32.mrf.mxu0
        %v4257 = vadd.f32 0.0, %v4256
        %v4258 = vpop.f32.mrf.mxu0
        %4259 = vmatprep.mubr.bf16.mxu0 0
        %4260 = vmatmul.mubr.bf16.gmra.mxu0 %v4160
        %v4261 = vpop.f32.mrf.mxu0
        %v4262 = vadd.f32 0.0, %v4261
        %v4263 = vpop.f32.mrf.mxu0
        %v4264 = vpop.f32.mrf.mxu0
        %v4265 = vadd.f32 0.0, %v4264
        %v4266 = vpop.f32.mrf.mxu0
        %4267 = vmatprep.mubr.bf16.mxu0 0
        %4268 = vmatmul.mubr.bf16.gmra.mxu0 %v4163
        %v4269 = vpop.f32.mrf.mxu0
        %v4270 = vadd.f32 0.0, %v4269
        %v4271 = vpop.f32.mrf.mxu0
        %v4272 = vpop.f32.mrf.mxu0
        %v4273 = vadd.f32 0.0, %v4272
        %v4274 = vpop.f32.mrf.mxu0
        %4275 = vmatprep.mubr.bf16.mxu0 0
        %4276 = vmatmul.mubr.bf16.gmra.mxu0 %v4166
        %v4277 = vpop.f32.mrf.mxu0
        %v4278 = vadd.f32 0.0, %v4277
        %v4279 = vpop.f32.mrf.mxu0
        %v4280 = vpop.f32.mrf.mxu0
        %v4281 = vadd.f32 0.0, %v4280
        %v4282 = vpop.f32.mrf.mxu0
        %4283 = vmatprep.mubr.bf16.mxu0 0
        %4284 = vmatmul.mubr.bf16.gmra.mxu0 %v4169
        %v4285 = vpop.f32.mrf.mxu0
        %v4286 = vadd.f32 0.0, %v4285
        %v4287 = vpop.f32.mrf.mxu0
        %v4288 = vpop.f32.mrf.mxu0
        %v4289 = vadd.f32 0.0, %v4288
        %v4290 = vpop.f32.mrf.mxu0
        %4291 = vmatprep.mubr.bf16.mxu0 0
        %4292 = vmatmul.mubr.bf16.gmra.mxu0 %v4172
        %v4293 = vpop.f32.mrf.mxu0
        %v4294 = vadd.f32 0.0, %v4293
        %v4295 = vpop.f32.mrf.mxu0
        %v4296 = vpop.f32.mrf.mxu0
        %v4297 = vadd.f32 0.0, %v4296
        %v4298 = vpop.f32.mrf.mxu0
        %4299 = vmatprep.mubr.bf16.mxu0 0
        %4300 = vmatmul.mubr.bf16.gmra.mxu0 %v4175
        %v4301 = vpop.f32.mrf.mxu0
        %v4302 = vadd.f32 0.0, %v4301
        %v4303 = vpop.f32.mrf.mxu0
        %v4304 = vpop.f32.mrf.mxu0
        %v4305 = vadd.f32 0.0, %v4304
        %v4306 = vpop.f32.mrf.mxu0
        %4307 = vmatprep.mubr.bf16.mxu0 0
        %4308 = vmatmul.mubr.bf16.gmra.mxu0 %v4178
        %v4309 = vpop.f32.mrf.mxu0
        %v4310 = vadd.f32 0.0, %v4309
        %v4311 = vpop.f32.mrf.mxu0
        %v4312 = vpop.f32.mrf.mxu0
        %v4313 = vadd.f32 0.0, %v4312
        %v4314 = vpop.f32.mrf.mxu0
        %4315 = vmatprep.mubr.bf16.mxu0 0
        %4316 = vmatmul.mubr.bf16.gmra.mxu0 %v4181
        %v4317 = vpop.f32.mrf.mxu0
        %v4318 = vadd.f32 0.0, %v4317
        %v4319 = vpop.f32.mrf.mxu0
        %v4320 = vpop.f32.mrf.mxu0
        %v4321 = vadd.f32 0.0, %v4320
        %v4322 = vpop.f32.mrf.mxu0
        %4323 = vmatprep.mubr.bf16.mxu0 0
        %4324 = vmatmul.mubr.bf16.gmra.mxu0 %v4184
        %v4325 = vpop.f32.mrf.mxu0
        %v4326 = vadd.f32 0.0, %v4325
        %v4327 = vpop.f32.mrf.mxu0
        %v4328 = vpop.f32.mrf.mxu0
        %v4329 = vadd.f32 0.0, %v4328
        %v4330 = vpop.f32.mrf.mxu0
        %4331 = vmatprep.mubr.bf16.mxu0 0
        %4332 = vmatmul.mubr.bf16.gmra.mxu0 %v4187
        %v4333 = vpop.f32.mrf.mxu0
        %v4334 = vadd.f32 0.0, %v4333
        %v4335 = vpop.f32.mrf.mxu0
        %v4336 = vpop.f32.mrf.mxu0
        %v4337 = vadd.f32 0.0, %v4336
        %v4338 = vpop.f32.mrf.mxu0
        %4339 = vmatprep.mubr.bf16.mxu0 0
        %4340 = vmatmul.mubr.bf16.gmra.mxu0 %v4190
        %v4341 = vpop.f32.mrf.mxu0
        %v4342 = vadd.f32 0.0, %v4341
        %v4343 = vpop.f32.mrf.mxu0
        %v4344 = vpop.f32.mrf.mxu0
        %v4345 = vadd.f32 0.0, %v4344
        %v4346 = vpop.f32.mrf.mxu0
        %4347 = vmatprep.mubr.bf16.mxu0 0
        %4348 = vmatmul.mubr.bf16.gmra.mxu0 %v4193
        %v4349 = vpop.f32.mrf.mxu0
        %v4350 = vadd.f32 0.0, %v4349
        %v4351 = vpop.f32.mrf.mxu0
        %v4352 = vpop.f32.mrf.mxu0
        %v4353 = vadd.f32 0.0, %v4352
        %v4354 = vpop.f32.mrf.mxu0
        %4355 = vdwg.mxu0
        %v4356 = vadd.f32 %v4049, %v4230
        %v4357 = vadd.f32 %v4050, %v4233
        %v4358 = vadd.f32 %v4051, %v4238
        %v4359 = vadd.f32 %v4052, %v4241
        %v4360 = vadd.f32 %v4053, %v4246
        %v4361 = vadd.f32 %v4054, %v4249
        %v4362 = vadd.f32 %v4055, %v4254
        %v4363 = vadd.f32 %v4056, %v4257
        %v4364 = vadd.f32 %v4057, %v4262
        %v4365 = vadd.f32 %v4058, %v4265
        %v4366 = vadd.f32 %v4059, %v4270
        %v4367 = vadd.f32 %v4060, %v4273
        %v4368 = vadd.f32 %v4061, %v4278
        %v4369 = vadd.f32 %v4062, %v4281
        %v4370 = vadd.f32 %v4063, %v4286
        %v4371 = vadd.f32 %v4064, %v4289
        %v4372 = vadd.f32 %v4065, %v4294
        %v4373 = vadd.f32 %v4066, %v4297
        %v4374 = vadd.f32 %v4067, %v4302
        %v4375 = vadd.f32 %v4068, %v4305
        %v4376 = vadd.f32 %v4069, %v4310
        %v4377 = vadd.f32 %v4070, %v4313
        %v4378 = vadd.f32 %v4071, %v4318
        %v4379 = vadd.f32 %v4072, %v4321
        %v4380 = vadd.f32 %v4073, %v4326
        %v4381 = vadd.f32 %v4074, %v4329
        %v4382 = vadd.f32 %v4075, %v4334
        %v4383 = vadd.f32 %v4076, %v4337
        %v4384 = vadd.f32 %v4077, %v4342
        %v4385 = vadd.f32 %v4078, %v4345
        %v4386 = vadd.f32 %v4079, %v4350
        %v4387 = vadd.f32 %v4080, %v4353
        %v4388 = vld [vmem:[%s4081 + $0x1] sm:$0xff]
        %v4389 = vld [vmem:[%s4081 + $0x11] sm:$0xff]
        %v4390 = vld [vmem:[%s4081 + $0x21] sm:$0xff]
        %v4391 = vld [vmem:[%s4081 + $0x31] sm:$0xff]
        %v4392 = vld [vmem:[%s4081 + $0x41] sm:$0xff]
        %v4393 = vld [vmem:[%s4081 + $0x51] sm:$0xff]
        %v4394 = vld [vmem:[%s4081 + $0x61] sm:$0xff]
        %v4395 = vld [vmem:[%s4081 + $0x71] sm:$0xff]
        %v4396 = vld [vmem:[%s4081 + $0xa1] sm:$0xff]
        %v4397 = vld [vmem:[%s4081 + $0xb1] sm:$0xff]
        %v4398 = vld [vmem:[%s4081 + $0xc1] sm:$0xff]
        %v4399 = vld [vmem:[%s4081 + $0xd1] sm:$0xff]
        %v4400 = vld [vmem:[%s4081 + $0xe1] sm:$0xff]
        %v4401 = vld [vmem:[%s4081 + $0xf1] sm:$0xff]
        %v4402 = vld [vmem:[%s4081 + $0x101] sm:$0xff]
        %v4403 = vld [vmem:[%s4081 + $0x111] sm:$0xff]
        %v4404 = vld [vmem:[%s4081 + $0x141] sm:$0xff]
        %v4405 = vld [vmem:[%s4081 + $0x151] sm:$0xff]
        %v4406 = vld [vmem:[%s4081 + $0x161] sm:$0xff]
        %v4407 = vld [vmem:[%s4081 + $0x171] sm:$0xff]
        %v4408 = vld [vmem:[%s4081 + $0x181] sm:$0xff]
        %v4409 = vld [vmem:[%s4081 + $0x191] sm:$0xff]
        %v4410 = vld [vmem:[%s4081 + $0x1a1] sm:$0xff]
        %v4411 = vld [vmem:[%s4081 + $0x1b1] sm:$0xff]
        %v4412 = vld [vmem:[%s4081 + $0x1e1] sm:$0xff]
        %v4413 = vld [vmem:[%s4081 + $0x1f1] sm:$0xff]
        %v4414 = vld [vmem:[%s4081 + $0x201] sm:$0xff]
        %v4415 = vld [vmem:[%s4081 + $0x211] sm:$0xff]
        %v4416 = vld [vmem:[%s4081 + $0x221] sm:$0xff]
        %v4417 = vld [vmem:[%s4081 + $0x231] sm:$0xff]
        %v4418 = vld [vmem:[%s4081 + $0x241] sm:$0xff]
        %v4419 = vld [vmem:[%s4081 + $0x251] sm:$0xff]
        %v4420 = vpack.c.bf16 %v4389, %v4388
        %v4421 = vpack.c.bf16 %v4391, %v4390
        %v4422 = vpack.c.bf16 %v4393, %v4392
        %v4423 = vpack.c.bf16 %v4395, %v4394
        %v4424 = vpack.c.bf16 %v4397, %v4396
        %v4425 = vpack.c.bf16 %v4399, %v4398
        %v4426 = vpack.c.bf16 %v4401, %v4400
        %v4427 = vpack.c.bf16 %v4403, %v4402
        %v4428 = vpack.c.bf16 %v4405, %v4404
        %v4429 = vpack.c.bf16 %v4407, %v4406
        %v4430 = vpack.c.bf16 %v4409, %v4408
        %v4431 = vpack.c.bf16 %v4411, %v4410
        %v4432 = vpack.c.bf16 %v4413, %v4412
        %v4433 = vpack.c.bf16 %v4415, %v4414
        %v4434 = vpack.c.bf16 %v4417, %v4416
        %v4435 = vpack.c.bf16 %v4419, %v4418
        %s4436 = scalar_lea.vmem [#allocation7], 160
        %v4437 = vld [vmem:[%s4436] sm:$0xf]
        %v4438 = vld [vmem:[%s4436 + $0x4] sm:$0xf]
        %v4439 = vld [vmem:[%s4436 + $0x8] sm:$0xf]
        %v4440 = vld [vmem:[%s4436 + $0xc] sm:$0xf]
        %v4445 = vunpack.c.l.b16 %v4437
        %v4446 = vunpack.c.l.b16 %v4438
        %v4447 = vunpack.c.l.b16 %v4439
        %v4448 = vunpack.c.l.b16 %v4440
        %v4449 = vpack.c.b16 %v4446, %v4445
        %v4450 = vpack.c.b16 %v4448, %v4447
        %v4454 = vsel %vm757, %v4420, 0
        %v4457 = vsel %vm757, %v4421, 0
        %v4460 = vsel %vm757, %v4422, 0
        %v4463 = vsel %vm757, %v4423, 0
        %v4466 = vsel %vm757, %v4424, 0
        %v4469 = vsel %vm757, %v4425, 0
        %v4472 = vsel %vm757, %v4426, 0
        %v4475 = vsel %vm757, %v4427, 0
        %v4478 = vsel %vm757, %v4428, 0
        %v4481 = vsel %vm757, %v4429, 0
        %v4484 = vsel %vm757, %v4430, 0
        %v4487 = vsel %vm757, %v4431, 0
        %v4490 = vsel %vm757, %v4432, 0
        %v4493 = vsel %vm757, %v4433, 0
        %v4496 = vsel %vm757, %v4434, 0
        %v4499 = vsel %vm757, %v4435, 0
        %4501 = vmatprep.subr.bf16.mxu0 0
        %4502 = vmatpush1.bf16.msra.mxu0 0
        %4503 = vmatprep.subr.bf16.mxu0 0
        %4504 = vmatpush1.bf16.msra.mxu0 0
        %4505 = vmatprep.subr.bf16.mxu0 0
        %4506 = vmatpush1.bf16.msra.mxu0 0
        %4507 = vmatprep.subr.bf16.mxu0 0
        %4508 = vmatpush1.bf16.msra.mxu0 0
        %4509 = vmatprep.subr.bf16.mxu0 0
        %4510 = vmatpush1.bf16.msra.mxu0 0
        %4511 = vmatprep.subr.bf16.mxu0 0
        %4512 = vmatpush1.bf16.msra.mxu0 0
        %4513 = vmatprep.subr.bf16.mxu0 0
        %4514 = vmatpush1.bf16.msra.mxu0 %v4450
        %4515 = vmatprep.subr.bf16.mxu0 0
        %4516 = vmatpush1.bf16.msra.mxu0 %v4449
        %4517 = vmatprep.subr.bf16.mxu0 0
        %4518 = vmatpush2.bf16.msra.mxu0 0
        %4519 = vmatprep.subr.bf16.mxu0 0
        %4520 = vmatpush2.bf16.msra.mxu0 0
        %4521 = vmatprep.subr.bf16.mxu0 0
        %4522 = vmatpush2.bf16.msra.mxu0 0
        %4523 = vmatprep.subr.bf16.mxu0 0
        %4524 = vmatpush2.bf16.msra.mxu0 0
        %4525 = vmatprep.subr.bf16.mxu0 0
        %4526 = vmatpush2.bf16.msra.mxu0 0
        %4527 = vmatprep.subr.bf16.mxu0 0
        %4528 = vmatpush2.bf16.msra.mxu0 0
        %4529 = vmatprep.subr.bf16.mxu0 0
        %4530 = vmatpush2.bf16.msra.mxu0 0
        %4531 = vmatprep.subr.bf16.mxu0 0
        %4532 = vmatpush2.bf16.msra.mxu0 0
        %4533 = vmatprep.mubr.bf16.mxu0 0
        %4534 = vmatmul.mubr.bf16.gmra.mxu0 %v4454
        %v4535 = vpop.f32.mrf.mxu0
        %v4536 = vadd.f32 0.0, %v4535
        %v4537 = vpop.f32.mrf.mxu0
        %v4538 = vpop.f32.mrf.mxu0
        %v4539 = vadd.f32 0.0, %v4538
        %v4540 = vpop.f32.mrf.mxu0
        %4541 = vmatprep.mubr.bf16.mxu0 0
        %4542 = vmatmul.mubr.bf16.gmra.mxu0 %v4457
        %v4543 = vpop.f32.mrf.mxu0
        %v4544 = vadd.f32 0.0, %v4543
        %v4545 = vpop.f32.mrf.mxu0
        %v4546 = vpop.f32.mrf.mxu0
        %v4547 = vadd.f32 0.0, %v4546
        %v4548 = vpop.f32.mrf.mxu0
        %4549 = vmatprep.mubr.bf16.mxu0 0
        %4550 = vmatmul.mubr.bf16.gmra.mxu0 %v4460
        %v4551 = vpop.f32.mrf.mxu0
        %v4552 = vadd.f32 0.0, %v4551
        %v4553 = vpop.f32.mrf.mxu0
        %v4554 = vpop.f32.mrf.mxu0
        %v4555 = vadd.f32 0.0, %v4554
        %v4556 = vpop.f32.mrf.mxu0
        %4557 = vmatprep.mubr.bf16.mxu0 0
        %4558 = vmatmul.mubr.bf16.gmra.mxu0 %v4463
        %v4559 = vpop.f32.mrf.mxu0
        %v4560 = vadd.f32 0.0, %v4559
        %v4561 = vpop.f32.mrf.mxu0
        %v4562 = vpop.f32.mrf.mxu0
        %v4563 = vadd.f32 0.0, %v4562
        %v4564 = vpop.f32.mrf.mxu0
        %4565 = vmatprep.mubr.bf16.mxu0 0
        %4566 = vmatmul.mubr.bf16.gmra.mxu0 %v4466
        %v4567 = vpop.f32.mrf.mxu0
        %v4568 = vadd.f32 0.0, %v4567
        %v4569 = vpop.f32.mrf.mxu0
        %v4570 = vpop.f32.mrf.mxu0
        %v4571 = vadd.f32 0.0, %v4570
        %v4572 = vpop.f32.mrf.mxu0
        %4573 = vmatprep.mubr.bf16.mxu0 0
        %4574 = vmatmul.mubr.bf16.gmra.mxu0 %v4469
        %v4575 = vpop.f32.mrf.mxu0
        %v4576 = vadd.f32 0.0, %v4575
        %v4577 = vpop.f32.mrf.mxu0
        %v4578 = vpop.f32.mrf.mxu0
        %v4579 = vadd.f32 0.0, %v4578
        %v4580 = vpop.f32.mrf.mxu0
        %4581 = vmatprep.mubr.bf16.mxu0 0
        %4582 = vmatmul.mubr.bf16.gmra.mxu0 %v4472
        %v4583 = vpop.f32.mrf.mxu0
        %v4584 = vadd.f32 0.0, %v4583
        %v4585 = vpop.f32.mrf.mxu0
        %v4586 = vpop.f32.mrf.mxu0
        %v4587 = vadd.f32 0.0, %v4586
        %v4588 = vpop.f32.mrf.mxu0
        %4589 = vmatprep.mubr.bf16.mxu0 0
        %4590 = vmatmul.mubr.bf16.gmra.mxu0 %v4475
        %v4591 = vpop.f32.mrf.mxu0
        %v4592 = vadd.f32 0.0, %v4591
        %v4593 = vpop.f32.mrf.mxu0
        %v4594 = vpop.f32.mrf.mxu0
        %v4595 = vadd.f32 0.0, %v4594
        %v4596 = vpop.f32.mrf.mxu0
        %4597 = vmatprep.mubr.bf16.mxu0 0
        %4598 = vmatmul.mubr.bf16.gmra.mxu0 %v4478
        %v4599 = vpop.f32.mrf.mxu0
        %v4600 = vadd.f32 0.0, %v4599
        %v4601 = vpop.f32.mrf.mxu0
        %v4602 = vpop.f32.mrf.mxu0
        %v4603 = vadd.f32 0.0, %v4602
        %v4604 = vpop.f32.mrf.mxu0
        %4605 = vmatprep.mubr.bf16.mxu0 0
        %4606 = vmatmul.mubr.bf16.gmra.mxu0 %v4481
        %v4607 = vpop.f32.mrf.mxu0
        %v4608 = vadd.f32 0.0, %v4607
        %v4609 = vpop.f32.mrf.mxu0
        %v4610 = vpop.f32.mrf.mxu0
        %v4611 = vadd.f32 0.0, %v4610
        %v4612 = vpop.f32.mrf.mxu0
        %4613 = vmatprep.mubr.bf16.mxu0 0
        %4614 = vmatmul.mubr.bf16.gmra.mxu0 %v4484
        %v4615 = vpop.f32.mrf.mxu0
        %v4616 = vadd.f32 0.0, %v4615
        %v4617 = vpop.f32.mrf.mxu0
        %v4618 = vpop.f32.mrf.mxu0
        %v4619 = vadd.f32 0.0, %v4618
        %v4620 = vpop.f32.mrf.mxu0
        %4621 = vmatprep.mubr.bf16.mxu0 0
        %4622 = vmatmul.mubr.bf16.gmra.mxu0 %v4487
        %v4623 = vpop.f32.mrf.mxu0
        %v4624 = vadd.f32 0.0, %v4623
        %v4625 = vpop.f32.mrf.mxu0
        %v4626 = vpop.f32.mrf.mxu0
        %v4627 = vadd.f32 0.0, %v4626
        %v4628 = vpop.f32.mrf.mxu0
        %4629 = vmatprep.mubr.bf16.mxu0 0
        %4630 = vmatmul.mubr.bf16.gmra.mxu0 %v4490
        %v4631 = vpop.f32.mrf.mxu0
        %v4632 = vadd.f32 0.0, %v4631
        %v4633 = vpop.f32.mrf.mxu0
        %v4634 = vpop.f32.mrf.mxu0
        %v4635 = vadd.f32 0.0, %v4634
        %v4636 = vpop.f32.mrf.mxu0
        %4637 = vmatprep.mubr.bf16.mxu0 0
        %4638 = vmatmul.mubr.bf16.gmra.mxu0 %v4493
        %v4639 = vpop.f32.mrf.mxu0
        %v4640 = vadd.f32 0.0, %v4639
        %v4641 = vpop.f32.mrf.mxu0
        %v4642 = vpop.f32.mrf.mxu0
        %v4643 = vadd.f32 0.0, %v4642
        %v4644 = vpop.f32.mrf.mxu0
        %4645 = vmatprep.mubr.bf16.mxu0 0
        %4646 = vmatmul.mubr.bf16.gmra.mxu0 %v4496
        %v4647 = vpop.f32.mrf.mxu0
        %v4648 = vadd.f32 0.0, %v4647
        %v4649 = vpop.f32.mrf.mxu0
        %v4650 = vpop.f32.mrf.mxu0
        %v4651 = vadd.f32 0.0, %v4650
        %v4652 = vpop.f32.mrf.mxu0
        %4653 = vmatprep.mubr.bf16.mxu0 0
        %4654 = vmatmul.mubr.bf16.gmra.mxu0 %v4499
        %v4655 = vpop.f32.mrf.mxu0
        %v4656 = vadd.f32 0.0, %v4655
        %v4657 = vpop.f32.mrf.mxu0
        %v4658 = vpop.f32.mrf.mxu0
        %v4659 = vadd.f32 0.0, %v4658
        %v4660 = vpop.f32.mrf.mxu0
        %4661 = vdwg.mxu0
        %v4662 = vadd.f32 %v4356, %v4536
        %v4663 = vadd.f32 %v4357, %v4539
        %v4664 = vadd.f32 %v4358, %v4544
        %v4665 = vadd.f32 %v4359, %v4547
        %v4666 = vadd.f32 %v4360, %v4552
        %v4667 = vadd.f32 %v4361, %v4555
        %v4668 = vadd.f32 %v4362, %v4560
        %v4669 = vadd.f32 %v4363, %v4563
        %v4670 = vadd.f32 %v4364, %v4568
        %v4671 = vadd.f32 %v4365, %v4571
        %v4672 = vadd.f32 %v4366, %v4576
        %v4673 = vadd.f32 %v4367, %v4579
        %v4674 = vadd.f32 %v4368, %v4584
        %v4675 = vadd.f32 %v4369, %v4587
        %v4676 = vadd.f32 %v4370, %v4592
        %v4677 = vadd.f32 %v4371, %v4595
        %v4678 = vadd.f32 %v4372, %v4600
        %v4679 = vadd.f32 %v4373, %v4603
        %v4680 = vadd.f32 %v4374, %v4608
        %v4681 = vadd.f32 %v4375, %v4611
        %v4682 = vadd.f32 %v4376, %v4616
        %v4683 = vadd.f32 %v4377, %v4619
        %v4684 = vadd.f32 %v4378, %v4624
        %v4685 = vadd.f32 %v4379, %v4627
        %v4686 = vadd.f32 %v4380, %v4632
        %v4687 = vadd.f32 %v4381, %v4635
        %v4688 = vadd.f32 %v4382, %v4640
        %v4689 = vadd.f32 %v4383, %v4643
        %v4690 = vadd.f32 %v4384, %v4648
        %v4691 = vadd.f32 %v4385, %v4651
        %v4692 = vadd.f32 %v4386, %v4656
        %v4693 = vadd.f32 %v4387, %v4659
        %v4694 = vld [vmem:[%s4081 + $0x2] sm:$0xff]
        %v4695 = vld [vmem:[%s4081 + $0x12] sm:$0xff]
        %v4696 = vld [vmem:[%s4081 + $0x22] sm:$0xff]
        %v4697 = vld [vmem:[%s4081 + $0x32] sm:$0xff]
        %v4698 = vld [vmem:[%s4081 + $0x42] sm:$0xff]
        %v4699 = vld [vmem:[%s4081 + $0x52] sm:$0xff]
        %v4700 = vld [vmem:[%s4081 + $0x62] sm:$0xff]
        %v4701 = vld [vmem:[%s4081 + $0x72] sm:$0xff]
        %v4702 = vld [vmem:[%s4081 + $0xa2] sm:$0xff]
        %v4703 = vld [vmem:[%s4081 + $0xb2] sm:$0xff]
        %v4704 = vld [vmem:[%s4081 + $0xc2] sm:$0xff]
        %v4705 = vld [vmem:[%s4081 + $0xd2] sm:$0xff]
        %v4706 = vld [vmem:[%s4081 + $0xe2] sm:$0xff]
        %v4707 = vld [vmem:[%s4081 + $0xf2] sm:$0xff]
        %v4708 = vld [vmem:[%s4081 + $0x102] sm:$0xff]
        %v4709 = vld [vmem:[%s4081 + $0x112] sm:$0xff]
        %v4710 = vld [vmem:[%s4081 + $0x142] sm:$0xff]
        %v4711 = vld [vmem:[%s4081 + $0x152] sm:$0xff]
        %v4712 = vld [vmem:[%s4081 + $0x162] sm:$0xff]
        %v4713 = vld [vmem:[%s4081 + $0x172] sm:$0xff]
        %v4714 = vld [vmem:[%s4081 + $0x182] sm:$0xff]
        %v4715 = vld [vmem:[%s4081 + $0x192] sm:$0xff]
        %v4716 = vld [vmem:[%s4081 + $0x1a2] sm:$0xff]
        %v4717 = vld [vmem:[%s4081 + $0x1b2] sm:$0xff]
        %v4718 = vld [vmem:[%s4081 + $0x1e2] sm:$0xff]
        %v4719 = vld [vmem:[%s4081 + $0x1f2] sm:$0xff]
        %v4720 = vld [vmem:[%s4081 + $0x202] sm:$0xff]
        %v4721 = vld [vmem:[%s4081 + $0x212] sm:$0xff]
        %v4722 = vld [vmem:[%s4081 + $0x222] sm:$0xff]
        %v4723 = vld [vmem:[%s4081 + $0x232] sm:$0xff]
        %v4724 = vld [vmem:[%s4081 + $0x242] sm:$0xff]
        %v4725 = vld [vmem:[%s4081 + $0x252] sm:$0xff]
        %v4726 = vpack.c.bf16 %v4695, %v4694
        %v4727 = vpack.c.bf16 %v4697, %v4696
        %v4728 = vpack.c.bf16 %v4699, %v4698
        %v4729 = vpack.c.bf16 %v4701, %v4700
        %v4730 = vpack.c.bf16 %v4703, %v4702
        %v4731 = vpack.c.bf16 %v4705, %v4704
        %v4732 = vpack.c.bf16 %v4707, %v4706
        %v4733 = vpack.c.bf16 %v4709, %v4708
        %v4734 = vpack.c.bf16 %v4711, %v4710
        %v4735 = vpack.c.bf16 %v4713, %v4712
        %v4736 = vpack.c.bf16 %v4715, %v4714
        %v4737 = vpack.c.bf16 %v4717, %v4716
        %v4738 = vpack.c.bf16 %v4719, %v4718
        %v4739 = vpack.c.bf16 %v4721, %v4720
        %v4740 = vpack.c.bf16 %v4723, %v4722
        %v4741 = vpack.c.bf16 %v4725, %v4724
        %s4742 = scalar_lea.vmem [#allocation7], 176
        %v4743 = vld [vmem:[%s4742] sm:$0xf]
        %v4744 = vld [vmem:[%s4742 + $0x4] sm:$0xf]
        %v4745 = vld [vmem:[%s4742 + $0x8] sm:$0xf]
        %v4746 = vld [vmem:[%s4742 + $0xc] sm:$0xf]
        %v4751 = vunpack.c.l.b16 %v4743
        %v4752 = vunpack.c.l.b16 %v4744
        %v4753 = vunpack.c.l.b16 %v4745
        %v4754 = vunpack.c.l.b16 %v4746
        %v4755 = vpack.c.b16 %v4752, %v4751
        %v4756 = vpack.c.b16 %v4754, %v4753
        %v4760 = vsel %vm757, %v4726, 0
        %v4763 = vsel %vm757, %v4727, 0
        %v4766 = vsel %vm757, %v4728, 0
        %v4769 = vsel %vm757, %v4729, 0
        %v4772 = vsel %vm757, %v4730, 0
        %v4775 = vsel %vm757, %v4731, 0
        %v4778 = vsel %vm757, %v4732, 0
        %v4781 = vsel %vm757, %v4733, 0
        %v4784 = vsel %vm757, %v4734, 0
        %v4787 = vsel %vm757, %v4735, 0
        %v4790 = vsel %vm757, %v4736, 0
        %v4793 = vsel %vm757, %v4737, 0
        %v4796 = vsel %vm757, %v4738, 0
        %v4799 = vsel %vm757, %v4739, 0
        %v4802 = vsel %vm757, %v4740, 0
        %v4805 = vsel %vm757, %v4741, 0
        %4807 = vmatprep.subr.bf16.mxu0 0
        %4808 = vmatpush1.bf16.msra.mxu0 0
        %4809 = vmatprep.subr.bf16.mxu0 0
        %4810 = vmatpush1.bf16.msra.mxu0 0
        %4811 = vmatprep.subr.bf16.mxu0 0
        %4812 = vmatpush1.bf16.msra.mxu0 0
        %4813 = vmatprep.subr.bf16.mxu0 0
        %4814 = vmatpush1.bf16.msra.mxu0 0
        %4815 = vmatprep.subr.bf16.mxu0 0
        %4816 = vmatpush1.bf16.msra.mxu0 0
        %4817 = vmatprep.subr.bf16.mxu0 0
        %4818 = vmatpush1.bf16.msra.mxu0 0
        %4819 = vmatprep.subr.bf16.mxu0 0
        %4820 = vmatpush1.bf16.msra.mxu0 %v4756
        %4821 = vmatprep.subr.bf16.mxu0 0
        %4822 = vmatpush1.bf16.msra.mxu0 %v4755
        %4823 = vmatprep.subr.bf16.mxu0 0
        %4824 = vmatpush2.bf16.msra.mxu0 0
        %4825 = vmatprep.subr.bf16.mxu0 0
        %4826 = vmatpush2.bf16.msra.mxu0 0
        %4827 = vmatprep.subr.bf16.mxu0 0
        %4828 = vmatpush2.bf16.msra.mxu0 0
        %4829 = vmatprep.subr.bf16.mxu0 0
        %4830 = vmatpush2.bf16.msra.mxu0 0
        %4831 = vmatprep.subr.bf16.mxu0 0
        %4832 = vmatpush2.bf16.msra.mxu0 0
        %4833 = vmatprep.subr.bf16.mxu0 0
        %4834 = vmatpush2.bf16.msra.mxu0 0
        %4835 = vmatprep.subr.bf16.mxu0 0
        %4836 = vmatpush2.bf16.msra.mxu0 0
        %4837 = vmatprep.subr.bf16.mxu0 0
        %4838 = vmatpush2.bf16.msra.mxu0 0
        %4839 = vmatprep.mubr.bf16.mxu0 0
        %4840 = vmatmul.mubr.bf16.gmra.mxu0 %v4760
        %v4841 = vpop.f32.mrf.mxu0
        %v4842 = vadd.f32 0.0, %v4841
        %v4843 = vpop.f32.mrf.mxu0
        %v4844 = vpop.f32.mrf.mxu0
        %v4845 = vadd.f32 0.0, %v4844
        %v4846 = vpop.f32.mrf.mxu0
        %4847 = vmatprep.mubr.bf16.mxu0 0
        %4848 = vmatmul.mubr.bf16.gmra.mxu0 %v4763
        %v4849 = vpop.f32.mrf.mxu0
        %v4850 = vadd.f32 0.0, %v4849
        %v4851 = vpop.f32.mrf.mxu0
        %v4852 = vpop.f32.mrf.mxu0
        %v4853 = vadd.f32 0.0, %v4852
        %v4854 = vpop.f32.mrf.mxu0
        %4855 = vmatprep.mubr.bf16.mxu0 0
        %4856 = vmatmul.mubr.bf16.gmra.mxu0 %v4766
        %v4857 = vpop.f32.mrf.mxu0
        %v4858 = vadd.f32 0.0, %v4857
        %v4859 = vpop.f32.mrf.mxu0
        %v4860 = vpop.f32.mrf.mxu0
        %v4861 = vadd.f32 0.0, %v4860
        %v4862 = vpop.f32.mrf.mxu0
        %4863 = vmatprep.mubr.bf16.mxu0 0
        %4864 = vmatmul.mubr.bf16.gmra.mxu0 %v4769
        %v4865 = vpop.f32.mrf.mxu0
        %v4866 = vadd.f32 0.0, %v4865
        %v4867 = vpop.f32.mrf.mxu0
        %v4868 = vpop.f32.mrf.mxu0
        %v4869 = vadd.f32 0.0, %v4868
        %v4870 = vpop.f32.mrf.mxu0
        %4871 = vmatprep.mubr.bf16.mxu0 0
        %4872 = vmatmul.mubr.bf16.gmra.mxu0 %v4772
        %v4873 = vpop.f32.mrf.mxu0
        %v4874 = vadd.f32 0.0, %v4873
        %v4875 = vpop.f32.mrf.mxu0
        %v4876 = vpop.f32.mrf.mxu0
        %v4877 = vadd.f32 0.0, %v4876
        %v4878 = vpop.f32.mrf.mxu0
        %4879 = vmatprep.mubr.bf16.mxu0 0
        %4880 = vmatmul.mubr.bf16.gmra.mxu0 %v4775
        %v4881 = vpop.f32.mrf.mxu0
        %v4882 = vadd.f32 0.0, %v4881
        %v4883 = vpop.f32.mrf.mxu0
        %v4884 = vpop.f32.mrf.mxu0
        %v4885 = vadd.f32 0.0, %v4884
        %v4886 = vpop.f32.mrf.mxu0
        %4887 = vmatprep.mubr.bf16.mxu0 0
        %4888 = vmatmul.mubr.bf16.gmra.mxu0 %v4778
        %v4889 = vpop.f32.mrf.mxu0
        %v4890 = vadd.f32 0.0, %v4889
        %v4891 = vpop.f32.mrf.mxu0
        %v4892 = vpop.f32.mrf.mxu0
        %v4893 = vadd.f32 0.0, %v4892
        %v4894 = vpop.f32.mrf.mxu0
        %4895 = vmatprep.mubr.bf16.mxu0 0
        %4896 = vmatmul.mubr.bf16.gmra.mxu0 %v4781
        %v4897 = vpop.f32.mrf.mxu0
        %v4898 = vadd.f32 0.0, %v4897
        %v4899 = vpop.f32.mrf.mxu0
        %v4900 = vpop.f32.mrf.mxu0
        %v4901 = vadd.f32 0.0, %v4900
        %v4902 = vpop.f32.mrf.mxu0
        %4903 = vmatprep.mubr.bf16.mxu0 0
        %4904 = vmatmul.mubr.bf16.gmra.mxu0 %v4784
        %v4905 = vpop.f32.mrf.mxu0
        %v4906 = vadd.f32 0.0, %v4905
        %v4907 = vpop.f32.mrf.mxu0
        %v4908 = vpop.f32.mrf.mxu0
        %v4909 = vadd.f32 0.0, %v4908
        %v4910 = vpop.f32.mrf.mxu0
        %4911 = vmatprep.mubr.bf16.mxu0 0
        %4912 = vmatmul.mubr.bf16.gmra.mxu0 %v4787
        %v4913 = vpop.f32.mrf.mxu0
        %v4914 = vadd.f32 0.0, %v4913
        %v4915 = vpop.f32.mrf.mxu0
        %v4916 = vpop.f32.mrf.mxu0
        %v4917 = vadd.f32 0.0, %v4916
        %v4918 = vpop.f32.mrf.mxu0
        %4919 = vmatprep.mubr.bf16.mxu0 0
        %4920 = vmatmul.mubr.bf16.gmra.mxu0 %v4790
        %v4921 = vpop.f32.mrf.mxu0
        %v4922 = vadd.f32 0.0, %v4921
        %v4923 = vpop.f32.mrf.mxu0
        %v4924 = vpop.f32.mrf.mxu0
        %v4925 = vadd.f32 0.0, %v4924
        %v4926 = vpop.f32.mrf.mxu0
        %4927 = vmatprep.mubr.bf16.mxu0 0
        %4928 = vmatmul.mubr.bf16.gmra.mxu0 %v4793
        %v4929 = vpop.f32.mrf.mxu0
        %v4930 = vadd.f32 0.0, %v4929
        %v4931 = vpop.f32.mrf.mxu0
        %v4932 = vpop.f32.mrf.mxu0
        %v4933 = vadd.f32 0.0, %v4932
        %v4934 = vpop.f32.mrf.mxu0
        %4935 = vmatprep.mubr.bf16.mxu0 0
        %4936 = vmatmul.mubr.bf16.gmra.mxu0 %v4796
        %v4937 = vpop.f32.mrf.mxu0
        %v4938 = vadd.f32 0.0, %v4937
        %v4939 = vpop.f32.mrf.mxu0
        %v4940 = vpop.f32.mrf.mxu0
        %v4941 = vadd.f32 0.0, %v4940
        %v4942 = vpop.f32.mrf.mxu0
        %4943 = vmatprep.mubr.bf16.mxu0 0
        %4944 = vmatmul.mubr.bf16.gmra.mxu0 %v4799
        %v4945 = vpop.f32.mrf.mxu0
        %v4946 = vadd.f32 0.0, %v4945
        %v4947 = vpop.f32.mrf.mxu0
        %v4948 = vpop.f32.mrf.mxu0
        %v4949 = vadd.f32 0.0, %v4948
        %v4950 = vpop.f32.mrf.mxu0
        %4951 = vmatprep.mubr.bf16.mxu0 0
        %4952 = vmatmul.mubr.bf16.gmra.mxu0 %v4802
        %v4953 = vpop.f32.mrf.mxu0
        %v4954 = vadd.f32 0.0, %v4953
        %v4955 = vpop.f32.mrf.mxu0
        %v4956 = vpop.f32.mrf.mxu0
        %v4957 = vadd.f32 0.0, %v4956
        %v4958 = vpop.f32.mrf.mxu0
        %4959 = vmatprep.mubr.bf16.mxu0 0
        %4960 = vmatmul.mubr.bf16.gmra.mxu0 %v4805
        %v4961 = vpop.f32.mrf.mxu0
        %v4962 = vadd.f32 0.0, %v4961
        %v4963 = vpop.f32.mrf.mxu0
        %v4964 = vpop.f32.mrf.mxu0
        %v4965 = vadd.f32 0.0, %v4964
        %v4966 = vpop.f32.mrf.mxu0
        %4967 = vdwg.mxu0
        %v4968 = vadd.f32 %v4662, %v4842
        %v4969 = vadd.f32 %v4663, %v4845
        %v4970 = vadd.f32 %v4664, %v4850
        %v4971 = vadd.f32 %v4665, %v4853
        %v4972 = vadd.f32 %v4666, %v4858
        %v4973 = vadd.f32 %v4667, %v4861
        %v4974 = vadd.f32 %v4668, %v4866
        %v4975 = vadd.f32 %v4669, %v4869
        %v4976 = vadd.f32 %v4670, %v4874
        %v4977 = vadd.f32 %v4671, %v4877
        %v4978 = vadd.f32 %v4672, %v4882
        %v4979 = vadd.f32 %v4673, %v4885
        %v4980 = vadd.f32 %v4674, %v4890
        %v4981 = vadd.f32 %v4675, %v4893
        %v4982 = vadd.f32 %v4676, %v4898
        %v4983 = vadd.f32 %v4677, %v4901
        %v4984 = vadd.f32 %v4678, %v4906
        %v4985 = vadd.f32 %v4679, %v4909
        %v4986 = vadd.f32 %v4680, %v4914
        %v4987 = vadd.f32 %v4681, %v4917
        %v4988 = vadd.f32 %v4682, %v4922
        %v4989 = vadd.f32 %v4683, %v4925
        %v4990 = vadd.f32 %v4684, %v4930
        %v4991 = vadd.f32 %v4685, %v4933
        %v4992 = vadd.f32 %v4686, %v4938
        %v4993 = vadd.f32 %v4687, %v4941
        %v4994 = vadd.f32 %v4688, %v4946
        %v4995 = vadd.f32 %v4689, %v4949
        %v4996 = vadd.f32 %v4690, %v4954
        %v4997 = vadd.f32 %v4691, %v4957
        %v4998 = vadd.f32 %v4692, %v4962
        %v4999 = vadd.f32 %v4693, %v4965
        %v5000 = vld [vmem:[%s1357] sm:$0xff]
        %v5001 = vld [vmem:[%s1357 + $0x10] sm:$0xff]
        %v5002 = vld [vmem:[%s1357 + $0x20] sm:$0xff]
        %v5003 = vld [vmem:[%s1357 + $0x30] sm:$0xff]
        %v5004 = vld [vmem:[%s1357 + $0x40] sm:$0xff]
        %v5005 = vld [vmem:[%s1357 + $0x50] sm:$0xff]
        %v5006 = vld [vmem:[%s1357 + $0x60] sm:$0xff]
        %v5007 = vld [vmem:[%s1357 + $0x70] sm:$0xff]
        %v5008 = vld [vmem:[%s1357 + $0xa0] sm:$0xff]
        %v5009 = vld [vmem:[%s1357 + $0xb0] sm:$0xff]
        %v5010 = vld [vmem:[%s1357 + $0xc0] sm:$0xff]
        %v5011 = vld [vmem:[%s1357 + $0xd0] sm:$0xff]
        %v5012 = vld [vmem:[%s1357 + $0xe0] sm:$0xff]
        %v5013 = vld [vmem:[%s1357 + $0xf0] sm:$0xff]
        %v5014 = vld [vmem:[%s1357 + $0x100] sm:$0xff]
        %v5015 = vld [vmem:[%s1357 + $0x110] sm:$0xff]
        %v5016 = vld [vmem:[%s1357 + $0x140] sm:$0xff]
        %v5017 = vld [vmem:[%s1357 + $0x150] sm:$0xff]
        %v5018 = vld [vmem:[%s1357 + $0x160] sm:$0xff]
        %v5019 = vld [vmem:[%s1357 + $0x170] sm:$0xff]
        %v5020 = vld [vmem:[%s1357 + $0x180] sm:$0xff]
        %v5021 = vld [vmem:[%s1357 + $0x190] sm:$0xff]
        %v5022 = vld [vmem:[%s1357 + $0x1a0] sm:$0xff]
        %v5023 = vld [vmem:[%s1357 + $0x1b0] sm:$0xff]
        %v5024 = vld [vmem:[%s1357 + $0x1e0] sm:$0xff]
        %v5025 = vld [vmem:[%s1357 + $0x1f0] sm:$0xff]
        %v5026 = vld [vmem:[%s1357 + $0x200] sm:$0xff]
        %v5027 = vld [vmem:[%s1357 + $0x210] sm:$0xff]
        %v5028 = vld [vmem:[%s1357 + $0x220] sm:$0xff]
        %v5029 = vld [vmem:[%s1357 + $0x230] sm:$0xff]
        %v5030 = vld [vmem:[%s1357 + $0x240] sm:$0xff]
        %v5031 = vld [vmem:[%s1357 + $0x250] sm:$0xff]
        %v5032 = vpack.c.bf16 %v5001, %v5000
        %v5033 = vpack.c.bf16 %v5003, %v5002
        %v5034 = vpack.c.bf16 %v5005, %v5004
        %v5035 = vpack.c.bf16 %v5007, %v5006
        %v5036 = vpack.c.bf16 %v5009, %v5008
        %v5037 = vpack.c.bf16 %v5011, %v5010
        %v5038 = vpack.c.bf16 %v5013, %v5012
        %v5039 = vpack.c.bf16 %v5015, %v5014
        %v5040 = vpack.c.bf16 %v5017, %v5016
        %v5041 = vpack.c.bf16 %v5019, %v5018
        %v5042 = vpack.c.bf16 %v5021, %v5020
        %v5043 = vpack.c.bf16 %v5023, %v5022
        %v5044 = vpack.c.bf16 %v5025, %v5024
        %v5045 = vpack.c.bf16 %v5027, %v5026
        %v5046 = vpack.c.bf16 %v5029, %v5028
        %v5047 = vpack.c.bf16 %v5031, %v5030
        %s5048 = scalar_lea.vmem [#allocation7], 192
        %v5049 = vld [vmem:[%s5048] sm:$0xf]
        %v5050 = vld [vmem:[%s5048 + $0x4] sm:$0xf]
        %v5051 = vld [vmem:[%s5048 + $0x8] sm:$0xf]
        %v5052 = vld [vmem:[%s5048 + $0xc] sm:$0xf]
        %v5057 = vunpack.c.l.b16 %v5049
        %v5058 = vunpack.c.l.b16 %v5050
        %v5059 = vunpack.c.l.b16 %v5051
        %v5060 = vunpack.c.l.b16 %v5052
        %v5061 = vpack.c.b16 %v5058, %v5057
        %v5062 = vpack.c.b16 %v5060, %v5059
        %v5066 = vsel %vm757, %v5032, 0
        %v5069 = vsel %vm757, %v5033, 0
        %v5072 = vsel %vm757, %v5034, 0
        %v5075 = vsel %vm757, %v5035, 0
        %v5078 = vsel %vm757, %v5036, 0
        %v5081 = vsel %vm757, %v5037, 0
        %v5084 = vsel %vm757, %v5038, 0
        %v5087 = vsel %vm757, %v5039, 0
        %v5090 = vsel %vm757, %v5040, 0
        %v5093 = vsel %vm757, %v5041, 0
        %v5096 = vsel %vm757, %v5042, 0
        %v5099 = vsel %vm757, %v5043, 0
        %v5102 = vsel %vm757, %v5044, 0
        %v5105 = vsel %vm757, %v5045, 0
        %v5108 = vsel %vm757, %v5046, 0
        %v5111 = vsel %vm757, %v5047, 0
        %5113 = vmatprep.subr.bf16.mxu0 0
        %5114 = vmatpush1.bf16.msra.mxu0 0
        %5115 = vmatprep.subr.bf16.mxu0 0
        %5116 = vmatpush1.bf16.msra.mxu0 0
        %5117 = vmatprep.subr.bf16.mxu0 0
        %5118 = vmatpush1.bf16.msra.mxu0 0
        %5119 = vmatprep.subr.bf16.mxu0 0
        %5120 = vmatpush1.bf16.msra.mxu0 0
        %5121 = vmatprep.subr.bf16.mxu0 0
        %5122 = vmatpush1.bf16.msra.mxu0 0
        %5123 = vmatprep.subr.bf16.mxu0 0
        %5124 = vmatpush1.bf16.msra.mxu0 0
        %5125 = vmatprep.subr.bf16.mxu0 0
        %5126 = vmatpush1.bf16.msra.mxu0 %v5062
        %5127 = vmatprep.subr.bf16.mxu0 0
        %5128 = vmatpush1.bf16.msra.mxu0 %v5061
        %5129 = vmatprep.subr.bf16.mxu0 0
        %5130 = vmatpush2.bf16.msra.mxu0 0
        %5131 = vmatprep.subr.bf16.mxu0 0
        %5132 = vmatpush2.bf16.msra.mxu0 0
        %5133 = vmatprep.subr.bf16.mxu0 0
        %5134 = vmatpush2.bf16.msra.mxu0 0
        %5135 = vmatprep.subr.bf16.mxu0 0
        %5136 = vmatpush2.bf16.msra.mxu0 0
        %5137 = vmatprep.subr.bf16.mxu0 0
        %5138 = vmatpush2.bf16.msra.mxu0 0
        %5139 = vmatprep.subr.bf16.mxu0 0
        %5140 = vmatpush2.bf16.msra.mxu0 0
        %5141 = vmatprep.subr.bf16.mxu0 0
        %5142 = vmatpush2.bf16.msra.mxu0 0
        %5143 = vmatprep.subr.bf16.mxu0 0
        %5144 = vmatpush2.bf16.msra.mxu0 0
        %5145 = vmatprep.mubr.bf16.mxu0 0
        %5146 = vmatmul.mubr.bf16.gmra.mxu0 %v5066
        %v5147 = vpop.f32.mrf.mxu0
        %v5148 = vadd.f32 0.0, %v5147
        %v5149 = vpop.f32.mrf.mxu0
        %v5150 = vpop.f32.mrf.mxu0
        %v5151 = vadd.f32 0.0, %v5150
        %v5152 = vpop.f32.mrf.mxu0
        %5153 = vmatprep.mubr.bf16.mxu0 0
        %5154 = vmatmul.mubr.bf16.gmra.mxu0 %v5069
        %v5155 = vpop.f32.mrf.mxu0
        %v5156 = vadd.f32 0.0, %v5155
        %v5157 = vpop.f32.mrf.mxu0
        %v5158 = vpop.f32.mrf.mxu0
        %v5159 = vadd.f32 0.0, %v5158
        %v5160 = vpop.f32.mrf.mxu0
        %5161 = vmatprep.mubr.bf16.mxu0 0
        %5162 = vmatmul.mubr.bf16.gmra.mxu0 %v5072
        %v5163 = vpop.f32.mrf.mxu0
        %v5164 = vadd.f32 0.0, %v5163
        %v5165 = vpop.f32.mrf.mxu0
        %v5166 = vpop.f32.mrf.mxu0
        %v5167 = vadd.f32 0.0, %v5166
        %v5168 = vpop.f32.mrf.mxu0
        %5169 = vmatprep.mubr.bf16.mxu0 0
        %5170 = vmatmul.mubr.bf16.gmra.mxu0 %v5075
        %v5171 = vpop.f32.mrf.mxu0
        %v5172 = vadd.f32 0.0, %v5171
        %v5173 = vpop.f32.mrf.mxu0
        %v5174 = vpop.f32.mrf.mxu0
        %v5175 = vadd.f32 0.0, %v5174
        %v5176 = vpop.f32.mrf.mxu0
        %5177 = vmatprep.mubr.bf16.mxu0 0
        %5178 = vmatmul.mubr.bf16.gmra.mxu0 %v5078
        %v5179 = vpop.f32.mrf.mxu0
        %v5180 = vadd.f32 0.0, %v5179
        %v5181 = vpop.f32.mrf.mxu0
        %v5182 = vpop.f32.mrf.mxu0
        %v5183 = vadd.f32 0.0, %v5182
        %v5184 = vpop.f32.mrf.mxu0
        %5185 = vmatprep.mubr.bf16.mxu0 0
        %5186 = vmatmul.mubr.bf16.gmra.mxu0 %v5081
        %v5187 = vpop.f32.mrf.mxu0
        %v5188 = vadd.f32 0.0, %v5187
        %v5189 = vpop.f32.mrf.mxu0
        %v5190 = vpop.f32.mrf.mxu0
        %v5191 = vadd.f32 0.0, %v5190
        %v5192 = vpop.f32.mrf.mxu0
        %5193 = vmatprep.mubr.bf16.mxu0 0
        %5194 = vmatmul.mubr.bf16.gmra.mxu0 %v5084
        %v5195 = vpop.f32.mrf.mxu0
        %v5196 = vadd.f32 0.0, %v5195
        %v5197 = vpop.f32.mrf.mxu0
        %v5198 = vpop.f32.mrf.mxu0
        %v5199 = vadd.f32 0.0, %v5198
        %v5200 = vpop.f32.mrf.mxu0
        %5201 = vmatprep.mubr.bf16.mxu0 0
        %5202 = vmatmul.mubr.bf16.gmra.mxu0 %v5087
        %v5203 = vpop.f32.mrf.mxu0
        %v5204 = vadd.f32 0.0, %v5203
        %v5205 = vpop.f32.mrf.mxu0
        %v5206 = vpop.f32.mrf.mxu0
        %v5207 = vadd.f32 0.0, %v5206
        %v5208 = vpop.f32.mrf.mxu0
        %5209 = vmatprep.mubr.bf16.mxu0 0
        %5210 = vmatmul.mubr.bf16.gmra.mxu0 %v5090
        %v5211 = vpop.f32.mrf.mxu0
        %v5212 = vadd.f32 0.0, %v5211
        %v5213 = vpop.f32.mrf.mxu0
        %v5214 = vpop.f32.mrf.mxu0
        %v5215 = vadd.f32 0.0, %v5214
        %v5216 = vpop.f32.mrf.mxu0
        %5217 = vmatprep.mubr.bf16.mxu0 0
        %5218 = vmatmul.mubr.bf16.gmra.mxu0 %v5093
        %v5219 = vpop.f32.mrf.mxu0
        %v5220 = vadd.f32 0.0, %v5219
        %v5221 = vpop.f32.mrf.mxu0
        %v5222 = vpop.f32.mrf.mxu0
        %v5223 = vadd.f32 0.0, %v5222
        %v5224 = vpop.f32.mrf.mxu0
        %5225 = vmatprep.mubr.bf16.mxu0 0
        %5226 = vmatmul.mubr.bf16.gmra.mxu0 %v5096
        %v5227 = vpop.f32.mrf.mxu0
        %v5228 = vadd.f32 0.0, %v5227
        %v5229 = vpop.f32.mrf.mxu0
        %v5230 = vpop.f32.mrf.mxu0
        %v5231 = vadd.f32 0.0, %v5230
        %v5232 = vpop.f32.mrf.mxu0
        %5233 = vmatprep.mubr.bf16.mxu0 0
        %5234 = vmatmul.mubr.bf16.gmra.mxu0 %v5099
        %v5235 = vpop.f32.mrf.mxu0
        %v5236 = vadd.f32 0.0, %v5235
        %v5237 = vpop.f32.mrf.mxu0
        %v5238 = vpop.f32.mrf.mxu0
        %v5239 = vadd.f32 0.0, %v5238
        %v5240 = vpop.f32.mrf.mxu0
        %5241 = vmatprep.mubr.bf16.mxu0 0
        %5242 = vmatmul.mubr.bf16.gmra.mxu0 %v5102
        %v5243 = vpop.f32.mrf.mxu0
        %v5244 = vadd.f32 0.0, %v5243
        %v5245 = vpop.f32.mrf.mxu0
        %v5246 = vpop.f32.mrf.mxu0
        %v5247 = vadd.f32 0.0, %v5246
        %v5248 = vpop.f32.mrf.mxu0
        %5249 = vmatprep.mubr.bf16.mxu0 0
        %5250 = vmatmul.mubr.bf16.gmra.mxu0 %v5105
        %v5251 = vpop.f32.mrf.mxu0
        %v5252 = vadd.f32 0.0, %v5251
        %v5253 = vpop.f32.mrf.mxu0
        %v5254 = vpop.f32.mrf.mxu0
        %v5255 = vadd.f32 0.0, %v5254
        %v5256 = vpop.f32.mrf.mxu0
        %5257 = vmatprep.mubr.bf16.mxu0 0
        %5258 = vmatmul.mubr.bf16.gmra.mxu0 %v5108
        %v5259 = vpop.f32.mrf.mxu0
        %v5260 = vadd.f32 0.0, %v5259
        %v5261 = vpop.f32.mrf.mxu0
        %v5262 = vpop.f32.mrf.mxu0
        %v5263 = vadd.f32 0.0, %v5262
        %v5264 = vpop.f32.mrf.mxu0
        %5265 = vmatprep.mubr.bf16.mxu0 0
        %5266 = vmatmul.mubr.bf16.gmra.mxu0 %v5111
        %v5267 = vpop.f32.mrf.mxu0
        %v5268 = vadd.f32 0.0, %v5267
        %v5269 = vpop.f32.mrf.mxu0
        %v5270 = vpop.f32.mrf.mxu0
        %v5271 = vadd.f32 0.0, %v5270
        %v5272 = vpop.f32.mrf.mxu0
        %5273 = vdwg.mxu0
        %v5274 = vadd.f32 %v4968, %v5148
        %v5275 = vadd.f32 %v4969, %v5151
        %v5276 = vadd.f32 %v4970, %v5156
        %v5277 = vadd.f32 %v4971, %v5159
        %v5278 = vadd.f32 %v4972, %v5164
        %v5279 = vadd.f32 %v4973, %v5167
        %v5280 = vadd.f32 %v4974, %v5172
        %v5281 = vadd.f32 %v4975, %v5175
        %v5282 = vadd.f32 %v4976, %v5180
        %v5283 = vadd.f32 %v4977, %v5183
        %v5284 = vadd.f32 %v4978, %v5188
        %v5285 = vadd.f32 %v4979, %v5191
        %v5286 = vadd.f32 %v4980, %v5196
        %v5287 = vadd.f32 %v4981, %v5199
        %v5288 = vadd.f32 %v4982, %v5204
        %v5289 = vadd.f32 %v4983, %v5207
        %v5290 = vadd.f32 %v4984, %v5212
        %v5291 = vadd.f32 %v4985, %v5215
        %v5292 = vadd.f32 %v4986, %v5220
        %v5293 = vadd.f32 %v4987, %v5223
        %v5294 = vadd.f32 %v4988, %v5228
        %v5295 = vadd.f32 %v4989, %v5231
        %v5296 = vadd.f32 %v4990, %v5236
        %v5297 = vadd.f32 %v4991, %v5239
        %v5298 = vadd.f32 %v4992, %v5244
        %v5299 = vadd.f32 %v4993, %v5247
        %v5300 = vadd.f32 %v4994, %v5252
        %v5301 = vadd.f32 %v4995, %v5255
        %v5302 = vadd.f32 %v4996, %v5260
        %v5303 = vadd.f32 %v4997, %v5263
        %v5304 = vadd.f32 %v4998, %v5268
        %v5305 = vadd.f32 %v4999, %v5271
        %v5306 = vld [vmem:[%s1357 + $0x1] sm:$0xff]
        %v5307 = vld [vmem:[%s1357 + $0x11] sm:$0xff]
        %v5308 = vld [vmem:[%s1357 + $0x21] sm:$0xff]
        %v5309 = vld [vmem:[%s1357 + $0x31] sm:$0xff]
        %v5310 = vld [vmem:[%s1357 + $0x41] sm:$0xff]
        %v5311 = vld [vmem:[%s1357 + $0x51] sm:$0xff]
        %v5312 = vld [vmem:[%s1357 + $0x61] sm:$0xff]
        %v5313 = vld [vmem:[%s1357 + $0x71] sm:$0xff]
        %v5314 = vld [vmem:[%s1357 + $0xa1] sm:$0xff]
        %v5315 = vld [vmem:[%s1357 + $0xb1] sm:$0xff]
        %v5316 = vld [vmem:[%s1357 + $0xc1] sm:$0xff]
        %v5317 = vld [vmem:[%s1357 + $0xd1] sm:$0xff]
        %v5318 = vld [vmem:[%s1357 + $0xe1] sm:$0xff]
        %v5319 = vld [vmem:[%s1357 + $0xf1] sm:$0xff]
        %v5320 = vld [vmem:[%s1357 + $0x101] sm:$0xff]
        %v5321 = vld [vmem:[%s1357 + $0x111] sm:$0xff]
        %v5322 = vld [vmem:[%s1357 + $0x141] sm:$0xff]
        %v5323 = vld [vmem:[%s1357 + $0x151] sm:$0xff]
        %v5324 = vld [vmem:[%s1357 + $0x161] sm:$0xff]
        %v5325 = vld [vmem:[%s1357 + $0x171] sm:$0xff]
        %v5326 = vld [vmem:[%s1357 + $0x181] sm:$0xff]
        %v5327 = vld [vmem:[%s1357 + $0x191] sm:$0xff]
        %v5328 = vld [vmem:[%s1357 + $0x1a1] sm:$0xff]
        %v5329 = vld [vmem:[%s1357 + $0x1b1] sm:$0xff]
        %v5330 = vld [vmem:[%s1357 + $0x1e1] sm:$0xff]
        %v5331 = vld [vmem:[%s1357 + $0x1f1] sm:$0xff]
        %v5332 = vld [vmem:[%s1357 + $0x201] sm:$0xff]
        %v5333 = vld [vmem:[%s1357 + $0x211] sm:$0xff]
        %v5334 = vld [vmem:[%s1357 + $0x221] sm:$0xff]
        %v5335 = vld [vmem:[%s1357 + $0x231] sm:$0xff]
        %v5336 = vld [vmem:[%s1357 + $0x241] sm:$0xff]
        %v5337 = vld [vmem:[%s1357 + $0x251] sm:$0xff]
        %v5338 = vpack.c.bf16 %v5307, %v5306
        %v5339 = vpack.c.bf16 %v5309, %v5308
        %v5340 = vpack.c.bf16 %v5311, %v5310
        %v5341 = vpack.c.bf16 %v5313, %v5312
        %v5342 = vpack.c.bf16 %v5315, %v5314
        %v5343 = vpack.c.bf16 %v5317, %v5316
        %v5344 = vpack.c.bf16 %v5319, %v5318
        %v5345 = vpack.c.bf16 %v5321, %v5320
        %v5346 = vpack.c.bf16 %v5323, %v5322
        %v5347 = vpack.c.bf16 %v5325, %v5324
        %v5348 = vpack.c.bf16 %v5327, %v5326
        %v5349 = vpack.c.bf16 %v5329, %v5328
        %v5350 = vpack.c.bf16 %v5331, %v5330
        %v5351 = vpack.c.bf16 %v5333, %v5332
        %v5352 = vpack.c.bf16 %v5335, %v5334
        %v5353 = vpack.c.bf16 %v5337, %v5336
        %s5354 = scalar_lea.vmem [#allocation7], 208
        %v5355 = vld [vmem:[%s5354] sm:$0xf]
        %v5356 = vld [vmem:[%s5354 + $0x4] sm:$0xf]
        %v5357 = vld [vmem:[%s5354 + $0x8] sm:$0xf]
        %v5358 = vld [vmem:[%s5354 + $0xc] sm:$0xf]
        %v5363 = vunpack.c.l.b16 %v5355
        %v5364 = vunpack.c.l.b16 %v5356
        %v5365 = vunpack.c.l.b16 %v5357
        %v5366 = vunpack.c.l.b16 %v5358
        %v5367 = vpack.c.b16 %v5364, %v5363
        %v5368 = vpack.c.b16 %v5366, %v5365
        %v5372 = vsel %vm757, %v5338, 0
        %v5375 = vsel %vm757, %v5339, 0
        %v5378 = vsel %vm757, %v5340, 0
        %v5381 = vsel %vm757, %v5341, 0
        %v5384 = vsel %vm757, %v5342, 0
        %v5387 = vsel %vm757, %v5343, 0
        %v5390 = vsel %vm757, %v5344, 0
        %v5393 = vsel %vm757, %v5345, 0
        %v5396 = vsel %vm757, %v5346, 0
        %v5399 = vsel %vm757, %v5347, 0
        %v5402 = vsel %vm757, %v5348, 0
        %v5405 = vsel %vm757, %v5349, 0
        %v5408 = vsel %vm757, %v5350, 0
        %v5411 = vsel %vm757, %v5351, 0
        %v5414 = vsel %vm757, %v5352, 0
        %v5417 = vsel %vm757, %v5353, 0
        %5419 = vmatprep.subr.bf16.mxu0 0
        %5420 = vmatpush1.bf16.msra.mxu0 0
        %5421 = vmatprep.subr.bf16.mxu0 0
        %5422 = vmatpush1.bf16.msra.mxu0 0
        %5423 = vmatprep.subr.bf16.mxu0 0
        %5424 = vmatpush1.bf16.msra.mxu0 0
        %5425 = vmatprep.subr.bf16.mxu0 0
        %5426 = vmatpush1.bf16.msra.mxu0 0
        %5427 = vmatprep.subr.bf16.mxu0 0
        %5428 = vmatpush1.bf16.msra.mxu0 0
        %5429 = vmatprep.subr.bf16.mxu0 0
        %5430 = vmatpush1.bf16.msra.mxu0 0
        %5431 = vmatprep.subr.bf16.mxu0 0
        %5432 = vmatpush1.bf16.msra.mxu0 %v5368
        %5433 = vmatprep.subr.bf16.mxu0 0
        %5434 = vmatpush1.bf16.msra.mxu0 %v5367
        %5435 = vmatprep.subr.bf16.mxu0 0
        %5436 = vmatpush2.bf16.msra.mxu0 0
        %5437 = vmatprep.subr.bf16.mxu0 0
        %5438 = vmatpush2.bf16.msra.mxu0 0
        %5439 = vmatprep.subr.bf16.mxu0 0
        %5440 = vmatpush2.bf16.msra.mxu0 0
        %5441 = vmatprep.subr.bf16.mxu0 0
        %5442 = vmatpush2.bf16.msra.mxu0 0
        %5443 = vmatprep.subr.bf16.mxu0 0
        %5444 = vmatpush2.bf16.msra.mxu0 0
        %5445 = vmatprep.subr.bf16.mxu0 0
        %5446 = vmatpush2.bf16.msra.mxu0 0
        %5447 = vmatprep.subr.bf16.mxu0 0
        %5448 = vmatpush2.bf16.msra.mxu0 0
        %5449 = vmatprep.subr.bf16.mxu0 0
        %5450 = vmatpush2.bf16.msra.mxu0 0
        %5451 = vmatprep.mubr.bf16.mxu0 0
        %5452 = vmatmul.mubr.bf16.gmra.mxu0 %v5372
        %v5453 = vpop.f32.mrf.mxu0
        %v5454 = vadd.f32 0.0, %v5453
        %v5455 = vpop.f32.mrf.mxu0
        %v5456 = vpop.f32.mrf.mxu0
        %v5457 = vadd.f32 0.0, %v5456
        %v5458 = vpop.f32.mrf.mxu0
        %5459 = vmatprep.mubr.bf16.mxu0 0
        %5460 = vmatmul.mubr.bf16.gmra.mxu0 %v5375
        %v5461 = vpop.f32.mrf.mxu0
        %v5462 = vadd.f32 0.0, %v5461
        %v5463 = vpop.f32.mrf.mxu0
        %v5464 = vpop.f32.mrf.mxu0
        %v5465 = vadd.f32 0.0, %v5464
        %v5466 = vpop.f32.mrf.mxu0
        %5467 = vmatprep.mubr.bf16.mxu0 0
        %5468 = vmatmul.mubr.bf16.gmra.mxu0 %v5378
        %v5469 = vpop.f32.mrf.mxu0
        %v5470 = vadd.f32 0.0, %v5469
        %v5471 = vpop.f32.mrf.mxu0
        %v5472 = vpop.f32.mrf.mxu0
        %v5473 = vadd.f32 0.0, %v5472
        %v5474 = vpop.f32.mrf.mxu0
        %5475 = vmatprep.mubr.bf16.mxu0 0
        %5476 = vmatmul.mubr.bf16.gmra.mxu0 %v5381
        %v5477 = vpop.f32.mrf.mxu0
        %v5478 = vadd.f32 0.0, %v5477
        %v5479 = vpop.f32.mrf.mxu0
        %v5480 = vpop.f32.mrf.mxu0
        %v5481 = vadd.f32 0.0, %v5480
        %v5482 = vpop.f32.mrf.mxu0
        %5483 = vmatprep.mubr.bf16.mxu0 0
        %5484 = vmatmul.mubr.bf16.gmra.mxu0 %v5384
        %v5485 = vpop.f32.mrf.mxu0
        %v5486 = vadd.f32 0.0, %v5485
        %v5487 = vpop.f32.mrf.mxu0
        %v5488 = vpop.f32.mrf.mxu0
        %v5489 = vadd.f32 0.0, %v5488
        %v5490 = vpop.f32.mrf.mxu0
        %5491 = vmatprep.mubr.bf16.mxu0 0
        %5492 = vmatmul.mubr.bf16.gmra.mxu0 %v5387
        %v5493 = vpop.f32.mrf.mxu0
        %v5494 = vadd.f32 0.0, %v5493
        %v5495 = vpop.f32.mrf.mxu0
        %v5496 = vpop.f32.mrf.mxu0
        %v5497 = vadd.f32 0.0, %v5496
        %v5498 = vpop.f32.mrf.mxu0
        %5499 = vmatprep.mubr.bf16.mxu0 0
        %5500 = vmatmul.mubr.bf16.gmra.mxu0 %v5390
        %v5501 = vpop.f32.mrf.mxu0
        %v5502 = vadd.f32 0.0, %v5501
        %v5503 = vpop.f32.mrf.mxu0
        %v5504 = vpop.f32.mrf.mxu0
        %v5505 = vadd.f32 0.0, %v5504
        %v5506 = vpop.f32.mrf.mxu0
        %5507 = vmatprep.mubr.bf16.mxu0 0
        %5508 = vmatmul.mubr.bf16.gmra.mxu0 %v5393
        %v5509 = vpop.f32.mrf.mxu0
        %v5510 = vadd.f32 0.0, %v5509
        %v5511 = vpop.f32.mrf.mxu0
        %v5512 = vpop.f32.mrf.mxu0
        %v5513 = vadd.f32 0.0, %v5512
        %v5514 = vpop.f32.mrf.mxu0
        %5515 = vmatprep.mubr.bf16.mxu0 0
        %5516 = vmatmul.mubr.bf16.gmra.mxu0 %v5396
        %v5517 = vpop.f32.mrf.mxu0
        %v5518 = vadd.f32 0.0, %v5517
        %v5519 = vpop.f32.mrf.mxu0
        %v5520 = vpop.f32.mrf.mxu0
        %v5521 = vadd.f32 0.0, %v5520
        %v5522 = vpop.f32.mrf.mxu0
        %5523 = vmatprep.mubr.bf16.mxu0 0
        %5524 = vmatmul.mubr.bf16.gmra.mxu0 %v5399
        %v5525 = vpop.f32.mrf.mxu0
        %v5526 = vadd.f32 0.0, %v5525
        %v5527 = vpop.f32.mrf.mxu0
        %v5528 = vpop.f32.mrf.mxu0
        %v5529 = vadd.f32 0.0, %v5528
        %v5530 = vpop.f32.mrf.mxu0
        %5531 = vmatprep.mubr.bf16.mxu0 0
        %5532 = vmatmul.mubr.bf16.gmra.mxu0 %v5402
        %v5533 = vpop.f32.mrf.mxu0
        %v5534 = vadd.f32 0.0, %v5533
        %v5535 = vpop.f32.mrf.mxu0
        %v5536 = vpop.f32.mrf.mxu0
        %v5537 = vadd.f32 0.0, %v5536
        %v5538 = vpop.f32.mrf.mxu0
        %5539 = vmatprep.mubr.bf16.mxu0 0
        %5540 = vmatmul.mubr.bf16.gmra.mxu0 %v5405
        %v5541 = vpop.f32.mrf.mxu0
        %v5542 = vadd.f32 0.0, %v5541
        %v5543 = vpop.f32.mrf.mxu0
        %v5544 = vpop.f32.mrf.mxu0
        %v5545 = vadd.f32 0.0, %v5544
        %v5546 = vpop.f32.mrf.mxu0
        %5547 = vmatprep.mubr.bf16.mxu0 0
        %5548 = vmatmul.mubr.bf16.gmra.mxu0 %v5408
        %v5549 = vpop.f32.mrf.mxu0
        %v5550 = vadd.f32 0.0, %v5549
        %v5551 = vpop.f32.mrf.mxu0
        %v5552 = vpop.f32.mrf.mxu0
        %v5553 = vadd.f32 0.0, %v5552
        %v5554 = vpop.f32.mrf.mxu0
        %5555 = vmatprep.mubr.bf16.mxu0 0
        %5556 = vmatmul.mubr.bf16.gmra.mxu0 %v5411
        %v5557 = vpop.f32.mrf.mxu0
        %v5558 = vadd.f32 0.0, %v5557
        %v5559 = vpop.f32.mrf.mxu0
        %v5560 = vpop.f32.mrf.mxu0
        %v5561 = vadd.f32 0.0, %v5560
        %v5562 = vpop.f32.mrf.mxu0
        %5563 = vmatprep.mubr.bf16.mxu0 0
        %5564 = vmatmul.mubr.bf16.gmra.mxu0 %v5414
        %v5565 = vpop.f32.mrf.mxu0
        %v5566 = vadd.f32 0.0, %v5565
        %v5567 = vpop.f32.mrf.mxu0
        %v5568 = vpop.f32.mrf.mxu0
        %v5569 = vadd.f32 0.0, %v5568
        %v5570 = vpop.f32.mrf.mxu0
        %5571 = vmatprep.mubr.bf16.mxu0 0
        %5572 = vmatmul.mubr.bf16.gmra.mxu0 %v5417
        %v5573 = vpop.f32.mrf.mxu0
        %v5574 = vadd.f32 0.0, %v5573
        %v5575 = vpop.f32.mrf.mxu0
        %v5576 = vpop.f32.mrf.mxu0
        %v5577 = vadd.f32 0.0, %v5576
        %v5578 = vpop.f32.mrf.mxu0
        %5579 = vdwg.mxu0
        %v5580 = vadd.f32 %v5274, %v5454
        %v5581 = vadd.f32 %v5275, %v5457
        %v5582 = vadd.f32 %v5276, %v5462
        %v5583 = vadd.f32 %v5277, %v5465
        %v5584 = vadd.f32 %v5278, %v5470
        %v5585 = vadd.f32 %v5279, %v5473
        %v5586 = vadd.f32 %v5280, %v5478
        %v5587 = vadd.f32 %v5281, %v5481
        %v5588 = vadd.f32 %v5282, %v5486
        %v5589 = vadd.f32 %v5283, %v5489
        %v5590 = vadd.f32 %v5284, %v5494
        %v5591 = vadd.f32 %v5285, %v5497
        %v5592 = vadd.f32 %v5286, %v5502
        %v5593 = vadd.f32 %v5287, %v5505
        %v5594 = vadd.f32 %v5288, %v5510
        %v5595 = vadd.f32 %v5289, %v5513
        %v5596 = vadd.f32 %v5290, %v5518
        %v5597 = vadd.f32 %v5291, %v5521
        %v5598 = vadd.f32 %v5292, %v5526
        %v5599 = vadd.f32 %v5293, %v5529
        %v5600 = vadd.f32 %v5294, %v5534
        %v5601 = vadd.f32 %v5295, %v5537
        %v5602 = vadd.f32 %v5296, %v5542
        %v5603 = vadd.f32 %v5297, %v5545
        %v5604 = vadd.f32 %v5298, %v5550
        %v5605 = vadd.f32 %v5299, %v5553
        %v5606 = vadd.f32 %v5300, %v5558
        %v5607 = vadd.f32 %v5301, %v5561
        %v5608 = vadd.f32 %v5302, %v5566
        %v5609 = vadd.f32 %v5303, %v5569
        %v5610 = vadd.f32 %v5304, %v5574
        %v5611 = vadd.f32 %v5305, %v5577
        %v5612 = vld [vmem:[%s1357 + $0x2] sm:$0xff]
        %v5613 = vld [vmem:[%s1357 + $0x12] sm:$0xff]
        %v5614 = vld [vmem:[%s1357 + $0x22] sm:$0xff]
        %v5615 = vld [vmem:[%s1357 + $0x32] sm:$0xff]
        %v5616 = vld [vmem:[%s1357 + $0x42] sm:$0xff]
        %v5617 = vld [vmem:[%s1357 + $0x52] sm:$0xff]
        %v5618 = vld [vmem:[%s1357 + $0x62] sm:$0xff]
        %v5619 = vld [vmem:[%s1357 + $0x72] sm:$0xff]
        %v5620 = vld [vmem:[%s1357 + $0xa2] sm:$0xff]
        %v5621 = vld [vmem:[%s1357 + $0xb2] sm:$0xff]
        %v5622 = vld [vmem:[%s1357 + $0xc2] sm:$0xff]
        %v5623 = vld [vmem:[%s1357 + $0xd2] sm:$0xff]
        %v5624 = vld [vmem:[%s1357 + $0xe2] sm:$0xff]
        %v5625 = vld [vmem:[%s1357 + $0xf2] sm:$0xff]
        %v5626 = vld [vmem:[%s1357 + $0x102] sm:$0xff]
        %v5627 = vld [vmem:[%s1357 + $0x112] sm:$0xff]
        %v5628 = vld [vmem:[%s1357 + $0x142] sm:$0xff]
        %v5629 = vld [vmem:[%s1357 + $0x152] sm:$0xff]
        %v5630 = vld [vmem:[%s1357 + $0x162] sm:$0xff]
        %v5631 = vld [vmem:[%s1357 + $0x172] sm:$0xff]
        %v5632 = vld [vmem:[%s1357 + $0x182] sm:$0xff]
        %v5633 = vld [vmem:[%s1357 + $0x192] sm:$0xff]
        %v5634 = vld [vmem:[%s1357 + $0x1a2] sm:$0xff]
        %v5635 = vld [vmem:[%s1357 + $0x1b2] sm:$0xff]
        %v5636 = vld [vmem:[%s1357 + $0x1e2] sm:$0xff]
        %v5637 = vld [vmem:[%s1357 + $0x1f2] sm:$0xff]
        %v5638 = vld [vmem:[%s1357 + $0x202] sm:$0xff]
        %v5639 = vld [vmem:[%s1357 + $0x212] sm:$0xff]
        %v5640 = vld [vmem:[%s1357 + $0x222] sm:$0xff]
        %v5641 = vld [vmem:[%s1357 + $0x232] sm:$0xff]
        %v5642 = vld [vmem:[%s1357 + $0x242] sm:$0xff]
        %v5643 = vld [vmem:[%s1357 + $0x252] sm:$0xff]
        %v5644 = vpack.c.bf16 %v5613, %v5612
        %v5645 = vpack.c.bf16 %v5615, %v5614
        %v5646 = vpack.c.bf16 %v5617, %v5616
        %v5647 = vpack.c.bf16 %v5619, %v5618
        %v5648 = vpack.c.bf16 %v5621, %v5620
        %v5649 = vpack.c.bf16 %v5623, %v5622
        %v5650 = vpack.c.bf16 %v5625, %v5624
        %v5651 = vpack.c.bf16 %v5627, %v5626
        %v5652 = vpack.c.bf16 %v5629, %v5628
        %v5653 = vpack.c.bf16 %v5631, %v5630
        %v5654 = vpack.c.bf16 %v5633, %v5632
        %v5655 = vpack.c.bf16 %v5635, %v5634
        %v5656 = vpack.c.bf16 %v5637, %v5636
        %v5657 = vpack.c.bf16 %v5639, %v5638
        %v5658 = vpack.c.bf16 %v5641, %v5640
        %v5659 = vpack.c.bf16 %v5643, %v5642
        %s5660 = scalar_lea.vmem [#allocation7], 224
        %v5661 = vld [vmem:[%s5660] sm:$0xf]
        %v5662 = vld [vmem:[%s5660 + $0x4] sm:$0xf]
        %v5663 = vld [vmem:[%s5660 + $0x8] sm:$0xf]
        %v5664 = vld [vmem:[%s5660 + $0xc] sm:$0xf]
        %v5669 = vunpack.c.l.b16 %v5661
        %v5670 = vunpack.c.l.b16 %v5662
        %v5671 = vunpack.c.l.b16 %v5663
        %v5672 = vunpack.c.l.b16 %v5664
        %v5673 = vpack.c.b16 %v5670, %v5669
        %v5674 = vpack.c.b16 %v5672, %v5671
        %v5678 = vsel %vm757, %v5644, 0
        %v5681 = vsel %vm757, %v5645, 0
        %v5684 = vsel %vm757, %v5646, 0
        %v5687 = vsel %vm757, %v5647, 0
        %v5690 = vsel %vm757, %v5648, 0
        %v5693 = vsel %vm757, %v5649, 0
        %v5696 = vsel %vm757, %v5650, 0
        %v5699 = vsel %vm757, %v5651, 0
        %v5702 = vsel %vm757, %v5652, 0
        %v5705 = vsel %vm757, %v5653, 0
        %v5708 = vsel %vm757, %v5654, 0
        %v5711 = vsel %vm757, %v5655, 0
        %v5714 = vsel %vm757, %v5656, 0
        %v5717 = vsel %vm757, %v5657, 0
        %v5720 = vsel %vm757, %v5658, 0
        %v5723 = vsel %vm757, %v5659, 0
        %5725 = vmatprep.subr.bf16.mxu0 0
        %5726 = vmatpush1.bf16.msra.mxu0 0
        %5727 = vmatprep.subr.bf16.mxu0 0
        %5728 = vmatpush1.bf16.msra.mxu0 0
        %5729 = vmatprep.subr.bf16.mxu0 0
        %5730 = vmatpush1.bf16.msra.mxu0 0
        %5731 = vmatprep.subr.bf16.mxu0 0
        %5732 = vmatpush1.bf16.msra.mxu0 0
        %5733 = vmatprep.subr.bf16.mxu0 0
        %5734 = vmatpush1.bf16.msra.mxu0 0
        %5735 = vmatprep.subr.bf16.mxu0 0
        %5736 = vmatpush1.bf16.msra.mxu0 0
        %5737 = vmatprep.subr.bf16.mxu0 0
        %5738 = vmatpush1.bf16.msra.mxu0 %v5674
        %5739 = vmatprep.subr.bf16.mxu0 0
        %5740 = vmatpush1.bf16.msra.mxu0 %v5673
        %5741 = vmatprep.subr.bf16.mxu0 0
        %5742 = vmatpush2.bf16.msra.mxu0 0
        %5743 = vmatprep.subr.bf16.mxu0 0
        %5744 = vmatpush2.bf16.msra.mxu0 0
        %5745 = vmatprep.subr.bf16.mxu0 0
        %5746 = vmatpush2.bf16.msra.mxu0 0
        %5747 = vmatprep.subr.bf16.mxu0 0
        %5748 = vmatpush2.bf16.msra.mxu0 0
        %5749 = vmatprep.subr.bf16.mxu0 0
        %5750 = vmatpush2.bf16.msra.mxu0 0
        %5751 = vmatprep.subr.bf16.mxu0 0
        %5752 = vmatpush2.bf16.msra.mxu0 0
        %5753 = vmatprep.subr.bf16.mxu0 0
        %5754 = vmatpush2.bf16.msra.mxu0 0
        %5755 = vmatprep.subr.bf16.mxu0 0
        %5756 = vmatpush2.bf16.msra.mxu0 0
        %5757 = vmatprep.mubr.bf16.mxu0 0
        %5758 = vmatmul.mubr.bf16.gmra.mxu0 %v5678
        %v5759 = vpop.f32.mrf.mxu0
        %v5760 = vadd.f32 0.0, %v5759
        %v5761 = vpop.f32.mrf.mxu0
        %v5762 = vpop.f32.mrf.mxu0
        %v5763 = vadd.f32 0.0, %v5762
        %v5764 = vpop.f32.mrf.mxu0
        %5765 = vmatprep.mubr.bf16.mxu0 0
        %5766 = vmatmul.mubr.bf16.gmra.mxu0 %v5681
        %v5767 = vpop.f32.mrf.mxu0
        %v5768 = vadd.f32 0.0, %v5767
        %v5769 = vpop.f32.mrf.mxu0
        %v5770 = vpop.f32.mrf.mxu0
        %v5771 = vadd.f32 0.0, %v5770
        %v5772 = vpop.f32.mrf.mxu0
        %5773 = vmatprep.mubr.bf16.mxu0 0
        %5774 = vmatmul.mubr.bf16.gmra.mxu0 %v5684
        %v5775 = vpop.f32.mrf.mxu0
        %v5776 = vadd.f32 0.0, %v5775
        %v5777 = vpop.f32.mrf.mxu0
        %v5778 = vpop.f32.mrf.mxu0
        %v5779 = vadd.f32 0.0, %v5778
        %v5780 = vpop.f32.mrf.mxu0
        %5781 = vmatprep.mubr.bf16.mxu0 0
        %5782 = vmatmul.mubr.bf16.gmra.mxu0 %v5687
        %v5783 = vpop.f32.mrf.mxu0
        %v5784 = vadd.f32 0.0, %v5783
        %v5785 = vpop.f32.mrf.mxu0
        %v5786 = vpop.f32.mrf.mxu0
        %v5787 = vadd.f32 0.0, %v5786
        %v5788 = vpop.f32.mrf.mxu0
        %5789 = vmatprep.mubr.bf16.mxu0 0
        %5790 = vmatmul.mubr.bf16.gmra.mxu0 %v5690
        %v5791 = vpop.f32.mrf.mxu0
        %v5792 = vadd.f32 0.0, %v5791
        %v5793 = vpop.f32.mrf.mxu0
        %v5794 = vpop.f32.mrf.mxu0
        %v5795 = vadd.f32 0.0, %v5794
        %v5796 = vpop.f32.mrf.mxu0
        %5797 = vmatprep.mubr.bf16.mxu0 0
        %5798 = vmatmul.mubr.bf16.gmra.mxu0 %v5693
        %v5799 = vpop.f32.mrf.mxu0
        %v5800 = vadd.f32 0.0, %v5799
        %v5801 = vpop.f32.mrf.mxu0
        %v5802 = vpop.f32.mrf.mxu0
        %v5803 = vadd.f32 0.0, %v5802
        %v5804 = vpop.f32.mrf.mxu0
        %5805 = vmatprep.mubr.bf16.mxu0 0
        %5806 = vmatmul.mubr.bf16.gmra.mxu0 %v5696
        %v5807 = vpop.f32.mrf.mxu0
        %v5808 = vadd.f32 0.0, %v5807
        %v5809 = vpop.f32.mrf.mxu0
        %v5810 = vpop.f32.mrf.mxu0
        %v5811 = vadd.f32 0.0, %v5810
        %v5812 = vpop.f32.mrf.mxu0
        %5813 = vmatprep.mubr.bf16.mxu0 0
        %5814 = vmatmul.mubr.bf16.gmra.mxu0 %v5699
        %v5815 = vpop.f32.mrf.mxu0
        %v5816 = vadd.f32 0.0, %v5815
        %v5817 = vpop.f32.mrf.mxu0
        %v5818 = vpop.f32.mrf.mxu0
        %v5819 = vadd.f32 0.0, %v5818
        %v5820 = vpop.f32.mrf.mxu0
        %5821 = vmatprep.mubr.bf16.mxu0 0
        %5822 = vmatmul.mubr.bf16.gmra.mxu0 %v5702
        %v5823 = vpop.f32.mrf.mxu0
        %v5824 = vadd.f32 0.0, %v5823
        %v5825 = vpop.f32.mrf.mxu0
        %v5826 = vpop.f32.mrf.mxu0
        %v5827 = vadd.f32 0.0, %v5826
        %v5828 = vpop.f32.mrf.mxu0
        %5829 = vmatprep.mubr.bf16.mxu0 0
        %5830 = vmatmul.mubr.bf16.gmra.mxu0 %v5705
        %v5831 = vpop.f32.mrf.mxu0
        %v5832 = vadd.f32 0.0, %v5831
        %v5833 = vpop.f32.mrf.mxu0
        %v5834 = vpop.f32.mrf.mxu0
        %v5835 = vadd.f32 0.0, %v5834
        %v5836 = vpop.f32.mrf.mxu0
        %5837 = vmatprep.mubr.bf16.mxu0 0
        %5838 = vmatmul.mubr.bf16.gmra.mxu0 %v5708
        %v5839 = vpop.f32.mrf.mxu0
        %v5840 = vadd.f32 0.0, %v5839
        %v5841 = vpop.f32.mrf.mxu0
        %v5842 = vpop.f32.mrf.mxu0
        %v5843 = vadd.f32 0.0, %v5842
        %v5844 = vpop.f32.mrf.mxu0
        %5845 = vmatprep.mubr.bf16.mxu0 0
        %5846 = vmatmul.mubr.bf16.gmra.mxu0 %v5711
        %v5847 = vpop.f32.mrf.mxu0
        %v5848 = vadd.f32 0.0, %v5847
        %v5849 = vpop.f32.mrf.mxu0
        %v5850 = vpop.f32.mrf.mxu0
        %v5851 = vadd.f32 0.0, %v5850
        %v5852 = vpop.f32.mrf.mxu0
        %5853 = vmatprep.mubr.bf16.mxu0 0
        %5854 = vmatmul.mubr.bf16.gmra.mxu0 %v5714
        %v5855 = vpop.f32.mrf.mxu0
        %v5856 = vadd.f32 0.0, %v5855
        %v5857 = vpop.f32.mrf.mxu0
        %v5858 = vpop.f32.mrf.mxu0
        %v5859 = vadd.f32 0.0, %v5858
        %v5860 = vpop.f32.mrf.mxu0
        %5861 = vmatprep.mubr.bf16.mxu0 0
        %5862 = vmatmul.mubr.bf16.gmra.mxu0 %v5717
        %v5863 = vpop.f32.mrf.mxu0
        %v5864 = vadd.f32 0.0, %v5863
        %v5865 = vpop.f32.mrf.mxu0
        %v5866 = vpop.f32.mrf.mxu0
        %v5867 = vadd.f32 0.0, %v5866
        %v5868 = vpop.f32.mrf.mxu0
        %5869 = vmatprep.mubr.bf16.mxu0 0
        %5870 = vmatmul.mubr.bf16.gmra.mxu0 %v5720
        %v5871 = vpop.f32.mrf.mxu0
        %v5872 = vadd.f32 0.0, %v5871
        %v5873 = vpop.f32.mrf.mxu0
        %v5874 = vpop.f32.mrf.mxu0
        %v5875 = vadd.f32 0.0, %v5874
        %v5876 = vpop.f32.mrf.mxu0
        %5877 = vmatprep.mubr.bf16.mxu0 0
        %5878 = vmatmul.mubr.bf16.gmra.mxu0 %v5723
        %v5879 = vpop.f32.mrf.mxu0
        %v5880 = vadd.f32 0.0, %v5879
        %v5881 = vpop.f32.mrf.mxu0
        %v5882 = vpop.f32.mrf.mxu0
        %v5883 = vadd.f32 0.0, %v5882
        %v5884 = vpop.f32.mrf.mxu0
        %5885 = vdwg.mxu0
        %v5886 = vadd.f32 %v5580, %v5760
        %v5887 = vadd.f32 %v5581, %v5763
        %v5888 = vadd.f32 %v5582, %v5768
        %v5889 = vadd.f32 %v5583, %v5771
        %v5890 = vadd.f32 %v5584, %v5776
        %v5891 = vadd.f32 %v5585, %v5779
        %v5892 = vadd.f32 %v5586, %v5784
        %v5893 = vadd.f32 %v5587, %v5787
        %v5894 = vadd.f32 %v5588, %v5792
        %v5895 = vadd.f32 %v5589, %v5795
        %v5896 = vadd.f32 %v5590, %v5800
        %v5897 = vadd.f32 %v5591, %v5803
        %v5898 = vadd.f32 %v5592, %v5808
        %v5899 = vadd.f32 %v5593, %v5811
        %v5900 = vadd.f32 %v5594, %v5816
        %v5901 = vadd.f32 %v5595, %v5819
        %v5902 = vadd.f32 %v5596, %v5824
        %v5903 = vadd.f32 %v5597, %v5827
        %v5904 = vadd.f32 %v5598, %v5832
        %v5905 = vadd.f32 %v5599, %v5835
        %v5906 = vadd.f32 %v5600, %v5840
        %v5907 = vadd.f32 %v5601, %v5843
        %v5908 = vadd.f32 %v5602, %v5848
        %v5909 = vadd.f32 %v5603, %v5851
        %v5910 = vadd.f32 %v5604, %v5856
        %v5911 = vadd.f32 %v5605, %v5859
        %v5912 = vadd.f32 %v5606, %v5864
        %v5913 = vadd.f32 %v5607, %v5867
        %v5914 = vadd.f32 %v5608, %v5872
        %v5915 = vadd.f32 %v5609, %v5875
        %v5916 = vadd.f32 %v5610, %v5880
        %v5917 = vadd.f32 %v5611, %v5883
        %s5918 = scalar_lea.vmem [#allocation2], 192
        %v5919 = vld [vmem:[%s5918] sm:$0xff]
        %v5920 = vld [vmem:[%s5918 + $0x10] sm:$0xff]
        %v5921 = vld [vmem:[%s5918 + $0x20] sm:$0xff]
        %v5922 = vld [vmem:[%s5918 + $0x30] sm:$0xff]
        %v5923 = vld [vmem:[%s5918 + $0x40] sm:$0xff]
        %v5924 = vld [vmem:[%s5918 + $0x50] sm:$0xff]
        %v5925 = vld [vmem:[%s5918 + $0x60] sm:$0xff]
        %v5926 = vld [vmem:[%s5918 + $0x70] sm:$0xff]
        %v5927 = vld [vmem:[%s5918 + $0xa0] sm:$0xff]
        %v5928 = vld [vmem:[%s5918 + $0xb0] sm:$0xff]
        %v5929 = vld [vmem:[%s5918 + $0xc0] sm:$0xff]
        %v5930 = vld [vmem:[%s5918 + $0xd0] sm:$0xff]
        %v5931 = vld [vmem:[%s5918 + $0xe0] sm:$0xff]
        %v5932 = vld [vmem:[%s5918 + $0xf0] sm:$0xff]
        %v5933 = vld [vmem:[%s5918 + $0x100] sm:$0xff]
        %v5934 = vld [vmem:[%s5918 + $0x110] sm:$0xff]
        %v5935 = vld [vmem:[%s5918 + $0x140] sm:$0xff]
        %v5936 = vld [vmem:[%s5918 + $0x150] sm:$0xff]
        %v5937 = vld [vmem:[%s5918 + $0x160] sm:$0xff]
        %v5938 = vld [vmem:[%s5918 + $0x170] sm:$0xff]
        %v5939 = vld [vmem:[%s5918 + $0x180] sm:$0xff]
        %v5940 = vld [vmem:[%s5918 + $0x190] sm:$0xff]
        %v5941 = vld [vmem:[%s5918 + $0x1a0] sm:$0xff]
        %v5942 = vld [vmem:[%s5918 + $0x1b0] sm:$0xff]
        %v5943 = vld [vmem:[%s5918 + $0x1e0] sm:$0xff]
        %v5944 = vld [vmem:[%s5918 + $0x1f0] sm:$0xff]
        %v5945 = vld [vmem:[%s5918 + $0x200] sm:$0xff]
        %v5946 = vld [vmem:[%s5918 + $0x210] sm:$0xff]
        %v5947 = vld [vmem:[%s5918 + $0x220] sm:$0xff]
        %v5948 = vld [vmem:[%s5918 + $0x230] sm:$0xff]
        %v5949 = vld [vmem:[%s5918 + $0x240] sm:$0xff]
        %v5950 = vld [vmem:[%s5918 + $0x250] sm:$0xff]
        %v5951 = vpack.c.bf16 %v5920, %v5919
        %v5952 = vpack.c.bf16 %v5922, %v5921
        %v5953 = vpack.c.bf16 %v5924, %v5923
        %v5954 = vpack.c.bf16 %v5926, %v5925
        %v5955 = vpack.c.bf16 %v5928, %v5927
        %v5956 = vpack.c.bf16 %v5930, %v5929
        %v5957 = vpack.c.bf16 %v5932, %v5931
        %v5958 = vpack.c.bf16 %v5934, %v5933
        %v5959 = vpack.c.bf16 %v5936, %v5935
        %v5960 = vpack.c.bf16 %v5938, %v5937
        %v5961 = vpack.c.bf16 %v5940, %v5939
        %v5962 = vpack.c.bf16 %v5942, %v5941
        %v5963 = vpack.c.bf16 %v5944, %v5943
        %v5964 = vpack.c.bf16 %v5946, %v5945
        %v5965 = vpack.c.bf16 %v5948, %v5947
        %v5966 = vpack.c.bf16 %v5950, %v5949
        %s5967 = scalar_lea.vmem [#allocation7], 240
        %v5968 = vld [vmem:[%s5967] sm:$0xf]
        %v5969 = vld [vmem:[%s5967 + $0x4] sm:$0xf]
        %v5970 = vld [vmem:[%s5967 + $0x8] sm:$0xf]
        %v5971 = vld [vmem:[%s5967 + $0xc] sm:$0xf]
        %v5976 = vunpack.c.l.b16 %v5968
        %v5977 = vunpack.c.l.b16 %v5969
        %v5978 = vunpack.c.l.b16 %v5970
        %v5979 = vunpack.c.l.b16 %v5971
        %v5980 = vpack.c.b16 %v5977, %v5976
        %v5981 = vpack.c.b16 %v5979, %v5978
        %v5985 = vsel %vm757, %v5951, 0
        %v5988 = vsel %vm757, %v5952, 0
        %v5991 = vsel %vm757, %v5953, 0
        %v5994 = vsel %vm757, %v5954, 0
        %v5997 = vsel %vm757, %v5955, 0
        %v6000 = vsel %vm757, %v5956, 0
        %v6003 = vsel %vm757, %v5957, 0
        %v6006 = vsel %vm757, %v5958, 0
        %v6009 = vsel %vm757, %v5959, 0
        %v6012 = vsel %vm757, %v5960, 0
        %v6015 = vsel %vm757, %v5961, 0
        %v6018 = vsel %vm757, %v5962, 0
        %v6021 = vsel %vm757, %v5963, 0
        %v6024 = vsel %vm757, %v5964, 0
        %v6027 = vsel %vm757, %v5965, 0
        %v6030 = vsel %vm757, %v5966, 0
        %6032 = vmatprep.subr.bf16.mxu0 0
        %6033 = vmatpush1.bf16.msra.mxu0 0
        %6034 = vmatprep.subr.bf16.mxu0 0
        %6035 = vmatpush1.bf16.msra.mxu0 0
        %6036 = vmatprep.subr.bf16.mxu0 0
        %6037 = vmatpush1.bf16.msra.mxu0 0
        %6038 = vmatprep.subr.bf16.mxu0 0
        %6039 = vmatpush1.bf16.msra.mxu0 0
        %6040 = vmatprep.subr.bf16.mxu0 0
        %6041 = vmatpush1.bf16.msra.mxu0 0
        %6042 = vmatprep.subr.bf16.mxu0 0
        %6043 = vmatpush1.bf16.msra.mxu0 0
        %6044 = vmatprep.subr.bf16.mxu0 0
        %6045 = vmatpush1.bf16.msra.mxu0 %v5981
        %6046 = vmatprep.subr.bf16.mxu0 0
        %6047 = vmatpush1.bf16.msra.mxu0 %v5980
        %6048 = vmatprep.subr.bf16.mxu0 0
        %6049 = vmatpush2.bf16.msra.mxu0 0
        %6050 = vmatprep.subr.bf16.mxu0 0
        %6051 = vmatpush2.bf16.msra.mxu0 0
        %6052 = vmatprep.subr.bf16.mxu0 0
        %6053 = vmatpush2.bf16.msra.mxu0 0
        %6054 = vmatprep.subr.bf16.mxu0 0
        %6055 = vmatpush2.bf16.msra.mxu0 0
        %6056 = vmatprep.subr.bf16.mxu0 0
        %6057 = vmatpush2.bf16.msra.mxu0 0
        %6058 = vmatprep.subr.bf16.mxu0 0
        %6059 = vmatpush2.bf16.msra.mxu0 0
        %6060 = vmatprep.subr.bf16.mxu0 0
        %6061 = vmatpush2.bf16.msra.mxu0 0
        %6062 = vmatprep.subr.bf16.mxu0 0
        %6063 = vmatpush2.bf16.msra.mxu0 0
        %6064 = vmatprep.mubr.bf16.mxu0 0
        %6065 = vmatmul.mubr.bf16.gmra.mxu0 %v5985
        %v6066 = vpop.f32.mrf.mxu0
        %v6067 = vadd.f32 0.0, %v6066
        %v6068 = vpop.f32.mrf.mxu0
        %v6069 = vpop.f32.mrf.mxu0
        %v6070 = vadd.f32 0.0, %v6069
        %v6071 = vpop.f32.mrf.mxu0
        %6072 = vmatprep.mubr.bf16.mxu0 0
        %6073 = vmatmul.mubr.bf16.gmra.mxu0 %v5988
        %v6074 = vpop.f32.mrf.mxu0
        %v6075 = vadd.f32 0.0, %v6074
        %v6076 = vpop.f32.mrf.mxu0
        %v6077 = vpop.f32.mrf.mxu0
        %v6078 = vadd.f32 0.0, %v6077
        %v6079 = vpop.f32.mrf.mxu0
        %6080 = vmatprep.mubr.bf16.mxu0 0
        %6081 = vmatmul.mubr.bf16.gmra.mxu0 %v5991
        %v6082 = vpop.f32.mrf.mxu0
        %v6083 = vadd.f32 0.0, %v6082
        %v6084 = vpop.f32.mrf.mxu0
        %v6085 = vpop.f32.mrf.mxu0
        %v6086 = vadd.f32 0.0, %v6085
        %v6087 = vpop.f32.mrf.mxu0
        %6088 = vmatprep.mubr.bf16.mxu0 0
        %6089 = vmatmul.mubr.bf16.gmra.mxu0 %v5994
        %v6090 = vpop.f32.mrf.mxu0
        %v6091 = vadd.f32 0.0, %v6090
        %v6092 = vpop.f32.mrf.mxu0
        %v6093 = vpop.f32.mrf.mxu0
        %v6094 = vadd.f32 0.0, %v6093
        %v6095 = vpop.f32.mrf.mxu0
        %6096 = vmatprep.mubr.bf16.mxu0 0
        %6097 = vmatmul.mubr.bf16.gmra.mxu0 %v5997
        %v6098 = vpop.f32.mrf.mxu0
        %v6099 = vadd.f32 0.0, %v6098
        %v6100 = vpop.f32.mrf.mxu0
        %v6101 = vpop.f32.mrf.mxu0
        %v6102 = vadd.f32 0.0, %v6101
        %v6103 = vpop.f32.mrf.mxu0
        %6104 = vmatprep.mubr.bf16.mxu0 0
        %6105 = vmatmul.mubr.bf16.gmra.mxu0 %v6000
        %v6106 = vpop.f32.mrf.mxu0
        %v6107 = vadd.f32 0.0, %v6106
        %v6108 = vpop.f32.mrf.mxu0
        %v6109 = vpop.f32.mrf.mxu0
        %v6110 = vadd.f32 0.0, %v6109
        %v6111 = vpop.f32.mrf.mxu0
        %6112 = vmatprep.mubr.bf16.mxu0 0
        %6113 = vmatmul.mubr.bf16.gmra.mxu0 %v6003
        %v6114 = vpop.f32.mrf.mxu0
        %v6115 = vadd.f32 0.0, %v6114
        %v6116 = vpop.f32.mrf.mxu0
        %v6117 = vpop.f32.mrf.mxu0
        %v6118 = vadd.f32 0.0, %v6117
        %v6119 = vpop.f32.mrf.mxu0
        %6120 = vmatprep.mubr.bf16.mxu0 0
        %6121 = vmatmul.mubr.bf16.gmra.mxu0 %v6006
        %v6122 = vpop.f32.mrf.mxu0
        %v6123 = vadd.f32 0.0, %v6122
        %v6124 = vpop.f32.mrf.mxu0
        %v6125 = vpop.f32.mrf.mxu0
        %v6126 = vadd.f32 0.0, %v6125
        %v6127 = vpop.f32.mrf.mxu0
        %6128 = vmatprep.mubr.bf16.mxu0 0
        %6129 = vmatmul.mubr.bf16.gmra.mxu0 %v6009
        %v6130 = vpop.f32.mrf.mxu0
        %v6131 = vadd.f32 0.0, %v6130
        %v6132 = vpop.f32.mrf.mxu0
        %v6133 = vpop.f32.mrf.mxu0
        %v6134 = vadd.f32 0.0, %v6133
        %v6135 = vpop.f32.mrf.mxu0
        %6136 = vmatprep.mubr.bf16.mxu0 0
        %6137 = vmatmul.mubr.bf16.gmra.mxu0 %v6012
        %v6138 = vpop.f32.mrf.mxu0
        %v6139 = vadd.f32 0.0, %v6138
        %v6140 = vpop.f32.mrf.mxu0
        %v6141 = vpop.f32.mrf.mxu0
        %v6142 = vadd.f32 0.0, %v6141
        %v6143 = vpop.f32.mrf.mxu0
        %6144 = vmatprep.mubr.bf16.mxu0 0
        %6145 = vmatmul.mubr.bf16.gmra.mxu0 %v6015
        %v6146 = vpop.f32.mrf.mxu0
        %v6147 = vadd.f32 0.0, %v6146
        %v6148 = vpop.f32.mrf.mxu0
        %v6149 = vpop.f32.mrf.mxu0
        %v6150 = vadd.f32 0.0, %v6149
        %v6151 = vpop.f32.mrf.mxu0
        %6152 = vmatprep.mubr.bf16.mxu0 0
        %6153 = vmatmul.mubr.bf16.gmra.mxu0 %v6018
        %v6154 = vpop.f32.mrf.mxu0
        %v6155 = vadd.f32 0.0, %v6154
        %v6156 = vpop.f32.mrf.mxu0
        %v6157 = vpop.f32.mrf.mxu0
        %v6158 = vadd.f32 0.0, %v6157
        %v6159 = vpop.f32.mrf.mxu0
        %6160 = vmatprep.mubr.bf16.mxu0 0
        %6161 = vmatmul.mubr.bf16.gmra.mxu0 %v6021
        %v6162 = vpop.f32.mrf.mxu0
        %v6163 = vadd.f32 0.0, %v6162
        %v6164 = vpop.f32.mrf.mxu0
        %v6165 = vpop.f32.mrf.mxu0
        %v6166 = vadd.f32 0.0, %v6165
        %v6167 = vpop.f32.mrf.mxu0
        %6168 = vmatprep.mubr.bf16.mxu0 0
        %6169 = vmatmul.mubr.bf16.gmra.mxu0 %v6024
        %v6170 = vpop.f32.mrf.mxu0
        %v6171 = vadd.f32 0.0, %v6170
        %v6172 = vpop.f32.mrf.mxu0
        %v6173 = vpop.f32.mrf.mxu0
        %v6174 = vadd.f32 0.0, %v6173
        %v6175 = vpop.f32.mrf.mxu0
        %6176 = vmatprep.mubr.bf16.mxu0 0
        %6177 = vmatmul.mubr.bf16.gmra.mxu0 %v6027
        %v6178 = vpop.f32.mrf.mxu0
        %v6179 = vadd.f32 0.0, %v6178
        %v6180 = vpop.f32.mrf.mxu0
        %v6181 = vpop.f32.mrf.mxu0
        %v6182 = vadd.f32 0.0, %v6181
        %v6183 = vpop.f32.mrf.mxu0
        %6184 = vmatprep.mubr.bf16.mxu0 0
        %6185 = vmatmul.mubr.bf16.gmra.mxu0 %v6030
        %v6186 = vpop.f32.mrf.mxu0
        %v6187 = vadd.f32 0.0, %v6186
        %v6188 = vpop.f32.mrf.mxu0
        %v6189 = vpop.f32.mrf.mxu0
        %v6190 = vadd.f32 0.0, %v6189
        %v6191 = vpop.f32.mrf.mxu0
        %6192 = vdwg.mxu0
        %v6193 = vadd.f32 %v5886, %v6067
        %v6194 = vadd.f32 %v5887, %v6070
        %v6195 = vadd.f32 %v5888, %v6075
        %v6196 = vadd.f32 %v5889, %v6078
        %v6197 = vadd.f32 %v5890, %v6083
        %v6198 = vadd.f32 %v5891, %v6086
        %v6199 = vadd.f32 %v5892, %v6091
        %v6200 = vadd.f32 %v5893, %v6094
        %v6201 = vadd.f32 %v5894, %v6099
        %v6202 = vadd.f32 %v5895, %v6102
        %v6203 = vadd.f32 %v5896, %v6107
        %v6204 = vadd.f32 %v5897, %v6110
        %v6205 = vadd.f32 %v5898, %v6115
        %v6206 = vadd.f32 %v5899, %v6118
        %v6207 = vadd.f32 %v5900, %v6123
        %v6208 = vadd.f32 %v5901, %v6126
        %v6209 = vadd.f32 %v5902, %v6131
        %v6210 = vadd.f32 %v5903, %v6134
        %v6211 = vadd.f32 %v5904, %v6139
        %v6212 = vadd.f32 %v5905, %v6142
        %v6213 = vadd.f32 %v5906, %v6147
        %v6214 = vadd.f32 %v5907, %v6150
        %v6215 = vadd.f32 %v5908, %v6155
        %v6216 = vadd.f32 %v5909, %v6158
        %v6217 = vadd.f32 %v5910, %v6163
        %v6218 = vadd.f32 %v5911, %v6166
        %v6219 = vadd.f32 %v5912, %v6171
        %v6220 = vadd.f32 %v5913, %v6174
        %v6221 = vadd.f32 %v5914, %v6179
        %v6222 = vadd.f32 %v5915, %v6182
        %v6223 = vadd.f32 %v5916, %v6187
        %v6224 = vadd.f32 %v5917, %v6190
        %v6225 = vld [vmem:[%s5918 + $0x1] sm:$0xff]
        %v6226 = vld [vmem:[%s5918 + $0x11] sm:$0xff]
        %v6227 = vld [vmem:[%s5918 + $0x21] sm:$0xff]
        %v6228 = vld [vmem:[%s5918 + $0x31] sm:$0xff]
        %v6229 = vld [vmem:[%s5918 + $0x41] sm:$0xff]
        %v6230 = vld [vmem:[%s5918 + $0x51] sm:$0xff]
        %v6231 = vld [vmem:[%s5918 + $0x61] sm:$0xff]
        %v6232 = vld [vmem:[%s5918 + $0x71] sm:$0xff]
        %v6233 = vld [vmem:[%s5918 + $0xa1] sm:$0xff]
        %v6234 = vld [vmem:[%s5918 + $0xb1] sm:$0xff]
        %v6235 = vld [vmem:[%s5918 + $0xc1] sm:$0xff]
        %v6236 = vld [vmem:[%s5918 + $0xd1] sm:$0xff]
        %v6237 = vld [vmem:[%s5918 + $0xe1] sm:$0xff]
        %v6238 = vld [vmem:[%s5918 + $0xf1] sm:$0xff]
        %v6239 = vld [vmem:[%s5918 + $0x101] sm:$0xff]
        %v6240 = vld [vmem:[%s5918 + $0x111] sm:$0xff]
        %v6241 = vld [vmem:[%s5918 + $0x141] sm:$0xff]
        %v6242 = vld [vmem:[%s5918 + $0x151] sm:$0xff]
        %v6243 = vld [vmem:[%s5918 + $0x161] sm:$0xff]
        %v6244 = vld [vmem:[%s5918 + $0x171] sm:$0xff]
        %v6245 = vld [vmem:[%s5918 + $0x181] sm:$0xff]
        %v6246 = vld [vmem:[%s5918 + $0x191] sm:$0xff]
        %v6247 = vld [vmem:[%s5918 + $0x1a1] sm:$0xff]
        %v6248 = vld [vmem:[%s5918 + $0x1b1] sm:$0xff]
        %v6249 = vld [vmem:[%s5918 + $0x1e1] sm:$0xff]
        %v6250 = vld [vmem:[%s5918 + $0x1f1] sm:$0xff]
        %v6251 = vld [vmem:[%s5918 + $0x201] sm:$0xff]
        %v6252 = vld [vmem:[%s5918 + $0x211] sm:$0xff]
        %v6253 = vld [vmem:[%s5918 + $0x221] sm:$0xff]
        %v6254 = vld [vmem:[%s5918 + $0x231] sm:$0xff]
        %v6255 = vld [vmem:[%s5918 + $0x241] sm:$0xff]
        %v6256 = vld [vmem:[%s5918 + $0x251] sm:$0xff]
        %v6257 = vpack.c.bf16 %v6226, %v6225
        %v6258 = vpack.c.bf16 %v6228, %v6227
        %v6259 = vpack.c.bf16 %v6230, %v6229
        %v6260 = vpack.c.bf16 %v6232, %v6231
        %v6261 = vpack.c.bf16 %v6234, %v6233
        %v6262 = vpack.c.bf16 %v6236, %v6235
        %v6263 = vpack.c.bf16 %v6238, %v6237
        %v6264 = vpack.c.bf16 %v6240, %v6239
        %v6265 = vpack.c.bf16 %v6242, %v6241
        %v6266 = vpack.c.bf16 %v6244, %v6243
        %v6267 = vpack.c.bf16 %v6246, %v6245
        %v6268 = vpack.c.bf16 %v6248, %v6247
        %v6269 = vpack.c.bf16 %v6250, %v6249
        %v6270 = vpack.c.bf16 %v6252, %v6251
        %v6271 = vpack.c.bf16 %v6254, %v6253
        %v6272 = vpack.c.bf16 %v6256, %v6255
        %s6273 = scalar_lea.vmem [#allocation7], 256
        %v6274 = vld [vmem:[%s6273] sm:$0xf]
        %v6275 = vld [vmem:[%s6273 + $0x4] sm:$0xf]
        %v6276 = vld [vmem:[%s6273 + $0x8] sm:$0xf]
        %v6277 = vld [vmem:[%s6273 + $0xc] sm:$0xf]
        %v6282 = vunpack.c.l.b16 %v6274
        %v6283 = vunpack.c.l.b16 %v6275
        %v6284 = vunpack.c.l.b16 %v6276
        %v6285 = vunpack.c.l.b16 %v6277
        %v6286 = vpack.c.b16 %v6283, %v6282
        %v6287 = vpack.c.b16 %v6285, %v6284
        %v6291 = vsel %vm757, %v6257, 0
        %v6294 = vsel %vm757, %v6258, 0
        %v6297 = vsel %vm757, %v6259, 0
        %v6300 = vsel %vm757, %v6260, 0
        %v6303 = vsel %vm757, %v6261, 0
        %v6306 = vsel %vm757, %v6262, 0
        %v6309 = vsel %vm757, %v6263, 0
        %v6312 = vsel %vm757, %v6264, 0
        %v6315 = vsel %vm757, %v6265, 0
        %v6318 = vsel %vm757, %v6266, 0
        %v6321 = vsel %vm757, %v6267, 0
        %v6324 = vsel %vm757, %v6268, 0
        %v6327 = vsel %vm757, %v6269, 0
        %v6330 = vsel %vm757, %v6270, 0
        %v6333 = vsel %vm757, %v6271, 0
        %v6336 = vsel %vm757, %v6272, 0
        %6338 = vmatprep.subr.bf16.mxu0 0
        %6339 = vmatpush1.bf16.msra.mxu0 0
        %6340 = vmatprep.subr.bf16.mxu0 0
        %6341 = vmatpush1.bf16.msra.mxu0 0
        %6342 = vmatprep.subr.bf16.mxu0 0
        %6343 = vmatpush1.bf16.msra.mxu0 0
        %6344 = vmatprep.subr.bf16.mxu0 0
        %6345 = vmatpush1.bf16.msra.mxu0 0
        %6346 = vmatprep.subr.bf16.mxu0 0
        %6347 = vmatpush1.bf16.msra.mxu0 0
        %6348 = vmatprep.subr.bf16.mxu0 0
        %6349 = vmatpush1.bf16.msra.mxu0 0
        %6350 = vmatprep.subr.bf16.mxu0 0
        %6351 = vmatpush1.bf16.msra.mxu0 %v6287
        %6352 = vmatprep.subr.bf16.mxu0 0
        %6353 = vmatpush1.bf16.msra.mxu0 %v6286
        %6354 = vmatprep.subr.bf16.mxu0 0
        %6355 = vmatpush2.bf16.msra.mxu0 0
        %6356 = vmatprep.subr.bf16.mxu0 0
        %6357 = vmatpush2.bf16.msra.mxu0 0
        %6358 = vmatprep.subr.bf16.mxu0 0
        %6359 = vmatpush2.bf16.msra.mxu0 0
        %6360 = vmatprep.subr.bf16.mxu0 0
        %6361 = vmatpush2.bf16.msra.mxu0 0
        %6362 = vmatprep.subr.bf16.mxu0 0
        %6363 = vmatpush2.bf16.msra.mxu0 0
        %6364 = vmatprep.subr.bf16.mxu0 0
        %6365 = vmatpush2.bf16.msra.mxu0 0
        %6366 = vmatprep.subr.bf16.mxu0 0
        %6367 = vmatpush2.bf16.msra.mxu0 0
        %6368 = vmatprep.subr.bf16.mxu0 0
        %6369 = vmatpush2.bf16.msra.mxu0 0
        %6370 = vmatprep.mubr.bf16.mxu0 0
        %6371 = vmatmul.mubr.bf16.gmra.mxu0 %v6291
        %v6372 = vpop.f32.mrf.mxu0
        %v6373 = vadd.f32 0.0, %v6372
        %v6374 = vpop.f32.mrf.mxu0
        %v6375 = vpop.f32.mrf.mxu0
        %v6376 = vadd.f32 0.0, %v6375
        %v6377 = vpop.f32.mrf.mxu0
        %6378 = vmatprep.mubr.bf16.mxu0 0
        %6379 = vmatmul.mubr.bf16.gmra.mxu0 %v6294
        %v6380 = vpop.f32.mrf.mxu0
        %v6381 = vadd.f32 0.0, %v6380
        %v6382 = vpop.f32.mrf.mxu0
        %v6383 = vpop.f32.mrf.mxu0
        %v6384 = vadd.f32 0.0, %v6383
        %v6385 = vpop.f32.mrf.mxu0
        %6386 = vmatprep.mubr.bf16.mxu0 0
        %6387 = vmatmul.mubr.bf16.gmra.mxu0 %v6297
        %v6388 = vpop.f32.mrf.mxu0
        %v6389 = vadd.f32 0.0, %v6388
        %v6390 = vpop.f32.mrf.mxu0
        %v6391 = vpop.f32.mrf.mxu0
        %v6392 = vadd.f32 0.0, %v6391
        %v6393 = vpop.f32.mrf.mxu0
        %6394 = vmatprep.mubr.bf16.mxu0 0
        %6395 = vmatmul.mubr.bf16.gmra.mxu0 %v6300
        %v6396 = vpop.f32.mrf.mxu0
        %v6397 = vadd.f32 0.0, %v6396
        %v6398 = vpop.f32.mrf.mxu0
        %v6399 = vpop.f32.mrf.mxu0
        %v6400 = vadd.f32 0.0, %v6399
        %v6401 = vpop.f32.mrf.mxu0
        %6402 = vmatprep.mubr.bf16.mxu0 0
        %6403 = vmatmul.mubr.bf16.gmra.mxu0 %v6303
        %v6404 = vpop.f32.mrf.mxu0
        %v6405 = vadd.f32 0.0, %v6404
        %v6406 = vpop.f32.mrf.mxu0
        %v6407 = vpop.f32.mrf.mxu0
        %v6408 = vadd.f32 0.0, %v6407
        %v6409 = vpop.f32.mrf.mxu0
        %6410 = vmatprep.mubr.bf16.mxu0 0
        %6411 = vmatmul.mubr.bf16.gmra.mxu0 %v6306
        %v6412 = vpop.f32.mrf.mxu0
        %v6413 = vadd.f32 0.0, %v6412
        %v6414 = vpop.f32.mrf.mxu0
        %v6415 = vpop.f32.mrf.mxu0
        %v6416 = vadd.f32 0.0, %v6415
        %v6417 = vpop.f32.mrf.mxu0
        %6418 = vmatprep.mubr.bf16.mxu0 0
        %6419 = vmatmul.mubr.bf16.gmra.mxu0 %v6309
        %v6420 = vpop.f32.mrf.mxu0
        %v6421 = vadd.f32 0.0, %v6420
        %v6422 = vpop.f32.mrf.mxu0
        %v6423 = vpop.f32.mrf.mxu0
        %v6424 = vadd.f32 0.0, %v6423
        %v6425 = vpop.f32.mrf.mxu0
        %6426 = vmatprep.mubr.bf16.mxu0 0
        %6427 = vmatmul.mubr.bf16.gmra.mxu0 %v6312
        %v6428 = vpop.f32.mrf.mxu0
        %v6429 = vadd.f32 0.0, %v6428
        %v6430 = vpop.f32.mrf.mxu0
        %v6431 = vpop.f32.mrf.mxu0
        %v6432 = vadd.f32 0.0, %v6431
        %v6433 = vpop.f32.mrf.mxu0
        %6434 = vmatprep.mubr.bf16.mxu0 0
        %6435 = vmatmul.mubr.bf16.gmra.mxu0 %v6315
        %v6436 = vpop.f32.mrf.mxu0
        %v6437 = vadd.f32 0.0, %v6436
        %v6438 = vpop.f32.mrf.mxu0
        %v6439 = vpop.f32.mrf.mxu0
        %v6440 = vadd.f32 0.0, %v6439
        %v6441 = vpop.f32.mrf.mxu0
        %6442 = vmatprep.mubr.bf16.mxu0 0
        %6443 = vmatmul.mubr.bf16.gmra.mxu0 %v6318
        %v6444 = vpop.f32.mrf.mxu0
        %v6445 = vadd.f32 0.0, %v6444
        %v6446 = vpop.f32.mrf.mxu0
        %v6447 = vpop.f32.mrf.mxu0
        %v6448 = vadd.f32 0.0, %v6447
        %v6449 = vpop.f32.mrf.mxu0
        %6450 = vmatprep.mubr.bf16.mxu0 0
        %6451 = vmatmul.mubr.bf16.gmra.mxu0 %v6321
        %v6452 = vpop.f32.mrf.mxu0
        %v6453 = vadd.f32 0.0, %v6452
        %v6454 = vpop.f32.mrf.mxu0
        %v6455 = vpop.f32.mrf.mxu0
        %v6456 = vadd.f32 0.0, %v6455
        %v6457 = vpop.f32.mrf.mxu0
        %6458 = vmatprep.mubr.bf16.mxu0 0
        %6459 = vmatmul.mubr.bf16.gmra.mxu0 %v6324
        %v6460 = vpop.f32.mrf.mxu0
        %v6461 = vadd.f32 0.0, %v6460
        %v6462 = vpop.f32.mrf.mxu0
        %v6463 = vpop.f32.mrf.mxu0
        %v6464 = vadd.f32 0.0, %v6463
        %v6465 = vpop.f32.mrf.mxu0
        %6466 = vmatprep.mubr.bf16.mxu0 0
        %6467 = vmatmul.mubr.bf16.gmra.mxu0 %v6327
        %v6468 = vpop.f32.mrf.mxu0
        %v6469 = vadd.f32 0.0, %v6468
        %v6470 = vpop.f32.mrf.mxu0
        %v6471 = vpop.f32.mrf.mxu0
        %v6472 = vadd.f32 0.0, %v6471
        %v6473 = vpop.f32.mrf.mxu0
        %6474 = vmatprep.mubr.bf16.mxu0 0
        %6475 = vmatmul.mubr.bf16.gmra.mxu0 %v6330
        %v6476 = vpop.f32.mrf.mxu0
        %v6477 = vadd.f32 0.0, %v6476
        %v6478 = vpop.f32.mrf.mxu0
        %v6479 = vpop.f32.mrf.mxu0
        %v6480 = vadd.f32 0.0, %v6479
        %v6481 = vpop.f32.mrf.mxu0
        %6482 = vmatprep.mubr.bf16.mxu0 0
        %6483 = vmatmul.mubr.bf16.gmra.mxu0 %v6333
        %v6484 = vpop.f32.mrf.mxu0
        %v6485 = vadd.f32 0.0, %v6484
        %v6486 = vpop.f32.mrf.mxu0
        %v6487 = vpop.f32.mrf.mxu0
        %v6488 = vadd.f32 0.0, %v6487
        %v6489 = vpop.f32.mrf.mxu0
        %6490 = vmatprep.mubr.bf16.mxu0 0
        %6491 = vmatmul.mubr.bf16.gmra.mxu0 %v6336
        %v6492 = vpop.f32.mrf.mxu0
        %v6493 = vadd.f32 0.0, %v6492
        %v6494 = vpop.f32.mrf.mxu0
        %v6495 = vpop.f32.mrf.mxu0
        %v6496 = vadd.f32 0.0, %v6495
        %v6497 = vpop.f32.mrf.mxu0
        %6498 = vdwg.mxu0
        %v6499 = vadd.f32 %v6193, %v6373
        %v6500 = vadd.f32 %v6194, %v6376
        %v6501 = vadd.f32 %v6195, %v6381
        %v6502 = vadd.f32 %v6196, %v6384
        %v6503 = vadd.f32 %v6197, %v6389
        %v6504 = vadd.f32 %v6198, %v6392
        %v6505 = vadd.f32 %v6199, %v6397
        %v6506 = vadd.f32 %v6200, %v6400
        %v6507 = vadd.f32 %v6201, %v6405
        %v6508 = vadd.f32 %v6202, %v6408
        %v6509 = vadd.f32 %v6203, %v6413
        %v6510 = vadd.f32 %v6204, %v6416
        %v6511 = vadd.f32 %v6205, %v6421
        %v6512 = vadd.f32 %v6206, %v6424
        %v6513 = vadd.f32 %v6207, %v6429
        %v6514 = vadd.f32 %v6208, %v6432
        %v6515 = vadd.f32 %v6209, %v6437
        %v6516 = vadd.f32 %v6210, %v6440
        %v6517 = vadd.f32 %v6211, %v6445
        %v6518 = vadd.f32 %v6212, %v6448
        %v6519 = vadd.f32 %v6213, %v6453
        %v6520 = vadd.f32 %v6214, %v6456
        %v6521 = vadd.f32 %v6215, %v6461
        %v6522 = vadd.f32 %v6216, %v6464
        %v6523 = vadd.f32 %v6217, %v6469
        %v6524 = vadd.f32 %v6218, %v6472
        %v6525 = vadd.f32 %v6219, %v6477
        %v6526 = vadd.f32 %v6220, %v6480
        %v6527 = vadd.f32 %v6221, %v6485
        %v6528 = vadd.f32 %v6222, %v6488
        %v6529 = vadd.f32 %v6223, %v6493
        %v6530 = vadd.f32 %v6224, %v6496
        %v6531 = vld [vmem:[%s5918 + $0x2] sm:$0xff]
        %v6532 = vld [vmem:[%s5918 + $0x12] sm:$0xff]
        %v6533 = vld [vmem:[%s5918 + $0x22] sm:$0xff]
        %v6534 = vld [vmem:[%s5918 + $0x32] sm:$0xff]
        %v6535 = vld [vmem:[%s5918 + $0x42] sm:$0xff]
        %v6536 = vld [vmem:[%s5918 + $0x52] sm:$0xff]
        %v6537 = vld [vmem:[%s5918 + $0x62] sm:$0xff]
        %v6538 = vld [vmem:[%s5918 + $0x72] sm:$0xff]
        %v6539 = vld [vmem:[%s5918 + $0xa2] sm:$0xff]
        %v6540 = vld [vmem:[%s5918 + $0xb2] sm:$0xff]
        %v6541 = vld [vmem:[%s5918 + $0xc2] sm:$0xff]
        %v6542 = vld [vmem:[%s5918 + $0xd2] sm:$0xff]
        %v6543 = vld [vmem:[%s5918 + $0xe2] sm:$0xff]
        %v6544 = vld [vmem:[%s5918 + $0xf2] sm:$0xff]
        %v6545 = vld [vmem:[%s5918 + $0x102] sm:$0xff]
        %v6546 = vld [vmem:[%s5918 + $0x112] sm:$0xff]
        %v6547 = vld [vmem:[%s5918 + $0x142] sm:$0xff]
        %v6548 = vld [vmem:[%s5918 + $0x152] sm:$0xff]
        %v6549 = vld [vmem:[%s5918 + $0x162] sm:$0xff]
        %v6550 = vld [vmem:[%s5918 + $0x172] sm:$0xff]
        %v6551 = vld [vmem:[%s5918 + $0x182] sm:$0xff]
        %v6552 = vld [vmem:[%s5918 + $0x192] sm:$0xff]
        %v6553 = vld [vmem:[%s5918 + $0x1a2] sm:$0xff]
        %v6554 = vld [vmem:[%s5918 + $0x1b2] sm:$0xff]
        %v6555 = vld [vmem:[%s5918 + $0x1e2] sm:$0xff]
        %v6556 = vld [vmem:[%s5918 + $0x1f2] sm:$0xff]
        %v6557 = vld [vmem:[%s5918 + $0x202] sm:$0xff]
        %v6558 = vld [vmem:[%s5918 + $0x212] sm:$0xff]
        %v6559 = vld [vmem:[%s5918 + $0x222] sm:$0xff]
        %v6560 = vld [vmem:[%s5918 + $0x232] sm:$0xff]
        %v6561 = vld [vmem:[%s5918 + $0x242] sm:$0xff]
        %v6562 = vld [vmem:[%s5918 + $0x252] sm:$0xff]
        %v6563 = vpack.c.bf16 %v6532, %v6531
        %v6564 = vpack.c.bf16 %v6534, %v6533
        %v6565 = vpack.c.bf16 %v6536, %v6535
        %v6566 = vpack.c.bf16 %v6538, %v6537
        %v6567 = vpack.c.bf16 %v6540, %v6539
        %v6568 = vpack.c.bf16 %v6542, %v6541
        %v6569 = vpack.c.bf16 %v6544, %v6543
        %v6570 = vpack.c.bf16 %v6546, %v6545
        %v6571 = vpack.c.bf16 %v6548, %v6547
        %v6572 = vpack.c.bf16 %v6550, %v6549
        %v6573 = vpack.c.bf16 %v6552, %v6551
        %v6574 = vpack.c.bf16 %v6554, %v6553
        %v6575 = vpack.c.bf16 %v6556, %v6555
        %v6576 = vpack.c.bf16 %v6558, %v6557
        %v6577 = vpack.c.bf16 %v6560, %v6559
        %v6578 = vpack.c.bf16 %v6562, %v6561
        %s6579 = scalar_lea.vmem [#allocation7], 272
        %v6580 = vld [vmem:[%s6579] sm:$0xf]
        %v6581 = vld [vmem:[%s6579 + $0x4] sm:$0xf]
        %v6582 = vld [vmem:[%s6579 + $0x8] sm:$0xf]
        %v6583 = vld [vmem:[%s6579 + $0xc] sm:$0xf]
        %v6588 = vunpack.c.l.b16 %v6580
        %v6589 = vunpack.c.l.b16 %v6581
        %v6590 = vunpack.c.l.b16 %v6582
        %v6591 = vunpack.c.l.b16 %v6583
        %v6592 = vpack.c.b16 %v6589, %v6588
        %v6593 = vpack.c.b16 %v6591, %v6590
        %v6597 = vsel %vm757, %v6563, 0
        %v6600 = vsel %vm757, %v6564, 0
        %v6603 = vsel %vm757, %v6565, 0
        %v6606 = vsel %vm757, %v6566, 0
        %v6609 = vsel %vm757, %v6567, 0
        %v6612 = vsel %vm757, %v6568, 0
        %v6615 = vsel %vm757, %v6569, 0
        %v6618 = vsel %vm757, %v6570, 0
        %v6621 = vsel %vm757, %v6571, 0
        %v6624 = vsel %vm757, %v6572, 0
        %v6627 = vsel %vm757, %v6573, 0
        %v6630 = vsel %vm757, %v6574, 0
        %v6633 = vsel %vm757, %v6575, 0
        %v6636 = vsel %vm757, %v6576, 0
        %v6639 = vsel %vm757, %v6577, 0
        %v6642 = vsel %vm757, %v6578, 0
        %6644 = vmatprep.subr.bf16.mxu0 0
        %6645 = vmatpush1.bf16.msra.mxu0 0
        %6646 = vmatprep.subr.bf16.mxu0 0
        %6647 = vmatpush1.bf16.msra.mxu0 0
        %6648 = vmatprep.subr.bf16.mxu0 0
        %6649 = vmatpush1.bf16.msra.mxu0 0
        %6650 = vmatprep.subr.bf16.mxu0 0
        %6651 = vmatpush1.bf16.msra.mxu0 0
        %6652 = vmatprep.subr.bf16.mxu0 0
        %6653 = vmatpush1.bf16.msra.mxu0 0
        %6654 = vmatprep.subr.bf16.mxu0 0
        %6655 = vmatpush1.bf16.msra.mxu0 0
        %6656 = vmatprep.subr.bf16.mxu0 0
        %6657 = vmatpush1.bf16.msra.mxu0 %v6593
        %6658 = vmatprep.subr.bf16.mxu0 0
        %6659 = vmatpush1.bf16.msra.mxu0 %v6592
        %6660 = vmatprep.subr.bf16.mxu0 0
        %6661 = vmatpush2.bf16.msra.mxu0 0
        %6662 = vmatprep.subr.bf16.mxu0 0
        %6663 = vmatpush2.bf16.msra.mxu0 0
        %6664 = vmatprep.subr.bf16.mxu0 0
        %6665 = vmatpush2.bf16.msra.mxu0 0
        %6666 = vmatprep.subr.bf16.mxu0 0
        %6667 = vmatpush2.bf16.msra.mxu0 0
        %6668 = vmatprep.subr.bf16.mxu0 0
        %6669 = vmatpush2.bf16.msra.mxu0 0
        %6670 = vmatprep.subr.bf16.mxu0 0
        %6671 = vmatpush2.bf16.msra.mxu0 0
        %6672 = vmatprep.subr.bf16.mxu0 0
        %6673 = vmatpush2.bf16.msra.mxu0 0
        %6674 = vmatprep.subr.bf16.mxu0 0
        %6675 = vmatpush2.bf16.msra.mxu0 0
        %6676 = vmatprep.mubr.bf16.mxu0 0
        %6677 = vmatmul.mubr.bf16.gmra.mxu0 %v6597
        %v6678 = vpop.f32.mrf.mxu0
        %v6679 = vadd.f32 0.0, %v6678
        %v6680 = vpop.f32.mrf.mxu0
        %v6681 = vpop.f32.mrf.mxu0
        %v6682 = vadd.f32 0.0, %v6681
        %v6683 = vpop.f32.mrf.mxu0
        %6684 = vmatprep.mubr.bf16.mxu0 0
        %6685 = vmatmul.mubr.bf16.gmra.mxu0 %v6600
        %v6686 = vpop.f32.mrf.mxu0
        %v6687 = vadd.f32 0.0, %v6686
        %v6688 = vpop.f32.mrf.mxu0
        %v6689 = vpop.f32.mrf.mxu0
        %v6690 = vadd.f32 0.0, %v6689
        %v6691 = vpop.f32.mrf.mxu0
        %6692 = vmatprep.mubr.bf16.mxu0 0
        %6693 = vmatmul.mubr.bf16.gmra.mxu0 %v6603
        %v6694 = vpop.f32.mrf.mxu0
        %v6695 = vadd.f32 0.0, %v6694
        %v6696 = vpop.f32.mrf.mxu0
        %v6697 = vpop.f32.mrf.mxu0
        %v6698 = vadd.f32 0.0, %v6697
        %v6699 = vpop.f32.mrf.mxu0
        %6700 = vmatprep.mubr.bf16.mxu0 0
        %6701 = vmatmul.mubr.bf16.gmra.mxu0 %v6606
        %v6702 = vpop.f32.mrf.mxu0
        %v6703 = vadd.f32 0.0, %v6702
        %v6704 = vpop.f32.mrf.mxu0
        %v6705 = vpop.f32.mrf.mxu0
        %v6706 = vadd.f32 0.0, %v6705
        %v6707 = vpop.f32.mrf.mxu0
        %6708 = vmatprep.mubr.bf16.mxu0 0
        %6709 = vmatmul.mubr.bf16.gmra.mxu0 %v6609
        %v6710 = vpop.f32.mrf.mxu0
        %v6711 = vadd.f32 0.0, %v6710
        %v6712 = vpop.f32.mrf.mxu0
        %v6713 = vpop.f32.mrf.mxu0
        %v6714 = vadd.f32 0.0, %v6713
        %v6715 = vpop.f32.mrf.mxu0
        %6716 = vmatprep.mubr.bf16.mxu0 0
        %6717 = vmatmul.mubr.bf16.gmra.mxu0 %v6612
        %v6718 = vpop.f32.mrf.mxu0
        %v6719 = vadd.f32 0.0, %v6718
        %v6720 = vpop.f32.mrf.mxu0
        %v6721 = vpop.f32.mrf.mxu0
        %v6722 = vadd.f32 0.0, %v6721
        %v6723 = vpop.f32.mrf.mxu0
        %6724 = vmatprep.mubr.bf16.mxu0 0
        %6725 = vmatmul.mubr.bf16.gmra.mxu0 %v6615
        %v6726 = vpop.f32.mrf.mxu0
        %v6727 = vadd.f32 0.0, %v6726
        %v6728 = vpop.f32.mrf.mxu0
        %v6729 = vpop.f32.mrf.mxu0
        %v6730 = vadd.f32 0.0, %v6729
        %v6731 = vpop.f32.mrf.mxu0
        %6732 = vmatprep.mubr.bf16.mxu0 0
        %6733 = vmatmul.mubr.bf16.gmra.mxu0 %v6618
        %v6734 = vpop.f32.mrf.mxu0
        %v6735 = vadd.f32 0.0, %v6734
        %v6736 = vpop.f32.mrf.mxu0
        %v6737 = vpop.f32.mrf.mxu0
        %v6738 = vadd.f32 0.0, %v6737
        %v6739 = vpop.f32.mrf.mxu0
        %6740 = vmatprep.mubr.bf16.mxu0 0
        %6741 = vmatmul.mubr.bf16.gmra.mxu0 %v6621
        %v6742 = vpop.f32.mrf.mxu0
        %v6743 = vadd.f32 0.0, %v6742
        %v6744 = vpop.f32.mrf.mxu0
        %v6745 = vpop.f32.mrf.mxu0
        %v6746 = vadd.f32 0.0, %v6745
        %v6747 = vpop.f32.mrf.mxu0
        %6748 = vmatprep.mubr.bf16.mxu0 0
        %6749 = vmatmul.mubr.bf16.gmra.mxu0 %v6624
        %v6750 = vpop.f32.mrf.mxu0
        %v6751 = vadd.f32 0.0, %v6750
        %v6752 = vpop.f32.mrf.mxu0
        %v6753 = vpop.f32.mrf.mxu0
        %v6754 = vadd.f32 0.0, %v6753
        %v6755 = vpop.f32.mrf.mxu0
        %6756 = vmatprep.mubr.bf16.mxu0 0
        %6757 = vmatmul.mubr.bf16.gmra.mxu0 %v6627
        %v6758 = vpop.f32.mrf.mxu0
        %v6759 = vadd.f32 0.0, %v6758
        %v6760 = vpop.f32.mrf.mxu0
        %v6761 = vpop.f32.mrf.mxu0
        %v6762 = vadd.f32 0.0, %v6761
        %v6763 = vpop.f32.mrf.mxu0
        %6764 = vmatprep.mubr.bf16.mxu0 0
        %6765 = vmatmul.mubr.bf16.gmra.mxu0 %v6630
        %v6766 = vpop.f32.mrf.mxu0
        %v6767 = vadd.f32 0.0, %v6766
        %v6768 = vpop.f32.mrf.mxu0
        %v6769 = vpop.f32.mrf.mxu0
        %v6770 = vadd.f32 0.0, %v6769
        %v6771 = vpop.f32.mrf.mxu0
        %6772 = vmatprep.mubr.bf16.mxu0 0
        %6773 = vmatmul.mubr.bf16.gmra.mxu0 %v6633
        %v6774 = vpop.f32.mrf.mxu0
        %v6775 = vadd.f32 0.0, %v6774
        %v6776 = vpop.f32.mrf.mxu0
        %v6777 = vpop.f32.mrf.mxu0
        %v6778 = vadd.f32 0.0, %v6777
        %v6779 = vpop.f32.mrf.mxu0
        %6780 = vmatprep.mubr.bf16.mxu0 0
        %6781 = vmatmul.mubr.bf16.gmra.mxu0 %v6636
        %v6782 = vpop.f32.mrf.mxu0
        %v6783 = vadd.f32 0.0, %v6782
        %v6784 = vpop.f32.mrf.mxu0
        %v6785 = vpop.f32.mrf.mxu0
        %v6786 = vadd.f32 0.0, %v6785
        %v6787 = vpop.f32.mrf.mxu0
        %6788 = vmatprep.mubr.bf16.mxu0 0
        %6789 = vmatmul.mubr.bf16.gmra.mxu0 %v6639
        %v6790 = vpop.f32.mrf.mxu0
        %v6791 = vadd.f32 0.0, %v6790
        %v6792 = vpop.f32.mrf.mxu0
        %v6793 = vpop.f32.mrf.mxu0
        %v6794 = vadd.f32 0.0, %v6793
        %v6795 = vpop.f32.mrf.mxu0
        %6796 = vmatprep.mubr.bf16.mxu0 0
        %6797 = vmatmul.mubr.bf16.gmra.mxu0 %v6642
        %v6798 = vpop.f32.mrf.mxu0
        %v6799 = vadd.f32 0.0, %v6798
        %v6800 = vpop.f32.mrf.mxu0
        %v6801 = vpop.f32.mrf.mxu0
        %v6802 = vadd.f32 0.0, %v6801
        %v6803 = vpop.f32.mrf.mxu0
        %6804 = vdwg.mxu0
        %v6805 = vadd.f32 %v6499, %v6679
        %v6806 = vadd.f32 %v6500, %v6682
        %v6807 = vadd.f32 %v6501, %v6687
        %v6808 = vadd.f32 %v6502, %v6690
        %v6809 = vadd.f32 %v6503, %v6695
        %v6810 = vadd.f32 %v6504, %v6698
        %v6811 = vadd.f32 %v6505, %v6703
        %v6812 = vadd.f32 %v6506, %v6706
        %v6813 = vadd.f32 %v6507, %v6711
        %v6814 = vadd.f32 %v6508, %v6714
        %v6815 = vadd.f32 %v6509, %v6719
        %v6816 = vadd.f32 %v6510, %v6722
        %v6817 = vadd.f32 %v6511, %v6727
        %v6818 = vadd.f32 %v6512, %v6730
        %v6819 = vadd.f32 %v6513, %v6735
        %v6820 = vadd.f32 %v6514, %v6738
        %v6821 = vadd.f32 %v6515, %v6743
        %v6822 = vadd.f32 %v6516, %v6746
        %v6823 = vadd.f32 %v6517, %v6751
        %v6824 = vadd.f32 %v6518, %v6754
        %v6825 = vadd.f32 %v6519, %v6759
        %v6826 = vadd.f32 %v6520, %v6762
        %v6827 = vadd.f32 %v6521, %v6767
        %v6828 = vadd.f32 %v6522, %v6770
        %v6829 = vadd.f32 %v6523, %v6775
        %v6830 = vadd.f32 %v6524, %v6778
        %v6831 = vadd.f32 %v6525, %v6783
        %v6832 = vadd.f32 %v6526, %v6786
        %v6833 = vadd.f32 %v6527, %v6791
        %v6834 = vadd.f32 %v6528, %v6794
        %v6835 = vadd.f32 %v6529, %v6799
        %v6836 = vadd.f32 %v6530, %v6802
        %s6837 = scalar_lea.vmem [#allocation2], 320
        %v6838 = vld [vmem:[%s6837] sm:$0xff]
        %v6839 = vld [vmem:[%s6837 + $0x10] sm:$0xff]
        %v6840 = vld [vmem:[%s6837 + $0x20] sm:$0xff]
        %v6841 = vld [vmem:[%s6837 + $0x30] sm:$0xff]
        %v6842 = vld [vmem:[%s6837 + $0x40] sm:$0xff]
        %v6843 = vld [vmem:[%s6837 + $0x50] sm:$0xff]
        %v6844 = vld [vmem:[%s6837 + $0x60] sm:$0xff]
        %v6845 = vld [vmem:[%s6837 + $0x70] sm:$0xff]
        %v6846 = vld [vmem:[%s6837 + $0xa0] sm:$0xff]
        %v6847 = vld [vmem:[%s6837 + $0xb0] sm:$0xff]
        %v6848 = vld [vmem:[%s6837 + $0xc0] sm:$0xff]
        %v6849 = vld [vmem:[%s6837 + $0xd0] sm:$0xff]
        %v6850 = vld [vmem:[%s6837 + $0xe0] sm:$0xff]
        %v6851 = vld [vmem:[%s6837 + $0xf0] sm:$0xff]
        %v6852 = vld [vmem:[%s6837 + $0x100] sm:$0xff]
        %v6853 = vld [vmem:[%s6837 + $0x110] sm:$0xff]
        %v6854 = vld [vmem:[%s6837 + $0x140] sm:$0xff]
        %v6855 = vld [vmem:[%s6837 + $0x150] sm:$0xff]
        %v6856 = vld [vmem:[%s6837 + $0x160] sm:$0xff]
        %v6857 = vld [vmem:[%s6837 + $0x170] sm:$0xff]
        %v6858 = vld [vmem:[%s6837 + $0x180] sm:$0xff]
        %v6859 = vld [vmem:[%s6837 + $0x190] sm:$0xff]
        %v6860 = vld [vmem:[%s6837 + $0x1a0] sm:$0xff]
        %v6861 = vld [vmem:[%s6837 + $0x1b0] sm:$0xff]
        %v6862 = vld [vmem:[%s6837 + $0x1e0] sm:$0xff]
        %v6863 = vld [vmem:[%s6837 + $0x1f0] sm:$0xff]
        %v6864 = vld [vmem:[%s6837 + $0x200] sm:$0xff]
        %v6865 = vld [vmem:[%s6837 + $0x210] sm:$0xff]
        %v6866 = vld [vmem:[%s6837 + $0x220] sm:$0xff]
        %v6867 = vld [vmem:[%s6837 + $0x230] sm:$0xff]
        %v6868 = vld [vmem:[%s6837 + $0x240] sm:$0xff]
        %v6869 = vld [vmem:[%s6837 + $0x250] sm:$0xff]
        %v6870 = vpack.c.bf16 %v6839, %v6838
        %v6871 = vpack.c.bf16 %v6841, %v6840
        %v6872 = vpack.c.bf16 %v6843, %v6842
        %v6873 = vpack.c.bf16 %v6845, %v6844
        %v6874 = vpack.c.bf16 %v6847, %v6846
        %v6875 = vpack.c.bf16 %v6849, %v6848
        %v6876 = vpack.c.bf16 %v6851, %v6850
        %v6877 = vpack.c.bf16 %v6853, %v6852
        %v6878 = vpack.c.bf16 %v6855, %v6854
        %v6879 = vpack.c.bf16 %v6857, %v6856
        %v6880 = vpack.c.bf16 %v6859, %v6858
        %v6881 = vpack.c.bf16 %v6861, %v6860
        %v6882 = vpack.c.bf16 %v6863, %v6862
        %v6883 = vpack.c.bf16 %v6865, %v6864
        %v6884 = vpack.c.bf16 %v6867, %v6866
        %v6885 = vpack.c.bf16 %v6869, %v6868
        %s6886 = scalar_lea.vmem [#allocation7], 288
        %v6887 = vld [vmem:[%s6886] sm:$0xf]
        %v6888 = vld [vmem:[%s6886 + $0x4] sm:$0xf]
        %v6889 = vld [vmem:[%s6886 + $0x8] sm:$0xf]
        %v6890 = vld [vmem:[%s6886 + $0xc] sm:$0xf]
        %v6895 = vunpack.c.l.b16 %v6887
        %v6896 = vunpack.c.l.b16 %v6888
        %v6897 = vunpack.c.l.b16 %v6889
        %v6898 = vunpack.c.l.b16 %v6890
        %v6899 = vpack.c.b16 %v6896, %v6895
        %v6900 = vpack.c.b16 %v6898, %v6897
        %v6904 = vsel %vm757, %v6870, 0
        %v6907 = vsel %vm757, %v6871, 0
        %v6910 = vsel %vm757, %v6872, 0
        %v6913 = vsel %vm757, %v6873, 0
        %v6916 = vsel %vm757, %v6874, 0
        %v6919 = vsel %vm757, %v6875, 0
        %v6922 = vsel %vm757, %v6876, 0
        %v6925 = vsel %vm757, %v6877, 0
        %v6928 = vsel %vm757, %v6878, 0
        %v6931 = vsel %vm757, %v6879, 0
        %v6934 = vsel %vm757, %v6880, 0
        %v6937 = vsel %vm757, %v6881, 0
        %v6940 = vsel %vm757, %v6882, 0
        %v6943 = vsel %vm757, %v6883, 0
        %v6946 = vsel %vm757, %v6884, 0
        %v6949 = vsel %vm757, %v6885, 0
        %6951 = vmatprep.subr.bf16.mxu0 0
        %6952 = vmatpush1.bf16.msra.mxu0 0
        %6953 = vmatprep.subr.bf16.mxu0 0
        %6954 = vmatpush1.bf16.msra.mxu0 0
        %6955 = vmatprep.subr.bf16.mxu0 0
        %6956 = vmatpush1.bf16.msra.mxu0 0
        %6957 = vmatprep.subr.bf16.mxu0 0
        %6958 = vmatpush1.bf16.msra.mxu0 0
        %6959 = vmatprep.subr.bf16.mxu0 0
        %6960 = vmatpush1.bf16.msra.mxu0 0
        %6961 = vmatprep.subr.bf16.mxu0 0
        %6962 = vmatpush1.bf16.msra.mxu0 0
        %6963 = vmatprep.subr.bf16.mxu0 0
        %6964 = vmatpush1.bf16.msra.mxu0 %v6900
        %6965 = vmatprep.subr.bf16.mxu0 0
        %6966 = vmatpush1.bf16.msra.mxu0 %v6899
        %6967 = vmatprep.subr.bf16.mxu0 0
        %6968 = vmatpush2.bf16.msra.mxu0 0
        %6969 = vmatprep.subr.bf16.mxu0 0
        %6970 = vmatpush2.bf16.msra.mxu0 0
        %6971 = vmatprep.subr.bf16.mxu0 0
        %6972 = vmatpush2.bf16.msra.mxu0 0
        %6973 = vmatprep.subr.bf16.mxu0 0
        %6974 = vmatpush2.bf16.msra.mxu0 0
        %6975 = vmatprep.subr.bf16.mxu0 0
        %6976 = vmatpush2.bf16.msra.mxu0 0
        %6977 = vmatprep.subr.bf16.mxu0 0
        %6978 = vmatpush2.bf16.msra.mxu0 0
        %6979 = vmatprep.subr.bf16.mxu0 0
        %6980 = vmatpush2.bf16.msra.mxu0 0
        %6981 = vmatprep.subr.bf16.mxu0 0
        %6982 = vmatpush2.bf16.msra.mxu0 0
        %6983 = vmatprep.mubr.bf16.mxu0 0
        %6984 = vmatmul.mubr.bf16.gmra.mxu0 %v6904
        %v6985 = vpop.f32.mrf.mxu0
        %v6986 = vadd.f32 0.0, %v6985
        %v6987 = vpop.f32.mrf.mxu0
        %v6988 = vpop.f32.mrf.mxu0
        %v6989 = vadd.f32 0.0, %v6988
        %v6990 = vpop.f32.mrf.mxu0
        %6991 = vmatprep.mubr.bf16.mxu0 0
        %6992 = vmatmul.mubr.bf16.gmra.mxu0 %v6907
        %v6993 = vpop.f32.mrf.mxu0
        %v6994 = vadd.f32 0.0, %v6993
        %v6995 = vpop.f32.mrf.mxu0
        %v6996 = vpop.f32.mrf.mxu0
        %v6997 = vadd.f32 0.0, %v6996
        %v6998 = vpop.f32.mrf.mxu0
        %6999 = vmatprep.mubr.bf16.mxu0 0
        %7000 = vmatmul.mubr.bf16.gmra.mxu0 %v6910
        %v7001 = vpop.f32.mrf.mxu0
        %v7002 = vadd.f32 0.0, %v7001
        %v7003 = vpop.f32.mrf.mxu0
        %v7004 = vpop.f32.mrf.mxu0
        %v7005 = vadd.f32 0.0, %v7004
        %v7006 = vpop.f32.mrf.mxu0
        %7007 = vmatprep.mubr.bf16.mxu0 0
        %7008 = vmatmul.mubr.bf16.gmra.mxu0 %v6913
        %v7009 = vpop.f32.mrf.mxu0
        %v7010 = vadd.f32 0.0, %v7009
        %v7011 = vpop.f32.mrf.mxu0
        %v7012 = vpop.f32.mrf.mxu0
        %v7013 = vadd.f32 0.0, %v7012
        %v7014 = vpop.f32.mrf.mxu0
        %7015 = vmatprep.mubr.bf16.mxu0 0
        %7016 = vmatmul.mubr.bf16.gmra.mxu0 %v6916
        %v7017 = vpop.f32.mrf.mxu0
        %v7018 = vadd.f32 0.0, %v7017
        %v7019 = vpop.f32.mrf.mxu0
        %v7020 = vpop.f32.mrf.mxu0
        %v7021 = vadd.f32 0.0, %v7020
        %v7022 = vpop.f32.mrf.mxu0
        %7023 = vmatprep.mubr.bf16.mxu0 0
        %7024 = vmatmul.mubr.bf16.gmra.mxu0 %v6919
        %v7025 = vpop.f32.mrf.mxu0
        %v7026 = vadd.f32 0.0, %v7025
        %v7027 = vpop.f32.mrf.mxu0
        %v7028 = vpop.f32.mrf.mxu0
        %v7029 = vadd.f32 0.0, %v7028
        %v7030 = vpop.f32.mrf.mxu0
        %7031 = vmatprep.mubr.bf16.mxu0 0
        %7032 = vmatmul.mubr.bf16.gmra.mxu0 %v6922
        %v7033 = vpop.f32.mrf.mxu0
        %v7034 = vadd.f32 0.0, %v7033
        %v7035 = vpop.f32.mrf.mxu0
        %v7036 = vpop.f32.mrf.mxu0
        %v7037 = vadd.f32 0.0, %v7036
        %v7038 = vpop.f32.mrf.mxu0
        %7039 = vmatprep.mubr.bf16.mxu0 0
        %7040 = vmatmul.mubr.bf16.gmra.mxu0 %v6925
        %v7041 = vpop.f32.mrf.mxu0
        %v7042 = vadd.f32 0.0, %v7041
        %v7043 = vpop.f32.mrf.mxu0
        %v7044 = vpop.f32.mrf.mxu0
        %v7045 = vadd.f32 0.0, %v7044
        %v7046 = vpop.f32.mrf.mxu0
        %7047 = vmatprep.mubr.bf16.mxu0 0
        %7048 = vmatmul.mubr.bf16.gmra.mxu0 %v6928
        %v7049 = vpop.f32.mrf.mxu0
        %v7050 = vadd.f32 0.0, %v7049
        %v7051 = vpop.f32.mrf.mxu0
        %v7052 = vpop.f32.mrf.mxu0
        %v7053 = vadd.f32 0.0, %v7052
        %v7054 = vpop.f32.mrf.mxu0
        %7055 = vmatprep.mubr.bf16.mxu0 0
        %7056 = vmatmul.mubr.bf16.gmra.mxu0 %v6931
        %v7057 = vpop.f32.mrf.mxu0
        %v7058 = vadd.f32 0.0, %v7057
        %v7059 = vpop.f32.mrf.mxu0
        %v7060 = vpop.f32.mrf.mxu0
        %v7061 = vadd.f32 0.0, %v7060
        %v7062 = vpop.f32.mrf.mxu0
        %7063 = vmatprep.mubr.bf16.mxu0 0
        %7064 = vmatmul.mubr.bf16.gmra.mxu0 %v6934
        %v7065 = vpop.f32.mrf.mxu0
        %v7066 = vadd.f32 0.0, %v7065
        %v7067 = vpop.f32.mrf.mxu0
        %v7068 = vpop.f32.mrf.mxu0
        %v7069 = vadd.f32 0.0, %v7068
        %v7070 = vpop.f32.mrf.mxu0
        %7071 = vmatprep.mubr.bf16.mxu0 0
        %7072 = vmatmul.mubr.bf16.gmra.mxu0 %v6937
        %v7073 = vpop.f32.mrf.mxu0
        %v7074 = vadd.f32 0.0, %v7073
        %v7075 = vpop.f32.mrf.mxu0
        %v7076 = vpop.f32.mrf.mxu0
        %v7077 = vadd.f32 0.0, %v7076
        %v7078 = vpop.f32.mrf.mxu0
        %7079 = vmatprep.mubr.bf16.mxu0 0
        %7080 = vmatmul.mubr.bf16.gmra.mxu0 %v6940
        %v7081 = vpop.f32.mrf.mxu0
        %v7082 = vadd.f32 0.0, %v7081
        %v7083 = vpop.f32.mrf.mxu0
        %v7084 = vpop.f32.mrf.mxu0
        %v7085 = vadd.f32 0.0, %v7084
        %v7086 = vpop.f32.mrf.mxu0
        %7087 = vmatprep.mubr.bf16.mxu0 0
        %7088 = vmatmul.mubr.bf16.gmra.mxu0 %v6943
        %v7089 = vpop.f32.mrf.mxu0
        %v7090 = vadd.f32 0.0, %v7089
        %v7091 = vpop.f32.mrf.mxu0
        %v7092 = vpop.f32.mrf.mxu0
        %v7093 = vadd.f32 0.0, %v7092
        %v7094 = vpop.f32.mrf.mxu0
        %7095 = vmatprep.mubr.bf16.mxu0 0
        %7096 = vmatmul.mubr.bf16.gmra.mxu0 %v6946
        %v7097 = vpop.f32.mrf.mxu0
        %v7098 = vadd.f32 0.0, %v7097
        %v7099 = vpop.f32.mrf.mxu0
        %v7100 = vpop.f32.mrf.mxu0
        %v7101 = vadd.f32 0.0, %v7100
        %v7102 = vpop.f32.mrf.mxu0
        %7103 = vmatprep.mubr.bf16.mxu0 0
        %7104 = vmatmul.mubr.bf16.gmra.mxu0 %v6949
        %v7105 = vpop.f32.mrf.mxu0
        %v7106 = vadd.f32 0.0, %v7105
        %v7107 = vpop.f32.mrf.mxu0
        %v7108 = vpop.f32.mrf.mxu0
        %v7109 = vadd.f32 0.0, %v7108
        %v7110 = vpop.f32.mrf.mxu0
        %7111 = vdwg.mxu0
        %v7112 = vadd.f32 %v6805, %v6986
        %v7113 = vadd.f32 %v6806, %v6989
        %v7114 = vadd.f32 %v6807, %v6994
        %v7115 = vadd.f32 %v6808, %v6997
        %v7116 = vadd.f32 %v6809, %v7002
        %v7117 = vadd.f32 %v6810, %v7005
        %v7118 = vadd.f32 %v6811, %v7010
        %v7119 = vadd.f32 %v6812, %v7013
        %v7120 = vadd.f32 %v6813, %v7018
        %v7121 = vadd.f32 %v6814, %v7021
        %v7122 = vadd.f32 %v6815, %v7026
        %v7123 = vadd.f32 %v6816, %v7029
        %v7124 = vadd.f32 %v6817, %v7034
        %v7125 = vadd.f32 %v6818, %v7037
        %v7126 = vadd.f32 %v6819, %v7042
        %v7127 = vadd.f32 %v6820, %v7045
        %v7128 = vadd.f32 %v6821, %v7050
        %v7129 = vadd.f32 %v6822, %v7053
        %v7130 = vadd.f32 %v6823, %v7058
        %v7131 = vadd.f32 %v6824, %v7061
        %v7132 = vadd.f32 %v6825, %v7066
        %v7133 = vadd.f32 %v6826, %v7069
        %v7134 = vadd.f32 %v6827, %v7074
        %v7135 = vadd.f32 %v6828, %v7077
        %v7136 = vadd.f32 %v6829, %v7082
        %v7137 = vadd.f32 %v6830, %v7085
        %v7138 = vadd.f32 %v6831, %v7090
        %v7139 = vadd.f32 %v6832, %v7093
        %v7140 = vadd.f32 %v6833, %v7098
        %v7141 = vadd.f32 %v6834, %v7101
        %v7142 = vadd.f32 %v6835, %v7106
        %v7143 = vadd.f32 %v6836, %v7109
        %v7144 = vld [vmem:[%s6837 + $0x1] sm:$0xff]
        %v7145 = vld [vmem:[%s6837 + $0x11] sm:$0xff]
        %v7146 = vld [vmem:[%s6837 + $0x21] sm:$0xff]
        %v7147 = vld [vmem:[%s6837 + $0x31] sm:$0xff]
        %v7148 = vld [vmem:[%s6837 + $0x41] sm:$0xff]
        %v7149 = vld [vmem:[%s6837 + $0x51] sm:$0xff]
        %v7150 = vld [vmem:[%s6837 + $0x61] sm:$0xff]
        %v7151 = vld [vmem:[%s6837 + $0x71] sm:$0xff]
        %v7152 = vld [vmem:[%s6837 + $0xa1] sm:$0xff]
        %v7153 = vld [vmem:[%s6837 + $0xb1] sm:$0xff]
        %v7154 = vld [vmem:[%s6837 + $0xc1] sm:$0xff]
        %v7155 = vld [vmem:[%s6837 + $0xd1] sm:$0xff]
        %v7156 = vld [vmem:[%s6837 + $0xe1] sm:$0xff]
        %v7157 = vld [vmem:[%s6837 + $0xf1] sm:$0xff]
        %v7158 = vld [vmem:[%s6837 + $0x101] sm:$0xff]
        %v7159 = vld [vmem:[%s6837 + $0x111] sm:$0xff]
        %v7160 = vld [vmem:[%s6837 + $0x141] sm:$0xff]
        %v7161 = vld [vmem:[%s6837 + $0x151] sm:$0xff]
        %v7162 = vld [vmem:[%s6837 + $0x161] sm:$0xff]
        %v7163 = vld [vmem:[%s6837 + $0x171] sm:$0xff]
        %v7164 = vld [vmem:[%s6837 + $0x181] sm:$0xff]
        %v7165 = vld [vmem:[%s6837 + $0x191] sm:$0xff]
        %v7166 = vld [vmem:[%s6837 + $0x1a1] sm:$0xff]
        %v7167 = vld [vmem:[%s6837 + $0x1b1] sm:$0xff]
        %v7168 = vld [vmem:[%s6837 + $0x1e1] sm:$0xff]
        %v7169 = vld [vmem:[%s6837 + $0x1f1] sm:$0xff]
        %v7170 = vld [vmem:[%s6837 + $0x201] sm:$0xff]
        %v7171 = vld [vmem:[%s6837 + $0x211] sm:$0xff]
        %v7172 = vld [vmem:[%s6837 + $0x221] sm:$0xff]
        %v7173 = vld [vmem:[%s6837 + $0x231] sm:$0xff]
        %v7174 = vld [vmem:[%s6837 + $0x241] sm:$0xff]
        %v7175 = vld [vmem:[%s6837 + $0x251] sm:$0xff]
        %v7176 = vpack.c.bf16 %v7145, %v7144
        %v7177 = vpack.c.bf16 %v7147, %v7146
        %v7178 = vpack.c.bf16 %v7149, %v7148
        %v7179 = vpack.c.bf16 %v7151, %v7150
        %v7180 = vpack.c.bf16 %v7153, %v7152
        %v7181 = vpack.c.bf16 %v7155, %v7154
        %v7182 = vpack.c.bf16 %v7157, %v7156
        %v7183 = vpack.c.bf16 %v7159, %v7158
        %v7184 = vpack.c.bf16 %v7161, %v7160
        %v7185 = vpack.c.bf16 %v7163, %v7162
        %v7186 = vpack.c.bf16 %v7165, %v7164
        %v7187 = vpack.c.bf16 %v7167, %v7166
        %v7188 = vpack.c.bf16 %v7169, %v7168
        %v7189 = vpack.c.bf16 %v7171, %v7170
        %v7190 = vpack.c.bf16 %v7173, %v7172
        %v7191 = vpack.c.bf16 %v7175, %v7174
        %s7192 = scalar_lea.vmem [#allocation7], 304
        %v7193 = vld [vmem:[%s7192] sm:$0xf]
        %v7194 = vld [vmem:[%s7192 + $0x4] sm:$0xf]
        %v7195 = vld [vmem:[%s7192 + $0x8] sm:$0xf]
        %v7196 = vld [vmem:[%s7192 + $0xc] sm:$0xf]
        %v7201 = vunpack.c.l.b16 %v7193
        %v7202 = vunpack.c.l.b16 %v7194
        %v7203 = vunpack.c.l.b16 %v7195
        %v7204 = vunpack.c.l.b16 %v7196
        %v7205 = vpack.c.b16 %v7202, %v7201
        %v7206 = vpack.c.b16 %v7204, %v7203
        %v7210 = vsel %vm757, %v7176, 0
        %v7213 = vsel %vm757, %v7177, 0
        %v7216 = vsel %vm757, %v7178, 0
        %v7219 = vsel %vm757, %v7179, 0
        %v7222 = vsel %vm757, %v7180, 0
        %v7225 = vsel %vm757, %v7181, 0
        %v7228 = vsel %vm757, %v7182, 0
        %v7231 = vsel %vm757, %v7183, 0
        %v7234 = vsel %vm757, %v7184, 0
        %v7237 = vsel %vm757, %v7185, 0
        %v7240 = vsel %vm757, %v7186, 0
        %v7243 = vsel %vm757, %v7187, 0
        %v7246 = vsel %vm757, %v7188, 0
        %v7249 = vsel %vm757, %v7189, 0
        %v7252 = vsel %vm757, %v7190, 0
        %v7255 = vsel %vm757, %v7191, 0
        %7257 = vmatprep.subr.bf16.mxu0 0
        %7258 = vmatpush1.bf16.msra.mxu0 0
        %7259 = vmatprep.subr.bf16.mxu0 0
        %7260 = vmatpush1.bf16.msra.mxu0 0
        %7261 = vmatprep.subr.bf16.mxu0 0
        %7262 = vmatpush1.bf16.msra.mxu0 0
        %7263 = vmatprep.subr.bf16.mxu0 0
        %7264 = vmatpush1.bf16.msra.mxu0 0
        %7265 = vmatprep.subr.bf16.mxu0 0
        %7266 = vmatpush1.bf16.msra.mxu0 0
        %7267 = vmatprep.subr.bf16.mxu0 0
        %7268 = vmatpush1.bf16.msra.mxu0 0
        %7269 = vmatprep.subr.bf16.mxu0 0
        %7270 = vmatpush1.bf16.msra.mxu0 %v7206
        %7271 = vmatprep.subr.bf16.mxu0 0
        %7272 = vmatpush1.bf16.msra.mxu0 %v7205
        %7273 = vmatprep.subr.bf16.mxu0 0
        %7274 = vmatpush2.bf16.msra.mxu0 0
        %7275 = vmatprep.subr.bf16.mxu0 0
        %7276 = vmatpush2.bf16.msra.mxu0 0
        %7277 = vmatprep.subr.bf16.mxu0 0
        %7278 = vmatpush2.bf16.msra.mxu0 0
        %7279 = vmatprep.subr.bf16.mxu0 0
        %7280 = vmatpush2.bf16.msra.mxu0 0
        %7281 = vmatprep.subr.bf16.mxu0 0
        %7282 = vmatpush2.bf16.msra.mxu0 0
        %7283 = vmatprep.subr.bf16.mxu0 0
        %7284 = vmatpush2.bf16.msra.mxu0 0
        %7285 = vmatprep.subr.bf16.mxu0 0
        %7286 = vmatpush2.bf16.msra.mxu0 0
        %7287 = vmatprep.subr.bf16.mxu0 0
        %7288 = vmatpush2.bf16.msra.mxu0 0
        %7289 = vmatprep.mubr.bf16.mxu0 0
        %7290 = vmatmul.mubr.bf16.gmra.mxu0 %v7210
        %v7291 = vpop.f32.mrf.mxu0
        %v7292 = vadd.f32 0.0, %v7291
        %v7293 = vpop.f32.mrf.mxu0
        %v7294 = vpop.f32.mrf.mxu0
        %v7295 = vadd.f32 0.0, %v7294
        %v7296 = vpop.f32.mrf.mxu0
        %7297 = vmatprep.mubr.bf16.mxu0 0
        %7298 = vmatmul.mubr.bf16.gmra.mxu0 %v7213
        %v7299 = vpop.f32.mrf.mxu0
        %v7300 = vadd.f32 0.0, %v7299
        %v7301 = vpop.f32.mrf.mxu0
        %v7302 = vpop.f32.mrf.mxu0
        %v7303 = vadd.f32 0.0, %v7302
        %v7304 = vpop.f32.mrf.mxu0
        %7305 = vmatprep.mubr.bf16.mxu0 0
        %7306 = vmatmul.mubr.bf16.gmra.mxu0 %v7216
        %v7307 = vpop.f32.mrf.mxu0
        %v7308 = vadd.f32 0.0, %v7307
        %v7309 = vpop.f32.mrf.mxu0
        %v7310 = vpop.f32.mrf.mxu0
        %v7311 = vadd.f32 0.0, %v7310
        %v7312 = vpop.f32.mrf.mxu0
        %7313 = vmatprep.mubr.bf16.mxu0 0
        %7314 = vmatmul.mubr.bf16.gmra.mxu0 %v7219
        %v7315 = vpop.f32.mrf.mxu0
        %v7316 = vadd.f32 0.0, %v7315
        %v7317 = vpop.f32.mrf.mxu0
        %v7318 = vpop.f32.mrf.mxu0
        %v7319 = vadd.f32 0.0, %v7318
        %v7320 = vpop.f32.mrf.mxu0
        %7321 = vmatprep.mubr.bf16.mxu0 0
        %7322 = vmatmul.mubr.bf16.gmra.mxu0 %v7222
        %v7323 = vpop.f32.mrf.mxu0
        %v7324 = vadd.f32 0.0, %v7323
        %v7325 = vpop.f32.mrf.mxu0
        %v7326 = vpop.f32.mrf.mxu0
        %v7327 = vadd.f32 0.0, %v7326
        %v7328 = vpop.f32.mrf.mxu0
        %7329 = vmatprep.mubr.bf16.mxu0 0
        %7330 = vmatmul.mubr.bf16.gmra.mxu0 %v7225
        %v7331 = vpop.f32.mrf.mxu0
        %v7332 = vadd.f32 0.0, %v7331
        %v7333 = vpop.f32.mrf.mxu0
        %v7334 = vpop.f32.mrf.mxu0
        %v7335 = vadd.f32 0.0, %v7334
        %v7336 = vpop.f32.mrf.mxu0
        %7337 = vmatprep.mubr.bf16.mxu0 0
        %7338 = vmatmul.mubr.bf16.gmra.mxu0 %v7228
        %v7339 = vpop.f32.mrf.mxu0
        %v7340 = vadd.f32 0.0, %v7339
        %v7341 = vpop.f32.mrf.mxu0
        %v7342 = vpop.f32.mrf.mxu0
        %v7343 = vadd.f32 0.0, %v7342
        %v7344 = vpop.f32.mrf.mxu0
        %7345 = vmatprep.mubr.bf16.mxu0 0
        %7346 = vmatmul.mubr.bf16.gmra.mxu0 %v7231
        %v7347 = vpop.f32.mrf.mxu0
        %v7348 = vadd.f32 0.0, %v7347
        %v7349 = vpop.f32.mrf.mxu0
        %v7350 = vpop.f32.mrf.mxu0
        %v7351 = vadd.f32 0.0, %v7350
        %v7352 = vpop.f32.mrf.mxu0
        %7353 = vmatprep.mubr.bf16.mxu0 0
        %7354 = vmatmul.mubr.bf16.gmra.mxu0 %v7234
        %v7355 = vpop.f32.mrf.mxu0
        %v7356 = vadd.f32 0.0, %v7355
        %v7357 = vpop.f32.mrf.mxu0
        %v7358 = vpop.f32.mrf.mxu0
        %v7359 = vadd.f32 0.0, %v7358
        %v7360 = vpop.f32.mrf.mxu0
        %7361 = vmatprep.mubr.bf16.mxu0 0
        %7362 = vmatmul.mubr.bf16.gmra.mxu0 %v7237
        %v7363 = vpop.f32.mrf.mxu0
        %v7364 = vadd.f32 0.0, %v7363
        %v7365 = vpop.f32.mrf.mxu0
        %v7366 = vpop.f32.mrf.mxu0
        %v7367 = vadd.f32 0.0, %v7366
        %v7368 = vpop.f32.mrf.mxu0
        %7369 = vmatprep.mubr.bf16.mxu0 0
        %7370 = vmatmul.mubr.bf16.gmra.mxu0 %v7240
        %v7371 = vpop.f32.mrf.mxu0
        %v7372 = vadd.f32 0.0, %v7371
        %v7373 = vpop.f32.mrf.mxu0
        %v7374 = vpop.f32.mrf.mxu0
        %v7375 = vadd.f32 0.0, %v7374
        %v7376 = vpop.f32.mrf.mxu0
        %7377 = vmatprep.mubr.bf16.mxu0 0
        %7378 = vmatmul.mubr.bf16.gmra.mxu0 %v7243
        %v7379 = vpop.f32.mrf.mxu0
        %v7380 = vadd.f32 0.0, %v7379
        %v7381 = vpop.f32.mrf.mxu0
        %v7382 = vpop.f32.mrf.mxu0
        %v7383 = vadd.f32 0.0, %v7382
        %v7384 = vpop.f32.mrf.mxu0
        %7385 = vmatprep.mubr.bf16.mxu0 0
        %7386 = vmatmul.mubr.bf16.gmra.mxu0 %v7246
        %v7387 = vpop.f32.mrf.mxu0
        %v7388 = vadd.f32 0.0, %v7387
        %v7389 = vpop.f32.mrf.mxu0
        %v7390 = vpop.f32.mrf.mxu0
        %v7391 = vadd.f32 0.0, %v7390
        %v7392 = vpop.f32.mrf.mxu0
        %7393 = vmatprep.mubr.bf16.mxu0 0
        %7394 = vmatmul.mubr.bf16.gmra.mxu0 %v7249
        %v7395 = vpop.f32.mrf.mxu0
        %v7396 = vadd.f32 0.0, %v7395
        %v7397 = vpop.f32.mrf.mxu0
        %v7398 = vpop.f32.mrf.mxu0
        %v7399 = vadd.f32 0.0, %v7398
        %v7400 = vpop.f32.mrf.mxu0
        %7401 = vmatprep.mubr.bf16.mxu0 0
        %7402 = vmatmul.mubr.bf16.gmra.mxu0 %v7252
        %v7403 = vpop.f32.mrf.mxu0
        %v7404 = vadd.f32 0.0, %v7403
        %v7405 = vpop.f32.mrf.mxu0
        %v7406 = vpop.f32.mrf.mxu0
        %v7407 = vadd.f32 0.0, %v7406
        %v7408 = vpop.f32.mrf.mxu0
        %7409 = vmatprep.mubr.bf16.mxu0 0
        %7410 = vmatmul.mubr.bf16.gmra.mxu0 %v7255
        %v7411 = vpop.f32.mrf.mxu0
        %v7412 = vadd.f32 0.0, %v7411
        %v7413 = vpop.f32.mrf.mxu0
        %v7414 = vpop.f32.mrf.mxu0
        %v7415 = vadd.f32 0.0, %v7414
        %v7416 = vpop.f32.mrf.mxu0
        %7417 = vdwg.mxu0
        %v7418 = vadd.f32 %v7112, %v7292
        %v7419 = vadd.f32 %v7113, %v7295
        %v7420 = vadd.f32 %v7114, %v7300
        %v7421 = vadd.f32 %v7115, %v7303
        %v7422 = vadd.f32 %v7116, %v7308
        %v7423 = vadd.f32 %v7117, %v7311
        %v7424 = vadd.f32 %v7118, %v7316
        %v7425 = vadd.f32 %v7119, %v7319
        %v7426 = vadd.f32 %v7120, %v7324
        %v7427 = vadd.f32 %v7121, %v7327
        %v7428 = vadd.f32 %v7122, %v7332
        %v7429 = vadd.f32 %v7123, %v7335
        %v7430 = vadd.f32 %v7124, %v7340
        %v7431 = vadd.f32 %v7125, %v7343
        %v7432 = vadd.f32 %v7126, %v7348
        %v7433 = vadd.f32 %v7127, %v7351
        %v7434 = vadd.f32 %v7128, %v7356
        %v7435 = vadd.f32 %v7129, %v7359
        %v7436 = vadd.f32 %v7130, %v7364
        %v7437 = vadd.f32 %v7131, %v7367
        %v7438 = vadd.f32 %v7132, %v7372
        %v7439 = vadd.f32 %v7133, %v7375
        %v7440 = vadd.f32 %v7134, %v7380
        %v7441 = vadd.f32 %v7135, %v7383
        %v7442 = vadd.f32 %v7136, %v7388
        %v7443 = vadd.f32 %v7137, %v7391
        %v7444 = vadd.f32 %v7138, %v7396
        %v7445 = vadd.f32 %v7139, %v7399
        %v7446 = vadd.f32 %v7140, %v7404
        %v7447 = vadd.f32 %v7141, %v7407
        %v7448 = vadd.f32 %v7142, %v7412
        %v7449 = vadd.f32 %v7143, %v7415
        %v7450 = vld [vmem:[%s6837 + $0x2] sm:$0xff]
        %v7451 = vld [vmem:[%s6837 + $0x12] sm:$0xff]
        %v7452 = vld [vmem:[%s6837 + $0x22] sm:$0xff]
        %v7453 = vld [vmem:[%s6837 + $0x32] sm:$0xff]
        %v7454 = vld [vmem:[%s6837 + $0x42] sm:$0xff]
        %v7455 = vld [vmem:[%s6837 + $0x52] sm:$0xff]
        %v7456 = vld [vmem:[%s6837 + $0x62] sm:$0xff]
        %v7457 = vld [vmem:[%s6837 + $0x72] sm:$0xff]
        %v7458 = vld [vmem:[%s6837 + $0xa2] sm:$0xff]
        %v7459 = vld [vmem:[%s6837 + $0xb2] sm:$0xff]
        %v7460 = vld [vmem:[%s6837 + $0xc2] sm:$0xff]
        %v7461 = vld [vmem:[%s6837 + $0xd2] sm:$0xff]
        %v7462 = vld [vmem:[%s6837 + $0xe2] sm:$0xff]
        %v7463 = vld [vmem:[%s6837 + $0xf2] sm:$0xff]
        %v7464 = vld [vmem:[%s6837 + $0x102] sm:$0xff]
        %v7465 = vld [vmem:[%s6837 + $0x112] sm:$0xff]
        %v7466 = vld [vmem:[%s6837 + $0x142] sm:$0xff]
        %v7467 = vld [vmem:[%s6837 + $0x152] sm:$0xff]
        %v7468 = vld [vmem:[%s6837 + $0x162] sm:$0xff]
        %v7469 = vld [vmem:[%s6837 + $0x172] sm:$0xff]
        %v7470 = vld [vmem:[%s6837 + $0x182] sm:$0xff]
        %v7471 = vld [vmem:[%s6837 + $0x192] sm:$0xff]
        %v7472 = vld [vmem:[%s6837 + $0x1a2] sm:$0xff]
        %v7473 = vld [vmem:[%s6837 + $0x1b2] sm:$0xff]
        %v7474 = vld [vmem:[%s6837 + $0x1e2] sm:$0xff]
        %v7475 = vld [vmem:[%s6837 + $0x1f2] sm:$0xff]
        %v7476 = vld [vmem:[%s6837 + $0x202] sm:$0xff]
        %v7477 = vld [vmem:[%s6837 + $0x212] sm:$0xff]
        %v7478 = vld [vmem:[%s6837 + $0x222] sm:$0xff]
        %v7479 = vld [vmem:[%s6837 + $0x232] sm:$0xff]
        %v7480 = vld [vmem:[%s6837 + $0x242] sm:$0xff]
        %v7481 = vld [vmem:[%s6837 + $0x252] sm:$0xff]
        %v7482 = vpack.c.bf16 %v7451, %v7450
        %v7483 = vpack.c.bf16 %v7453, %v7452
        %v7484 = vpack.c.bf16 %v7455, %v7454
        %v7485 = vpack.c.bf16 %v7457, %v7456
        %v7486 = vpack.c.bf16 %v7459, %v7458
        %v7487 = vpack.c.bf16 %v7461, %v7460
        %v7488 = vpack.c.bf16 %v7463, %v7462
        %v7489 = vpack.c.bf16 %v7465, %v7464
        %v7490 = vpack.c.bf16 %v7467, %v7466
        %v7491 = vpack.c.bf16 %v7469, %v7468
        %v7492 = vpack.c.bf16 %v7471, %v7470
        %v7493 = vpack.c.bf16 %v7473, %v7472
        %v7494 = vpack.c.bf16 %v7475, %v7474
        %v7495 = vpack.c.bf16 %v7477, %v7476
        %v7496 = vpack.c.bf16 %v7479, %v7478
        %v7497 = vpack.c.bf16 %v7481, %v7480
        %s7498 = scalar_lea.vmem [#allocation7], 320
        %v7499 = vld [vmem:[%s7498] sm:$0xf]
        %v7500 = vld [vmem:[%s7498 + $0x4] sm:$0xf]
        %v7501 = vld [vmem:[%s7498 + $0x8] sm:$0xf]
        %v7502 = vld [vmem:[%s7498 + $0xc] sm:$0xf]
        %v7507 = vunpack.c.l.b16 %v7499
        %v7508 = vunpack.c.l.b16 %v7500
        %v7509 = vunpack.c.l.b16 %v7501
        %v7510 = vunpack.c.l.b16 %v7502
        %v7511 = vpack.c.b16 %v7508, %v7507
        %v7512 = vpack.c.b16 %v7510, %v7509
        %v7516 = vsel %vm757, %v7482, 0
        %v7519 = vsel %vm757, %v7483, 0
        %v7522 = vsel %vm757, %v7484, 0
        %v7525 = vsel %vm757, %v7485, 0
        %v7528 = vsel %vm757, %v7486, 0
        %v7531 = vsel %vm757, %v7487, 0
        %v7534 = vsel %vm757, %v7488, 0
        %v7537 = vsel %vm757, %v7489, 0
        %v7540 = vsel %vm757, %v7490, 0
        %v7543 = vsel %vm757, %v7491, 0
        %v7546 = vsel %vm757, %v7492, 0
        %v7549 = vsel %vm757, %v7493, 0
        %v7552 = vsel %vm757, %v7494, 0
        %v7555 = vsel %vm757, %v7495, 0
        %v7558 = vsel %vm757, %v7496, 0
        %v7561 = vsel %vm757, %v7497, 0
        %7563 = vmatprep.subr.bf16.mxu0 0
        %7564 = vmatpush1.bf16.msra.mxu0 0
        %7565 = vmatprep.subr.bf16.mxu0 0
        %7566 = vmatpush1.bf16.msra.mxu0 0
        %7567 = vmatprep.subr.bf16.mxu0 0
        %7568 = vmatpush1.bf16.msra.mxu0 0
        %7569 = vmatprep.subr.bf16.mxu0 0
        %7570 = vmatpush1.bf16.msra.mxu0 0
        %7571 = vmatprep.subr.bf16.mxu0 0
        %7572 = vmatpush1.bf16.msra.mxu0 0
        %7573 = vmatprep.subr.bf16.mxu0 0
        %7574 = vmatpush1.bf16.msra.mxu0 0
        %7575 = vmatprep.subr.bf16.mxu0 0
        %7576 = vmatpush1.bf16.msra.mxu0 %v7512
        %7577 = vmatprep.subr.bf16.mxu0 0
        %7578 = vmatpush1.bf16.msra.mxu0 %v7511
        %7579 = vmatprep.subr.bf16.mxu0 0
        %7580 = vmatpush2.bf16.msra.mxu0 0
        %7581 = vmatprep.subr.bf16.mxu0 0
        %7582 = vmatpush2.bf16.msra.mxu0 0
        %7583 = vmatprep.subr.bf16.mxu0 0
        %7584 = vmatpush2.bf16.msra.mxu0 0
        %7585 = vmatprep.subr.bf16.mxu0 0
        %7586 = vmatpush2.bf16.msra.mxu0 0
        %7587 = vmatprep.subr.bf16.mxu0 0
        %7588 = vmatpush2.bf16.msra.mxu0 0
        %7589 = vmatprep.subr.bf16.mxu0 0
        %7590 = vmatpush2.bf16.msra.mxu0 0
        %7591 = vmatprep.subr.bf16.mxu0 0
        %7592 = vmatpush2.bf16.msra.mxu0 0
        %7593 = vmatprep.subr.bf16.mxu0 0
        %7594 = vmatpush2.bf16.msra.mxu0 0
        %7595 = vmatprep.mubr.bf16.mxu0 0
        %7596 = vmatmul.mubr.bf16.gmra.mxu0 %v7516
        %v7597 = vpop.f32.mrf.mxu0
        %v7598 = vadd.f32 0.0, %v7597
        %v7599 = vpop.f32.mrf.mxu0
        %v7600 = vpop.f32.mrf.mxu0
        %v7601 = vadd.f32 0.0, %v7600
        %v7602 = vpop.f32.mrf.mxu0
        %7603 = vmatprep.mubr.bf16.mxu0 0
        %7604 = vmatmul.mubr.bf16.gmra.mxu0 %v7519
        %v7605 = vpop.f32.mrf.mxu0
        %v7606 = vadd.f32 0.0, %v7605
        %v7607 = vpop.f32.mrf.mxu0
        %v7608 = vpop.f32.mrf.mxu0
        %v7609 = vadd.f32 0.0, %v7608
        %v7610 = vpop.f32.mrf.mxu0
        %7611 = vmatprep.mubr.bf16.mxu0 0
        %7612 = vmatmul.mubr.bf16.gmra.mxu0 %v7522
        %v7613 = vpop.f32.mrf.mxu0
        %v7614 = vadd.f32 0.0, %v7613
        %v7615 = vpop.f32.mrf.mxu0
        %v7616 = vpop.f32.mrf.mxu0
        %v7617 = vadd.f32 0.0, %v7616
        %v7618 = vpop.f32.mrf.mxu0
        %7619 = vmatprep.mubr.bf16.mxu0 0
        %7620 = vmatmul.mubr.bf16.gmra.mxu0 %v7525
        %v7621 = vpop.f32.mrf.mxu0
        %v7622 = vadd.f32 0.0, %v7621
        %v7623 = vpop.f32.mrf.mxu0
        %v7624 = vpop.f32.mrf.mxu0
        %v7625 = vadd.f32 0.0, %v7624
        %v7626 = vpop.f32.mrf.mxu0
        %7627 = vmatprep.mubr.bf16.mxu0 0
        %7628 = vmatmul.mubr.bf16.gmra.mxu0 %v7528
        %v7629 = vpop.f32.mrf.mxu0
        %v7630 = vadd.f32 0.0, %v7629
        %v7631 = vpop.f32.mrf.mxu0
        %v7632 = vpop.f32.mrf.mxu0
        %v7633 = vadd.f32 0.0, %v7632
        %v7634 = vpop.f32.mrf.mxu0
        %7635 = vmatprep.mubr.bf16.mxu0 0
        %7636 = vmatmul.mubr.bf16.gmra.mxu0 %v7531
        %v7637 = vpop.f32.mrf.mxu0
        %v7638 = vadd.f32 0.0, %v7637
        %v7639 = vpop.f32.mrf.mxu0
        %v7640 = vpop.f32.mrf.mxu0
        %v7641 = vadd.f32 0.0, %v7640
        %v7642 = vpop.f32.mrf.mxu0
        %7643 = vmatprep.mubr.bf16.mxu0 0
        %7644 = vmatmul.mubr.bf16.gmra.mxu0 %v7534
        %v7645 = vpop.f32.mrf.mxu0
        %v7646 = vadd.f32 0.0, %v7645
        %v7647 = vpop.f32.mrf.mxu0
        %v7648 = vpop.f32.mrf.mxu0
        %v7649 = vadd.f32 0.0, %v7648
        %v7650 = vpop.f32.mrf.mxu0
        %7651 = vmatprep.mubr.bf16.mxu0 0
        %7652 = vmatmul.mubr.bf16.gmra.mxu0 %v7537
        %v7653 = vpop.f32.mrf.mxu0
        %v7654 = vadd.f32 0.0, %v7653
        %v7655 = vpop.f32.mrf.mxu0
        %v7656 = vpop.f32.mrf.mxu0
        %v7657 = vadd.f32 0.0, %v7656
        %v7658 = vpop.f32.mrf.mxu0
        %7659 = vmatprep.mubr.bf16.mxu0 0
        %7660 = vmatmul.mubr.bf16.gmra.mxu0 %v7540
        %v7661 = vpop.f32.mrf.mxu0
        %v7662 = vadd.f32 0.0, %v7661
        %v7663 = vpop.f32.mrf.mxu0
        %v7664 = vpop.f32.mrf.mxu0
        %v7665 = vadd.f32 0.0, %v7664
        %v7666 = vpop.f32.mrf.mxu0
        %7667 = vmatprep.mubr.bf16.mxu0 0
        %7668 = vmatmul.mubr.bf16.gmra.mxu0 %v7543
        %v7669 = vpop.f32.mrf.mxu0
        %v7670 = vadd.f32 0.0, %v7669
        %v7671 = vpop.f32.mrf.mxu0
        %v7672 = vpop.f32.mrf.mxu0
        %v7673 = vadd.f32 0.0, %v7672
        %v7674 = vpop.f32.mrf.mxu0
        %7675 = vmatprep.mubr.bf16.mxu0 0
        %7676 = vmatmul.mubr.bf16.gmra.mxu0 %v7546
        %v7677 = vpop.f32.mrf.mxu0
        %v7678 = vadd.f32 0.0, %v7677
        %v7679 = vpop.f32.mrf.mxu0
        %v7680 = vpop.f32.mrf.mxu0
        %v7681 = vadd.f32 0.0, %v7680
        %v7682 = vpop.f32.mrf.mxu0
        %7683 = vmatprep.mubr.bf16.mxu0 0
        %7684 = vmatmul.mubr.bf16.gmra.mxu0 %v7549
        %v7685 = vpop.f32.mrf.mxu0
        %v7686 = vadd.f32 0.0, %v7685
        %v7687 = vpop.f32.mrf.mxu0
        %v7688 = vpop.f32.mrf.mxu0
        %v7689 = vadd.f32 0.0, %v7688
        %v7690 = vpop.f32.mrf.mxu0
        %7691 = vmatprep.mubr.bf16.mxu0 0
        %7692 = vmatmul.mubr.bf16.gmra.mxu0 %v7552
        %v7693 = vpop.f32.mrf.mxu0
        %v7694 = vadd.f32 0.0, %v7693
        %v7695 = vpop.f32.mrf.mxu0
        %v7696 = vpop.f32.mrf.mxu0
        %v7697 = vadd.f32 0.0, %v7696
        %v7698 = vpop.f32.mrf.mxu0
        %7699 = vmatprep.mubr.bf16.mxu0 0
        %7700 = vmatmul.mubr.bf16.gmra.mxu0 %v7555
        %v7701 = vpop.f32.mrf.mxu0
        %v7702 = vadd.f32 0.0, %v7701
        %v7703 = vpop.f32.mrf.mxu0
        %v7704 = vpop.f32.mrf.mxu0
        %v7705 = vadd.f32 0.0, %v7704
        %v7706 = vpop.f32.mrf.mxu0
        %7707 = vmatprep.mubr.bf16.mxu0 0
        %7708 = vmatmul.mubr.bf16.gmra.mxu0 %v7558
        %v7709 = vpop.f32.mrf.mxu0
        %v7710 = vadd.f32 0.0, %v7709
        %v7711 = vpop.f32.mrf.mxu0
        %v7712 = vpop.f32.mrf.mxu0
        %v7713 = vadd.f32 0.0, %v7712
        %v7714 = vpop.f32.mrf.mxu0
        %7715 = vmatprep.mubr.bf16.mxu0 0
        %7716 = vmatmul.mubr.bf16.gmra.mxu0 %v7561
        %v7717 = vpop.f32.mrf.mxu0
        %v7718 = vadd.f32 0.0, %v7717
        %v7719 = vpop.f32.mrf.mxu0
        %v7720 = vpop.f32.mrf.mxu0
        %v7721 = vadd.f32 0.0, %v7720
        %v7722 = vpop.f32.mrf.mxu0
        %7723 = vdwg.mxu0
        %v7724 = vadd.f32 %v7418, %v7598
        %v7725 = vadd.f32 %v7419, %v7601
        %v7726 = vadd.f32 %v7420, %v7606
        %v7727 = vadd.f32 %v7421, %v7609
        %v7728 = vadd.f32 %v7422, %v7614
        %v7729 = vadd.f32 %v7423, %v7617
        %v7730 = vadd.f32 %v7424, %v7622
        %v7731 = vadd.f32 %v7425, %v7625
        %v7732 = vadd.f32 %v7426, %v7630
        %v7733 = vadd.f32 %v7427, %v7633
        %v7734 = vadd.f32 %v7428, %v7638
        %v7735 = vadd.f32 %v7429, %v7641
        %v7736 = vadd.f32 %v7430, %v7646
        %v7737 = vadd.f32 %v7431, %v7649
        %v7738 = vadd.f32 %v7432, %v7654
        %v7739 = vadd.f32 %v7433, %v7657
        %v7740 = vadd.f32 %v7434, %v7662
        %v7741 = vadd.f32 %v7435, %v7665
        %v7742 = vadd.f32 %v7436, %v7670
        %v7743 = vadd.f32 %v7437, %v7673
        %v7744 = vadd.f32 %v7438, %v7678
        %v7745 = vadd.f32 %v7439, %v7681
        %v7746 = vadd.f32 %v7440, %v7686
        %v7747 = vadd.f32 %v7441, %v7689
        %v7748 = vadd.f32 %v7442, %v7694
        %v7749 = vadd.f32 %v7443, %v7697
        %v7750 = vadd.f32 %v7444, %v7702
        %v7751 = vadd.f32 %v7445, %v7705
        %v7752 = vadd.f32 %v7446, %v7710
        %v7753 = vadd.f32 %v7447, %v7713
        %v7754 = vadd.f32 %v7448, %v7718
        %v7755 = vadd.f32 %v7449, %v7721
        %s7756 = scalar_lea.vmem [#allocation2], 336
        %v7757 = vld [vmem:[%s7756] sm:$0xff]
        %v7758 = vld [vmem:[%s7756 + $0x10] sm:$0xff]
        %v7759 = vld [vmem:[%s7756 + $0x20] sm:$0xff]
        %v7760 = vld [vmem:[%s7756 + $0x30] sm:$0xff]
        %v7761 = vld [vmem:[%s7756 + $0x40] sm:$0xff]
        %v7762 = vld [vmem:[%s7756 + $0x50] sm:$0xff]
        %v7763 = vld [vmem:[%s7756 + $0x60] sm:$0xff]
        %v7764 = vld [vmem:[%s7756 + $0x70] sm:$0xff]
        %v7765 = vld [vmem:[%s7756 + $0xa0] sm:$0xff]
        %v7766 = vld [vmem:[%s7756 + $0xb0] sm:$0xff]
        %v7767 = vld [vmem:[%s7756 + $0xc0] sm:$0xff]
        %v7768 = vld [vmem:[%s7756 + $0xd0] sm:$0xff]
        %v7769 = vld [vmem:[%s7756 + $0xe0] sm:$0xff]
        %v7770 = vld [vmem:[%s7756 + $0xf0] sm:$0xff]
        %v7771 = vld [vmem:[%s7756 + $0x100] sm:$0xff]
        %v7772 = vld [vmem:[%s7756 + $0x110] sm:$0xff]
        %v7773 = vld [vmem:[%s7756 + $0x140] sm:$0xff]
        %v7774 = vld [vmem:[%s7756 + $0x150] sm:$0xff]
        %v7775 = vld [vmem:[%s7756 + $0x160] sm:$0xff]
        %v7776 = vld [vmem:[%s7756 + $0x170] sm:$0xff]
        %v7777 = vld [vmem:[%s7756 + $0x180] sm:$0xff]
        %v7778 = vld [vmem:[%s7756 + $0x190] sm:$0xff]
        %v7779 = vld [vmem:[%s7756 + $0x1a0] sm:$0xff]
        %v7780 = vld [vmem:[%s7756 + $0x1b0] sm:$0xff]
        %v7781 = vld [vmem:[%s7756 + $0x1e0] sm:$0xff]
        %v7782 = vld [vmem:[%s7756 + $0x1f0] sm:$0xff]
        %v7783 = vld [vmem:[%s7756 + $0x200] sm:$0xff]
        %v7784 = vld [vmem:[%s7756 + $0x210] sm:$0xff]
        %v7785 = vld [vmem:[%s7756 + $0x220] sm:$0xff]
        %v7786 = vld [vmem:[%s7756 + $0x230] sm:$0xff]
        %v7787 = vld [vmem:[%s7756 + $0x240] sm:$0xff]
        %v7788 = vld [vmem:[%s7756 + $0x250] sm:$0xff]
        %v7789 = vpack.c.bf16 %v7758, %v7757
        %v7790 = vpack.c.bf16 %v7760, %v7759
        %v7791 = vpack.c.bf16 %v7762, %v7761
        %v7792 = vpack.c.bf16 %v7764, %v7763
        %v7793 = vpack.c.bf16 %v7766, %v7765
        %v7794 = vpack.c.bf16 %v7768, %v7767
        %v7795 = vpack.c.bf16 %v7770, %v7769
        %v7796 = vpack.c.bf16 %v7772, %v7771
        %v7797 = vpack.c.bf16 %v7774, %v7773
        %v7798 = vpack.c.bf16 %v7776, %v7775
        %v7799 = vpack.c.bf16 %v7778, %v7777
        %v7800 = vpack.c.bf16 %v7780, %v7779
        %v7801 = vpack.c.bf16 %v7782, %v7781
        %v7802 = vpack.c.bf16 %v7784, %v7783
        %v7803 = vpack.c.bf16 %v7786, %v7785
        %v7804 = vpack.c.bf16 %v7788, %v7787
        %s7805 = scalar_lea.vmem [#allocation7], 336
        %v7806 = vld [vmem:[%s7805] sm:$0xf]
        %v7807 = vld [vmem:[%s7805 + $0x4] sm:$0xf]
        %v7808 = vld [vmem:[%s7805 + $0x8] sm:$0xf]
        %v7809 = vld [vmem:[%s7805 + $0xc] sm:$0xf]
        %v7814 = vunpack.c.l.b16 %v7806
        %v7815 = vunpack.c.l.b16 %v7807
        %v7816 = vunpack.c.l.b16 %v7808
        %v7817 = vunpack.c.l.b16 %v7809
        %v7818 = vpack.c.b16 %v7815, %v7814
        %v7819 = vpack.c.b16 %v7817, %v7816
        %v7823 = vsel %vm757, %v7789, 0
        %v7826 = vsel %vm757, %v7790, 0
        %v7829 = vsel %vm757, %v7791, 0
        %v7832 = vsel %vm757, %v7792, 0
        %v7835 = vsel %vm757, %v7793, 0
        %v7838 = vsel %vm757, %v7794, 0
        %v7841 = vsel %vm757, %v7795, 0
        %v7844 = vsel %vm757, %v7796, 0
        %v7847 = vsel %vm757, %v7797, 0
        %v7850 = vsel %vm757, %v7798, 0
        %v7853 = vsel %vm757, %v7799, 0
        %v7856 = vsel %vm757, %v7800, 0
        %v7859 = vsel %vm757, %v7801, 0
        %v7862 = vsel %vm757, %v7802, 0
        %v7865 = vsel %vm757, %v7803, 0
        %v7868 = vsel %vm757, %v7804, 0
        %7870 = vmatprep.subr.bf16.mxu0 0
        %7871 = vmatpush1.bf16.msra.mxu0 0
        %7872 = vmatprep.subr.bf16.mxu0 0
        %7873 = vmatpush1.bf16.msra.mxu0 0
        %7874 = vmatprep.subr.bf16.mxu0 0
        %7875 = vmatpush1.bf16.msra.mxu0 0
        %7876 = vmatprep.subr.bf16.mxu0 0
        %7877 = vmatpush1.bf16.msra.mxu0 0
        %7878 = vmatprep.subr.bf16.mxu0 0
        %7879 = vmatpush1.bf16.msra.mxu0 0
        %7880 = vmatprep.subr.bf16.mxu0 0
        %7881 = vmatpush1.bf16.msra.mxu0 0
        %7882 = vmatprep.subr.bf16.mxu0 0
        %7883 = vmatpush1.bf16.msra.mxu0 %v7819
        %7884 = vmatprep.subr.bf16.mxu0 0
        %7885 = vmatpush1.bf16.msra.mxu0 %v7818
        %7886 = vmatprep.subr.bf16.mxu0 0
        %7887 = vmatpush2.bf16.msra.mxu0 0
        %7888 = vmatprep.subr.bf16.mxu0 0
        %7889 = vmatpush2.bf16.msra.mxu0 0
        %7890 = vmatprep.subr.bf16.mxu0 0
        %7891 = vmatpush2.bf16.msra.mxu0 0
        %7892 = vmatprep.subr.bf16.mxu0 0
        %7893 = vmatpush2.bf16.msra.mxu0 0
        %7894 = vmatprep.subr.bf16.mxu0 0
        %7895 = vmatpush2.bf16.msra.mxu0 0
        %7896 = vmatprep.subr.bf16.mxu0 0
        %7897 = vmatpush2.bf16.msra.mxu0 0
        %7898 = vmatprep.subr.bf16.mxu0 0
        %7899 = vmatpush2.bf16.msra.mxu0 0
        %7900 = vmatprep.subr.bf16.mxu0 0
        %7901 = vmatpush2.bf16.msra.mxu0 0
        %7902 = vmatprep.mubr.bf16.mxu0 0
        %7903 = vmatmul.mubr.bf16.gmra.mxu0 %v7823
        %v7904 = vpop.f32.mrf.mxu0
        %v7905 = vadd.f32 0.0, %v7904
        %v7906 = vpop.f32.mrf.mxu0
        %v7907 = vpop.f32.mrf.mxu0
        %v7908 = vadd.f32 0.0, %v7907
        %v7909 = vpop.f32.mrf.mxu0
        %7910 = vmatprep.mubr.bf16.mxu0 0
        %7911 = vmatmul.mubr.bf16.gmra.mxu0 %v7826
        %v7912 = vpop.f32.mrf.mxu0
        %v7913 = vadd.f32 0.0, %v7912
        %v7914 = vpop.f32.mrf.mxu0
        %v7915 = vpop.f32.mrf.mxu0
        %v7916 = vadd.f32 0.0, %v7915
        %v7917 = vpop.f32.mrf.mxu0
        %7918 = vmatprep.mubr.bf16.mxu0 0
        %7919 = vmatmul.mubr.bf16.gmra.mxu0 %v7829
        %v7920 = vpop.f32.mrf.mxu0
        %v7921 = vadd.f32 0.0, %v7920
        %v7922 = vpop.f32.mrf.mxu0
        %v7923 = vpop.f32.mrf.mxu0
        %v7924 = vadd.f32 0.0, %v7923
        %v7925 = vpop.f32.mrf.mxu0
        %7926 = vmatprep.mubr.bf16.mxu0 0
        %7927 = vmatmul.mubr.bf16.gmra.mxu0 %v7832
        %v7928 = vpop.f32.mrf.mxu0
        %v7929 = vadd.f32 0.0, %v7928
        %v7930 = vpop.f32.mrf.mxu0
        %v7931 = vpop.f32.mrf.mxu0
        %v7932 = vadd.f32 0.0, %v7931
        %v7933 = vpop.f32.mrf.mxu0
        %7934 = vmatprep.mubr.bf16.mxu0 0
        %7935 = vmatmul.mubr.bf16.gmra.mxu0 %v7835
        %v7936 = vpop.f32.mrf.mxu0
        %v7937 = vadd.f32 0.0, %v7936
        %v7938 = vpop.f32.mrf.mxu0
        %v7939 = vpop.f32.mrf.mxu0
        %v7940 = vadd.f32 0.0, %v7939
        %v7941 = vpop.f32.mrf.mxu0
        %7942 = vmatprep.mubr.bf16.mxu0 0
        %7943 = vmatmul.mubr.bf16.gmra.mxu0 %v7838
        %v7944 = vpop.f32.mrf.mxu0
        %v7945 = vadd.f32 0.0, %v7944
        %v7946 = vpop.f32.mrf.mxu0
        %v7947 = vpop.f32.mrf.mxu0
        %v7948 = vadd.f32 0.0, %v7947
        %v7949 = vpop.f32.mrf.mxu0
        %7950 = vmatprep.mubr.bf16.mxu0 0
        %7951 = vmatmul.mubr.bf16.gmra.mxu0 %v7841
        %v7952 = vpop.f32.mrf.mxu0
        %v7953 = vadd.f32 0.0, %v7952
        %v7954 = vpop.f32.mrf.mxu0
        %v7955 = vpop.f32.mrf.mxu0
        %v7956 = vadd.f32 0.0, %v7955
        %v7957 = vpop.f32.mrf.mxu0
        %7958 = vmatprep.mubr.bf16.mxu0 0
        %7959 = vmatmul.mubr.bf16.gmra.mxu0 %v7844
        %v7960 = vpop.f32.mrf.mxu0
        %v7961 = vadd.f32 0.0, %v7960
        %v7962 = vpop.f32.mrf.mxu0
        %v7963 = vpop.f32.mrf.mxu0
        %v7964 = vadd.f32 0.0, %v7963
        %v7965 = vpop.f32.mrf.mxu0
        %7966 = vmatprep.mubr.bf16.mxu0 0
        %7967 = vmatmul.mubr.bf16.gmra.mxu0 %v7847
        %v7968 = vpop.f32.mrf.mxu0
        %v7969 = vadd.f32 0.0, %v7968
        %v7970 = vpop.f32.mrf.mxu0
        %v7971 = vpop.f32.mrf.mxu0
        %v7972 = vadd.f32 0.0, %v7971
        %v7973 = vpop.f32.mrf.mxu0
        %7974 = vmatprep.mubr.bf16.mxu0 0
        %7975 = vmatmul.mubr.bf16.gmra.mxu0 %v7850
        %v7976 = vpop.f32.mrf.mxu0
        %v7977 = vadd.f32 0.0, %v7976
        %v7978 = vpop.f32.mrf.mxu0
        %v7979 = vpop.f32.mrf.mxu0
        %v7980 = vadd.f32 0.0, %v7979
        %v7981 = vpop.f32.mrf.mxu0
        %7982 = vmatprep.mubr.bf16.mxu0 0
        %7983 = vmatmul.mubr.bf16.gmra.mxu0 %v7853
        %v7984 = vpop.f32.mrf.mxu0
        %v7985 = vadd.f32 0.0, %v7984
        %v7986 = vpop.f32.mrf.mxu0
        %v7987 = vpop.f32.mrf.mxu0
        %v7988 = vadd.f32 0.0, %v7987
        %v7989 = vpop.f32.mrf.mxu0
        %7990 = vmatprep.mubr.bf16.mxu0 0
        %7991 = vmatmul.mubr.bf16.gmra.mxu0 %v7856
        %v7992 = vpop.f32.mrf.mxu0
        %v7993 = vadd.f32 0.0, %v7992
        %v7994 = vpop.f32.mrf.mxu0
        %v7995 = vpop.f32.mrf.mxu0
        %v7996 = vadd.f32 0.0, %v7995
        %v7997 = vpop.f32.mrf.mxu0
        %7998 = vmatprep.mubr.bf16.mxu0 0
        %7999 = vmatmul.mubr.bf16.gmra.mxu0 %v7859
        %v8000 = vpop.f32.mrf.mxu0
        %v8001 = vadd.f32 0.0, %v8000
        %v8002 = vpop.f32.mrf.mxu0
        %v8003 = vpop.f32.mrf.mxu0
        %v8004 = vadd.f32 0.0, %v8003
        %v8005 = vpop.f32.mrf.mxu0
        %8006 = vmatprep.mubr.bf16.mxu0 0
        %8007 = vmatmul.mubr.bf16.gmra.mxu0 %v7862
        %v8008 = vpop.f32.mrf.mxu0
        %v8009 = vadd.f32 0.0, %v8008
        %v8010 = vpop.f32.mrf.mxu0
        %v8011 = vpop.f32.mrf.mxu0
        %v8012 = vadd.f32 0.0, %v8011
        %v8013 = vpop.f32.mrf.mxu0
        %8014 = vmatprep.mubr.bf16.mxu0 0
        %8015 = vmatmul.mubr.bf16.gmra.mxu0 %v7865
        %v8016 = vpop.f32.mrf.mxu0
        %v8017 = vadd.f32 0.0, %v8016
        %v8018 = vpop.f32.mrf.mxu0
        %v8019 = vpop.f32.mrf.mxu0
        %v8020 = vadd.f32 0.0, %v8019
        %v8021 = vpop.f32.mrf.mxu0
        %8022 = vmatprep.mubr.bf16.mxu0 0
        %8023 = vmatmul.mubr.bf16.gmra.mxu0 %v7868
        %v8024 = vpop.f32.mrf.mxu0
        %v8025 = vadd.f32 0.0, %v8024
        %v8026 = vpop.f32.mrf.mxu0
        %v8027 = vpop.f32.mrf.mxu0
        %v8028 = vadd.f32 0.0, %v8027
        %v8029 = vpop.f32.mrf.mxu0
        %8030 = vdwg.mxu0
        %v8031 = vadd.f32 %v7724, %v7905
        %v8032 = vadd.f32 %v7725, %v7908
        %v8033 = vadd.f32 %v7726, %v7913
        %v8034 = vadd.f32 %v7727, %v7916
        %v8035 = vadd.f32 %v7728, %v7921
        %v8036 = vadd.f32 %v7729, %v7924
        %v8037 = vadd.f32 %v7730, %v7929
        %v8038 = vadd.f32 %v7731, %v7932
        %v8039 = vadd.f32 %v7732, %v7937
        %v8040 = vadd.f32 %v7733, %v7940
        %v8041 = vadd.f32 %v7734, %v7945
        %v8042 = vadd.f32 %v7735, %v7948
        %v8043 = vadd.f32 %v7736, %v7953
        %v8044 = vadd.f32 %v7737, %v7956
        %v8045 = vadd.f32 %v7738, %v7961
        %v8046 = vadd.f32 %v7739, %v7964
        %v8047 = vadd.f32 %v7740, %v7969
        %v8048 = vadd.f32 %v7741, %v7972
        %v8049 = vadd.f32 %v7742, %v7977
        %v8050 = vadd.f32 %v7743, %v7980
        %v8051 = vadd.f32 %v7744, %v7985
        %v8052 = vadd.f32 %v7745, %v7988
        %v8053 = vadd.f32 %v7746, %v7993
        %v8054 = vadd.f32 %v7747, %v7996
        %v8055 = vadd.f32 %v7748, %v8001
        %v8056 = vadd.f32 %v7749, %v8004
        %v8057 = vadd.f32 %v7750, %v8009
        %v8058 = vadd.f32 %v7751, %v8012
        %v8059 = vadd.f32 %v7752, %v8017
        %v8060 = vadd.f32 %v7753, %v8020
        %v8061 = vadd.f32 %v7754, %v8025
        %v8062 = vadd.f32 %v7755, %v8028
        %v8063 = vld [vmem:[%s7756 + $0x1] sm:$0xff]
        %v8064 = vld [vmem:[%s7756 + $0x11] sm:$0xff]
        %v8065 = vld [vmem:[%s7756 + $0x21] sm:$0xff]
        %v8066 = vld [vmem:[%s7756 + $0x31] sm:$0xff]
        %v8067 = vld [vmem:[%s7756 + $0x41] sm:$0xff]
        %v8068 = vld [vmem:[%s7756 + $0x51] sm:$0xff]
        %v8069 = vld [vmem:[%s7756 + $0x61] sm:$0xff]
        %v8070 = vld [vmem:[%s7756 + $0x71] sm:$0xff]
        %v8071 = vld [vmem:[%s7756 + $0xa1] sm:$0xff]
        %v8072 = vld [vmem:[%s7756 + $0xb1] sm:$0xff]
        %v8073 = vld [vmem:[%s7756 + $0xc1] sm:$0xff]
        %v8074 = vld [vmem:[%s7756 + $0xd1] sm:$0xff]
        %v8075 = vld [vmem:[%s7756 + $0xe1] sm:$0xff]
        %v8076 = vld [vmem:[%s7756 + $0xf1] sm:$0xff]
        %v8077 = vld [vmem:[%s7756 + $0x101] sm:$0xff]
        %v8078 = vld [vmem:[%s7756 + $0x111] sm:$0xff]
        %v8079 = vld [vmem:[%s7756 + $0x141] sm:$0xff]
        %v8080 = vld [vmem:[%s7756 + $0x151] sm:$0xff]
        %v8081 = vld [vmem:[%s7756 + $0x161] sm:$0xff]
        %v8082 = vld [vmem:[%s7756 + $0x171] sm:$0xff]
        %v8083 = vld [vmem:[%s7756 + $0x181] sm:$0xff]
        %v8084 = vld [vmem:[%s7756 + $0x191] sm:$0xff]
        %v8085 = vld [vmem:[%s7756 + $0x1a1] sm:$0xff]
        %v8086 = vld [vmem:[%s7756 + $0x1b1] sm:$0xff]
        %v8087 = vld [vmem:[%s7756 + $0x1e1] sm:$0xff]
        %v8088 = vld [vmem:[%s7756 + $0x1f1] sm:$0xff]
        %v8089 = vld [vmem:[%s7756 + $0x201] sm:$0xff]
        %v8090 = vld [vmem:[%s7756 + $0x211] sm:$0xff]
        %v8091 = vld [vmem:[%s7756 + $0x221] sm:$0xff]
        %v8092 = vld [vmem:[%s7756 + $0x231] sm:$0xff]
        %v8093 = vld [vmem:[%s7756 + $0x241] sm:$0xff]
        %v8094 = vld [vmem:[%s7756 + $0x251] sm:$0xff]
        %v8095 = vpack.c.bf16 %v8064, %v8063
        %v8096 = vpack.c.bf16 %v8066, %v8065
        %v8097 = vpack.c.bf16 %v8068, %v8067
        %v8098 = vpack.c.bf16 %v8070, %v8069
        %v8099 = vpack.c.bf16 %v8072, %v8071
        %v8100 = vpack.c.bf16 %v8074, %v8073
        %v8101 = vpack.c.bf16 %v8076, %v8075
        %v8102 = vpack.c.bf16 %v8078, %v8077
        %v8103 = vpack.c.bf16 %v8080, %v8079
        %v8104 = vpack.c.bf16 %v8082, %v8081
        %v8105 = vpack.c.bf16 %v8084, %v8083
        %v8106 = vpack.c.bf16 %v8086, %v8085
        %v8107 = vpack.c.bf16 %v8088, %v8087
        %v8108 = vpack.c.bf16 %v8090, %v8089
        %v8109 = vpack.c.bf16 %v8092, %v8091
        %v8110 = vpack.c.bf16 %v8094, %v8093
        %s8111 = scalar_lea.vmem [#allocation7], 352
        %v8112 = vld [vmem:[%s8111] sm:$0xf]
        %v8113 = vld [vmem:[%s8111 + $0x4] sm:$0xf]
        %v8114 = vld [vmem:[%s8111 + $0x8] sm:$0xf]
        %v8115 = vld [vmem:[%s8111 + $0xc] sm:$0xf]
        %v8120 = vunpack.c.l.b16 %v8112
        %v8121 = vunpack.c.l.b16 %v8113
        %v8122 = vunpack.c.l.b16 %v8114
        %v8123 = vunpack.c.l.b16 %v8115
        %v8124 = vpack.c.b16 %v8121, %v8120
        %v8125 = vpack.c.b16 %v8123, %v8122
        %v8129 = vsel %vm757, %v8095, 0
        %v8132 = vsel %vm757, %v8096, 0
        %v8135 = vsel %vm757, %v8097, 0
        %v8138 = vsel %vm757, %v8098, 0
        %v8141 = vsel %vm757, %v8099, 0
        %v8144 = vsel %vm757, %v8100, 0
        %v8147 = vsel %vm757, %v8101, 0
        %v8150 = vsel %vm757, %v8102, 0
        %v8153 = vsel %vm757, %v8103, 0
        %v8156 = vsel %vm757, %v8104, 0
        %v8159 = vsel %vm757, %v8105, 0
        %v8162 = vsel %vm757, %v8106, 0
        %v8165 = vsel %vm757, %v8107, 0
        %v8168 = vsel %vm757, %v8108, 0
        %v8171 = vsel %vm757, %v8109, 0
        %v8174 = vsel %vm757, %v8110, 0
        %8176 = vmatprep.subr.bf16.mxu0 0
        %8177 = vmatpush1.bf16.msra.mxu0 0
        %8178 = vmatprep.subr.bf16.mxu0 0
        %8179 = vmatpush1.bf16.msra.mxu0 0
        %8180 = vmatprep.subr.bf16.mxu0 0
        %8181 = vmatpush1.bf16.msra.mxu0 0
        %8182 = vmatprep.subr.bf16.mxu0 0
        %8183 = vmatpush1.bf16.msra.mxu0 0
        %8184 = vmatprep.subr.bf16.mxu0 0
        %8185 = vmatpush1.bf16.msra.mxu0 0
        %8186 = vmatprep.subr.bf16.mxu0 0
        %8187 = vmatpush1.bf16.msra.mxu0 0
        %8188 = vmatprep.subr.bf16.mxu0 0
        %8189 = vmatpush1.bf16.msra.mxu0 %v8125
        %8190 = vmatprep.subr.bf16.mxu0 0
        %8191 = vmatpush1.bf16.msra.mxu0 %v8124
        %8192 = vmatprep.subr.bf16.mxu0 0
        %8193 = vmatpush2.bf16.msra.mxu0 0
        %8194 = vmatprep.subr.bf16.mxu0 0
        %8195 = vmatpush2.bf16.msra.mxu0 0
        %8196 = vmatprep.subr.bf16.mxu0 0
        %8197 = vmatpush2.bf16.msra.mxu0 0
        %8198 = vmatprep.subr.bf16.mxu0 0
        %8199 = vmatpush2.bf16.msra.mxu0 0
        %8200 = vmatprep.subr.bf16.mxu0 0
        %8201 = vmatpush2.bf16.msra.mxu0 0
        %8202 = vmatprep.subr.bf16.mxu0 0
        %8203 = vmatpush2.bf16.msra.mxu0 0
        %8204 = vmatprep.subr.bf16.mxu0 0
        %8205 = vmatpush2.bf16.msra.mxu0 0
        %8206 = vmatprep.subr.bf16.mxu0 0
        %8207 = vmatpush2.bf16.msra.mxu0 0
        %8208 = vmatprep.mubr.bf16.mxu0 0
        %8209 = vmatmul.mubr.bf16.gmra.mxu0 %v8129
        %v8210 = vpop.f32.mrf.mxu0
        %v8211 = vadd.f32 0.0, %v8210
        %v8212 = vpop.f32.mrf.mxu0
        %v8213 = vpop.f32.mrf.mxu0
        %v8214 = vadd.f32 0.0, %v8213
        %v8215 = vpop.f32.mrf.mxu0
        %8216 = vmatprep.mubr.bf16.mxu0 0
        %8217 = vmatmul.mubr.bf16.gmra.mxu0 %v8132
        %v8218 = vpop.f32.mrf.mxu0
        %v8219 = vadd.f32 0.0, %v8218
        %v8220 = vpop.f32.mrf.mxu0
        %v8221 = vpop.f32.mrf.mxu0
        %v8222 = vadd.f32 0.0, %v8221
        %v8223 = vpop.f32.mrf.mxu0
        %8224 = vmatprep.mubr.bf16.mxu0 0
        %8225 = vmatmul.mubr.bf16.gmra.mxu0 %v8135
        %v8226 = vpop.f32.mrf.mxu0
        %v8227 = vadd.f32 0.0, %v8226
        %v8228 = vpop.f32.mrf.mxu0
        %v8229 = vpop.f32.mrf.mxu0
        %v8230 = vadd.f32 0.0, %v8229
        %v8231 = vpop.f32.mrf.mxu0
        %8232 = vmatprep.mubr.bf16.mxu0 0
        %8233 = vmatmul.mubr.bf16.gmra.mxu0 %v8138
        %v8234 = vpop.f32.mrf.mxu0
        %v8235 = vadd.f32 0.0, %v8234
        %v8236 = vpop.f32.mrf.mxu0
        %v8237 = vpop.f32.mrf.mxu0
        %v8238 = vadd.f32 0.0, %v8237
        %v8239 = vpop.f32.mrf.mxu0
        %8240 = vmatprep.mubr.bf16.mxu0 0
        %8241 = vmatmul.mubr.bf16.gmra.mxu0 %v8141
        %v8242 = vpop.f32.mrf.mxu0
        %v8243 = vadd.f32 0.0, %v8242
        %v8244 = vpop.f32.mrf.mxu0
        %v8245 = vpop.f32.mrf.mxu0
        %v8246 = vadd.f32 0.0, %v8245
        %v8247 = vpop.f32.mrf.mxu0
        %8248 = vmatprep.mubr.bf16.mxu0 0
        %8249 = vmatmul.mubr.bf16.gmra.mxu0 %v8144
        %v8250 = vpop.f32.mrf.mxu0
        %v8251 = vadd.f32 0.0, %v8250
        %v8252 = vpop.f32.mrf.mxu0
        %v8253 = vpop.f32.mrf.mxu0
        %v8254 = vadd.f32 0.0, %v8253
        %v8255 = vpop.f32.mrf.mxu0
        %8256 = vmatprep.mubr.bf16.mxu0 0
        %8257 = vmatmul.mubr.bf16.gmra.mxu0 %v8147
        %v8258 = vpop.f32.mrf.mxu0
        %v8259 = vadd.f32 0.0, %v8258
        %v8260 = vpop.f32.mrf.mxu0
        %v8261 = vpop.f32.mrf.mxu0
        %v8262 = vadd.f32 0.0, %v8261
        %v8263 = vpop.f32.mrf.mxu0
        %8264 = vmatprep.mubr.bf16.mxu0 0
        %8265 = vmatmul.mubr.bf16.gmra.mxu0 %v8150
        %v8266 = vpop.f32.mrf.mxu0
        %v8267 = vadd.f32 0.0, %v8266
        %v8268 = vpop.f32.mrf.mxu0
        %v8269 = vpop.f32.mrf.mxu0
        %v8270 = vadd.f32 0.0, %v8269
        %v8271 = vpop.f32.mrf.mxu0
        %8272 = vmatprep.mubr.bf16.mxu0 0
        %8273 = vmatmul.mubr.bf16.gmra.mxu0 %v8153
        %v8274 = vpop.f32.mrf.mxu0
        %v8275 = vadd.f32 0.0, %v8274
        %v8276 = vpop.f32.mrf.mxu0
        %v8277 = vpop.f32.mrf.mxu0
        %v8278 = vadd.f32 0.0, %v8277
        %v8279 = vpop.f32.mrf.mxu0
        %8280 = vmatprep.mubr.bf16.mxu0 0
        %8281 = vmatmul.mubr.bf16.gmra.mxu0 %v8156
        %v8282 = vpop.f32.mrf.mxu0
        %v8283 = vadd.f32 0.0, %v8282
        %v8284 = vpop.f32.mrf.mxu0
        %v8285 = vpop.f32.mrf.mxu0
        %v8286 = vadd.f32 0.0, %v8285
        %v8287 = vpop.f32.mrf.mxu0
        %8288 = vmatprep.mubr.bf16.mxu0 0
        %8289 = vmatmul.mubr.bf16.gmra.mxu0 %v8159
        %v8290 = vpop.f32.mrf.mxu0
        %v8291 = vadd.f32 0.0, %v8290
        %v8292 = vpop.f32.mrf.mxu0
        %v8293 = vpop.f32.mrf.mxu0
        %v8294 = vadd.f32 0.0, %v8293
        %v8295 = vpop.f32.mrf.mxu0
        %8296 = vmatprep.mubr.bf16.mxu0 0
        %8297 = vmatmul.mubr.bf16.gmra.mxu0 %v8162
        %v8298 = vpop.f32.mrf.mxu0
        %v8299 = vadd.f32 0.0, %v8298
        %v8300 = vpop.f32.mrf.mxu0
        %v8301 = vpop.f32.mrf.mxu0
        %v8302 = vadd.f32 0.0, %v8301
        %v8303 = vpop.f32.mrf.mxu0
        %8304 = vmatprep.mubr.bf16.mxu0 0
        %8305 = vmatmul.mubr.bf16.gmra.mxu0 %v8165
        %v8306 = vpop.f32.mrf.mxu0
        %v8307 = vadd.f32 0.0, %v8306
        %v8308 = vpop.f32.mrf.mxu0
        %v8309 = vpop.f32.mrf.mxu0
        %v8310 = vadd.f32 0.0, %v8309
        %v8311 = vpop.f32.mrf.mxu0
        %8312 = vmatprep.mubr.bf16.mxu0 0
        %8313 = vmatmul.mubr.bf16.gmra.mxu0 %v8168
        %v8314 = vpop.f32.mrf.mxu0
        %v8315 = vadd.f32 0.0, %v8314
        %v8316 = vpop.f32.mrf.mxu0
        %v8317 = vpop.f32.mrf.mxu0
        %v8318 = vadd.f32 0.0, %v8317
        %v8319 = vpop.f32.mrf.mxu0
        %8320 = vmatprep.mubr.bf16.mxu0 0
        %8321 = vmatmul.mubr.bf16.gmra.mxu0 %v8171
        %v8322 = vpop.f32.mrf.mxu0
        %v8323 = vadd.f32 0.0, %v8322
        %v8324 = vpop.f32.mrf.mxu0
        %v8325 = vpop.f32.mrf.mxu0
        %v8326 = vadd.f32 0.0, %v8325
        %v8327 = vpop.f32.mrf.mxu0
        %8328 = vmatprep.mubr.bf16.mxu0 0
        %8329 = vmatmul.mubr.bf16.gmra.mxu0 %v8174
        %v8330 = vpop.f32.mrf.mxu0
        %v8331 = vadd.f32 0.0, %v8330
        %v8332 = vpop.f32.mrf.mxu0
        %v8333 = vpop.f32.mrf.mxu0
        %v8334 = vadd.f32 0.0, %v8333
        %v8335 = vpop.f32.mrf.mxu0
        %8336 = vdwg.mxu0
        %v8337 = vadd.f32 %v8031, %v8211
        %v8338 = vadd.f32 %v8032, %v8214
        %v8339 = vadd.f32 %v8033, %v8219
        %v8340 = vadd.f32 %v8034, %v8222
        %v8341 = vadd.f32 %v8035, %v8227
        %v8342 = vadd.f32 %v8036, %v8230
        %v8343 = vadd.f32 %v8037, %v8235
        %v8344 = vadd.f32 %v8038, %v8238
        %v8345 = vadd.f32 %v8039, %v8243
        %v8346 = vadd.f32 %v8040, %v8246
        %v8347 = vadd.f32 %v8041, %v8251
        %v8348 = vadd.f32 %v8042, %v8254
        %v8349 = vadd.f32 %v8043, %v8259
        %v8350 = vadd.f32 %v8044, %v8262
        %v8351 = vadd.f32 %v8045, %v8267
        %v8352 = vadd.f32 %v8046, %v8270
        %v8353 = vadd.f32 %v8047, %v8275
        %v8354 = vadd.f32 %v8048, %v8278
        %v8355 = vadd.f32 %v8049, %v8283
        %v8356 = vadd.f32 %v8050, %v8286
        %v8357 = vadd.f32 %v8051, %v8291
        %v8358 = vadd.f32 %v8052, %v8294
        %v8359 = vadd.f32 %v8053, %v8299
        %v8360 = vadd.f32 %v8054, %v8302
        %v8361 = vadd.f32 %v8055, %v8307
        %v8362 = vadd.f32 %v8056, %v8310
        %v8363 = vadd.f32 %v8057, %v8315
        %v8364 = vadd.f32 %v8058, %v8318
        %v8365 = vadd.f32 %v8059, %v8323
        %v8366 = vadd.f32 %v8060, %v8326
        %v8367 = vadd.f32 %v8061, %v8331
        %v8368 = vadd.f32 %v8062, %v8334
        %v8369 = vld [vmem:[%s7756 + $0x2] sm:$0xff]
        %v8370 = vld [vmem:[%s7756 + $0x12] sm:$0xff]
        %v8371 = vld [vmem:[%s7756 + $0x22] sm:$0xff]
        %v8372 = vld [vmem:[%s7756 + $0x32] sm:$0xff]
        %v8373 = vld [vmem:[%s7756 + $0x42] sm:$0xff]
        %v8374 = vld [vmem:[%s7756 + $0x52] sm:$0xff]
        %v8375 = vld [vmem:[%s7756 + $0x62] sm:$0xff]
        %v8376 = vld [vmem:[%s7756 + $0x72] sm:$0xff]
        %v8377 = vld [vmem:[%s7756 + $0xa2] sm:$0xff]
        %v8378 = vld [vmem:[%s7756 + $0xb2] sm:$0xff]
        %v8379 = vld [vmem:[%s7756 + $0xc2] sm:$0xff]
        %v8380 = vld [vmem:[%s7756 + $0xd2] sm:$0xff]
        %v8381 = vld [vmem:[%s7756 + $0xe2] sm:$0xff]
        %v8382 = vld [vmem:[%s7756 + $0xf2] sm:$0xff]
        %v8383 = vld [vmem:[%s7756 + $0x102] sm:$0xff]
        %v8384 = vld [vmem:[%s7756 + $0x112] sm:$0xff]
        %v8385 = vld [vmem:[%s7756 + $0x142] sm:$0xff]
        %v8386 = vld [vmem:[%s7756 + $0x152] sm:$0xff]
        %v8387 = vld [vmem:[%s7756 + $0x162] sm:$0xff]
        %v8388 = vld [vmem:[%s7756 + $0x172] sm:$0xff]
        %v8389 = vld [vmem:[%s7756 + $0x182] sm:$0xff]
        %v8390 = vld [vmem:[%s7756 + $0x192] sm:$0xff]
        %v8391 = vld [vmem:[%s7756 + $0x1a2] sm:$0xff]
        %v8392 = vld [vmem:[%s7756 + $0x1b2] sm:$0xff]
        %v8393 = vld [vmem:[%s7756 + $0x1e2] sm:$0xff]
        %v8394 = vld [vmem:[%s7756 + $0x1f2] sm:$0xff]
        %v8395 = vld [vmem:[%s7756 + $0x202] sm:$0xff]
        %v8396 = vld [vmem:[%s7756 + $0x212] sm:$0xff]
        %v8397 = vld [vmem:[%s7756 + $0x222] sm:$0xff]
        %v8398 = vld [vmem:[%s7756 + $0x232] sm:$0xff]
        %v8399 = vld [vmem:[%s7756 + $0x242] sm:$0xff]
        %v8400 = vld [vmem:[%s7756 + $0x252] sm:$0xff]
        %v8401 = vpack.c.bf16 %v8370, %v8369
        %v8402 = vpack.c.bf16 %v8372, %v8371
        %v8403 = vpack.c.bf16 %v8374, %v8373
        %v8404 = vpack.c.bf16 %v8376, %v8375
        %v8405 = vpack.c.bf16 %v8378, %v8377
        %v8406 = vpack.c.bf16 %v8380, %v8379
        %v8407 = vpack.c.bf16 %v8382, %v8381
        %v8408 = vpack.c.bf16 %v8384, %v8383
        %v8409 = vpack.c.bf16 %v8386, %v8385
        %v8410 = vpack.c.bf16 %v8388, %v8387
        %v8411 = vpack.c.bf16 %v8390, %v8389
        %v8412 = vpack.c.bf16 %v8392, %v8391
        %v8413 = vpack.c.bf16 %v8394, %v8393
        %v8414 = vpack.c.bf16 %v8396, %v8395
        %v8415 = vpack.c.bf16 %v8398, %v8397
        %v8416 = vpack.c.bf16 %v8400, %v8399
        %s8417 = scalar_lea.vmem [#allocation7], 368
        %v8418 = vld [vmem:[%s8417] sm:$0xf]
        %v8419 = vld [vmem:[%s8417 + $0x4] sm:$0xf]
        %v8420 = vld [vmem:[%s8417 + $0x8] sm:$0xf]
        %v8421 = vld [vmem:[%s8417 + $0xc] sm:$0xf]
        %v8426 = vunpack.c.l.b16 %v8418
        %v8427 = vunpack.c.l.b16 %v8419
        %v8428 = vunpack.c.l.b16 %v8420
        %v8429 = vunpack.c.l.b16 %v8421
        %v8430 = vpack.c.b16 %v8427, %v8426
        %v8431 = vpack.c.b16 %v8429, %v8428
        %v8435 = vsel %vm757, %v8401, 0
        %v8438 = vsel %vm757, %v8402, 0
        %v8441 = vsel %vm757, %v8403, 0
        %v8444 = vsel %vm757, %v8404, 0
        %v8447 = vsel %vm757, %v8405, 0
        %v8450 = vsel %vm757, %v8406, 0
        %v8453 = vsel %vm757, %v8407, 0
        %v8456 = vsel %vm757, %v8408, 0
        %v8459 = vsel %vm757, %v8409, 0
        %v8462 = vsel %vm757, %v8410, 0
        %v8465 = vsel %vm757, %v8411, 0
        %v8468 = vsel %vm757, %v8412, 0
        %v8471 = vsel %vm757, %v8413, 0
        %v8474 = vsel %vm757, %v8414, 0
        %v8477 = vsel %vm757, %v8415, 0
        %v8480 = vsel %vm757, %v8416, 0
        %8482 = vmatprep.subr.bf16.mxu0 0
        %8483 = vmatpush1.bf16.msra.mxu0 0
        %8484 = vmatprep.subr.bf16.mxu0 0
        %8485 = vmatpush1.bf16.msra.mxu0 0
        %8486 = vmatprep.subr.bf16.mxu0 0
        %8487 = vmatpush1.bf16.msra.mxu0 0
        %8488 = vmatprep.subr.bf16.mxu0 0
        %8489 = vmatpush1.bf16.msra.mxu0 0
        %8490 = vmatprep.subr.bf16.mxu0 0
        %8491 = vmatpush1.bf16.msra.mxu0 0
        %8492 = vmatprep.subr.bf16.mxu0 0
        %8493 = vmatpush1.bf16.msra.mxu0 0
        %8494 = vmatprep.subr.bf16.mxu0 0
        %8495 = vmatpush1.bf16.msra.mxu0 %v8431
        %8496 = vmatprep.subr.bf16.mxu0 0
        %8497 = vmatpush1.bf16.msra.mxu0 %v8430
        %8498 = vmatprep.subr.bf16.mxu0 0
        %8499 = vmatpush2.bf16.msra.mxu0 0
        %8500 = vmatprep.subr.bf16.mxu0 0
        %8501 = vmatpush2.bf16.msra.mxu0 0
        %8502 = vmatprep.subr.bf16.mxu0 0
        %8503 = vmatpush2.bf16.msra.mxu0 0
        %8504 = vmatprep.subr.bf16.mxu0 0
        %8505 = vmatpush2.bf16.msra.mxu0 0
        %8506 = vmatprep.subr.bf16.mxu0 0
        %8507 = vmatpush2.bf16.msra.mxu0 0
        %8508 = vmatprep.subr.bf16.mxu0 0
        %8509 = vmatpush2.bf16.msra.mxu0 0
        %8510 = vmatprep.subr.bf16.mxu0 0
        %8511 = vmatpush2.bf16.msra.mxu0 0
        %8512 = vmatprep.subr.bf16.mxu0 0
        %8513 = vmatpush2.bf16.msra.mxu0 0
        %8514 = vmatprep.mubr.bf16.mxu0 0
        %8515 = vmatmul.mubr.bf16.gmra.mxu0 %v8435
        %v8516 = vpop.f32.mrf.mxu0
        %v8517 = vadd.f32 0.0, %v8516
        %v8518 = vpop.f32.mrf.mxu0
        %v8519 = vpop.f32.mrf.mxu0
        %v8520 = vadd.f32 0.0, %v8519
        %v8521 = vpop.f32.mrf.mxu0
        %8522 = vmatprep.mubr.bf16.mxu0 0
        %8523 = vmatmul.mubr.bf16.gmra.mxu0 %v8438
        %v8524 = vpop.f32.mrf.mxu0
        %v8525 = vadd.f32 0.0, %v8524
        %v8526 = vpop.f32.mrf.mxu0
        %v8527 = vpop.f32.mrf.mxu0
        %v8528 = vadd.f32 0.0, %v8527
        %v8529 = vpop.f32.mrf.mxu0
        %8530 = vmatprep.mubr.bf16.mxu0 0
        %8531 = vmatmul.mubr.bf16.gmra.mxu0 %v8441
        %v8532 = vpop.f32.mrf.mxu0
        %v8533 = vadd.f32 0.0, %v8532
        %v8534 = vpop.f32.mrf.mxu0
        %v8535 = vpop.f32.mrf.mxu0
        %v8536 = vadd.f32 0.0, %v8535
        %v8537 = vpop.f32.mrf.mxu0
        %8538 = vmatprep.mubr.bf16.mxu0 0
        %8539 = vmatmul.mubr.bf16.gmra.mxu0 %v8444
        %v8540 = vpop.f32.mrf.mxu0
        %v8541 = vadd.f32 0.0, %v8540
        %v8542 = vpop.f32.mrf.mxu0
        %v8543 = vpop.f32.mrf.mxu0
        %v8544 = vadd.f32 0.0, %v8543
        %v8545 = vpop.f32.mrf.mxu0
        %8546 = vmatprep.mubr.bf16.mxu0 0
        %8547 = vmatmul.mubr.bf16.gmra.mxu0 %v8447
        %v8548 = vpop.f32.mrf.mxu0
        %v8549 = vadd.f32 0.0, %v8548
        %v8550 = vpop.f32.mrf.mxu0
        %v8551 = vpop.f32.mrf.mxu0
        %v8552 = vadd.f32 0.0, %v8551
        %v8553 = vpop.f32.mrf.mxu0
        %8554 = vmatprep.mubr.bf16.mxu0 0
        %8555 = vmatmul.mubr.bf16.gmra.mxu0 %v8450
        %v8556 = vpop.f32.mrf.mxu0
        %v8557 = vadd.f32 0.0, %v8556
        %v8558 = vpop.f32.mrf.mxu0
        %v8559 = vpop.f32.mrf.mxu0
        %v8560 = vadd.f32 0.0, %v8559
        %v8561 = vpop.f32.mrf.mxu0
        %8562 = vmatprep.mubr.bf16.mxu0 0
        %8563 = vmatmul.mubr.bf16.gmra.mxu0 %v8453
        %v8564 = vpop.f32.mrf.mxu0
        %v8565 = vadd.f32 0.0, %v8564
        %v8566 = vpop.f32.mrf.mxu0
        %v8567 = vpop.f32.mrf.mxu0
        %v8568 = vadd.f32 0.0, %v8567
        %v8569 = vpop.f32.mrf.mxu0
        %8570 = vmatprep.mubr.bf16.mxu0 0
        %8571 = vmatmul.mubr.bf16.gmra.mxu0 %v8456
        %v8572 = vpop.f32.mrf.mxu0
        %v8573 = vadd.f32 0.0, %v8572
        %v8574 = vpop.f32.mrf.mxu0
        %v8575 = vpop.f32.mrf.mxu0
        %v8576 = vadd.f32 0.0, %v8575
        %v8577 = vpop.f32.mrf.mxu0
        %8578 = vmatprep.mubr.bf16.mxu0 0
        %8579 = vmatmul.mubr.bf16.gmra.mxu0 %v8459
        %v8580 = vpop.f32.mrf.mxu0
        %v8581 = vadd.f32 0.0, %v8580
        %v8582 = vpop.f32.mrf.mxu0
        %v8583 = vpop.f32.mrf.mxu0
        %v8584 = vadd.f32 0.0, %v8583
        %v8585 = vpop.f32.mrf.mxu0
        %8586 = vmatprep.mubr.bf16.mxu0 0
        %8587 = vmatmul.mubr.bf16.gmra.mxu0 %v8462
        %v8588 = vpop.f32.mrf.mxu0
        %v8589 = vadd.f32 0.0, %v8588
        %v8590 = vpop.f32.mrf.mxu0
        %v8591 = vpop.f32.mrf.mxu0
        %v8592 = vadd.f32 0.0, %v8591
        %v8593 = vpop.f32.mrf.mxu0
        %8594 = vmatprep.mubr.bf16.mxu0 0
        %8595 = vmatmul.mubr.bf16.gmra.mxu0 %v8465
        %v8596 = vpop.f32.mrf.mxu0
        %v8597 = vadd.f32 0.0, %v8596
        %v8598 = vpop.f32.mrf.mxu0
        %v8599 = vpop.f32.mrf.mxu0
        %v8600 = vadd.f32 0.0, %v8599
        %v8601 = vpop.f32.mrf.mxu0
        %8602 = vmatprep.mubr.bf16.mxu0 0
        %8603 = vmatmul.mubr.bf16.gmra.mxu0 %v8468
        %v8604 = vpop.f32.mrf.mxu0
        %v8605 = vadd.f32 0.0, %v8604
        %v8606 = vpop.f32.mrf.mxu0
        %v8607 = vpop.f32.mrf.mxu0
        %v8608 = vadd.f32 0.0, %v8607
        %v8609 = vpop.f32.mrf.mxu0
        %8610 = vmatprep.mubr.bf16.mxu0 0
        %8611 = vmatmul.mubr.bf16.gmra.mxu0 %v8471
        %v8612 = vpop.f32.mrf.mxu0
        %v8613 = vadd.f32 0.0, %v8612
        %v8614 = vpop.f32.mrf.mxu0
        %v8615 = vpop.f32.mrf.mxu0
        %v8616 = vadd.f32 0.0, %v8615
        %v8617 = vpop.f32.mrf.mxu0
        %8618 = vmatprep.mubr.bf16.mxu0 0
        %8619 = vmatmul.mubr.bf16.gmra.mxu0 %v8474
        %v8620 = vpop.f32.mrf.mxu0
        %v8621 = vadd.f32 0.0, %v8620
        %v8622 = vpop.f32.mrf.mxu0
        %v8623 = vpop.f32.mrf.mxu0
        %v8624 = vadd.f32 0.0, %v8623
        %v8625 = vpop.f32.mrf.mxu0
        %8626 = vmatprep.mubr.bf16.mxu0 0
        %8627 = vmatmul.mubr.bf16.gmra.mxu0 %v8477
        %v8628 = vpop.f32.mrf.mxu0
        %v8629 = vadd.f32 0.0, %v8628
        %v8630 = vpop.f32.mrf.mxu0
        %v8631 = vpop.f32.mrf.mxu0
        %v8632 = vadd.f32 0.0, %v8631
        %v8633 = vpop.f32.mrf.mxu0
        %8634 = vmatprep.mubr.bf16.mxu0 0
        %8635 = vmatmul.mubr.bf16.gmra.mxu0 %v8480
        %v8636 = vpop.f32.mrf.mxu0
        %v8637 = vadd.f32 0.0, %v8636
        %v8638 = vpop.f32.mrf.mxu0
        %v8639 = vpop.f32.mrf.mxu0
        %v8640 = vadd.f32 0.0, %v8639
        %v8641 = vpop.f32.mrf.mxu0
        %8642 = vdwg.mxu0
        %v8643 = vadd.f32 %v8337, %v8517
        %v8644 = vadd.f32 %v8338, %v8520
        %v8645 = vadd.f32 %v8339, %v8525
        %v8646 = vadd.f32 %v8340, %v8528
        %v8647 = vadd.f32 %v8341, %v8533
        %v8648 = vadd.f32 %v8342, %v8536
        %v8649 = vadd.f32 %v8343, %v8541
        %v8650 = vadd.f32 %v8344, %v8544
        %v8651 = vadd.f32 %v8345, %v8549
        %v8652 = vadd.f32 %v8346, %v8552
        %v8653 = vadd.f32 %v8347, %v8557
        %v8654 = vadd.f32 %v8348, %v8560
        %v8655 = vadd.f32 %v8349, %v8565
        %v8656 = vadd.f32 %v8350, %v8568
        %v8657 = vadd.f32 %v8351, %v8573
        %v8658 = vadd.f32 %v8352, %v8576
        %v8659 = vadd.f32 %v8353, %v8581
        %v8660 = vadd.f32 %v8354, %v8584
        %v8661 = vadd.f32 %v8355, %v8589
        %v8662 = vadd.f32 %v8356, %v8592
        %v8663 = vadd.f32 %v8357, %v8597
        %v8664 = vadd.f32 %v8358, %v8600
        %v8665 = vadd.f32 %v8359, %v8605
        %v8666 = vadd.f32 %v8360, %v8608
        %v8667 = vadd.f32 %v8361, %v8613
        %v8668 = vadd.f32 %v8362, %v8616
        %v8669 = vadd.f32 %v8363, %v8621
        %v8670 = vadd.f32 %v8364, %v8624
        %v8671 = vadd.f32 %v8365, %v8629
        %v8672 = vadd.f32 %v8366, %v8632
        %v8673 = vadd.f32 %v8367, %v8637
        %v8674 = vadd.f32 %v8368, %v8640
        %s8675 = scalar_lea.vmem [#allocation2], 352
        %v8676 = vld [vmem:[%s8675] sm:$0xff]
        %v8677 = vld [vmem:[%s8675 + $0x10] sm:$0xff]
        %v8678 = vld [vmem:[%s8675 + $0x20] sm:$0xff]
        %v8679 = vld [vmem:[%s8675 + $0x30] sm:$0xff]
        %v8680 = vld [vmem:[%s8675 + $0x40] sm:$0xff]
        %v8681 = vld [vmem:[%s8675 + $0x50] sm:$0xff]
        %v8682 = vld [vmem:[%s8675 + $0x60] sm:$0xff]
        %v8683 = vld [vmem:[%s8675 + $0x70] sm:$0xff]
        %v8684 = vld [vmem:[%s8675 + $0xa0] sm:$0xff]
        %v8685 = vld [vmem:[%s8675 + $0xb0] sm:$0xff]
        %v8686 = vld [vmem:[%s8675 + $0xc0] sm:$0xff]
        %v8687 = vld [vmem:[%s8675 + $0xd0] sm:$0xff]
        %v8688 = vld [vmem:[%s8675 + $0xe0] sm:$0xff]
        %v8689 = vld [vmem:[%s8675 + $0xf0] sm:$0xff]
        %v8690 = vld [vmem:[%s8675 + $0x100] sm:$0xff]
        %v8691 = vld [vmem:[%s8675 + $0x110] sm:$0xff]
        %v8692 = vld [vmem:[%s8675 + $0x140] sm:$0xff]
        %v8693 = vld [vmem:[%s8675 + $0x150] sm:$0xff]
        %v8694 = vld [vmem:[%s8675 + $0x160] sm:$0xff]
        %v8695 = vld [vmem:[%s8675 + $0x170] sm:$0xff]
        %v8696 = vld [vmem:[%s8675 + $0x180] sm:$0xff]
        %v8697 = vld [vmem:[%s8675 + $0x190] sm:$0xff]
        %v8698 = vld [vmem:[%s8675 + $0x1a0] sm:$0xff]
        %v8699 = vld [vmem:[%s8675 + $0x1b0] sm:$0xff]
        %v8700 = vld [vmem:[%s8675 + $0x1e0] sm:$0xff]
        %v8701 = vld [vmem:[%s8675 + $0x1f0] sm:$0xff]
        %v8702 = vld [vmem:[%s8675 + $0x200] sm:$0xff]
        %v8703 = vld [vmem:[%s8675 + $0x210] sm:$0xff]
        %v8704 = vld [vmem:[%s8675 + $0x220] sm:$0xff]
        %v8705 = vld [vmem:[%s8675 + $0x230] sm:$0xff]
        %v8706 = vld [vmem:[%s8675 + $0x240] sm:$0xff]
        %v8707 = vld [vmem:[%s8675 + $0x250] sm:$0xff]
        %v8708 = vpack.c.bf16 %v8677, %v8676
        %v8709 = vpack.c.bf16 %v8679, %v8678
        %v8710 = vpack.c.bf16 %v8681, %v8680
        %v8711 = vpack.c.bf16 %v8683, %v8682
        %v8712 = vpack.c.bf16 %v8685, %v8684
        %v8713 = vpack.c.bf16 %v8687, %v8686
        %v8714 = vpack.c.bf16 %v8689, %v8688
        %v8715 = vpack.c.bf16 %v8691, %v8690
        %v8716 = vpack.c.bf16 %v8693, %v8692
        %v8717 = vpack.c.bf16 %v8695, %v8694
        %v8718 = vpack.c.bf16 %v8697, %v8696
        %v8719 = vpack.c.bf16 %v8699, %v8698
        %v8720 = vpack.c.bf16 %v8701, %v8700
        %v8721 = vpack.c.bf16 %v8703, %v8702
        %v8722 = vpack.c.bf16 %v8705, %v8704
        %v8723 = vpack.c.bf16 %v8707, %v8706
        %s8724 = scalar_lea.vmem [#allocation7], 384
        %v8725 = vld [vmem:[%s8724] sm:$0xf]
        %v8726 = vld [vmem:[%s8724 + $0x4] sm:$0xf]
        %v8727 = vld [vmem:[%s8724 + $0x8] sm:$0xf]
        %v8728 = vld [vmem:[%s8724 + $0xc] sm:$0xf]
        %v8733 = vunpack.c.l.b16 %v8725
        %v8734 = vunpack.c.l.b16 %v8726
        %v8735 = vunpack.c.l.b16 %v8727
        %v8736 = vunpack.c.l.b16 %v8728
        %v8737 = vpack.c.b16 %v8734, %v8733
        %v8738 = vpack.c.b16 %v8736, %v8735
        %v8742 = vsel %vm757, %v8708, 0
        %v8745 = vsel %vm757, %v8709, 0
        %v8748 = vsel %vm757, %v8710, 0
        %v8751 = vsel %vm757, %v8711, 0
        %v8754 = vsel %vm757, %v8712, 0
        %v8757 = vsel %vm757, %v8713, 0
        %v8760 = vsel %vm757, %v8714, 0
        %v8763 = vsel %vm757, %v8715, 0
        %v8766 = vsel %vm757, %v8716, 0
        %v8769 = vsel %vm757, %v8717, 0
        %v8772 = vsel %vm757, %v8718, 0
        %v8775 = vsel %vm757, %v8719, 0
        %v8778 = vsel %vm757, %v8720, 0
        %v8781 = vsel %vm757, %v8721, 0
        %v8784 = vsel %vm757, %v8722, 0
        %v8787 = vsel %vm757, %v8723, 0
        %8789 = vmatprep.subr.bf16.mxu0 0
        %8790 = vmatpush1.bf16.msra.mxu0 0
        %8791 = vmatprep.subr.bf16.mxu0 0
        %8792 = vmatpush1.bf16.msra.mxu0 0
        %8793 = vmatprep.subr.bf16.mxu0 0
        %8794 = vmatpush1.bf16.msra.mxu0 0
        %8795 = vmatprep.subr.bf16.mxu0 0
        %8796 = vmatpush1.bf16.msra.mxu0 0
        %8797 = vmatprep.subr.bf16.mxu0 0
        %8798 = vmatpush1.bf16.msra.mxu0 0
        %8799 = vmatprep.subr.bf16.mxu0 0
        %8800 = vmatpush1.bf16.msra.mxu0 0
        %8801 = vmatprep.subr.bf16.mxu0 0
        %8802 = vmatpush1.bf16.msra.mxu0 %v8738
        %8803 = vmatprep.subr.bf16.mxu0 0
        %8804 = vmatpush1.bf16.msra.mxu0 %v8737
        %8805 = vmatprep.subr.bf16.mxu0 0
        %8806 = vmatpush2.bf16.msra.mxu0 0
        %8807 = vmatprep.subr.bf16.mxu0 0
        %8808 = vmatpush2.bf16.msra.mxu0 0
        %8809 = vmatprep.subr.bf16.mxu0 0
        %8810 = vmatpush2.bf16.msra.mxu0 0
        %8811 = vmatprep.subr.bf16.mxu0 0
        %8812 = vmatpush2.bf16.msra.mxu0 0
        %8813 = vmatprep.subr.bf16.mxu0 0
        %8814 = vmatpush2.bf16.msra.mxu0 0
        %8815 = vmatprep.subr.bf16.mxu0 0
        %8816 = vmatpush2.bf16.msra.mxu0 0
        %8817 = vmatprep.subr.bf16.mxu0 0
        %8818 = vmatpush2.bf16.msra.mxu0 0
        %8819 = vmatprep.subr.bf16.mxu0 0
        %8820 = vmatpush2.bf16.msra.mxu0 0
        %8821 = vmatprep.mubr.bf16.mxu0 0
        %8822 = vmatmul.mubr.bf16.gmra.mxu0 %v8742
        %v8823 = vpop.f32.mrf.mxu0
        %v8824 = vadd.f32 0.0, %v8823
        %v8825 = vpop.f32.mrf.mxu0
        %v8826 = vpop.f32.mrf.mxu0
        %v8827 = vadd.f32 0.0, %v8826
        %v8828 = vpop.f32.mrf.mxu0
        %8829 = vmatprep.mubr.bf16.mxu0 0
        %8830 = vmatmul.mubr.bf16.gmra.mxu0 %v8745
        %v8831 = vpop.f32.mrf.mxu0
        %v8832 = vadd.f32 0.0, %v8831
        %v8833 = vpop.f32.mrf.mxu0
        %v8834 = vpop.f32.mrf.mxu0
        %v8835 = vadd.f32 0.0, %v8834
        %v8836 = vpop.f32.mrf.mxu0
        %8837 = vmatprep.mubr.bf16.mxu0 0
        %8838 = vmatmul.mubr.bf16.gmra.mxu0 %v8748
        %v8839 = vpop.f32.mrf.mxu0
        %v8840 = vadd.f32 0.0, %v8839
        %v8841 = vpop.f32.mrf.mxu0
        %v8842 = vpop.f32.mrf.mxu0
        %v8843 = vadd.f32 0.0, %v8842
        %v8844 = vpop.f32.mrf.mxu0
        %8845 = vmatprep.mubr.bf16.mxu0 0
        %8846 = vmatmul.mubr.bf16.gmra.mxu0 %v8751
        %v8847 = vpop.f32.mrf.mxu0
        %v8848 = vadd.f32 0.0, %v8847
        %v8849 = vpop.f32.mrf.mxu0
        %v8850 = vpop.f32.mrf.mxu0
        %v8851 = vadd.f32 0.0, %v8850
        %v8852 = vpop.f32.mrf.mxu0
        %8853 = vmatprep.mubr.bf16.mxu0 0
        %8854 = vmatmul.mubr.bf16.gmra.mxu0 %v8754
        %v8855 = vpop.f32.mrf.mxu0
        %v8856 = vadd.f32 0.0, %v8855
        %v8857 = vpop.f32.mrf.mxu0
        %v8858 = vpop.f32.mrf.mxu0
        %v8859 = vadd.f32 0.0, %v8858
        %v8860 = vpop.f32.mrf.mxu0
        %8861 = vmatprep.mubr.bf16.mxu0 0
        %8862 = vmatmul.mubr.bf16.gmra.mxu0 %v8757
        %v8863 = vpop.f32.mrf.mxu0
        %v8864 = vadd.f32 0.0, %v8863
        %v8865 = vpop.f32.mrf.mxu0
        %v8866 = vpop.f32.mrf.mxu0
        %v8867 = vadd.f32 0.0, %v8866
        %v8868 = vpop.f32.mrf.mxu0
        %8869 = vmatprep.mubr.bf16.mxu0 0
        %8870 = vmatmul.mubr.bf16.gmra.mxu0 %v8760
        %v8871 = vpop.f32.mrf.mxu0
        %v8872 = vadd.f32 0.0, %v8871
        %v8873 = vpop.f32.mrf.mxu0
        %v8874 = vpop.f32.mrf.mxu0
        %v8875 = vadd.f32 0.0, %v8874
        %v8876 = vpop.f32.mrf.mxu0
        %8877 = vmatprep.mubr.bf16.mxu0 0
        %8878 = vmatmul.mubr.bf16.gmra.mxu0 %v8763
        %v8879 = vpop.f32.mrf.mxu0
        %v8880 = vadd.f32 0.0, %v8879
        %v8881 = vpop.f32.mrf.mxu0
        %v8882 = vpop.f32.mrf.mxu0
        %v8883 = vadd.f32 0.0, %v8882
        %v8884 = vpop.f32.mrf.mxu0
        %8885 = vmatprep.mubr.bf16.mxu0 0
        %8886 = vmatmul.mubr.bf16.gmra.mxu0 %v8766
        %v8887 = vpop.f32.mrf.mxu0
        %v8888 = vadd.f32 0.0, %v8887
        %v8889 = vpop.f32.mrf.mxu0
        %v8890 = vpop.f32.mrf.mxu0
        %v8891 = vadd.f32 0.0, %v8890
        %v8892 = vpop.f32.mrf.mxu0
        %8893 = vmatprep.mubr.bf16.mxu0 0
        %8894 = vmatmul.mubr.bf16.gmra.mxu0 %v8769
        %v8895 = vpop.f32.mrf.mxu0
        %v8896 = vadd.f32 0.0, %v8895
        %v8897 = vpop.f32.mrf.mxu0
        %v8898 = vpop.f32.mrf.mxu0
        %v8899 = vadd.f32 0.0, %v8898
        %v8900 = vpop.f32.mrf.mxu0
        %8901 = vmatprep.mubr.bf16.mxu0 0
        %8902 = vmatmul.mubr.bf16.gmra.mxu0 %v8772
        %v8903 = vpop.f32.mrf.mxu0
        %v8904 = vadd.f32 0.0, %v8903
        %v8905 = vpop.f32.mrf.mxu0
        %v8906 = vpop.f32.mrf.mxu0
        %v8907 = vadd.f32 0.0, %v8906
        %v8908 = vpop.f32.mrf.mxu0
        %8909 = vmatprep.mubr.bf16.mxu0 0
        %8910 = vmatmul.mubr.bf16.gmra.mxu0 %v8775
        %v8911 = vpop.f32.mrf.mxu0
        %v8912 = vadd.f32 0.0, %v8911
        %v8913 = vpop.f32.mrf.mxu0
        %v8914 = vpop.f32.mrf.mxu0
        %v8915 = vadd.f32 0.0, %v8914
        %v8916 = vpop.f32.mrf.mxu0
        %8917 = vmatprep.mubr.bf16.mxu0 0
        %8918 = vmatmul.mubr.bf16.gmra.mxu0 %v8778
        %v8919 = vpop.f32.mrf.mxu0
        %v8920 = vadd.f32 0.0, %v8919
        %v8921 = vpop.f32.mrf.mxu0
        %v8922 = vpop.f32.mrf.mxu0
        %v8923 = vadd.f32 0.0, %v8922
        %v8924 = vpop.f32.mrf.mxu0
        %8925 = vmatprep.mubr.bf16.mxu0 0
        %8926 = vmatmul.mubr.bf16.gmra.mxu0 %v8781
        %v8927 = vpop.f32.mrf.mxu0
        %v8928 = vadd.f32 0.0, %v8927
        %v8929 = vpop.f32.mrf.mxu0
        %v8930 = vpop.f32.mrf.mxu0
        %v8931 = vadd.f32 0.0, %v8930
        %v8932 = vpop.f32.mrf.mxu0
        %8933 = vmatprep.mubr.bf16.mxu0 0
        %8934 = vmatmul.mubr.bf16.gmra.mxu0 %v8784
        %v8935 = vpop.f32.mrf.mxu0
        %v8936 = vadd.f32 0.0, %v8935
        %v8937 = vpop.f32.mrf.mxu0
        %v8938 = vpop.f32.mrf.mxu0
        %v8939 = vadd.f32 0.0, %v8938
        %v8940 = vpop.f32.mrf.mxu0
        %8941 = vmatprep.mubr.bf16.mxu0 0
        %8942 = vmatmul.mubr.bf16.gmra.mxu0 %v8787
        %v8943 = vpop.f32.mrf.mxu0
        %v8944 = vadd.f32 0.0, %v8943
        %v8945 = vpop.f32.mrf.mxu0
        %v8946 = vpop.f32.mrf.mxu0
        %v8947 = vadd.f32 0.0, %v8946
        %v8948 = vpop.f32.mrf.mxu0
        %8949 = vdwg.mxu0
        %v8950 = vadd.f32 %v8643, %v8824
        %v8951 = vadd.f32 %v8644, %v8827
        %v8952 = vadd.f32 %v8645, %v8832
        %v8953 = vadd.f32 %v8646, %v8835
        %v8954 = vadd.f32 %v8647, %v8840
        %v8955 = vadd.f32 %v8648, %v8843
        %v8956 = vadd.f32 %v8649, %v8848
        %v8957 = vadd.f32 %v8650, %v8851
        %v8958 = vadd.f32 %v8651, %v8856
        %v8959 = vadd.f32 %v8652, %v8859
        %v8960 = vadd.f32 %v8653, %v8864
        %v8961 = vadd.f32 %v8654, %v8867
        %v8962 = vadd.f32 %v8655, %v8872
        %v8963 = vadd.f32 %v8656, %v8875
        %v8964 = vadd.f32 %v8657, %v8880
        %v8965 = vadd.f32 %v8658, %v8883
        %v8966 = vadd.f32 %v8659, %v8888
        %v8967 = vadd.f32 %v8660, %v8891
        %v8968 = vadd.f32 %v8661, %v8896
        %v8969 = vadd.f32 %v8662, %v8899
        %v8970 = vadd.f32 %v8663, %v8904
        %v8971 = vadd.f32 %v8664, %v8907
        %v8972 = vadd.f32 %v8665, %v8912
        %v8973 = vadd.f32 %v8666, %v8915
        %v8974 = vadd.f32 %v8667, %v8920
        %v8975 = vadd.f32 %v8668, %v8923
        %v8976 = vadd.f32 %v8669, %v8928
        %v8977 = vadd.f32 %v8670, %v8931
        %v8978 = vadd.f32 %v8671, %v8936
        %v8979 = vadd.f32 %v8672, %v8939
        %v8980 = vadd.f32 %v8673, %v8944
        %v8981 = vadd.f32 %v8674, %v8947
        %v8982 = vld [vmem:[%s8675 + $0x1] sm:$0xff]
        %v8983 = vld [vmem:[%s8675 + $0x11] sm:$0xff]
        %v8984 = vld [vmem:[%s8675 + $0x21] sm:$0xff]
        %v8985 = vld [vmem:[%s8675 + $0x31] sm:$0xff]
        %v8986 = vld [vmem:[%s8675 + $0x41] sm:$0xff]
        %v8987 = vld [vmem:[%s8675 + $0x51] sm:$0xff]
        %v8988 = vld [vmem:[%s8675 + $0x61] sm:$0xff]
        %v8989 = vld [vmem:[%s8675 + $0x71] sm:$0xff]
        %v8990 = vld [vmem:[%s8675 + $0xa1] sm:$0xff]
        %v8991 = vld [vmem:[%s8675 + $0xb1] sm:$0xff]
        %v8992 = vld [vmem:[%s8675 + $0xc1] sm:$0xff]
        %v8993 = vld [vmem:[%s8675 + $0xd1] sm:$0xff]
        %v8994 = vld [vmem:[%s8675 + $0xe1] sm:$0xff]
        %v8995 = vld [vmem:[%s8675 + $0xf1] sm:$0xff]
        %v8996 = vld [vmem:[%s8675 + $0x101] sm:$0xff]
        %v8997 = vld [vmem:[%s8675 + $0x111] sm:$0xff]
        %v8998 = vld [vmem:[%s8675 + $0x141] sm:$0xff]
        %v8999 = vld [vmem:[%s8675 + $0x151] sm:$0xff]
        %v9000 = vld [vmem:[%s8675 + $0x161] sm:$0xff]
        %v9001 = vld [vmem:[%s8675 + $0x171] sm:$0xff]
        %v9002 = vld [vmem:[%s8675 + $0x181] sm:$0xff]
        %v9003 = vld [vmem:[%s8675 + $0x191] sm:$0xff]
        %v9004 = vld [vmem:[%s8675 + $0x1a1] sm:$0xff]
        %v9005 = vld [vmem:[%s8675 + $0x1b1] sm:$0xff]
        %v9006 = vld [vmem:[%s8675 + $0x1e1] sm:$0xff]
        %v9007 = vld [vmem:[%s8675 + $0x1f1] sm:$0xff]
        %v9008 = vld [vmem:[%s8675 + $0x201] sm:$0xff]
        %v9009 = vld [vmem:[%s8675 + $0x211] sm:$0xff]
        %v9010 = vld [vmem:[%s8675 + $0x221] sm:$0xff]
        %v9011 = vld [vmem:[%s8675 + $0x231] sm:$0xff]
        %v9012 = vld [vmem:[%s8675 + $0x241] sm:$0xff]
        %v9013 = vld [vmem:[%s8675 + $0x251] sm:$0xff]
        %v9014 = vpack.c.bf16 %v8983, %v8982
        %v9015 = vpack.c.bf16 %v8985, %v8984
        %v9016 = vpack.c.bf16 %v8987, %v8986
        %v9017 = vpack.c.bf16 %v8989, %v8988
        %v9018 = vpack.c.bf16 %v8991, %v8990
        %v9019 = vpack.c.bf16 %v8993, %v8992
        %v9020 = vpack.c.bf16 %v8995, %v8994
        %v9021 = vpack.c.bf16 %v8997, %v8996
        %v9022 = vpack.c.bf16 %v8999, %v8998
        %v9023 = vpack.c.bf16 %v9001, %v9000
        %v9024 = vpack.c.bf16 %v9003, %v9002
        %v9025 = vpack.c.bf16 %v9005, %v9004
        %v9026 = vpack.c.bf16 %v9007, %v9006
        %v9027 = vpack.c.bf16 %v9009, %v9008
        %v9028 = vpack.c.bf16 %v9011, %v9010
        %v9029 = vpack.c.bf16 %v9013, %v9012
        %s9030 = scalar_lea.vmem [#allocation7], 400
        %v9031 = vld [vmem:[%s9030] sm:$0xf]
        %v9032 = vld [vmem:[%s9030 + $0x4] sm:$0xf]
        %v9033 = vld [vmem:[%s9030 + $0x8] sm:$0xf]
        %v9034 = vld [vmem:[%s9030 + $0xc] sm:$0xf]
        %v9039 = vunpack.c.l.b16 %v9031
        %v9040 = vunpack.c.l.b16 %v9032
        %v9041 = vunpack.c.l.b16 %v9033
        %v9042 = vunpack.c.l.b16 %v9034
        %v9043 = vpack.c.b16 %v9040, %v9039
        %v9044 = vpack.c.b16 %v9042, %v9041
        %v9048 = vsel %vm757, %v9014, 0
        %v9051 = vsel %vm757, %v9015, 0
        %v9054 = vsel %vm757, %v9016, 0
        %v9057 = vsel %vm757, %v9017, 0
        %v9060 = vsel %vm757, %v9018, 0
        %v9063 = vsel %vm757, %v9019, 0
        %v9066 = vsel %vm757, %v9020, 0
        %v9069 = vsel %vm757, %v9021, 0
        %v9072 = vsel %vm757, %v9022, 0
        %v9075 = vsel %vm757, %v9023, 0
        %v9078 = vsel %vm757, %v9024, 0
        %v9081 = vsel %vm757, %v9025, 0
        %v9084 = vsel %vm757, %v9026, 0
        %v9087 = vsel %vm757, %v9027, 0
        %v9090 = vsel %vm757, %v9028, 0
        %v9093 = vsel %vm757, %v9029, 0
        %9095 = vmatprep.subr.bf16.mxu0 0
        %9096 = vmatpush1.bf16.msra.mxu0 0
        %9097 = vmatprep.subr.bf16.mxu0 0
        %9098 = vmatpush1.bf16.msra.mxu0 0
        %9099 = vmatprep.subr.bf16.mxu0 0
        %9100 = vmatpush1.bf16.msra.mxu0 0
        %9101 = vmatprep.subr.bf16.mxu0 0
        %9102 = vmatpush1.bf16.msra.mxu0 0
        %9103 = vmatprep.subr.bf16.mxu0 0
        %9104 = vmatpush1.bf16.msra.mxu0 0
        %9105 = vmatprep.subr.bf16.mxu0 0
        %9106 = vmatpush1.bf16.msra.mxu0 0
        %9107 = vmatprep.subr.bf16.mxu0 0
        %9108 = vmatpush1.bf16.msra.mxu0 %v9044
        %9109 = vmatprep.subr.bf16.mxu0 0
        %9110 = vmatpush1.bf16.msra.mxu0 %v9043
        %9111 = vmatprep.subr.bf16.mxu0 0
        %9112 = vmatpush2.bf16.msra.mxu0 0
        %9113 = vmatprep.subr.bf16.mxu0 0
        %9114 = vmatpush2.bf16.msra.mxu0 0
        %9115 = vmatprep.subr.bf16.mxu0 0
        %9116 = vmatpush2.bf16.msra.mxu0 0
        %9117 = vmatprep.subr.bf16.mxu0 0
        %9118 = vmatpush2.bf16.msra.mxu0 0
        %9119 = vmatprep.subr.bf16.mxu0 0
        %9120 = vmatpush2.bf16.msra.mxu0 0
        %9121 = vmatprep.subr.bf16.mxu0 0
        %9122 = vmatpush2.bf16.msra.mxu0 0
        %9123 = vmatprep.subr.bf16.mxu0 0
        %9124 = vmatpush2.bf16.msra.mxu0 0
        %9125 = vmatprep.subr.bf16.mxu0 0
        %9126 = vmatpush2.bf16.msra.mxu0 0
        %9127 = vmatprep.mubr.bf16.mxu0 0
        %9128 = vmatmul.mubr.bf16.gmra.mxu0 %v9048
        %v9129 = vpop.f32.mrf.mxu0
        %v9130 = vadd.f32 0.0, %v9129
        %v9131 = vpop.f32.mrf.mxu0
        %v9132 = vpop.f32.mrf.mxu0
        %v9133 = vadd.f32 0.0, %v9132
        %v9134 = vpop.f32.mrf.mxu0
        %9135 = vmatprep.mubr.bf16.mxu0 0
        %9136 = vmatmul.mubr.bf16.gmra.mxu0 %v9051
        %v9137 = vpop.f32.mrf.mxu0
        %v9138 = vadd.f32 0.0, %v9137
        %v9139 = vpop.f32.mrf.mxu0
        %v9140 = vpop.f32.mrf.mxu0
        %v9141 = vadd.f32 0.0, %v9140
        %v9142 = vpop.f32.mrf.mxu0
        %9143 = vmatprep.mubr.bf16.mxu0 0
        %9144 = vmatmul.mubr.bf16.gmra.mxu0 %v9054
        %v9145 = vpop.f32.mrf.mxu0
        %v9146 = vadd.f32 0.0, %v9145
        %v9147 = vpop.f32.mrf.mxu0
        %v9148 = vpop.f32.mrf.mxu0
        %v9149 = vadd.f32 0.0, %v9148
        %v9150 = vpop.f32.mrf.mxu0
        %9151 = vmatprep.mubr.bf16.mxu0 0
        %9152 = vmatmul.mubr.bf16.gmra.mxu0 %v9057
        %v9153 = vpop.f32.mrf.mxu0
        %v9154 = vadd.f32 0.0, %v9153
        %v9155 = vpop.f32.mrf.mxu0
        %v9156 = vpop.f32.mrf.mxu0
        %v9157 = vadd.f32 0.0, %v9156
        %v9158 = vpop.f32.mrf.mxu0
        %9159 = vmatprep.mubr.bf16.mxu0 0
        %9160 = vmatmul.mubr.bf16.gmra.mxu0 %v9060
        %v9161 = vpop.f32.mrf.mxu0
        %v9162 = vadd.f32 0.0, %v9161
        %v9163 = vpop.f32.mrf.mxu0
        %v9164 = vpop.f32.mrf.mxu0
        %v9165 = vadd.f32 0.0, %v9164
        %v9166 = vpop.f32.mrf.mxu0
        %9167 = vmatprep.mubr.bf16.mxu0 0
        %9168 = vmatmul.mubr.bf16.gmra.mxu0 %v9063
        %v9169 = vpop.f32.mrf.mxu0
        %v9170 = vadd.f32 0.0, %v9169
        %v9171 = vpop.f32.mrf.mxu0
        %v9172 = vpop.f32.mrf.mxu0
        %v9173 = vadd.f32 0.0, %v9172
        %v9174 = vpop.f32.mrf.mxu0
        %9175 = vmatprep.mubr.bf16.mxu0 0
        %9176 = vmatmul.mubr.bf16.gmra.mxu0 %v9066
        %v9177 = vpop.f32.mrf.mxu0
        %v9178 = vadd.f32 0.0, %v9177
        %v9179 = vpop.f32.mrf.mxu0
        %v9180 = vpop.f32.mrf.mxu0
        %v9181 = vadd.f32 0.0, %v9180
        %v9182 = vpop.f32.mrf.mxu0
        %9183 = vmatprep.mubr.bf16.mxu0 0
        %9184 = vmatmul.mubr.bf16.gmra.mxu0 %v9069
        %v9185 = vpop.f32.mrf.mxu0
        %v9186 = vadd.f32 0.0, %v9185
        %v9187 = vpop.f32.mrf.mxu0
        %v9188 = vpop.f32.mrf.mxu0
        %v9189 = vadd.f32 0.0, %v9188
        %v9190 = vpop.f32.mrf.mxu0
        %9191 = vmatprep.mubr.bf16.mxu0 0
        %9192 = vmatmul.mubr.bf16.gmra.mxu0 %v9072
        %v9193 = vpop.f32.mrf.mxu0
        %v9194 = vadd.f32 0.0, %v9193
        %v9195 = vpop.f32.mrf.mxu0
        %v9196 = vpop.f32.mrf.mxu0
        %v9197 = vadd.f32 0.0, %v9196
        %v9198 = vpop.f32.mrf.mxu0
        %9199 = vmatprep.mubr.bf16.mxu0 0
        %9200 = vmatmul.mubr.bf16.gmra.mxu0 %v9075
        %v9201 = vpop.f32.mrf.mxu0
        %v9202 = vadd.f32 0.0, %v9201
        %v9203 = vpop.f32.mrf.mxu0
        %v9204 = vpop.f32.mrf.mxu0
        %v9205 = vadd.f32 0.0, %v9204
        %v9206 = vpop.f32.mrf.mxu0
        %9207 = vmatprep.mubr.bf16.mxu0 0
        %9208 = vmatmul.mubr.bf16.gmra.mxu0 %v9078
        %v9209 = vpop.f32.mrf.mxu0
        %v9210 = vadd.f32 0.0, %v9209
        %v9211 = vpop.f32.mrf.mxu0
        %v9212 = vpop.f32.mrf.mxu0
        %v9213 = vadd.f32 0.0, %v9212
        %v9214 = vpop.f32.mrf.mxu0
        %9215 = vmatprep.mubr.bf16.mxu0 0
        %9216 = vmatmul.mubr.bf16.gmra.mxu0 %v9081
        %v9217 = vpop.f32.mrf.mxu0
        %v9218 = vadd.f32 0.0, %v9217
        %v9219 = vpop.f32.mrf.mxu0
        %v9220 = vpop.f32.mrf.mxu0
        %v9221 = vadd.f32 0.0, %v9220
        %v9222 = vpop.f32.mrf.mxu0
        %9223 = vmatprep.mubr.bf16.mxu0 0
        %9224 = vmatmul.mubr.bf16.gmra.mxu0 %v9084
        %v9225 = vpop.f32.mrf.mxu0
        %v9226 = vadd.f32 0.0, %v9225
        %v9227 = vpop.f32.mrf.mxu0
        %v9228 = vpop.f32.mrf.mxu0
        %v9229 = vadd.f32 0.0, %v9228
        %v9230 = vpop.f32.mrf.mxu0
        %9231 = vmatprep.mubr.bf16.mxu0 0
        %9232 = vmatmul.mubr.bf16.gmra.mxu0 %v9087
        %v9233 = vpop.f32.mrf.mxu0
        %v9234 = vadd.f32 0.0, %v9233
        %v9235 = vpop.f32.mrf.mxu0
        %v9236 = vpop.f32.mrf.mxu0
        %v9237 = vadd.f32 0.0, %v9236
        %v9238 = vpop.f32.mrf.mxu0
        %9239 = vmatprep.mubr.bf16.mxu0 0
        %9240 = vmatmul.mubr.bf16.gmra.mxu0 %v9090
        %v9241 = vpop.f32.mrf.mxu0
        %v9242 = vadd.f32 0.0, %v9241
        %v9243 = vpop.f32.mrf.mxu0
        %v9244 = vpop.f32.mrf.mxu0
        %v9245 = vadd.f32 0.0, %v9244
        %v9246 = vpop.f32.mrf.mxu0
        %9247 = vmatprep.mubr.bf16.mxu0 0
        %9248 = vmatmul.mubr.bf16.gmra.mxu0 %v9093
        %v9249 = vpop.f32.mrf.mxu0
        %v9250 = vadd.f32 0.0, %v9249
        %v9251 = vpop.f32.mrf.mxu0
        %v9252 = vpop.f32.mrf.mxu0
        %v9253 = vadd.f32 0.0, %v9252
        %v9254 = vpop.f32.mrf.mxu0
        %9255 = vdwg.mxu0
        %v9256 = vadd.f32 %v8950, %v9130
        %v9257 = vadd.f32 %v8951, %v9133
        %v9258 = vadd.f32 %v8952, %v9138
        %v9259 = vadd.f32 %v8953, %v9141
        %v9260 = vadd.f32 %v8954, %v9146
        %v9261 = vadd.f32 %v8955, %v9149
        %v9262 = vadd.f32 %v8956, %v9154
        %v9263 = vadd.f32 %v8957, %v9157
        %v9264 = vadd.f32 %v8958, %v9162
        %v9265 = vadd.f32 %v8959, %v9165
        %v9266 = vadd.f32 %v8960, %v9170
        %v9267 = vadd.f32 %v8961, %v9173
        %v9268 = vadd.f32 %v8962, %v9178
        %v9269 = vadd.f32 %v8963, %v9181
        %v9270 = vadd.f32 %v8964, %v9186
        %v9271 = vadd.f32 %v8965, %v9189
        %v9272 = vadd.f32 %v8966, %v9194
        %v9273 = vadd.f32 %v8967, %v9197
        %v9274 = vadd.f32 %v8968, %v9202
        %v9275 = vadd.f32 %v8969, %v9205
        %v9276 = vadd.f32 %v8970, %v9210
        %v9277 = vadd.f32 %v8971, %v9213
        %v9278 = vadd.f32 %v8972, %v9218
        %v9279 = vadd.f32 %v8973, %v9221
        %v9280 = vadd.f32 %v8974, %v9226
        %v9281 = vadd.f32 %v8975, %v9229
        %v9282 = vadd.f32 %v8976, %v9234
        %v9283 = vadd.f32 %v8977, %v9237
        %v9284 = vadd.f32 %v8978, %v9242
        %v9285 = vadd.f32 %v8979, %v9245
        %v9286 = vadd.f32 %v8980, %v9250
        %v9287 = vadd.f32 %v8981, %v9253
        %v9288 = vld [vmem:[%s8675 + $0x2] sm:$0xff]
        %v9289 = vld [vmem:[%s8675 + $0x12] sm:$0xff]
        %v9290 = vld [vmem:[%s8675 + $0x22] sm:$0xff]
        %v9291 = vld [vmem:[%s8675 + $0x32] sm:$0xff]
        %v9292 = vld [vmem:[%s8675 + $0x42] sm:$0xff]
        %v9293 = vld [vmem:[%s8675 + $0x52] sm:$0xff]
        %v9294 = vld [vmem:[%s8675 + $0x62] sm:$0xff]
        %v9295 = vld [vmem:[%s8675 + $0x72] sm:$0xff]
        %v9296 = vld [vmem:[%s8675 + $0xa2] sm:$0xff]
        %v9297 = vld [vmem:[%s8675 + $0xb2] sm:$0xff]
        %v9298 = vld [vmem:[%s8675 + $0xc2] sm:$0xff]
        %v9299 = vld [vmem:[%s8675 + $0xd2] sm:$0xff]
        %v9300 = vld [vmem:[%s8675 + $0xe2] sm:$0xff]
        %v9301 = vld [vmem:[%s8675 + $0xf2] sm:$0xff]
        %v9302 = vld [vmem:[%s8675 + $0x102] sm:$0xff]
        %v9303 = vld [vmem:[%s8675 + $0x112] sm:$0xff]
        %v9304 = vld [vmem:[%s8675 + $0x142] sm:$0xff]
        %v9305 = vld [vmem:[%s8675 + $0x152] sm:$0xff]
        %v9306 = vld [vmem:[%s8675 + $0x162] sm:$0xff]
        %v9307 = vld [vmem:[%s8675 + $0x172] sm:$0xff]
        %v9308 = vld [vmem:[%s8675 + $0x182] sm:$0xff]
        %v9309 = vld [vmem:[%s8675 + $0x192] sm:$0xff]
        %v9310 = vld [vmem:[%s8675 + $0x1a2] sm:$0xff]
        %v9311 = vld [vmem:[%s8675 + $0x1b2] sm:$0xff]
        %v9312 = vld [vmem:[%s8675 + $0x1e2] sm:$0xff]
        %v9313 = vld [vmem:[%s8675 + $0x1f2] sm:$0xff]
        %v9314 = vld [vmem:[%s8675 + $0x202] sm:$0xff]
        %v9315 = vld [vmem:[%s8675 + $0x212] sm:$0xff]
        %v9316 = vld [vmem:[%s8675 + $0x222] sm:$0xff]
        %v9317 = vld [vmem:[%s8675 + $0x232] sm:$0xff]
        %v9318 = vld [vmem:[%s8675 + $0x242] sm:$0xff]
        %v9319 = vld [vmem:[%s8675 + $0x252] sm:$0xff]
        %v9320 = vpack.c.bf16 %v9289, %v9288
        %v9321 = vpack.c.bf16 %v9291, %v9290
        %v9322 = vpack.c.bf16 %v9293, %v9292
        %v9323 = vpack.c.bf16 %v9295, %v9294
        %v9324 = vpack.c.bf16 %v9297, %v9296
        %v9325 = vpack.c.bf16 %v9299, %v9298
        %v9326 = vpack.c.bf16 %v9301, %v9300
        %v9327 = vpack.c.bf16 %v9303, %v9302
        %v9328 = vpack.c.bf16 %v9305, %v9304
        %v9329 = vpack.c.bf16 %v9307, %v9306
        %v9330 = vpack.c.bf16 %v9309, %v9308
        %v9331 = vpack.c.bf16 %v9311, %v9310
        %v9332 = vpack.c.bf16 %v9313, %v9312
        %v9333 = vpack.c.bf16 %v9315, %v9314
        %v9334 = vpack.c.bf16 %v9317, %v9316
        %v9335 = vpack.c.bf16 %v9319, %v9318
        %s9336 = scalar_lea.vmem [#allocation7], 416
        %v9337 = vld [vmem:[%s9336] sm:$0xf]
        %v9338 = vld [vmem:[%s9336 + $0x4] sm:$0xf]
        %v9339 = vld [vmem:[%s9336 + $0x8] sm:$0xf]
        %v9340 = vld [vmem:[%s9336 + $0xc] sm:$0xf]
        %v9345 = vunpack.c.l.b16 %v9337
        %v9346 = vunpack.c.l.b16 %v9338
        %v9347 = vunpack.c.l.b16 %v9339
        %v9348 = vunpack.c.l.b16 %v9340
        %v9349 = vpack.c.b16 %v9346, %v9345
        %v9350 = vpack.c.b16 %v9348, %v9347
        %v9354 = vsel %vm757, %v9320, 0
        %v9357 = vsel %vm757, %v9321, 0
        %v9360 = vsel %vm757, %v9322, 0
        %v9363 = vsel %vm757, %v9323, 0
        %v9366 = vsel %vm757, %v9324, 0
        %v9369 = vsel %vm757, %v9325, 0
        %v9372 = vsel %vm757, %v9326, 0
        %v9375 = vsel %vm757, %v9327, 0
        %v9378 = vsel %vm757, %v9328, 0
        %v9381 = vsel %vm757, %v9329, 0
        %v9384 = vsel %vm757, %v9330, 0
        %v9387 = vsel %vm757, %v9331, 0
        %v9390 = vsel %vm757, %v9332, 0
        %v9393 = vsel %vm757, %v9333, 0
        %v9396 = vsel %vm757, %v9334, 0
        %v9399 = vsel %vm757, %v9335, 0
        %9401 = vmatprep.subr.bf16.mxu0 0
        %9402 = vmatpush1.bf16.msra.mxu0 0
        %9403 = vmatprep.subr.bf16.mxu0 0
        %9404 = vmatpush1.bf16.msra.mxu0 0
        %9405 = vmatprep.subr.bf16.mxu0 0
        %9406 = vmatpush1.bf16.msra.mxu0 0
        %9407 = vmatprep.subr.bf16.mxu0 0
        %9408 = vmatpush1.bf16.msra.mxu0 0
        %9409 = vmatprep.subr.bf16.mxu0 0
        %9410 = vmatpush1.bf16.msra.mxu0 0
        %9411 = vmatprep.subr.bf16.mxu0 0
        %9412 = vmatpush1.bf16.msra.mxu0 0
        %9413 = vmatprep.subr.bf16.mxu0 0
        %9414 = vmatpush1.bf16.msra.mxu0 %v9350
        %9415 = vmatprep.subr.bf16.mxu0 0
        %9416 = vmatpush1.bf16.msra.mxu0 %v9349
        %9417 = vmatprep.subr.bf16.mxu0 0
        %9418 = vmatpush2.bf16.msra.mxu0 0
        %9419 = vmatprep.subr.bf16.mxu0 0
        %9420 = vmatpush2.bf16.msra.mxu0 0
        %9421 = vmatprep.subr.bf16.mxu0 0
        %9422 = vmatpush2.bf16.msra.mxu0 0
        %9423 = vmatprep.subr.bf16.mxu0 0
        %9424 = vmatpush2.bf16.msra.mxu0 0
        %9425 = vmatprep.subr.bf16.mxu0 0
        %9426 = vmatpush2.bf16.msra.mxu0 0
        %9427 = vmatprep.subr.bf16.mxu0 0
        %9428 = vmatpush2.bf16.msra.mxu0 0
        %9429 = vmatprep.subr.bf16.mxu0 0
        %9430 = vmatpush2.bf16.msra.mxu0 0
        %9431 = vmatprep.subr.bf16.mxu0 0
        %9432 = vmatpush2.bf16.msra.mxu0 0
        %9433 = vmatprep.mubr.bf16.mxu0 0
        %9434 = vmatmul.mubr.bf16.gmra.mxu0 %v9354
        %v9435 = vpop.f32.mrf.mxu0
        %v9436 = vadd.f32 0.0, %v9435
        %v9437 = vpop.f32.mrf.mxu0
        %v9438 = vpop.f32.mrf.mxu0
        %v9439 = vadd.f32 0.0, %v9438
        %v9440 = vpop.f32.mrf.mxu0
        %9441 = vmatprep.mubr.bf16.mxu0 0
        %9442 = vmatmul.mubr.bf16.gmra.mxu0 %v9357
        %v9443 = vpop.f32.mrf.mxu0
        %v9444 = vadd.f32 0.0, %v9443
        %v9445 = vpop.f32.mrf.mxu0
        %v9446 = vpop.f32.mrf.mxu0
        %v9447 = vadd.f32 0.0, %v9446
        %v9448 = vpop.f32.mrf.mxu0
        %9449 = vmatprep.mubr.bf16.mxu0 0
        %9450 = vmatmul.mubr.bf16.gmra.mxu0 %v9360
        %v9451 = vpop.f32.mrf.mxu0
        %v9452 = vadd.f32 0.0, %v9451
        %v9453 = vpop.f32.mrf.mxu0
        %v9454 = vpop.f32.mrf.mxu0
        %v9455 = vadd.f32 0.0, %v9454
        %v9456 = vpop.f32.mrf.mxu0
        %9457 = vmatprep.mubr.bf16.mxu0 0
        %9458 = vmatmul.mubr.bf16.gmra.mxu0 %v9363
        %v9459 = vpop.f32.mrf.mxu0
        %v9460 = vadd.f32 0.0, %v9459
        %v9461 = vpop.f32.mrf.mxu0
        %v9462 = vpop.f32.mrf.mxu0
        %v9463 = vadd.f32 0.0, %v9462
        %v9464 = vpop.f32.mrf.mxu0
        %9465 = vmatprep.mubr.bf16.mxu0 0
        %9466 = vmatmul.mubr.bf16.gmra.mxu0 %v9366
        %v9467 = vpop.f32.mrf.mxu0
        %v9468 = vadd.f32 0.0, %v9467
        %v9469 = vpop.f32.mrf.mxu0
        %v9470 = vpop.f32.mrf.mxu0
        %v9471 = vadd.f32 0.0, %v9470
        %v9472 = vpop.f32.mrf.mxu0
        %9473 = vmatprep.mubr.bf16.mxu0 0
        %9474 = vmatmul.mubr.bf16.gmra.mxu0 %v9369
        %v9475 = vpop.f32.mrf.mxu0
        %v9476 = vadd.f32 0.0, %v9475
        %v9477 = vpop.f32.mrf.mxu0
        %v9478 = vpop.f32.mrf.mxu0
        %v9479 = vadd.f32 0.0, %v9478
        %v9480 = vpop.f32.mrf.mxu0
        %9481 = vmatprep.mubr.bf16.mxu0 0
        %9482 = vmatmul.mubr.bf16.gmra.mxu0 %v9372
        %v9483 = vpop.f32.mrf.mxu0
        %v9484 = vadd.f32 0.0, %v9483
        %v9485 = vpop.f32.mrf.mxu0
        %v9486 = vpop.f32.mrf.mxu0
        %v9487 = vadd.f32 0.0, %v9486
        %v9488 = vpop.f32.mrf.mxu0
        %9489 = vmatprep.mubr.bf16.mxu0 0
        %9490 = vmatmul.mubr.bf16.gmra.mxu0 %v9375
        %v9491 = vpop.f32.mrf.mxu0
        %v9492 = vadd.f32 0.0, %v9491
        %v9493 = vpop.f32.mrf.mxu0
        %v9494 = vpop.f32.mrf.mxu0
        %v9495 = vadd.f32 0.0, %v9494
        %v9496 = vpop.f32.mrf.mxu0
        %9497 = vmatprep.mubr.bf16.mxu0 0
        %9498 = vmatmul.mubr.bf16.gmra.mxu0 %v9378
        %v9499 = vpop.f32.mrf.mxu0
        %v9500 = vadd.f32 0.0, %v9499
        %v9501 = vpop.f32.mrf.mxu0
        %v9502 = vpop.f32.mrf.mxu0
        %v9503 = vadd.f32 0.0, %v9502
        %v9504 = vpop.f32.mrf.mxu0
        %9505 = vmatprep.mubr.bf16.mxu0 0
        %9506 = vmatmul.mubr.bf16.gmra.mxu0 %v9381
        %v9507 = vpop.f32.mrf.mxu0
        %v9508 = vadd.f32 0.0, %v9507
        %v9509 = vpop.f32.mrf.mxu0
        %v9510 = vpop.f32.mrf.mxu0
        %v9511 = vadd.f32 0.0, %v9510
        %v9512 = vpop.f32.mrf.mxu0
        %9513 = vmatprep.mubr.bf16.mxu0 0
        %9514 = vmatmul.mubr.bf16.gmra.mxu0 %v9384
        %v9515 = vpop.f32.mrf.mxu0
        %v9516 = vadd.f32 0.0, %v9515
        %v9517 = vpop.f32.mrf.mxu0
        %v9518 = vpop.f32.mrf.mxu0
        %v9519 = vadd.f32 0.0, %v9518
        %v9520 = vpop.f32.mrf.mxu0
        %9521 = vmatprep.mubr.bf16.mxu0 0
        %9522 = vmatmul.mubr.bf16.gmra.mxu0 %v9387
        %v9523 = vpop.f32.mrf.mxu0
        %v9524 = vadd.f32 0.0, %v9523
        %v9525 = vpop.f32.mrf.mxu0
        %v9526 = vpop.f32.mrf.mxu0
        %v9527 = vadd.f32 0.0, %v9526
        %v9528 = vpop.f32.mrf.mxu0
        %9529 = vmatprep.mubr.bf16.mxu0 0
        %9530 = vmatmul.mubr.bf16.gmra.mxu0 %v9390
        %v9531 = vpop.f32.mrf.mxu0
        %v9532 = vadd.f32 0.0, %v9531
        %v9533 = vpop.f32.mrf.mxu0
        %v9534 = vpop.f32.mrf.mxu0
        %v9535 = vadd.f32 0.0, %v9534
        %v9536 = vpop.f32.mrf.mxu0
        %9537 = vmatprep.mubr.bf16.mxu0 0
        %9538 = vmatmul.mubr.bf16.gmra.mxu0 %v9393
        %v9539 = vpop.f32.mrf.mxu0
        %v9540 = vadd.f32 0.0, %v9539
        %v9541 = vpop.f32.mrf.mxu0
        %v9542 = vpop.f32.mrf.mxu0
        %v9543 = vadd.f32 0.0, %v9542
        %v9544 = vpop.f32.mrf.mxu0
        %9545 = vmatprep.mubr.bf16.mxu0 0
        %9546 = vmatmul.mubr.bf16.gmra.mxu0 %v9396
        %v9547 = vpop.f32.mrf.mxu0
        %v9548 = vadd.f32 0.0, %v9547
        %v9549 = vpop.f32.mrf.mxu0
        %v9550 = vpop.f32.mrf.mxu0
        %v9551 = vadd.f32 0.0, %v9550
        %v9552 = vpop.f32.mrf.mxu0
        %9553 = vmatprep.mubr.bf16.mxu0 0
        %9554 = vmatmul.mubr.bf16.gmra.mxu0 %v9399
        %v9555 = vpop.f32.mrf.mxu0
        %v9556 = vadd.f32 0.0, %v9555
        %v9557 = vpop.f32.mrf.mxu0
        %v9558 = vpop.f32.mrf.mxu0
        %v9559 = vadd.f32 0.0, %v9558
        %v9560 = vpop.f32.mrf.mxu0
        %9561 = vdwg.mxu0
        %v9562 = vadd.f32 %v9256, %v9436
        %v9563 = vadd.f32 %v9257, %v9439
        %v9564 = vadd.f32 %v9258, %v9444
        %v9565 = vadd.f32 %v9259, %v9447
        %v9566 = vadd.f32 %v9260, %v9452
        %v9567 = vadd.f32 %v9261, %v9455
        %v9568 = vadd.f32 %v9262, %v9460
        %v9569 = vadd.f32 %v9263, %v9463
        %v9570 = vadd.f32 %v9264, %v9468
        %v9571 = vadd.f32 %v9265, %v9471
        %v9572 = vadd.f32 %v9266, %v9476
        %v9573 = vadd.f32 %v9267, %v9479
        %v9574 = vadd.f32 %v9268, %v9484
        %v9575 = vadd.f32 %v9269, %v9487
        %v9576 = vadd.f32 %v9270, %v9492
        %v9577 = vadd.f32 %v9271, %v9495
        %v9578 = vadd.f32 %v9272, %v9500
        %v9579 = vadd.f32 %v9273, %v9503
        %v9580 = vadd.f32 %v9274, %v9508
        %v9581 = vadd.f32 %v9275, %v9511
        %v9582 = vadd.f32 %v9276, %v9516
        %v9583 = vadd.f32 %v9277, %v9519
        %v9584 = vadd.f32 %v9278, %v9524
        %v9585 = vadd.f32 %v9279, %v9527
        %v9586 = vadd.f32 %v9280, %v9532
        %v9587 = vadd.f32 %v9281, %v9535
        %v9588 = vadd.f32 %v9282, %v9540
        %v9589 = vadd.f32 %v9283, %v9543
        %v9590 = vadd.f32 %v9284, %v9548
        %v9591 = vadd.f32 %v9285, %v9551
        %v9592 = vadd.f32 %v9286, %v9556
        %v9593 = vadd.f32 %v9287, %v9559
        %v9594 = vld [vmem:[%s6] sm:$0x1]
        %v9595 = vld [vmem:[%s7] sm:$0x1]
        %v9596 = vsel %vm757, %v9562, 0.0
        %v9597 = vsel %vm757, %v9563, 0.0
        %v9598 = vadd.f32 %v9596, %v9597
        %v9599 = vsel %vm757, %v9564, 0.0
        %v9600 = vadd.f32 %v9598, %v9599
        %v9601 = vsel %vm757, %v9565, 0.0
        %v9602 = vadd.f32 %v9600, %v9601
        %v9603 = vsel %vm757, %v9566, 0.0
        %v9604 = vadd.f32 %v9602, %v9603
        %v9605 = vsel %vm757, %v9567, 0.0
        %v9606 = vadd.f32 %v9604, %v9605
        %v9607 = vsel %vm757, %v9568, 0.0
        %v9608 = vadd.f32 %v9606, %v9607
        %v9609 = vsel %vm757, %v9569, 0.0
        %v9610 = vadd.f32 %v9608, %v9609
        %v9611 = vsel %vm757, %v9570, 0.0
        %v9612 = vadd.f32 %v9610, %v9611
        %v9613 = vsel %vm757, %v9571, 0.0
        %v9614 = vadd.f32 %v9612, %v9613
        %v9615 = vsel %vm757, %v9572, 0.0
        %v9616 = vadd.f32 %v9614, %v9615
        %v9617 = vsel %vm757, %v9573, 0.0
        %v9618 = vadd.f32 %v9616, %v9617
        %v9619 = vsel %vm757, %v9574, 0.0
        %v9620 = vadd.f32 %v9618, %v9619
        %v9621 = vsel %vm757, %v9575, 0.0
        %v9622 = vadd.f32 %v9620, %v9621
        %v9623 = vsel %vm757, %v9576, 0.0
        %v9624 = vadd.f32 %v9622, %v9623
        %v9625 = vsel %vm757, %v9577, 0.0
        %v9626 = vadd.f32 %v9624, %v9625
        %v9627 = vsel %vm757, %v9578, 0.0
        %v9628 = vadd.f32 %v9626, %v9627
        %v9629 = vsel %vm757, %v9579, 0.0
        %v9630 = vadd.f32 %v9628, %v9629
        %v9631 = vsel %vm757, %v9580, 0.0
        %v9632 = vadd.f32 %v9630, %v9631
        %v9633 = vsel %vm757, %v9581, 0.0
        %v9634 = vadd.f32 %v9632, %v9633
        %v9635 = vsel %vm757, %v9582, 0.0
        %v9636 = vadd.f32 %v9634, %v9635
        %v9637 = vsel %vm757, %v9583, 0.0
        %v9638 = vadd.f32 %v9636, %v9637
        %v9639 = vsel %vm757, %v9584, 0.0
        %v9640 = vadd.f32 %v9638, %v9639
        %v9641 = vsel %vm757, %v9585, 0.0
        %v9642 = vadd.f32 %v9640, %v9641
        %v9643 = vsel %vm757, %v9586, 0.0
        %v9644 = vadd.f32 %v9642, %v9643
        %v9645 = vsel %vm757, %v9587, 0.0
        %v9646 = vadd.f32 %v9644, %v9645
        %v9647 = vsel %vm757, %v9588, 0.0
        %v9648 = vadd.f32 %v9646, %v9647
        %v9649 = vsel %vm757, %v9589, 0.0
        %v9650 = vadd.f32 %v9648, %v9649
        %v9651 = vsel %vm757, %v9590, 0.0
        %v9652 = vadd.f32 %v9650, %v9651
        %v9653 = vsel %vm757, %v9591, 0.0
        %v9654 = vadd.f32 %v9652, %v9653
        %v9655 = vsel %vm757, %v9592, 0.0
        %v9656 = vadd.f32 %v9654, %v9655
        %v9657 = vsel %vm757, %v9593, 0.0
        %v9658 = vadd.f32 %v9656, %v9657
        %v9659 = vrot.slane %v9658, 4
        %v9660 = vadd.f32 %v9658, %v9659
        %v9661 = vrot.slane %v9660, 2
        %v9662 = vadd.f32 %v9660, %v9661
        %v9663 = vrot.slane %v9662, 1
        %v9664 = vadd.f32 %v9662, %v9663
        %v9665 = vmul.f32 %v9664, 0.00390625
        %v9666 = vsub.f32 %v9562, %v9665
        %v9667 = vsub.f32 %v9563, %v9665
        %v9668 = vsub.f32 %v9564, %v9665
        %v9669 = vsub.f32 %v9565, %v9665
        %v9670 = vsub.f32 %v9566, %v9665
        %v9671 = vsub.f32 %v9567, %v9665
        %v9672 = vsub.f32 %v9568, %v9665
        %v9673 = vsub.f32 %v9569, %v9665
        %v9674 = vsub.f32 %v9570, %v9665
        %v9675 = vsub.f32 %v9571, %v9665
        %v9676 = vsub.f32 %v9572, %v9665
        %v9677 = vsub.f32 %v9573, %v9665
        %v9678 = vsub.f32 %v9574, %v9665
        %v9679 = vsub.f32 %v9575, %v9665
        %v9680 = vsub.f32 %v9576, %v9665
        %v9681 = vsub.f32 %v9577, %v9665
        %v9682 = vsub.f32 %v9578, %v9665
        %v9683 = vsub.f32 %v9579, %v9665
        %v9684 = vsub.f32 %v9580, %v9665
        %v9685 = vsub.f32 %v9581, %v9665
        %v9686 = vsub.f32 %v9582, %v9665
        %v9687 = vsub.f32 %v9583, %v9665
        %v9688 = vsub.f32 %v9584, %v9665
        %v9689 = vsub.f32 %v9585, %v9665
        %v9690 = vsub.f32 %v9586, %v9665
        %v9691 = vsub.f32 %v9587, %v9665
        %v9692 = vsub.f32 %v9588, %v9665
        %v9693 = vsub.f32 %v9589, %v9665
        %v9694 = vsub.f32 %v9590, %v9665
        %v9695 = vsub.f32 %v9591, %v9665
        %v9696 = vsub.f32 %v9592, %v9665
        %v9697 = vsub.f32 %v9593, %v9665
        %v9698 = vmul.f32 %v9666, %v9666
        %v9699 = vmul.f32 %v9667, %v9667
        %v9700 = vmul.f32 %v9668, %v9668
        %v9701 = vmul.f32 %v9669, %v9669
        %v9702 = vmul.f32 %v9670, %v9670
        %v9703 = vmul.f32 %v9671, %v9671
        %v9704 = vmul.f32 %v9672, %v9672
        %v9705 = vmul.f32 %v9673, %v9673
        %v9706 = vmul.f32 %v9674, %v9674
        %v9707 = vmul.f32 %v9675, %v9675
        %v9708 = vmul.f32 %v9676, %v9676
        %v9709 = vmul.f32 %v9677, %v9677
        %v9710 = vmul.f32 %v9678, %v9678
        %v9711 = vmul.f32 %v9679, %v9679
        %v9712 = vmul.f32 %v9680, %v9680
        %v9713 = vmul.f32 %v9681, %v9681
        %v9714 = vmul.f32 %v9682, %v9682
        %v9715 = vmul.f32 %v9683, %v9683
        %v9716 = vmul.f32 %v9684, %v9684
        %v9717 = vmul.f32 %v9685, %v9685
        %v9718 = vmul.f32 %v9686, %v9686
        %v9719 = vmul.f32 %v9687, %v9687
        %v9720 = vmul.f32 %v9688, %v9688
        %v9721 = vmul.f32 %v9689, %v9689
        %v9722 = vmul.f32 %v9690, %v9690
        %v9723 = vmul.f32 %v9691, %v9691
        %v9724 = vmul.f32 %v9692, %v9692
        %v9725 = vmul.f32 %v9693, %v9693
        %v9726 = vmul.f32 %v9694, %v9694
        %v9727 = vmul.f32 %v9695, %v9695
        %v9728 = vmul.f32 %v9696, %v9696
        %v9729 = vmul.f32 %v9697, %v9697
        %v9730 = vsel %vm757, %v9698, 0.0
        %v9731 = vsel %vm757, %v9699, 0.0
        %v9732 = vadd.f32 %v9730, %v9731
        %v9733 = vsel %vm757, %v9700, 0.0
        %v9734 = vadd.f32 %v9732, %v9733
        %v9735 = vsel %vm757, %v9701, 0.0
        %v9736 = vadd.f32 %v9734, %v9735
        %v9737 = vsel %vm757, %v9702, 0.0
        %v9738 = vadd.f32 %v9736, %v9737
        %v9739 = vsel %vm757, %v9703, 0.0
        %v9740 = vadd.f32 %v9738, %v9739
        %v9741 = vsel %vm757, %v9704, 0.0
        %v9742 = vadd.f32 %v9740, %v9741
        %v9743 = vsel %vm757, %v9705, 0.0
        %v9744 = vadd.f32 %v9742, %v9743
        %v9745 = vsel %vm757, %v9706, 0.0
        %v9746 = vadd.f32 %v9744, %v9745
        %v9747 = vsel %vm757, %v9707, 0.0
        %v9748 = vadd.f32 %v9746, %v9747
        %v9749 = vsel %vm757, %v9708, 0.0
        %v9750 = vadd.f32 %v9748, %v9749
        %v9751 = vsel %vm757, %v9709, 0.0
        %v9752 = vadd.f32 %v9750, %v9751
        %v9753 = vsel %vm757, %v9710, 0.0
        %v9754 = vadd.f32 %v9752, %v9753
        %v9755 = vsel %vm757, %v9711, 0.0
        %v9756 = vadd.f32 %v9754, %v9755
        %v9757 = vsel %vm757, %v9712, 0.0
        %v9758 = vadd.f32 %v9756, %v9757
        %v9759 = vsel %vm757, %v9713, 0.0
        %v9760 = vadd.f32 %v9758, %v9759
        %v9761 = vsel %vm757, %v9714, 0.0
        %v9762 = vadd.f32 %v9760, %v9761
        %v9763 = vsel %vm757, %v9715, 0.0
        %v9764 = vadd.f32 %v9762, %v9763
        %v9765 = vsel %vm757, %v9716, 0.0
        %v9766 = vadd.f32 %v9764, %v9765
        %v9767 = vsel %vm757, %v9717, 0.0
        %v9768 = vadd.f32 %v9766, %v9767
        %v9769 = vsel %vm757, %v9718, 0.0
        %v9770 = vadd.f32 %v9768, %v9769
        %v9771 = vsel %vm757, %v9719, 0.0
        %v9772 = vadd.f32 %v9770, %v9771
        %v9773 = vsel %vm757, %v9720, 0.0
        %v9774 = vadd.f32 %v9772, %v9773
        %v9775 = vsel %vm757, %v9721, 0.0
        %v9776 = vadd.f32 %v9774, %v9775
        %v9777 = vsel %vm757, %v9722, 0.0
        %v9778 = vadd.f32 %v9776, %v9777
        %v9779 = vsel %vm757, %v9723, 0.0
        %v9780 = vadd.f32 %v9778, %v9779
        %v9781 = vsel %vm757, %v9724, 0.0
        %v9782 = vadd.f32 %v9780, %v9781
        %v9783 = vsel %vm757, %v9725, 0.0
        %v9784 = vadd.f32 %v9782, %v9783
        %v9785 = vsel %vm757, %v9726, 0.0
        %v9786 = vadd.f32 %v9784, %v9785
        %v9787 = vsel %vm757, %v9727, 0.0
        %v9788 = vadd.f32 %v9786, %v9787
        %v9789 = vsel %vm757, %v9728, 0.0
        %v9790 = vadd.f32 %v9788, %v9789
        %v9791 = vsel %vm757, %v9729, 0.0
        %v9792 = vadd.f32 %v9790, %v9791
        %v9793 = vrot.slane %v9792, 4
        %v9794 = vadd.f32 %v9792, %v9793
        %v9795 = vrot.slane %v9794, 2
        %v9796 = vadd.f32 %v9794, %v9795
        %v9797 = vrot.slane %v9796, 1
        %v9798 = vadd.f32 %v9796, %v9797
        %v9799 = vmul.f32 %v9798, 0.00390625
        %v9800 = vadd.f32 %v9799, 1e-05
        %v9801 = vrsqrt.pop %v9800
        %v9802 = vmul.f32 %v9666, %v9801
        %v9803 = vmul.f32 %v9667, %v9801
        %v9804 = vmul.f32 %v9668, %v9801
        %v9805 = vmul.f32 %v9669, %v9801
        %v9806 = vmul.f32 %v9670, %v9801
        %v9807 = vmul.f32 %v9671, %v9801
        %v9808 = vmul.f32 %v9672, %v9801
        %v9809 = vmul.f32 %v9673, %v9801
        %v9810 = vmul.f32 %v9674, %v9801
        %v9811 = vmul.f32 %v9675, %v9801
        %v9812 = vmul.f32 %v9676, %v9801
        %v9813 = vmul.f32 %v9677, %v9801
        %v9814 = vmul.f32 %v9678, %v9801
        %v9815 = vmul.f32 %v9679, %v9801
        %v9816 = vmul.f32 %v9680, %v9801
        %v9817 = vmul.f32 %v9681, %v9801
        %v9818 = vmul.f32 %v9682, %v9801
        %v9819 = vmul.f32 %v9683, %v9801
        %v9820 = vmul.f32 %v9684, %v9801
        %v9821 = vmul.f32 %v9685, %v9801
        %v9822 = vmul.f32 %v9686, %v9801
        %v9823 = vmul.f32 %v9687, %v9801
        %v9824 = vmul.f32 %v9688, %v9801
        %v9825 = vmul.f32 %v9689, %v9801
        %v9826 = vmul.f32 %v9690, %v9801
        %v9827 = vmul.f32 %v9691, %v9801
        %v9828 = vmul.f32 %v9692, %v9801
        %v9829 = vmul.f32 %v9693, %v9801
        %v9830 = vmul.f32 %v9694, %v9801
        %v9831 = vmul.f32 %v9695, %v9801
        %v9832 = vmul.f32 %v9696, %v9801
        %v9833 = vmul.f32 %v9697, %v9801
        %v9835 = vlaneseq
        %v9836 = vshrl.u32 %v9835, 7
        %v9837 = vsub.s32 0, %v9836
        %v9838 = vrot.slane %v9594, %v9837
        %v9840 = vmul.f32 %v9802, %v9838
        %v9841 = vmul.f32 %v9803, %v9838
        %v9842 = vmul.f32 %v9804, %v9838
        %v9843 = vmul.f32 %v9805, %v9838
        %v9844 = vmul.f32 %v9806, %v9838
        %v9845 = vmul.f32 %v9807, %v9838
        %v9846 = vmul.f32 %v9808, %v9838
        %v9847 = vmul.f32 %v9809, %v9838
        %v9848 = vmul.f32 %v9810, %v9838
        %v9849 = vmul.f32 %v9811, %v9838
        %v9850 = vmul.f32 %v9812, %v9838
        %v9851 = vmul.f32 %v9813, %v9838
        %v9852 = vmul.f32 %v9814, %v9838
        %v9853 = vmul.f32 %v9815, %v9838
        %v9854 = vmul.f32 %v9816, %v9838
        %v9855 = vmul.f32 %v9817, %v9838
        %v9856 = vmul.f32 %v9818, %v9838
        %v9857 = vmul.f32 %v9819, %v9838
        %v9858 = vmul.f32 %v9820, %v9838
        %v9859 = vmul.f32 %v9821, %v9838
        %v9860 = vmul.f32 %v9822, %v9838
        %v9861 = vmul.f32 %v9823, %v9838
        %v9862 = vmul.f32 %v9824, %v9838
        %v9863 = vmul.f32 %v9825, %v9838
        %v9864 = vmul.f32 %v9826, %v9838
        %v9865 = vmul.f32 %v9827, %v9838
        %v9866 = vmul.f32 %v9828, %v9838
        %v9867 = vmul.f32 %v9829, %v9838
        %v9868 = vmul.f32 %v9830, %v9838
        %v9869 = vmul.f32 %v9831, %v9838
        %v9870 = vmul.f32 %v9832, %v9838
        %v9871 = vmul.f32 %v9833, %v9838
        %v9873 = vlaneseq
        %v9874 = vshrl.u32 %v9873, 7
        %v9875 = vsub.s32 0, %v9874
        %v9876 = vrot.slane %v9595, %v9875
        %v9878 = vadd.f32 %v9840, %v9876
        %v9879 = vadd.f32 %v9841, %v9876
        %v9880 = vadd.f32 %v9842, %v9876
        %v9881 = vadd.f32 %v9843, %v9876
        %v9882 = vadd.f32 %v9844, %v9876
        %v9883 = vadd.f32 %v9845, %v9876
        %v9884 = vadd.f32 %v9846, %v9876
        %v9885 = vadd.f32 %v9847, %v9876
        %v9886 = vadd.f32 %v9848, %v9876
        %v9887 = vadd.f32 %v9849, %v9876
        %v9888 = vadd.f32 %v9850, %v9876
        %v9889 = vadd.f32 %v9851, %v9876
        %v9890 = vadd.f32 %v9852, %v9876
        %v9891 = vadd.f32 %v9853, %v9876
        %v9892 = vadd.f32 %v9854, %v9876
        %v9893 = vadd.f32 %v9855, %v9876
        %v9894 = vadd.f32 %v9856, %v9876
        %v9895 = vadd.f32 %v9857, %v9876
        %v9896 = vadd.f32 %v9858, %v9876
        %v9897 = vadd.f32 %v9859, %v9876
        %v9898 = vadd.f32 %v9860, %v9876
        %v9899 = vadd.f32 %v9861, %v9876
        %v9900 = vadd.f32 %v9862, %v9876
        %v9901 = vadd.f32 %v9863, %v9876
        %v9902 = vadd.f32 %v9864, %v9876
        %v9903 = vadd.f32 %v9865, %v9876
        %v9904 = vadd.f32 %v9866, %v9876
        %v9905 = vadd.f32 %v9867, %v9876
        %v9906 = vadd.f32 %v9868, %v9876
        %v9907 = vadd.f32 %v9869, %v9876
        %v9908 = vadd.f32 %v9870, %v9876
        %v9909 = vadd.f32 %v9871, %v9876
        %vm9910 = vcmp.gt.f32.partialorder %v9878, 0.0
        %vm9911 = vcmp.gt.f32.partialorder %v9879, 0.0
        %vm9912 = vcmp.gt.f32.partialorder %v9880, 0.0
        %vm9913 = vcmp.gt.f32.partialorder %v9881, 0.0
        %vm9914 = vcmp.gt.f32.partialorder %v9882, 0.0
        %vm9915 = vcmp.gt.f32.partialorder %v9883, 0.0
        %vm9916 = vcmp.gt.f32.partialorder %v9884, 0.0
        %vm9917 = vcmp.gt.f32.partialorder %v9885, 0.0
        %vm9918 = vcmp.gt.f32.partialorder %v9886, 0.0
        %vm9919 = vcmp.gt.f32.partialorder %v9887, 0.0
        %vm9920 = vcmp.gt.f32.partialorder %v9888, 0.0
        %vm9921 = vcmp.gt.f32.partialorder %v9889, 0.0
        %vm9922 = vcmp.gt.f32.partialorder %v9890, 0.0
        %vm9923 = vcmp.gt.f32.partialorder %v9891, 0.0
        %vm9924 = vcmp.gt.f32.partialorder %v9892, 0.0
        %vm9925 = vcmp.gt.f32.partialorder %v9893, 0.0
        %vm9926 = vcmp.gt.f32.partialorder %v9894, 0.0
        %vm9927 = vcmp.gt.f32.partialorder %v9895, 0.0
        %vm9928 = vcmp.gt.f32.partialorder %v9896, 0.0
        %vm9929 = vcmp.gt.f32.partialorder %v9897, 0.0
        %vm9930 = vcmp.gt.f32.partialorder %v9898, 0.0
        %vm9931 = vcmp.gt.f32.partialorder %v9899, 0.0
        %vm9932 = vcmp.gt.f32.partialorder %v9900, 0.0
        %vm9933 = vcmp.gt.f32.partialorder %v9901, 0.0
        %vm9934 = vcmp.gt.f32.partialorder %v9902, 0.0
        %vm9935 = vcmp.gt.f32.partialorder %v9903, 0.0
        %vm9936 = vcmp.gt.f32.partialorder %v9904, 0.0
        %vm9937 = vcmp.gt.f32.partialorder %v9905, 0.0
        %vm9938 = vcmp.gt.f32.partialorder %v9906, 0.0
        %vm9939 = vcmp.gt.f32.partialorder %v9907, 0.0
        %vm9940 = vcmp.gt.f32.partialorder %v9908, 0.0
        %vm9941 = vcmp.gt.f32.partialorder %v9909, 0.0
        %v9942 = vmul.f32 %v1104, %v9878
        %v9943 = vmul.f32 %v1104, %v9879
        %v9944 = vmul.f32 %v1104, %v9880
        %v9945 = vmul.f32 %v1104, %v9881
        %v9946 = vmul.f32 %v1104, %v9882
        %v9947 = vmul.f32 %v1104, %v9883
        %v9948 = vmul.f32 %v1104, %v9884
        %v9949 = vmul.f32 %v1104, %v9885
        %v9950 = vmul.f32 %v1104, %v9886
        %v9951 = vmul.f32 %v1104, %v9887
        %v9952 = vmul.f32 %v1104, %v9888
        %v9953 = vmul.f32 %v1104, %v9889
        %v9954 = vmul.f32 %v1104, %v9890
        %v9955 = vmul.f32 %v1104, %v9891
        %v9956 = vmul.f32 %v1104, %v9892
        %v9957 = vmul.f32 %v1104, %v9893
        %v9958 = vmul.f32 %v1104, %v9894
        %v9959 = vmul.f32 %v1104, %v9895
        %v9960 = vmul.f32 %v1104, %v9896
        %v9961 = vmul.f32 %v1104, %v9897
        %v9962 = vmul.f32 %v1104, %v9898
        %v9963 = vmul.f32 %v1104, %v9899
        %v9964 = vmul.f32 %v1104, %v9900
        %v9965 = vmul.f32 %v1104, %v9901
        %v9966 = vmul.f32 %v1104, %v9902
        %v9967 = vmul.f32 %v1104, %v9903
        %v9968 = vmul.f32 %v1104, %v9904
        %v9969 = vmul.f32 %v1104, %v9905
        %v9970 = vmul.f32 %v1104, %v9906
        %v9971 = vmul.f32 %v1104, %v9907
        %v9972 = vmul.f32 %v1104, %v9908
        %v9973 = vmul.f32 %v1104, %v9909
        %v9974 = vsel %vm9910, %v9878, %v9942
        %v9975 = vsel %vm9911, %v9879, %v9943
        %v9976 = vsel %vm9912, %v9880, %v9944
        %v9977 = vsel %vm9913, %v9881, %v9945
        %v9978 = vsel %vm9914, %v9882, %v9946
        %v9979 = vsel %vm9915, %v9883, %v9947
        %v9980 = vsel %vm9916, %v9884, %v9948
        %v9981 = vsel %vm9917, %v9885, %v9949
        %v9982 = vsel %vm9918, %v9886, %v9950
        %v9983 = vsel %vm9919, %v9887, %v9951
        %v9984 = vsel %vm9920, %v9888, %v9952
        %v9985 = vsel %vm9921, %v9889, %v9953
        %v9986 = vsel %vm9922, %v9890, %v9954
        %v9987 = vsel %vm9923, %v9891, %v9955
        %v9988 = vsel %vm9924, %v9892, %v9956
        %v9989 = vsel %vm9925, %v9893, %v9957
        %v9990 = vsel %vm9926, %v9894, %v9958
        %v9991 = vsel %vm9927, %v9895, %v9959
        %v9992 = vsel %vm9928, %v9896, %v9960
        %v9993 = vsel %vm9929, %v9897, %v9961
        %v9994 = vsel %vm9930, %v9898, %v9962
        %v9995 = vsel %vm9931, %v9899, %v9963
        %v9996 = vsel %vm9932, %v9900, %v9964
        %v9997 = vsel %vm9933, %v9901, %v9965
        %v9998 = vsel %vm9934, %v9902, %v9966
        %v9999 = vsel %vm9935, %v9903, %v9967
        %v10000 = vsel %vm9936, %v9904, %v9968
        %v10001 = vsel %vm9937, %v9905, %v9969
        %v10002 = vsel %vm9938, %v9906, %v9970
        %v10003 = vsel %vm9939, %v9907, %v9971
        %v10004 = vsel %vm9940, %v9908, %v9972
        %v10005 = vsel %vm9941, %v9909, %v9973
        %v10006 = vpack.c.bf16 %v9975, %v9974
        %v10007 = vpack.c.bf16 %v9977, %v9976
        %v10008 = vpack.c.bf16 %v9979, %v9978
        %v10009 = vpack.c.bf16 %v9981, %v9980
        %v10010 = vpack.c.bf16 %v9983, %v9982
        %v10011 = vpack.c.bf16 %v9985, %v9984
        %v10012 = vpack.c.bf16 %v9987, %v9986
        %v10013 = vpack.c.bf16 %v9989, %v9988
        %v10014 = vpack.c.bf16 %v9991, %v9990
        %v10015 = vpack.c.bf16 %v9993, %v9992
        %v10016 = vpack.c.bf16 %v9995, %v9994
        %v10017 = vpack.c.bf16 %v9997, %v9996
        %v10018 = vpack.c.bf16 %v9999, %v9998
        %v10019 = vpack.c.bf16 %v10001, %v10000
        %v10020 = vpack.c.bf16 %v10003, %v10002
        %v10021 = vpack.c.bf16 %v10005, %v10004
        %v10022 = vld [vmem:[%s3] sm:$0xf]
        %v10023 = vld [vmem:[%s3 + $0x4] sm:$0xf]
        %v10024 = vld [vmem:[%s3 + $0x8] sm:$0xf]
        %v10025 = vld [vmem:[%s3 + $0xc] sm:$0xf]
        %v10030 = vunpack.c.l.b16 %v10022
        %v10031 = vunpack.c.l.b16 %v10023
        %v10032 = vunpack.c.l.b16 %v10024
        %v10033 = vunpack.c.l.b16 %v10025
        %v10034 = vpack.c.b16 %v10031, %v10030
        %v10035 = vpack.c.b16 %v10033, %v10032
        %v10039 = vsel %vm757, %v10006, 0
        %v10042 = vsel %vm757, %v10007, 0
        %v10045 = vsel %vm757, %v10008, 0
        %v10048 = vsel %vm757, %v10009, 0
        %v10051 = vsel %vm757, %v10010, 0
        %v10054 = vsel %vm757, %v10011, 0
        %v10057 = vsel %vm757, %v10012, 0
        %v10060 = vsel %vm757, %v10013, 0
        %v10063 = vsel %vm757, %v10014, 0
        %v10066 = vsel %vm757, %v10015, 0
        %v10069 = vsel %vm757, %v10016, 0
        %v10072 = vsel %vm757, %v10017, 0
        %v10075 = vsel %vm757, %v10018, 0
        %v10078 = vsel %vm757, %v10019, 0
        %v10081 = vsel %vm757, %v10020, 0
        %v10084 = vsel %vm757, %v10021, 0
        %10086 = vmatprep.subr.bf16.mxu0 0
        %10087 = vmatpush1.bf16.msra.mxu0 0
        %10088 = vmatprep.subr.bf16.mxu0 0
        %10089 = vmatpush1.bf16.msra.mxu0 0
        %10090 = vmatprep.subr.bf16.mxu0 0
        %10091 = vmatpush1.bf16.msra.mxu0 0
        %10092 = vmatprep.subr.bf16.mxu0 0
        %10093 = vmatpush1.bf16.msra.mxu0 0
        %10094 = vmatprep.subr.bf16.mxu0 0
        %10095 = vmatpush1.bf16.msra.mxu0 0
        %10096 = vmatprep.subr.bf16.mxu0 0
        %10097 = vmatpush1.bf16.msra.mxu0 0
        %10098 = vmatprep.subr.bf16.mxu0 0
        %10099 = vmatpush1.bf16.msra.mxu0 %v10035
        %10100 = vmatprep.subr.bf16.mxu0 0
        %10101 = vmatpush1.bf16.msra.mxu0 %v10034
        %10102 = vmatprep.subr.bf16.mxu0 0
        %10103 = vmatpush2.bf16.msra.mxu0 0
        %10104 = vmatprep.subr.bf16.mxu0 0
        %10105 = vmatpush2.bf16.msra.mxu0 0
        %10106 = vmatprep.subr.bf16.mxu0 0
        %10107 = vmatpush2.bf16.msra.mxu0 0
        %10108 = vmatprep.subr.bf16.mxu0 0
        %10109 = vmatpush2.bf16.msra.mxu0 0
        %10110 = vmatprep.subr.bf16.mxu0 0
        %10111 = vmatpush2.bf16.msra.mxu0 0
        %10112 = vmatprep.subr.bf16.mxu0 0
        %10113 = vmatpush2.bf16.msra.mxu0 0
        %10114 = vmatprep.subr.bf16.mxu0 0
        %10115 = vmatpush2.bf16.msra.mxu0 0
        %10116 = vmatprep.subr.bf16.mxu0 0
        %10117 = vmatpush2.bf16.msra.mxu0 0
        %10118 = vmatprep.mubr.bf16.mxu0 0
        %10119 = vmatmul.mubr.bf16.gmra.mxu0 %v10039
        %v10120 = vpop.f32.mrf.mxu0
        %v10121 = vadd.f32 0.0, %v10120
        %v10122 = vpop.f32.mrf.mxu0
        %v10123 = vpop.f32.mrf.mxu0
        %v10124 = vadd.f32 0.0, %v10123
        %v10125 = vpop.f32.mrf.mxu0
        %10126 = vmatprep.mubr.bf16.mxu0 0
        %10127 = vmatmul.mubr.bf16.gmra.mxu0 %v10042
        %v10128 = vpop.f32.mrf.mxu0
        %v10129 = vadd.f32 0.0, %v10128
        %v10130 = vpop.f32.mrf.mxu0
        %v10131 = vpop.f32.mrf.mxu0
        %v10132 = vadd.f32 0.0, %v10131
        %v10133 = vpop.f32.mrf.mxu0
        %10134 = vmatprep.mubr.bf16.mxu0 0
        %10135 = vmatmul.mubr.bf16.gmra.mxu0 %v10045
        %v10136 = vpop.f32.mrf.mxu0
        %v10137 = vadd.f32 0.0, %v10136
        %v10138 = vpop.f32.mrf.mxu0
        %v10139 = vpop.f32.mrf.mxu0
        %v10140 = vadd.f32 0.0, %v10139
        %v10141 = vpop.f32.mrf.mxu0
        %10142 = vmatprep.mubr.bf16.mxu0 0
        %10143 = vmatmul.mubr.bf16.gmra.mxu0 %v10048
        %v10144 = vpop.f32.mrf.mxu0
        %v10145 = vadd.f32 0.0, %v10144
        %v10146 = vpop.f32.mrf.mxu0
        %v10147 = vpop.f32.mrf.mxu0
        %v10148 = vadd.f32 0.0, %v10147
        %v10149 = vpop.f32.mrf.mxu0
        %10150 = vmatprep.mubr.bf16.mxu0 0
        %10151 = vmatmul.mubr.bf16.gmra.mxu0 %v10051
        %v10152 = vpop.f32.mrf.mxu0
        %v10153 = vadd.f32 0.0, %v10152
        %v10154 = vpop.f32.mrf.mxu0
        %v10155 = vpop.f32.mrf.mxu0
        %v10156 = vadd.f32 0.0, %v10155
        %v10157 = vpop.f32.mrf.mxu0
        %10158 = vmatprep.mubr.bf16.mxu0 0
        %10159 = vmatmul.mubr.bf16.gmra.mxu0 %v10054
        %v10160 = vpop.f32.mrf.mxu0
        %v10161 = vadd.f32 0.0, %v10160
        %v10162 = vpop.f32.mrf.mxu0
        %v10163 = vpop.f32.mrf.mxu0
        %v10164 = vadd.f32 0.0, %v10163
        %v10165 = vpop.f32.mrf.mxu0
        %10166 = vmatprep.mubr.bf16.mxu0 0
        %10167 = vmatmul.mubr.bf16.gmra.mxu0 %v10057
        %v10168 = vpop.f32.mrf.mxu0
        %v10169 = vadd.f32 0.0, %v10168
        %v10170 = vpop.f32.mrf.mxu0
        %v10171 = vpop.f32.mrf.mxu0
        %v10172 = vadd.f32 0.0, %v10171
        %v10173 = vpop.f32.mrf.mxu0
        %10174 = vmatprep.mubr.bf16.mxu0 0
        %10175 = vmatmul.mubr.bf16.gmra.mxu0 %v10060
        %v10176 = vpop.f32.mrf.mxu0
        %v10177 = vadd.f32 0.0, %v10176
        %v10178 = vpop.f32.mrf.mxu0
        %v10179 = vpop.f32.mrf.mxu0
        %v10180 = vadd.f32 0.0, %v10179
        %v10181 = vpop.f32.mrf.mxu0
        %10182 = vmatprep.mubr.bf16.mxu0 0
        %10183 = vmatmul.mubr.bf16.gmra.mxu0 %v10063
        %v10184 = vpop.f32.mrf.mxu0
        %v10185 = vadd.f32 0.0, %v10184
        %v10186 = vpop.f32.mrf.mxu0
        %v10187 = vpop.f32.mrf.mxu0
        %v10188 = vadd.f32 0.0, %v10187
        %v10189 = vpop.f32.mrf.mxu0
        %10190 = vmatprep.mubr.bf16.mxu0 0
        %10191 = vmatmul.mubr.bf16.gmra.mxu0 %v10066
        %v10192 = vpop.f32.mrf.mxu0
        %v10193 = vadd.f32 0.0, %v10192
        %v10194 = vpop.f32.mrf.mxu0
        %v10195 = vpop.f32.mrf.mxu0
        %v10196 = vadd.f32 0.0, %v10195
        %v10197 = vpop.f32.mrf.mxu0
        %10198 = vmatprep.mubr.bf16.mxu0 0
        %10199 = vmatmul.mubr.bf16.gmra.mxu0 %v10069
        %v10200 = vpop.f32.mrf.mxu0
        %v10201 = vadd.f32 0.0, %v10200
        %v10202 = vpop.f32.mrf.mxu0
        %v10203 = vpop.f32.mrf.mxu0
        %v10204 = vadd.f32 0.0, %v10203
        %v10205 = vpop.f32.mrf.mxu0
        %10206 = vmatprep.mubr.bf16.mxu0 0
        %10207 = vmatmul.mubr.bf16.gmra.mxu0 %v10072
        %v10208 = vpop.f32.mrf.mxu0
        %v10209 = vadd.f32 0.0, %v10208
        %v10210 = vpop.f32.mrf.mxu0
        %v10211 = vpop.f32.mrf.mxu0
        %v10212 = vadd.f32 0.0, %v10211
        %v10213 = vpop.f32.mrf.mxu0
        %10214 = vmatprep.mubr.bf16.mxu0 0
        %10215 = vmatmul.mubr.bf16.gmra.mxu0 %v10075
        %v10216 = vpop.f32.mrf.mxu0
        %v10217 = vadd.f32 0.0, %v10216
        %v10218 = vpop.f32.mrf.mxu0
        %v10219 = vpop.f32.mrf.mxu0
        %v10220 = vadd.f32 0.0, %v10219
        %v10221 = vpop.f32.mrf.mxu0
        %10222 = vmatprep.mubr.bf16.mxu0 0
        %10223 = vmatmul.mubr.bf16.gmra.mxu0 %v10078
        %v10224 = vpop.f32.mrf.mxu0
        %v10225 = vadd.f32 0.0, %v10224
        %v10226 = vpop.f32.mrf.mxu0
        %v10227 = vpop.f32.mrf.mxu0
        %v10228 = vadd.f32 0.0, %v10227
        %v10229 = vpop.f32.mrf.mxu0
        %10230 = vmatprep.mubr.bf16.mxu0 0
        %10231 = vmatmul.mubr.bf16.gmra.mxu0 %v10081
        %v10232 = vpop.f32.mrf.mxu0
        %v10233 = vadd.f32 0.0, %v10232
        %v10234 = vpop.f32.mrf.mxu0
        %v10235 = vpop.f32.mrf.mxu0
        %v10236 = vadd.f32 0.0, %v10235
        %v10237 = vpop.f32.mrf.mxu0
        %10238 = vmatprep.mubr.bf16.mxu0 0
        %10239 = vmatmul.mubr.bf16.gmra.mxu0 %v10084
        %v10240 = vpop.f32.mrf.mxu0
        %v10241 = vadd.f32 0.0, %v10240
        %v10242 = vpop.f32.mrf.mxu0
        %v10243 = vpop.f32.mrf.mxu0
        %v10244 = vadd.f32 0.0, %v10243
        %v10245 = vpop.f32.mrf.mxu0
        %10246 = vdwg.mxu0
        %v10247 = vld [vmem:[%s8] sm:$0x1]
        %v10248 = vld [vmem:[%s9] sm:$0x1]
        %v10249 = vadd.f32 %v10121, %v10124
        %v10250 = vadd.f32 %v10249, %v10129
        %v10251 = vadd.f32 %v10250, %v10132
        %v10252 = vadd.f32 %v10251, %v10137
        %v10253 = vadd.f32 %v10252, %v10140
        %v10254 = vadd.f32 %v10253, %v10145
        %v10255 = vadd.f32 %v10254, %v10148
        %v10256 = vadd.f32 %v10255, %v10153
        %v10257 = vadd.f32 %v10256, %v10156
        %v10258 = vadd.f32 %v10257, %v10161
        %v10259 = vadd.f32 %v10258, %v10164
        %v10260 = vadd.f32 %v10259, %v10169
        %v10261 = vadd.f32 %v10260, %v10172
        %v10262 = vadd.f32 %v10261, %v10177
        %v10263 = vadd.f32 %v10262, %v10180
        %v10264 = vadd.f32 %v10263, %v10185
        %v10265 = vadd.f32 %v10264, %v10188
        %v10266 = vadd.f32 %v10265, %v10193
        %v10267 = vadd.f32 %v10266, %v10196
        %v10268 = vadd.f32 %v10267, %v10201
        %v10269 = vadd.f32 %v10268, %v10204
        %v10270 = vadd.f32 %v10269, %v10209
        %v10271 = vadd.f32 %v10270, %v10212
        %v10272 = vadd.f32 %v10271, %v10217
        %v10273 = vadd.f32 %v10272, %v10220
        %v10274 = vadd.f32 %v10273, %v10225
        %v10275 = vadd.f32 %v10274, %v10228
        %v10276 = vadd.f32 %v10275, %v10233
        %v10277 = vadd.f32 %v10276, %v10236
        %v10278 = vadd.f32 %v10277, %v10241
        %v10279 = vadd.f32 %v10278, %v10244
        %v10280 = vrot.slane %v10279, 4
        %v10281 = vadd.f32 %v10279, %v10280
        %v10282 = vrot.slane %v10281, 2
        %v10283 = vadd.f32 %v10281, %v10282
        %v10284 = vrot.slane %v10283, 1
        %v10285 = vadd.f32 %v10283, %v10284
        %v10286 = vmul.f32 %v10121, %v10121
        %v10287 = vmul.f32 %v10124, %v10124
        %v10288 = vmul.f32 %v10129, %v10129
        %v10289 = vmul.f32 %v10132, %v10132
        %v10290 = vmul.f32 %v10137, %v10137
        %v10291 = vmul.f32 %v10140, %v10140
        %v10292 = vmul.f32 %v10145, %v10145
        %v10293 = vmul.f32 %v10148, %v10148
        %v10294 = vmul.f32 %v10153, %v10153
        %v10295 = vmul.f32 %v10156, %v10156
        %v10296 = vmul.f32 %v10161, %v10161
        %v10297 = vmul.f32 %v10164, %v10164
        %v10298 = vmul.f32 %v10169, %v10169
        %v10299 = vmul.f32 %v10172, %v10172
        %v10300 = vmul.f32 %v10177, %v10177
        %v10301 = vmul.f32 %v10180, %v10180
        %v10302 = vmul.f32 %v10185, %v10185
        %v10303 = vmul.f32 %v10188, %v10188
        %v10304 = vmul.f32 %v10193, %v10193
        %v10305 = vmul.f32 %v10196, %v10196
        %v10306 = vmul.f32 %v10201, %v10201
        %v10307 = vmul.f32 %v10204, %v10204
        %v10308 = vmul.f32 %v10209, %v10209
        %v10309 = vmul.f32 %v10212, %v10212
        %v10310 = vmul.f32 %v10217, %v10217
        %v10311 = vmul.f32 %v10220, %v10220
        %v10312 = vmul.f32 %v10225, %v10225
        %v10313 = vmul.f32 %v10228, %v10228
        %v10314 = vmul.f32 %v10233, %v10233
        %v10315 = vmul.f32 %v10236, %v10236
        %v10316 = vmul.f32 %v10241, %v10241
        %v10317 = vmul.f32 %v10244, %v10244
        %v10318 = vadd.f32 %v10286, %v10287
        %v10319 = vadd.f32 %v10318, %v10288
        %v10320 = vadd.f32 %v10319, %v10289
        %v10321 = vadd.f32 %v10320, %v10290
        %v10322 = vadd.f32 %v10321, %v10291
        %v10323 = vadd.f32 %v10322, %v10292
        %v10324 = vadd.f32 %v10323, %v10293
        %v10325 = vadd.f32 %v10324, %v10294
        %v10326 = vadd.f32 %v10325, %v10295
        %v10327 = vadd.f32 %v10326, %v10296
        %v10328 = vadd.f32 %v10327, %v10297
        %v10329 = vadd.f32 %v10328, %v10298
        %v10330 = vadd.f32 %v10329, %v10299
        %v10331 = vadd.f32 %v10330, %v10300
        %v10332 = vadd.f32 %v10331, %v10301
        %v10333 = vadd.f32 %v10332, %v10302
        %v10334 = vadd.f32 %v10333, %v10303
        %v10335 = vadd.f32 %v10334, %v10304
        %v10336 = vadd.f32 %v10335, %v10305
        %v10337 = vadd.f32 %v10336, %v10306
        %v10338 = vadd.f32 %v10337, %v10307
        %v10339 = vadd.f32 %v10338, %v10308
        %v10340 = vadd.f32 %v10339, %v10309
        %v10341 = vadd.f32 %v10340, %v10310
        %v10342 = vadd.f32 %v10341, %v10311
        %v10343 = vadd.f32 %v10342, %v10312
        %v10344 = vadd.f32 %v10343, %v10313
        %v10345 = vadd.f32 %v10344, %v10314
        %v10346 = vadd.f32 %v10345, %v10315
        %v10347 = vadd.f32 %v10346, %v10316
        %v10348 = vadd.f32 %v10347, %v10317
        %v10349 = vrot.slane %v10348, 4
        %v10350 = vadd.f32 %v10348, %v10349
        %v10351 = vrot.slane %v10350, 2
        %v10352 = vadd.f32 %v10350, %v10351
        %v10353 = vrot.slane %v10352, 1
        %v10354 = vadd.f32 %v10352, %v10353
        %vm10355 = vcmask 1040384
        %v10356 = vsel %vm10355, %v10285, %v10354
        %10357 = vmatprep.subr.mxu0 0.0
        %10358 = vmatpush1.msra.mxu0 %v479
        %10359 = vmatprep.subr.mxu0 0.0
        %10360 = vmatpush1.msra.mxu0 %v478
        %10361 = vmatprep.subr.mxu0 0.0
        %10362 = vmatpush1.msra.mxu0 %v477
        %10363 = vmatprep.subr.mxu0 0.0
        %10364 = vmatpush1.msra.mxu0 %v476
        %10365 = vmatprep.subr.mxu0 0.0
        %10366 = vmatpush1.msra.mxu0 %v475
        %10367 = vmatprep.subr.mxu0 0.0
        %10368 = vmatpush1.msra.mxu0 %v474
        %10369 = vmatprep.subr.mxu0 0.0
        %10370 = vmatpush1.msra.mxu0 %v473
        %10371 = vmatprep.subr.mxu0 0.0
        %10372 = vmatpush1.msra.mxu0 %v472
        %10373 = vmatprep.subr.mxu0 0.0
        %10374 = vmatpush1.msra.mxu0 %v471
        %10375 = vmatprep.subr.mxu0 0.0
        %10376 = vmatpush1.msra.mxu0 %v470
        %10377 = vmatprep.subr.mxu0 0.0
        %10378 = vmatpush1.msra.mxu0 %v469
        %10379 = vmatprep.subr.mxu0 0.0
        %10380 = vmatpush1.msra.mxu0 %v468
        %10381 = vmatprep.subr.mxu0 0.0
        %10382 = vmatpush1.msra.mxu0 %v467
        %10383 = vmatprep.subr.mxu0 0.0
        %10384 = vmatpush1.msra.mxu0 %v466
        %10385 = vmatprep.subr.mxu0 0.0
        %10386 = vmatpush1.msra.mxu0 %v465
        %10387 = vmatprep.subr.mxu0 0.0
        %10388 = vmatpush1.msra.mxu0 %v464
        %10389 = vmatprep.subr.mxu0 0.0
        %10390 = vmatpush2.msra.mxu0 0.0
        %10391 = vmatprep.subr.mxu0 0.0
        %10392 = vmatpush2.msra.mxu0 0.0
        %10393 = vmatprep.subr.mxu0 0.0
        %10394 = vmatpush2.msra.mxu0 0.0
        %10395 = vmatprep.subr.mxu0 0.0
        %10396 = vmatpush2.msra.mxu0 0.0
        %10397 = vmatprep.subr.mxu0 0.0
        %10398 = vmatpush2.msra.mxu0 0.0
        %10399 = vmatprep.subr.mxu0 0.0
        %10400 = vmatpush2.msra.mxu0 0.0
        %10401 = vmatprep.subr.mxu0 0.0
        %10402 = vmatpush2.msra.mxu0 0.0
        %10403 = vmatprep.subr.mxu0 0.0
        %10404 = vmatpush2.msra.mxu0 0.0
        %10405 = vmatprep.subr.mxu0 0.0
        %10406 = vmatpush2.msra.mxu0 0.0
        %10407 = vmatprep.subr.mxu0 0.0
        %10408 = vmatpush2.msra.mxu0 0.0
        %10409 = vmatprep.subr.mxu0 0.0
        %10410 = vmatpush2.msra.mxu0 0.0
        %10411 = vmatprep.subr.mxu0 0.0
        %10412 = vmatpush2.msra.mxu0 0.0
        %10413 = vmatprep.subr.mxu0 0.0
        %10414 = vmatpush2.msra.mxu0 0.0
        %10415 = vmatprep.subr.mxu0 0.0
        %10416 = vmatpush2.msra.mxu0 0.0
        %10417 = vmatprep.subr.mxu0 0.0
        %10418 = vmatpush2.msra.mxu0 0.0
        %10419 = vmatprep.subr.mxu0 0.0
        %10420 = vmatpush2.msra.mxu0 0.0
        %10421 = vmatprep.mubr.f32.mxu0 0.0
        %10422 = vmatmul.mubr.f32.gmra.mxu0 %v10356
        %v10423 = vpop.f32.mrf.mxu0
        %v10424 = vadd.f32 0.0, %v10423
        %v10425 = vpop.f32.mrf.mxu0
        %10426 = vdwg.mxu0
        %v10427 = vmul.f32 %v10424, 0.0009765625
        %v10428 = vmul.f32 %v10427, %v10427
        %v10430 = vrot.slane %v10428, 7
        %v10432 = vsub.f32 %v10427, %v10430
        %v10433 = vmax.f32 %v10432, 0.0
        %v10434 = vlaneseq
        %v10435 = vshrl.u32 %v10434, 7
        %v10436 = vsub.s32 0, %v10435
        %v10437 = vrot.slane %v10427, %v10436
        %v10438 = vsub.f32 %v10121, %v10437
        %v10439 = vsub.f32 %v10124, %v10437
        %v10440 = vsub.f32 %v10129, %v10437
        %v10441 = vsub.f32 %v10132, %v10437
        %v10442 = vsub.f32 %v10137, %v10437
        %v10443 = vsub.f32 %v10140, %v10437
        %v10444 = vsub.f32 %v10145, %v10437
        %v10445 = vsub.f32 %v10148, %v10437
        %v10446 = vsub.f32 %v10153, %v10437
        %v10447 = vsub.f32 %v10156, %v10437
        %v10448 = vsub.f32 %v10161, %v10437
        %v10449 = vsub.f32 %v10164, %v10437
        %v10450 = vsub.f32 %v10169, %v10437
        %v10451 = vsub.f32 %v10172, %v10437
        %v10452 = vsub.f32 %v10177, %v10437
        %v10453 = vsub.f32 %v10180, %v10437
        %v10454 = vsub.f32 %v10185, %v10437
        %v10455 = vsub.f32 %v10188, %v10437
        %v10456 = vsub.f32 %v10193, %v10437
        %v10457 = vsub.f32 %v10196, %v10437
        %v10458 = vsub.f32 %v10201, %v10437
        %v10459 = vsub.f32 %v10204, %v10437
        %v10460 = vsub.f32 %v10209, %v10437
        %v10461 = vsub.f32 %v10212, %v10437
        %v10462 = vsub.f32 %v10217, %v10437
        %v10463 = vsub.f32 %v10220, %v10437
        %v10464 = vsub.f32 %v10225, %v10437
        %v10465 = vsub.f32 %v10228, %v10437
        %v10466 = vsub.f32 %v10233, %v10437
        %v10467 = vsub.f32 %v10236, %v10437
        %v10468 = vsub.f32 %v10241, %v10437
        %v10469 = vsub.f32 %v10244, %v10437
        %v10470 = vadd.f32 %v10433, 1e-05
        %v10471 = vrsqrt.pop %v10470
        %v10472 = vlaneseq
        %v10473 = vshrl.u32 %v10472, 7
        %v10474 = vsub.s32 1, %v10473
        %v10475 = vrot.slane %v10471, %v10474
        %v10476 = vmul.f32 %v10438, %v10475
        %v10477 = vmul.f32 %v10439, %v10475
        %v10478 = vmul.f32 %v10440, %v10475
        %v10479 = vmul.f32 %v10441, %v10475
        %v10480 = vmul.f32 %v10442, %v10475
        %v10481 = vmul.f32 %v10443, %v10475
        %v10482 = vmul.f32 %v10444, %v10475
        %v10483 = vmul.f32 %v10445, %v10475
        %v10484 = vmul.f32 %v10446, %v10475
        %v10485 = vmul.f32 %v10447, %v10475
        %v10486 = vmul.f32 %v10448, %v10475
        %v10487 = vmul.f32 %v10449, %v10475
        %v10488 = vmul.f32 %v10450, %v10475
        %v10489 = vmul.f32 %v10451, %v10475
        %v10490 = vmul.f32 %v10452, %v10475
        %v10491 = vmul.f32 %v10453, %v10475
        %v10492 = vmul.f32 %v10454, %v10475
        %v10493 = vmul.f32 %v10455, %v10475
        %v10494 = vmul.f32 %v10456, %v10475
        %v10495 = vmul.f32 %v10457, %v10475
        %v10496 = vmul.f32 %v10458, %v10475
        %v10497 = vmul.f32 %v10459, %v10475
        %v10498 = vmul.f32 %v10460, %v10475
        %v10499 = vmul.f32 %v10461, %v10475
        %v10500 = vmul.f32 %v10462, %v10475
        %v10501 = vmul.f32 %v10463, %v10475
        %v10502 = vmul.f32 %v10464, %v10475
        %v10503 = vmul.f32 %v10465, %v10475
        %v10504 = vmul.f32 %v10466, %v10475
        %v10505 = vmul.f32 %v10467, %v10475
        %v10506 = vmul.f32 %v10468, %v10475
        %v10507 = vmul.f32 %v10469, %v10475
        %v10509 = vlaneseq
        %v10510 = vshrl.u32 %v10509, 7
        %v10511 = vsub.s32 0, %v10510
        %v10512 = vrot.slane %v10247, %v10511
        %v10514 = vmul.f32 %v10476, %v10512
        %v10515 = vmul.f32 %v10477, %v10512
        %v10516 = vmul.f32 %v10478, %v10512
        %v10517 = vmul.f32 %v10479, %v10512
        %v10518 = vmul.f32 %v10480, %v10512
        %v10519 = vmul.f32 %v10481, %v10512
        %v10520 = vmul.f32 %v10482, %v10512
        %v10521 = vmul.f32 %v10483, %v10512
        %v10522 = vmul.f32 %v10484, %v10512
        %v10523 = vmul.f32 %v10485, %v10512
        %v10524 = vmul.f32 %v10486, %v10512
        %v10525 = vmul.f32 %v10487, %v10512
        %v10526 = vmul.f32 %v10488, %v10512
        %v10527 = vmul.f32 %v10489, %v10512
        %v10528 = vmul.f32 %v10490, %v10512
        %v10529 = vmul.f32 %v10491, %v10512
        %v10530 = vmul.f32 %v10492, %v10512
        %v10531 = vmul.f32 %v10493, %v10512
        %v10532 = vmul.f32 %v10494, %v10512
        %v10533 = vmul.f32 %v10495, %v10512
        %v10534 = vmul.f32 %v10496, %v10512
        %v10535 = vmul.f32 %v10497, %v10512
        %v10536 = vmul.f32 %v10498, %v10512
        %v10537 = vmul.f32 %v10499, %v10512
        %v10538 = vmul.f32 %v10500, %v10512
        %v10539 = vmul.f32 %v10501, %v10512
        %v10540 = vmul.f32 %v10502, %v10512
        %v10541 = vmul.f32 %v10503, %v10512
        %v10542 = vmul.f32 %v10504, %v10512
        %v10543 = vmul.f32 %v10505, %v10512
        %v10544 = vmul.f32 %v10506, %v10512
        %v10545 = vmul.f32 %v10507, %v10512
        %v10547 = vlaneseq
        %v10548 = vshrl.u32 %v10547, 7
        %v10549 = vsub.s32 0, %v10548
        %v10550 = vrot.slane %v10248, %v10549
        %v10552 = vadd.f32 %v10514, %v10550
        %v10553 = vadd.f32 %v10515, %v10550
        %v10554 = vadd.f32 %v10516, %v10550
        %v10555 = vadd.f32 %v10517, %v10550
        %v10556 = vadd.f32 %v10518, %v10550
        %v10557 = vadd.f32 %v10519, %v10550
        %v10558 = vadd.f32 %v10520, %v10550
        %v10559 = vadd.f32 %v10521, %v10550
        %v10560 = vadd.f32 %v10522, %v10550
        %v10561 = vadd.f32 %v10523, %v10550
        %v10562 = vadd.f32 %v10524, %v10550
        %v10563 = vadd.f32 %v10525, %v10550
        %v10564 = vadd.f32 %v10526, %v10550
        %v10565 = vadd.f32 %v10527, %v10550
        %v10566 = vadd.f32 %v10528, %v10550
        %v10567 = vadd.f32 %v10529, %v10550
        %v10568 = vadd.f32 %v10530, %v10550
        %v10569 = vadd.f32 %v10531, %v10550
        %v10570 = vadd.f32 %v10532, %v10550
        %v10571 = vadd.f32 %v10533, %v10550
        %v10572 = vadd.f32 %v10534, %v10550
        %v10573 = vadd.f32 %v10535, %v10550
        %v10574 = vadd.f32 %v10536, %v10550
        %v10575 = vadd.f32 %v10537, %v10550
        %v10576 = vadd.f32 %v10538, %v10550
        %v10577 = vadd.f32 %v10539, %v10550
        %v10578 = vadd.f32 %v10540, %v10550
        %v10579 = vadd.f32 %v10541, %v10550
        %v10580 = vadd.f32 %v10542, %v10550
        %v10581 = vadd.f32 %v10543, %v10550
        %v10582 = vadd.f32 %v10544, %v10550
        %v10583 = vadd.f32 %v10545, %v10550
        %v10584 = vld [vmem:[%s414] sm:$0xff]
        %v10585 = vld [vmem:[%s414 + $0x8] sm:$0xff]
        %v10586 = vld [vmem:[%s414 + $0x10] sm:$0xff]
        %v10587 = vld [vmem:[%s414 + $0x18] sm:$0xff]
        %v10588 = vld [vmem:[%s414 + $0x20] sm:$0xff]
        %v10589 = vld [vmem:[%s414 + $0x28] sm:$0xff]
        %v10590 = vld [vmem:[%s414 + $0x30] sm:$0xff]
        %v10591 = vld [vmem:[%s414 + $0x38] sm:$0xff]
        %v10592 = vld [vmem:[%s414 + $0x40] sm:$0xff]
        %v10593 = vld [vmem:[%s414 + $0x48] sm:$0xff]
        %v10594 = vld [vmem:[%s414 + $0x50] sm:$0xff]
        %v10595 = vld [vmem:[%s414 + $0x58] sm:$0xff]
        %v10596 = vld [vmem:[%s414 + $0x60] sm:$0xff]
        %v10597 = vld [vmem:[%s414 + $0x68] sm:$0xff]
        %v10598 = vld [vmem:[%s414 + $0x70] sm:$0xff]
        %v10599 = vld [vmem:[%s414 + $0x78] sm:$0xff]
        %v10600 = vld [vmem:[%s414 + $0x80] sm:$0xff]
        %v10601 = vld [vmem:[%s414 + $0x88] sm:$0xff]
        %v10602 = vld [vmem:[%s414 + $0x90] sm:$0xff]
        %v10603 = vld [vmem:[%s414 + $0x98] sm:$0xff]
        %v10604 = vld [vmem:[%s414 + $0xa0] sm:$0xff]
        %v10605 = vld [vmem:[%s414 + $0xa8] sm:$0xff]
        %v10606 = vld [vmem:[%s414 + $0xb0] sm:$0xff]
        %v10607 = vld [vmem:[%s414 + $0xb8] sm:$0xff]
        %v10608 = vld [vmem:[%s414 + $0xc0] sm:$0xff]
        %v10609 = vld [vmem:[%s414 + $0xc8] sm:$0xff]
        %v10610 = vld [vmem:[%s414 + $0xd0] sm:$0xff]
        %v10611 = vld [vmem:[%s414 + $0xd8] sm:$0xff]
        %v10612 = vld [vmem:[%s414 + $0xe0] sm:$0xff]
        %v10613 = vld [vmem:[%s414 + $0xe8] sm:$0xff]
        %v10614 = vld [vmem:[%s414 + $0xf0] sm:$0xff]
        %v10615 = vld [vmem:[%s414 + $0xf8] sm:$0xff]
        %v10616 = vadd.f32 %v10552, %v10584
        %v10617 = vadd.f32 %v10553, %v10585
        %v10618 = vadd.f32 %v10554, %v10586
        %v10619 = vadd.f32 %v10555, %v10587
        %v10620 = vadd.f32 %v10556, %v10588
        %v10621 = vadd.f32 %v10557, %v10589
        %v10622 = vadd.f32 %v10558, %v10590
        %v10623 = vadd.f32 %v10559, %v10591
        %v10624 = vadd.f32 %v10560, %v10592
        %v10625 = vadd.f32 %v10561, %v10593
        %v10626 = vadd.f32 %v10562, %v10594
        %v10627 = vadd.f32 %v10563, %v10595
        %v10628 = vadd.f32 %v10564, %v10596
        %v10629 = vadd.f32 %v10565, %v10597
        %v10630 = vadd.f32 %v10566, %v10598
        %v10631 = vadd.f32 %v10567, %v10599
        %v10632 = vadd.f32 %v10568, %v10600
        %v10633 = vadd.f32 %v10569, %v10601
        %v10634 = vadd.f32 %v10570, %v10602
        %v10635 = vadd.f32 %v10571, %v10603
        %v10636 = vadd.f32 %v10572, %v10604
        %v10637 = vadd.f32 %v10573, %v10605
        %v10638 = vadd.f32 %v10574, %v10606
        %v10639 = vadd.f32 %v10575, %v10607
        %v10640 = vadd.f32 %v10576, %v10608
        %v10641 = vadd.f32 %v10577, %v10609
        %v10642 = vadd.f32 %v10578, %v10610
        %v10643 = vadd.f32 %v10579, %v10611
        %v10644 = vadd.f32 %v10580, %v10612
        %v10645 = vadd.f32 %v10581, %v10613
        %v10646 = vadd.f32 %v10582, %v10614
        %v10647 = vadd.f32 %v10583, %v10615
        %vm10648 = vcmp.gt.f32.partialorder %v10616, 0.0
        %vm10649 = vcmp.gt.f32.partialorder %v10617, 0.0
        %vm10650 = vcmp.gt.f32.partialorder %v10618, 0.0
        %vm10651 = vcmp.gt.f32.partialorder %v10619, 0.0
        %vm10652 = vcmp.gt.f32.partialorder %v10620, 0.0
        %vm10653 = vcmp.gt.f32.partialorder %v10621, 0.0
        %vm10654 = vcmp.gt.f32.partialorder %v10622, 0.0
        %vm10655 = vcmp.gt.f32.partialorder %v10623, 0.0
        %vm10656 = vcmp.gt.f32.partialorder %v10624, 0.0
        %vm10657 = vcmp.gt.f32.partialorder %v10625, 0.0
        %vm10658 = vcmp.gt.f32.partialorder %v10626, 0.0
        %vm10659 = vcmp.gt.f32.partialorder %v10627, 0.0
        %vm10660 = vcmp.gt.f32.partialorder %v10628, 0.0
        %vm10661 = vcmp.gt.f32.partialorder %v10629, 0.0
        %vm10662 = vcmp.gt.f32.partialorder %v10630, 0.0
        %vm10663 = vcmp.gt.f32.partialorder %v10631, 0.0
        %vm10664 = vcmp.gt.f32.partialorder %v10632, 0.0
        %vm10665 = vcmp.gt.f32.partialorder %v10633, 0.0
        %vm10666 = vcmp.gt.f32.partialorder %v10634, 0.0
        %vm10667 = vcmp.gt.f32.partialorder %v10635, 0.0
        %vm10668 = vcmp.gt.f32.partialorder %v10636, 0.0
        %vm10669 = vcmp.gt.f32.partialorder %v10637, 0.0
        %vm10670 = vcmp.gt.f32.partialorder %v10638, 0.0
        %vm10671 = vcmp.gt.f32.partialorder %v10639, 0.0
        %vm10672 = vcmp.gt.f32.partialorder %v10640, 0.0
        %vm10673 = vcmp.gt.f32.partialorder %v10641, 0.0
        %vm10674 = vcmp.gt.f32.partialorder %v10642, 0.0
        %vm10675 = vcmp.gt.f32.partialorder %v10643, 0.0
        %vm10676 = vcmp.gt.f32.partialorder %v10644, 0.0
        %vm10677 = vcmp.gt.f32.partialorder %v10645, 0.0
        %vm10678 = vcmp.gt.f32.partialorder %v10646, 0.0
        %vm10679 = vcmp.gt.f32.partialorder %v10647, 0.0
        %v10680 = vmul.f32 %v1104, %v10616
        %v10681 = vmul.f32 %v1104, %v10617
        %v10682 = vmul.f32 %v1104, %v10618
        %v10683 = vmul.f32 %v1104, %v10619
        %v10684 = vmul.f32 %v1104, %v10620
        %v10685 = vmul.f32 %v1104, %v10621
        %v10686 = vmul.f32 %v1104, %v10622
        %v10687 = vmul.f32 %v1104, %v10623
        %v10688 = vmul.f32 %v1104, %v10624
        %v10689 = vmul.f32 %v1104, %v10625
        %v10690 = vmul.f32 %v1104, %v10626
        %v10691 = vmul.f32 %v1104, %v10627
        %v10692 = vmul.f32 %v1104, %v10628
        %v10693 = vmul.f32 %v1104, %v10629
        %v10694 = vmul.f32 %v1104, %v10630
        %v10695 = vmul.f32 %v1104, %v10631
        %v10696 = vmul.f32 %v1104, %v10632
        %v10697 = vmul.f32 %v1104, %v10633
        %v10698 = vmul.f32 %v1104, %v10634
        %v10699 = vmul.f32 %v1104, %v10635
        %v10700 = vmul.f32 %v1104, %v10636
        %v10701 = vmul.f32 %v1104, %v10637
        %v10702 = vmul.f32 %v1104, %v10638
        %v10703 = vmul.f32 %v1104, %v10639
        %v10704 = vmul.f32 %v1104, %v10640
        %v10705 = vmul.f32 %v1104, %v10641
        %v10706 = vmul.f32 %v1104, %v10642
        %v10707 = vmul.f32 %v1104, %v10643
        %v10708 = vmul.f32 %v1104, %v10644
        %v10709 = vmul.f32 %v1104, %v10645
        %v10710 = vmul.f32 %v1104, %v10646
        %v10711 = vmul.f32 %v1104, %v10647
        %v10712 = vsel %vm10648, %v10616, %v10680
        %v10713 = vsel %vm10649, %v10617, %v10681
        %v10714 = vsel %vm10650, %v10618, %v10682
        %v10715 = vsel %vm10651, %v10619, %v10683
        %v10716 = vsel %vm10652, %v10620, %v10684
        %v10717 = vsel %vm10653, %v10621, %v10685
        %v10718 = vsel %vm10654, %v10622, %v10686
        %v10719 = vsel %vm10655, %v10623, %v10687
        %v10720 = vsel %vm10656, %v10624, %v10688
        %v10721 = vsel %vm10657, %v10625, %v10689
        %v10722 = vsel %vm10658, %v10626, %v10690
        %v10723 = vsel %vm10659, %v10627, %v10691
        %v10724 = vsel %vm10660, %v10628, %v10692
        %v10725 = vsel %vm10661, %v10629, %v10693
        %v10726 = vsel %vm10662, %v10630, %v10694
        %v10727 = vsel %vm10663, %v10631, %v10695
        %v10728 = vsel %vm10664, %v10632, %v10696
        %v10729 = vsel %vm10665, %v10633, %v10697
        %v10730 = vsel %vm10666, %v10634, %v10698
        %v10731 = vsel %vm10667, %v10635, %v10699
        %v10732 = vsel %vm10668, %v10636, %v10700
        %v10733 = vsel %vm10669, %v10637, %v10701
        %v10734 = vsel %vm10670, %v10638, %v10702
        %v10735 = vsel %vm10671, %v10639, %v10703
        %v10736 = vsel %vm10672, %v10640, %v10704
        %v10737 = vsel %vm10673, %v10641, %v10705
        %v10738 = vsel %vm10674, %v10642, %v10706
        %v10739 = vsel %vm10675, %v10643, %v10707
        %v10740 = vsel %vm10676, %v10644, %v10708
        %v10741 = vsel %vm10677, %v10645, %v10709
        %v10742 = vsel %vm10678, %v10646, %v10710
        %v10743 = vsel %vm10679, %v10647, %v10711
        %10744 = vst [vmem:[%s462] sm:$0xff] %v10712
        %10745 = vst [vmem:[%s462 + $0x8] sm:$0xff] %v10713
        %10746 = vst [vmem:[%s462 + $0x10] sm:$0xff] %v10714
        %10747 = vst [vmem:[%s462 + $0x18] sm:$0xff] %v10715
        %10748 = vst [vmem:[%s462 + $0x20] sm:$0xff] %v10716
        %10749 = vst [vmem:[%s462 + $0x28] sm:$0xff] %v10717
        %10750 = vst [vmem:[%s462 + $0x30] sm:$0xff] %v10718
        %10751 = vst [vmem:[%s462 + $0x38] sm:$0xff] %v10719
        %10752 = vst [vmem:[%s462 + $0x40] sm:$0xff] %v10720
        %10753 = vst [vmem:[%s462 + $0x48] sm:$0xff] %v10721
        %10754 = vst [vmem:[%s462 + $0x50] sm:$0xff] %v10722
        %10755 = vst [vmem:[%s462 + $0x58] sm:$0xff] %v10723
        %10756 = vst [vmem:[%s462 + $0x60] sm:$0xff] %v10724
        %10757 = vst [vmem:[%s462 + $0x68] sm:$0xff] %v10725
        %10758 = vst [vmem:[%s462 + $0x70] sm:$0xff] %v10726
        %10759 = vst [vmem:[%s462 + $0x78] sm:$0xff] %v10727
        %10760 = vst [vmem:[%s462 + $0x80] sm:$0xff] %v10728
        %10761 = vst [vmem:[%s462 + $0x88] sm:$0xff] %v10729
        %10762 = vst [vmem:[%s462 + $0x90] sm:$0xff] %v10730
        %10763 = vst [vmem:[%s462 + $0x98] sm:$0xff] %v10731
        %10764 = vst [vmem:[%s462 + $0xa0] sm:$0xff] %v10732
        %10765 = vst [vmem:[%s462 + $0xa8] sm:$0xff] %v10733
        %10766 = vst [vmem:[%s462 + $0xb0] sm:$0xff] %v10734
        %10767 = vst [vmem:[%s462 + $0xb8] sm:$0xff] %v10735
        %10768 = vst [vmem:[%s462 + $0xc0] sm:$0xff] %v10736
        %10769 = vst [vmem:[%s462 + $0xc8] sm:$0xff] %v10737
        %10770 = vst [vmem:[%s462 + $0xd0] sm:$0xff] %v10738
        %10771 = vst [vmem:[%s462 + $0xd8] sm:$0xff] %v10739
        %10772 = vst [vmem:[%s462 + $0xe0] sm:$0xff] %v10740
        %10773 = vst [vmem:[%s462 + $0xe8] sm:$0xff] %v10741
        %10774 = vst [vmem:[%s462 + $0xf0] sm:$0xff] %v10742
        %10775 = vst [vmem:[%s462 + $0xf8] sm:$0xff] %v10743
        %s10776 = sand.u32 %s297, 1
        %s10777 = scalar_lea.sflag [#allocation6], %s10776
        %s10778 = sand.u32 %s297, 1
        %s10779 = smul.addr %s10778, 256
        %s10780 = scalar_lea.vmem [#allocation10], %s10779
        // Predicated region
        $region81: #{resnext_bottleneck_forward.1} parent=67 // pred_check
          %p10781 = pneg %p307
        $region82: #{resnext_bottleneck_forward.1} parent=67 // pred_check_branch
          %10783 = sbr.rel (%p10781) target = $region84
        $region83: #{resnext_bottleneck_forward.1} parent=67 // pred_region
          %s10785 = ssub.s32 4096, 4096
          %10786 = vsyncadd %s10777, %s10785
          %s10787 = smul.addr %s32, 32
          %s10788 = smul.addr %s10787, 128
          %s10789 = scalar_lea.hbm %s12, %s10788
          %s10790 = sshll.u32 %s10780, 4
          %s10791 = int_to_ptr.vmem [resolvable:$true] %s10790
          %10796 = dma.vmem_to_hbm [thread:$0]  %s10791, 4096, %s10789, %s10777, 128, 128, 8
        $region84: #{resnext_bottleneck_forward.1} parent=67 // pred_fallthru
          _
      $region68: #{resnext_bottleneck_forward.1} parent=5 // pred_fallthru
        _
      %p10797 = scmp.le.s32.totalorder 2, %s27
      // Predicated region
      $region85: #{resnext_bottleneck_forward.1} parent=5 // pred_check
        %p10798 = pneg %p10797
      $region86: #{resnext_bottleneck_forward.1} parent=5 // pred_check_branch
        %10800 = sbr.rel (%p10798) target = $region88
      $region87: #{resnext_bottleneck_forward.1} parent=5 // pred_region
        %s10801 = ssub.s32 %s27, 2
        // Predicated region
        $region89: #{resnext_bottleneck_forward.1} parent=87 // pred_check
          %p10802 = pneg %p313
        $region90: #{resnext_bottleneck_forward.1} parent=87 // pred_check_branch
          %10804 = sbr.rel (%p10802) target = $region92
        $region91: #{resnext_bottleneck_forward.1} parent=87 // pred_region
          %s10805 = sand.u32 %s298, 1
          %s10806 = scalar_lea.sflag [#allocation6], %s10805
          %s10807 = sand.u32 %s298, 1
          %s10808 = smul.addr %s10807, 256
          %s10809 = scalar_lea.vmem [#allocation10], %s10808
          %10810 = dma.done %s10806, 4096
        $region92: #{resnext_bottleneck_forward.1} parent=87 // pred_fallthru
          _
      $region88: #{resnext_bottleneck_forward.1} parent=5 // pred_fallthru
        _
    $region6: #{resnext_bottleneck_forward.1} parent=1 // loop_footer
      %s31 = sadd.s32 1, %s27
    $region7: #{resnext_bottleneck_forward.1} parent=1 // loop_footer_branch
      %26 = sbr.rel target = $region3
    $region8: #{resnext_bottleneck_forward.1} parent=1 // loop_exit
      _
    %10811 = vsyncpa [#allocation5], 1
    %s10812 = scalar_lea.sflag [#allocation5], 1
    %10813 = vsyncpa %s10812, 1
    %10814 = vsyncpa [#allocation8], 1
    %10815 = vsyncpa [#allocation6], 1
    %s10816 = scalar_lea.sflag [#allocation6], 1
    %10817 = vsyncpa %s10816, 1

</llo_original>
